<compile_context>
chip_gen: v7x
topology: tpu7x:2x2x1
jax: 0.10.0
libtpu: 0.0.40
codegen_flags: <defaults>
</compile_context>

<pallas_src>
import math

import jax
import jax.numpy as jnp
from jax.experimental import pallas as pl
from jax.experimental.pallas import tpu as pltpu


# ---------------------------------------------------------------------------
# Fused forward kernel
# ---------------------------------------------------------------------------
def fused_kernel(x_lb_ref, x_bl_ref,
                 wihf_ref, whhf_ref, bf_ref, wihb_ref, bb_ref,
                 w1_ref, s1_ref, b1_ref, sh1_ref, se1a_ref, se1b_ref,
                 w2_ref, s2_ref, b2_ref, sh2_ref, se2a_ref, se2b_ref,
                 w3_ref, s3_ref, b3_ref, sh3_ref,
                 fcwyf_ref, fcwyb_ref, fcwx_ref, fcb_ref,
                 out_ref):
    f32 = jnp.float32
    bf16 = jnp.bfloat16
    B = out_ref.shape[0]
    L = x_lb_ref.shape[0] // B
    BL = B * L
    H = whhf_ref.shape[0]
    H3 = 3 * H

    # ---------------- LSTM branch (f32; tiny, latency-bound recurrence) ------
    x_lb = x_lb_ref[...]                                       # (L*B, C)
    # Single hoisted input projection for ALL timesteps (one MXU push).
    gx_all = jnp.dot(x_lb, wihf_ref[...],
                     preferred_element_type=f32) + bf_ref[...]  # (L*B, 4H)
    whh = whhf_ref[...]

    h = jnp.zeros((B, H), f32)
    c = jnp.zeros((B, H), f32)
    for t in range(L):  # static unroll -> full scheduler visibility
        gates = gx_all[t * B:(t + 1) * B, :] + jnp.dot(
            h, whh, preferred_element_type=f32)                # (B, 4H)
        # gate columns reordered to [i, f, o, g]: one sigmoid block, one tanh.
        sg = jax.nn.sigmoid(gates[:, :H3])
        g_g = jnp.tanh(gates[:, H3:])
        i_g = sg[:, :H]
        f_g = sg[:, H:2 * H]
        o_g = sg[:, 2 * H:H3]
        c = f_g * c + i_g * g_g
        h = o_g * jnp.tanh(c)
    h_fwd = h

    # output[:, -1, :] of the reverse direction is its FIRST step (consumes
    # x[L-1] from zero state), so one cell evaluation suffices (h0=0 => W_hhb
    # contributes nothing).
    gb = jnp.dot(x_lb[(L - 1) * B:, :], wihb_ref[...],
                 preferred_element_type=f32) + bb_ref[...]      # (B, 4H)
    sgb = jax.nn.sigmoid(gb[:, :H3])
    ggb = jnp.tanh(gb[:, H3:])
    c_b = sgb[:, :H] * ggb
    h_bwd = sgb[:, 2 * H:H3] * jnp.tanh(c_b)
    # LSTMdropout(p=0.8): identity at inference.

    # ---------------- FCN branch helpers --------------------------------------
    def conv_bn_relu(slab_f32, w_ref_, s_ref_, b_ref_, sh_ref_):
        """'same' conv as K shifted-accumulation matmuls on a (B*L, Cin) slab.
        sh_ref_[k] is a constant 0/1 banded (BL, BL) matrix encoding the per-tap
        shift, zero padding at sequence boundaries, and batch separation."""
        K = sh_ref_.shape[0]
        Cin = w_ref_.shape[0] // K
        Cout = w_ref_.shape[1]
        pad = (K - 1) // 2
        slab_bf = slab_f32.astype(bf16)                         # matmul operand only
        acc = jnp.zeros((BL, Cout), f32)
        for k in range(K):
            if k == pad:
                xs = slab_bf                                    # identity tap
            else:
                xs = jnp.dot(sh_ref_[k], slab_bf,               # exact 0/1 selection
                             preferred_element_type=f32).astype(bf16)
            acc = acc + jnp.dot(xs, w_ref_[k * Cin:(k + 1) * Cin, :],
                                preferred_element_type=f32)
        return jnp.maximum(acc * s_ref_[...] + b_ref_[...], 0.0)

    def squeeze_excite(slab, w1v_ref, w2v_ref):
        """Batch-vectorized SE via the layout-free (B*L, C)->(B, L, C) reshape."""
        Cc = slab.shape[1]
        h3 = slab.reshape(B, L, Cc)
        m = jnp.sum(h3, axis=1) * (1.0 / L)                     # (B, C) f32
        z = jnp.maximum(jnp.dot(m.astype(bf16), w1v_ref[...],
                                preferred_element_type=f32), 0.0)
        gate = jax.nn.sigmoid(jnp.dot(z.astype(bf16), w2v_ref[...],
                                      preferred_element_type=f32))  # (B, C)
        return (h3 * gate[:, None, :]).reshape(BL, Cc)

    # ---------------- FCN branch ----------------------------------------------
    a1 = conv_bn_relu(x_bl_ref[...], w1_ref, s1_ref, b1_ref, sh1_ref)   # (BL,128)
    a1 = squeeze_excite(a1, se1a_ref, se1b_ref)
    a2 = conv_bn_relu(a1, w2_ref, s2_ref, b2_ref, sh2_ref)              # (BL,256)
    a2 = squeeze_excite(a2, se2a_ref, se2b_ref)
    a3 = conv_bn_relu(a2, w3_ref, s3_ref, b3_ref, sh3_ref)              # (BL,128)

    # ---------------- GAP + Linear head ----------------------------------------
    gap = jnp.sum(a3.reshape(B, L, a3.shape[1]), axis=1) * (1.0 / L)    # (B,128)
    # fc_dropout(p=0.8): identity at inference.
    out = (jnp.dot(h_fwd.astype(bf16), fcwyf_ref[...], preferred_element_type=f32)
           + jnp.dot(h_bwd.astype(bf16), fcwyb_ref[...], preferred_element_type=f32)
           + jnp.dot(gap.astype(bf16), fcwx_ref[...], preferred_element_type=f32)
           + fcb_ref[...])
    out_ref[...] = out.astype(out_ref.dtype)


# ---------------------------------------------------------------------------
# Wrapper: one pallas_call for the whole forward pass
# ---------------------------------------------------------------------------
def mlstm_fcn_forward(x_bcl, kp):
    """x_bcl: (B, C, L) like the PyTorch module input.  kp: prepare_params()."""
    B, C, L = x_bcl.shape
    OUT = kp["fcb"].shape[1]

    # One-time, tiny per-call input layout prep (~1 KiB each).
    x_lb = jnp.transpose(x_bcl, (2, 0, 1)).reshape(L * B, C)   # time-major (LSTM)
    x_bl = jnp.transpose(x_bcl, (0, 2, 1)).reshape(B * L, C)   # batch-major (FCN)

    args = (x_lb, x_bl,
            kp["wihf"], kp["whhf"], kp["bf"], kp["wihb"], kp["bb"],
            kp["w1"], kp["s1"], kp["b1"], kp["sh1"], kp["se1a"], kp["se1b"],
            kp["w2"], kp["s2"], kp["b2"], kp["sh2"], kp["se2a"], kp["se2b"],
            kp["w3"], kp["s3"], kp["b3"], kp["sh3"],
            kp["fcwyf"], kp["fcwyb"], kp["fcwx"], kp["fcb"])

    vmem = lambda: pl.BlockSpec(memory_space=pltpu.MemorySpace.VMEM)
    # No grid: weights (<1 MiB) + activations (<100 KiB) fit in VMEM on every
    # TPU generation, so the whole model is one VMEM-resident invocation.
    return pl.pallas_call(
        fused_kernel,
        out_shape=jax.ShapeDtypeStruct((B, OUT), jnp.float32),
        in_specs=[vmem() for _ in args],
        out_specs=vmem(),
        compiler_params=pltpu.CompilerParams(vmem_limit_bytes=32 * 1024 * 1024),
    )(*args)


# ---------------------------------------------------------------------------
# One-time parameter preparation (outside jit): fold, reorder gates, cast bf16,
# build banded shift matrices for the shifted-accumulation convs.
# ---------------------------------------------------------------------------
def prepare_params(p, B, L):
    bf16 = jnp.bfloat16
    H = p["whhf"].shape[0]

    def reorder(a):  # gate columns [i, f, g, o] -> [i, f, o, g]
        return jnp.concatenate(
            [a[..., :2 * H], a[..., 3 * H:], a[..., 2 * H:3 * H]], axis=-1)

    def fold(w):     # (K, Cin, Cout) -> (K*Cin, Cout) bf16 MXU operand
        return w.reshape(-1, w.shape[-1]).astype(bf16)

    def shift_mats(K):
        """(K, BL, BL) 0/1 matrices: output row r gets input row r+(k-pad),
        zero when crossing the sequence/batch boundary ('same' padding)."""
        BL = B * L
        pad = (K - 1) // 2
        r = jnp.arange(BL)[:, None]
        q = jnp.arange(BL)[None, :]
        mats = [((q == r + (k - pad)) & ((r // L) == (q // L))).astype(bf16)
                for k in range(K)]
        return jnp.stack(mats, axis=0)

    return {
        "wihf": reorder(p["wihf"]), "whhf": reorder(p["whhf"]), "bf": reorder(p["bf"]),
        "wihb": reorder(p["wihb"]), "bb": reorder(p["bb"]),
        "w1": fold(p["w1"]), "s1": p["s1"], "b1": p["b1"],
        "sh1": shift_mats(p["w1"].shape[0]),
        "se1a": p["se1_w1"].astype(bf16), "se1b": p["se1_w2"].astype(bf16),
        "w2": fold(p["w2"]), "s2": p["s2"], "b2": p["b2"],
        "sh2": shift_mats(p["w2"].shape[0]),
        "se2a": p["se2_w1"].astype(bf16), "se2b": p["se2_w2"].astype(bf16),
        "w3": fold(p["w3"]), "s3": p["s3"], "b3": p["b3"],
        "sh3": shift_mats(p["w3"].shape[0]),
        "fcwyf": p["fc_wy"][:H].astype(bf16), "fcwyb": p["fc_wy"][H:].astype(bf16),
        "fcwx": p["fc_wx"].astype(bf16), "fcb": p["fc_b"],
    }


# ---------------------------------------------------------------------------
# Deterministic parameter construction (PyTorch-like parameterization)
# ---------------------------------------------------------------------------
def init_params(key, C, H, OUT):
    keys = iter(jax.random.split(key, 48))

    def nrm(shape, scale):
        return jax.random.normal(next(keys), shape, jnp.float32) * scale

    def unif(shape, lo, hi):
        return jax.random.uniform(next(keys), shape, jnp.float32, lo, hi)

    p = {}
    # Bidirectional LSTM (gate order i, f, g, o); combined bias = b_ih + b_hh.
    s = 1.0 / math.sqrt(H)
    p["wihf"] = nrm((C, 4 * H), s)
    p["whhf"] = nrm((H, 4 * H), s)
    p["bf"] = nrm((1, 4 * H), s)
    p["wihb"] = nrm((C, 4 * H), s)
    p["whhb"] = nrm((H, 4 * H), s)   # only used by the reference (h0 = 0 anyway)
    p["bb"] = nrm((1, 4 * H), s)

    def conv_bn(Cin, Cout, K, eps=0.001):
        w = nrm((K, Cin, Cout), 1.0 / math.sqrt(Cin * K))       # (K, Cin, Cout)
        conv_b = nrm((Cout,), 1.0 / math.sqrt(Cin * K))
        gamma = 1.0 + nrm((Cout,), 0.1)
        beta = nrm((Cout,), 0.1)
        mean = nrm((Cout,), 0.1)
        var = unif((Cout,), 0.5, 1.5)
        scale = gamma / jnp.sqrt(var + eps)
        bias = beta + (conv_b - mean) * scale
        return w, scale.reshape(1, Cout), bias.reshape(1, Cout)

    p["w1"], p["s1"], p["b1"] = conv_bn(C, 128, 7)
    p["se1_w1"] = nrm((128, 128 // 16), 1.0 / math.sqrt(128))
    p["se1_w2"] = nrm((128 // 16, 128), 1.0 / math.sqrt(128 // 16))
    p["w2"], p["s2"], p["b2"] = conv_bn(128, 256, 5)
    p["se2_w1"] = nrm((256, 256 // 16), 1.0 / math.sqrt(256))
    p["se2_w2"] = nrm((256 // 16, 256), 1.0 / math.sqrt(256 // 16))
    p["w3"], p["s3"], p["b3"] = conv_bn(256, 128, 3)

    fin = 128 + 2 * H
    p["fc_wy"] = nrm((2 * H, OUT), 1.0 / math.sqrt(fin))
    p["fc_wx"] = nrm((128, OUT), 1.0 / math.sqrt(fin))
    p["fc_b"] = nrm((1, OUT), 1.0 / math.sqrt(fin))
    return p


# ---------------------------------------------------------------------------
# Pure-JAX reference (same math, no Pallas, all f32) for a sanity check
# ---------------------------------------------------------------------------
def reference_forward(x_bcl, p):
    B, C, L = x_bcl.shape
    H = p["whhf"].shape[0]
    xl = jnp.transpose(x_bcl, (0, 2, 1))  # (B, L, C)

    def cell(x_t, h, c, wih, whh, b):
        gates = x_t @ wih + h @ whh + b
        i = jax.nn.sigmoid(gates[:, :H])
        f = jax.nn.sigmoid(gates[:, H:2 * H])
        g = jnp.tanh(gates[:, 2 * H:3 * H])
        o = jax.nn.sigmoid(gates[:, 3 * H:])
        c = f * c + i * g
        return o * jnp.tanh(c), c

    h = jnp.zeros((B, H), jnp.float32)
    c = jnp.zeros((B, H), jnp.float32)
    for t in range(L):
        h, c = cell(xl[:, t], h, c, p["wihf"], p["whhf"], p["bf"])
    hb, _ = cell(xl[:, L - 1], jnp.zeros((B, H)), jnp.zeros((B, H)),
                 p["wihb"], p["whhb"], p["bb"])
    y = jnp.concatenate([h, hb], axis=1)

    def convblock(z, w, s, b):
        K = w.shape[0]
        pad = (K - 1) // 2
        zp = jnp.pad(z, ((0, 0), (pad, pad), (0, 0)))
        Lz = z.shape[1]
        acc = 0.0
        for k in range(K):
            acc = acc + jnp.einsum("blc,co->blo", zp[:, k:k + Lz, :], w[k])
        return jnp.maximum(acc * s + b, 0.0)

    def se(z, w1, w2):
        m = jnp.mean(z, axis=1)
        sgate = jax.nn.sigmoid(jnp.maximum(m @ w1, 0.0) @ w2)
        return z * sgate[:, None, :]

    g = convblock(xl, p["w1"], p["s1"], p["b1"])
    g = se(g, p["se1_w1"], p["se1_w2"])
    g = convblock(g, p["w2"], p["s2"], p["b2"])
    g = se(g, p["se2_w1"], p["se2_w2"])
    g = convblock(g, p["w3"], p["s3"], p["b3"])
    gap = jnp.mean(g, axis=1)
    return y @ p["fc_wy"] + gap @ p["fc_wx"] + p["fc_b"]


# ---------------------------------------------------------------------------
if __name__ == "__main__":
    B, C, L, H, OUT = 2, 8, 16, 32, 2   # batch, in-channels, seq, lstm hidden, targets

    key = jax.random.PRNGKey(0)
    k_x, k_p = jax.random.split(key)
    x = jax.random.normal(k_x, (B, C, L), jnp.float32)
    params = init_params(k_p, C, H, OUT)
    kparams = prepare_params(params, B, L)      # one-time, outside the jitted call

    fwd = jax.jit(mlstm_fcn_forward)
    out = jax.block_until_ready(fwd(x, kparams))
    assert out.shape == (B, OUT), out.shape

    ref = jax.jit(reference_forward)(x, params)
    assert bool(jnp.all(jnp.isfinite(out)))
    assert bool(jnp.allclose(out, ref, rtol=5e-2, atol=5e-2)), (out, ref)

    print("KERNEL_OK")
</pallas_src>

<mosaic_0001>
module attributes {stable_mosaic.version = 11 : i64} {
  func.func @fused_kernel(%arg0: memref<32x8xf32, #tpu.memory_space<vmem>>, %arg1: memref<32x8xf32, #tpu.memory_space<vmem>>, %arg2: memref<8x128xf32, #tpu.memory_space<vmem>>, %arg3: memref<32x128xf32, #tpu.memory_space<vmem>>, %arg4: memref<1x128xf32, #tpu.memory_space<vmem>>, %arg5: memref<8x128xf32, #tpu.memory_space<vmem>>, %arg6: memref<1x128xf32, #tpu.memory_space<vmem>>, %arg7: memref<56x128xbf16, #tpu.memory_space<vmem>>, %arg8: memref<1x128xf32, #tpu.memory_space<vmem>>, %arg9: memref<1x128xf32, #tpu.memory_space<vmem>>, %arg10: memref<7x32x32xbf16, #tpu.memory_space<vmem>>, %arg11: memref<128x8xbf16, #tpu.memory_space<vmem>>, %arg12: memref<8x128xbf16, #tpu.memory_space<vmem>>, %arg13: memref<640x256xbf16, #tpu.memory_space<vmem>>, %arg14: memref<1x256xf32, #tpu.memory_space<vmem>>, %arg15: memref<1x256xf32, #tpu.memory_space<vmem>>, %arg16: memref<5x32x32xbf16, #tpu.memory_space<vmem>>, %arg17: memref<256x16xbf16, #tpu.memory_space<vmem>>, %arg18: memref<16x256xbf16, #tpu.memory_space<vmem>>, %arg19: memref<768x128xbf16, #tpu.memory_space<vmem>>, %arg20: memref<1x128xf32, #tpu.memory_space<vmem>>, %arg21: memref<1x128xf32, #tpu.memory_space<vmem>>, %arg22: memref<3x32x32xbf16, #tpu.memory_space<vmem>>, %arg23: memref<32x2xbf16, #tpu.memory_space<vmem>>, %arg24: memref<32x2xbf16, #tpu.memory_space<vmem>>, %arg25: memref<128x2xbf16, #tpu.memory_space<vmem>>, %arg26: memref<1x2xf32, #tpu.memory_space<vmem>>, %arg27: memref<2x2xf32, #tpu.memory_space<vmem>>) attributes {dimension_semantics = [], scalar_prefetch = 0 : i64, scratch_operands = 0 : i64, tpu.core_type = #tpu.core_type<tc>} {
    %c0 = arith.constant 0 : index
    %c0_0 = arith.constant 0 : index
    %0 = vector.load %arg0[%c0, %c0_0] : memref<32x8xf32, #tpu.memory_space<vmem>>, vector<32x8xf32>
    %c0_1 = arith.constant 0 : index
    %c0_2 = arith.constant 0 : index
    %1 = vector.load %arg2[%c0_1, %c0_2] : memref<8x128xf32, #tpu.memory_space<vmem>>, vector<8x128xf32>
    %cst = arith.constant dense<0.000000e+00> : vector<32x128xf32>
    %2 = tpu.matmul %0, %1, %cst {dimension_numbers = #tpu.dot_dimension_numbers<[1], [0], [0], [1], [0, 0, 1, 1], [], []>} : vector<32x8xf32>, vector<8x128xf32>, vector<32x128xf32> -> vector<32x128xf32>
    %c0_3 = arith.constant 0 : index
    %c0_4 = arith.constant 0 : index
    %3 = vector.load %arg4[%c0_3, %c0_4] : memref<1x128xf32, #tpu.memory_space<vmem>>, vector<1x128xf32>
    %4 = vector.broadcast %3 : vector<1x128xf32> to vector<32x128xf32>
    %5 = arith.addf %2, %4 : vector<32x128xf32>
    %c0_5 = arith.constant 0 : index
    %c0_6 = arith.constant 0 : index
    %6 = vector.load %arg3[%c0_5, %c0_6] : memref<32x128xf32, #tpu.memory_space<vmem>>, vector<32x128xf32>
    %cst_7 = arith.constant 0.000000e+00 : f32
    %7 = vector.broadcast %cst_7 : f32 to vector<2x32xf32>
    %cst_8 = arith.constant 0.000000e+00 : f32
    %8 = vector.broadcast %cst_8 : f32 to vector<2x32xf32>
    %9 = vector.extract_strided_slice %5 {offsets = [0, 0], sizes = [2, 128], strides = [1, 1]} : vector<32x128xf32> to vector<2x128xf32>
    %cst_9 = arith.constant dense<0.000000e+00> : vector<2x128xf32>
    %10 = tpu.matmul %7, %6, %cst_9 {dimension_numbers = #tpu.dot_dimension_numbers<[1], [0], [0], [1], [0, 0, 1, 1], [], []>} : vector<2x32xf32>, vector<32x128xf32>, vector<2x128xf32> -> vector<2x128xf32>
    %11 = arith.addf %9, %10 : vector<2x128xf32>
    %12 = vector.extract_strided_slice %11 {offsets = [0, 0], sizes = [2, 96], strides = [1, 1]} : vector<2x128xf32> to vector<2x96xf32>
    %13 = arith.negf %12 : vector<2x96xf32>
    %14 = math.exp %13 : vector<2x96xf32>
    %cst_10 = arith.constant 1.000000e+00 : f32
    %15 = vector.broadcast %cst_10 : f32 to vector<2x96xf32>
    %16 = arith.addf %15, %14 : vector<2x96xf32>
    %17 = arith.divf %15, %16 : vector<2x96xf32>
    %18 = vector.extract_strided_slice %11 {offsets = [0, 96], sizes = [2, 32], strides = [1, 1]} : vector<2x128xf32> to vector<2x32xf32>
    %19 = math.tanh %18 : vector<2x32xf32>
    %20 = vector.extract_strided_slice %17 {offsets = [0, 0], sizes = [2, 32], strides = [1, 1]} : vector<2x96xf32> to vector<2x32xf32>
    %21 = vector.extract_strided_slice %17 {offsets = [0, 32], sizes = [2, 32], strides = [1, 1]} : vector<2x96xf32> to vector<2x32xf32>
    %22 = vector.extract_strided_slice %17 {offsets = [0, 64], sizes = [2, 32], strides = [1, 1]} : vector<2x96xf32> to vector<2x32xf32>
    %23 = arith.mulf %21, %8 : vector<2x32xf32>
    %24 = arith.mulf %20, %19 : vector<2x32xf32>
    %25 = arith.addf %23, %24 : vector<2x32xf32>
    %26 = math.tanh %25 : vector<2x32xf32>
    %27 = arith.mulf %22, %26 : vector<2x32xf32>
    %28 = vector.extract_strided_slice %5 {offsets = [2, 0], sizes = [2, 128], strides = [1, 1]} : vector<32x128xf32> to vector<2x128xf32>
    %cst_11 = arith.constant dense<0.000000e+00> : vector<2x128xf32>
    %29 = tpu.matmul %27, %6, %cst_11 {dimension_numbers = #tpu.dot_dimension_numbers<[1], [0], [0], [1], [0, 0, 1, 1], [], []>} : vector<2x32xf32>, vector<32x128xf32>, vector<2x128xf32> -> vector<2x128xf32>
    %30 = arith.addf %28, %29 : vector<2x128xf32>
    %31 = vector.extract_strided_slice %30 {offsets = [0, 0], sizes = [2, 96], strides = [1, 1]} : vector<2x128xf32> to vector<2x96xf32>
    %32 = arith.negf %31 : vector<2x96xf32>
    %33 = math.exp %32 : vector<2x96xf32>
    %cst_12 = arith.constant 1.000000e+00 : f32
    %34 = vector.broadcast %cst_12 : f32 to vector<2x96xf32>
    %35 = arith.addf %34, %33 : vector<2x96xf32>
    %36 = arith.divf %34, %35 : vector<2x96xf32>
    %37 = vector.extract_strided_slice %30 {offsets = [0, 96], sizes = [2, 32], strides = [1, 1]} : vector<2x128xf32> to vector<2x32xf32>
    %38 = math.tanh %37 : vector<2x32xf32>
    %39 = vector.extract_strided_slice %36 {offsets = [0, 0], sizes = [2, 32], strides = [1, 1]} : vector<2x96xf32> to vector<2x32xf32>
    %40 = vector.extract_strided_slice %36 {offsets = [0, 32], sizes = [2, 32], strides = [1, 1]} : vector<2x96xf32> to vector<2x32xf32>
    %41 = vector.extract_strided_slice %36 {offsets = [0, 64], sizes = [2, 32], strides = [1, 1]} : vector<2x96xf32> to vector<2x32xf32>
    %42 = arith.mulf %40, %25 : vector<2x32xf32>
    %43 = arith.mulf %39, %38 : vector<2x32xf32>
    %44 = arith.addf %42, %43 : vector<2x32xf32>
    %45 = math.tanh %44 : vector<2x32xf32>
    %46 = arith.mulf %41, %45 : vector<2x32xf32>
    %47 = vector.extract_strided_slice %5 {offsets = [4, 0], sizes = [2, 128], strides = [1, 1]} : vector<32x128xf32> to vector<2x128xf32>
    %cst_13 = arith.constant dense<0.000000e+00> : vector<2x128xf32>
    %48 = tpu.matmul %46, %6, %cst_13 {dimension_numbers = #tpu.dot_dimension_numbers<[1], [0], [0], [1], [0, 0, 1, 1], [], []>} : vector<2x32xf32>, vector<32x128xf32>, vector<2x128xf32> -> vector<2x128xf32>
    %49 = arith.addf %47, %48 : vector<2x128xf32>
    %50 = vector.extract_strided_slice %49 {offsets = [0, 0], sizes = [2, 96], strides = [1, 1]} : vector<2x128xf32> to vector<2x96xf32>
    %51 = arith.negf %50 : vector<2x96xf32>
    %52 = math.exp %51 : vector<2x96xf32>
    %cst_14 = arith.constant 1.000000e+00 : f32
    %53 = vector.broadcast %cst_14 : f32 to vector<2x96xf32>
    %54 = arith.addf %53, %52 : vector<2x96xf32>
    %55 = arith.divf %53, %54 : vector<2x96xf32>
    %56 = vector.extract_strided_slice %49 {offsets = [0, 96], sizes = [2, 32], strides = [1, 1]} : vector<2x128xf32> to vector<2x32xf32>
    %57 = math.tanh %56 : vector<2x32xf32>
    %58 = vector.extract_strided_slice %55 {offsets = [0, 0], sizes = [2, 32], strides = [1, 1]} : vector<2x96xf32> to vector<2x32xf32>
    %59 = vector.extract_strided_slice %55 {offsets = [0, 32], sizes = [2, 32], strides = [1, 1]} : vector<2x96xf32> to vector<2x32xf32>
    %60 = vector.extract_strided_slice %55 {offsets = [0, 64], sizes = [2, 32], strides = [1, 1]} : vector<2x96xf32> to vector<2x32xf32>
    %61 = arith.mulf %59, %44 : vector<2x32xf32>
    %62 = arith.mulf %58, %57 : vector<2x32xf32>
    %63 = arith.addf %61, %62 : vector<2x32xf32>
    %64 = math.tanh %63 : vector<2x32xf32>
    %65 = arith.mulf %60, %64 : vector<2x32xf32>
    %66 = vector.extract_strided_slice %5 {offsets = [6, 0], sizes = [2, 128], strides = [1, 1]} : vector<32x128xf32> to vector<2x128xf32>
    %cst_15 = arith.constant dense<0.000000e+00> : vector<2x128xf32>
    %67 = tpu.matmul %65, %6, %cst_15 {dimension_numbers = #tpu.dot_dimension_numbers<[1], [0], [0], [1], [0, 0, 1, 1], [], []>} : vector<2x32xf32>, vector<32x128xf32>, vector<2x128xf32> -> vector<2x128xf32>
    %68 = arith.addf %66, %67 : vector<2x128xf32>
    %69 = vector.extract_strided_slice %68 {offsets = [0, 0], sizes = [2, 96], strides = [1, 1]} : vector<2x128xf32> to vector<2x96xf32>
    %70 = arith.negf %69 : vector<2x96xf32>
    %71 = math.exp %70 : vector<2x96xf32>
    %cst_16 = arith.constant 1.000000e+00 : f32
    %72 = vector.broadcast %cst_16 : f32 to vector<2x96xf32>
    %73 = arith.addf %72, %71 : vector<2x96xf32>
    %74 = arith.divf %72, %73 : vector<2x96xf32>
    %75 = vector.extract_strided_slice %68 {offsets = [0, 96], sizes = [2, 32], strides = [1, 1]} : vector<2x128xf32> to vector<2x32xf32>
    %76 = math.tanh %75 : vector<2x32xf32>
    %77 = vector.extract_strided_slice %74 {offsets = [0, 0], sizes = [2, 32], strides = [1, 1]} : vector<2x96xf32> to vector<2x32xf32>
    %78 = vector.extract_strided_slice %74 {offsets = [0, 32], sizes = [2, 32], strides = [1, 1]} : vector<2x96xf32> to vector<2x32xf32>
    %79 = vector.extract_strided_slice %74 {offsets = [0, 64], sizes = [2, 32], strides = [1, 1]} : vector<2x96xf32> to vector<2x32xf32>
    %80 = arith.mulf %78, %63 : vector<2x32xf32>
    %81 = arith.mulf %77, %76 : vector<2x32xf32>
    %82 = arith.addf %80, %81 : vector<2x32xf32>
    %83 = math.tanh %82 : vector<2x32xf32>
    %84 = arith.mulf %79, %83 : vector<2x32xf32>
    %85 = vector.extract_strided_slice %5 {offsets = [8, 0], sizes = [2, 128], strides = [1, 1]} : vector<32x128xf32> to vector<2x128xf32>
    %cst_17 = arith.constant dense<0.000000e+00> : vector<2x128xf32>
    %86 = tpu.matmul %84, %6, %cst_17 {dimension_numbers = #tpu.dot_dimension_numbers<[1], [0], [0], [1], [0, 0, 1, 1], [], []>} : vector<2x32xf32>, vector<32x128xf32>, vector<2x128xf32> -> vector<2x128xf32>
    %87 = arith.addf %85, %86 : vector<2x128xf32>
    %88 = vector.extract_strided_slice %87 {offsets = [0, 0], sizes = [2, 96], strides = [1, 1]} : vector<2x128xf32> to vector<2x96xf32>
    %89 = arith.negf %88 : vector<2x96xf32>
    %90 = math.exp %89 : vector<2x96xf32>
    %cst_18 = arith.constant 1.000000e+00 : f32
    %91 = vector.broadcast %cst_18 : f32 to vector<2x96xf32>
    %92 = arith.addf %91, %90 : vector<2x96xf32>
    %93 = arith.divf %91, %92 : vector<2x96xf32>
    %94 = vector.extract_strided_slice %87 {offsets = [0, 96], sizes = [2, 32], strides = [1, 1]} : vector<2x128xf32> to vector<2x32xf32>
    %95 = math.tanh %94 : vector<2x32xf32>
    %96 = vector.extract_strided_slice %93 {offsets = [0, 0], sizes = [2, 32], strides = [1, 1]} : vector<2x96xf32> to vector<2x32xf32>
    %97 = vector.extract_strided_slice %93 {offsets = [0, 32], sizes = [2, 32], strides = [1, 1]} : vector<2x96xf32> to vector<2x32xf32>
    %98 = vector.extract_strided_slice %93 {offsets = [0, 64], sizes = [2, 32], strides = [1, 1]} : vector<2x96xf32> to vector<2x32xf32>
    %99 = arith.mulf %97, %82 : vector<2x32xf32>
    %100 = arith.mulf %96, %95 : vector<2x32xf32>
    %101 = arith.addf %99, %100 : vector<2x32xf32>
    %102 = math.tanh %101 : vector<2x32xf32>
    %103 = arith.mulf %98, %102 : vector<2x32xf32>
    %104 = vector.extract_strided_slice %5 {offsets = [10, 0], sizes = [2, 128], strides = [1, 1]} : vector<32x128xf32> to vector<2x128xf32>
    %cst_19 = arith.constant dense<0.000000e+00> : vector<2x128xf32>
    %105 = tpu.matmul %103, %6, %cst_19 {dimension_numbers = #tpu.dot_dimension_numbers<[1], [0], [0], [1], [0, 0, 1, 1], [], []>} : vector<2x32xf32>, vector<32x128xf32>, vector<2x128xf32> -> vector<2x128xf32>
    %106 = arith.addf %104, %105 : vector<2x128xf32>
    %107 = vector.extract_strided_slice %106 {offsets = [0, 0], sizes = [2, 96], strides = [1, 1]} : vector<2x128xf32> to vector<2x96xf32>
    %108 = arith.negf %107 : vector<2x96xf32>
    %109 = math.exp %108 : vector<2x96xf32>
    %cst_20 = arith.constant 1.000000e+00 : f32
    %110 = vector.broadcast %cst_20 : f32 to vector<2x96xf32>
    %111 = arith.addf %110, %109 : vector<2x96xf32>
    %112 = arith.divf %110, %111 : vector<2x96xf32>
    %113 = vector.extract_strided_slice %106 {offsets = [0, 96], sizes = [2, 32], strides = [1, 1]} : vector<2x128xf32> to vector<2x32xf32>
    %114 = math.tanh %113 : vector<2x32xf32>
    %115 = vector.extract_strided_slice %112 {offsets = [0, 0], sizes = [2, 32], strides = [1, 1]} : vector<2x96xf32> to vector<2x32xf32>
    %116 = vector.extract_strided_slice %112 {offsets = [0, 32], sizes = [2, 32], strides = [1, 1]} : vector<2x96xf32> to vector<2x32xf32>
    %117 = vector.extract_strided_slice %112 {offsets = [0, 64], sizes = [2, 32], strides = [1, 1]} : vector<2x96xf32> to vector<2x32xf32>
    %118 = arith.mulf %116, %101 : vector<2x32xf32>
    %119 = arith.mulf %115, %114 : vector<2x32xf32>
    %120 = arith.addf %118, %119 : vector<2x32xf32>
    %121 = math.tanh %120 : vector<2x32xf32>
    %122 = arith.mulf %117, %121 : vector<2x32xf32>
    %123 = vector.extract_strided_slice %5 {offsets = [12, 0], sizes = [2, 128], strides = [1, 1]} : vector<32x128xf32> to vector<2x128xf32>
    %cst_21 = arith.constant dense<0.000000e+00> : vector<2x128xf32>
    %124 = tpu.matmul %122, %6, %cst_21 {dimension_numbers = #tpu.dot_dimension_numbers<[1], [0], [0], [1], [0, 0, 1, 1], [], []>} : vector<2x32xf32>, vector<32x128xf32>, vector<2x128xf32> -> vector<2x128xf32>
    %125 = arith.addf %123, %124 : vector<2x128xf32>
    %126 = vector.extract_strided_slice %125 {offsets = [0, 0], sizes = [2, 96], strides = [1, 1]} : vector<2x128xf32> to vector<2x96xf32>
    %127 = arith.negf %126 : vector<2x96xf32>
    %128 = math.exp %127 : vector<2x96xf32>
    %cst_22 = arith.constant 1.000000e+00 : f32
    %129 = vector.broadcast %cst_22 : f32 to vector<2x96xf32>
    %130 = arith.addf %129, %128 : vector<2x96xf32>
    %131 = arith.divf %129, %130 : vector<2x96xf32>
    %132 = vector.extract_strided_slice %125 {offsets = [0, 96], sizes = [2, 32], strides = [1, 1]} : vector<2x128xf32> to vector<2x32xf32>
    %133 = math.tanh %132 : vector<2x32xf32>
    %134 = vector.extract_strided_slice %131 {offsets = [0, 0], sizes = [2, 32], strides = [1, 1]} : vector<2x96xf32> to vector<2x32xf32>
    %135 = vector.extract_strided_slice %131 {offsets = [0, 32], sizes = [2, 32], strides = [1, 1]} : vector<2x96xf32> to vector<2x32xf32>
    %136 = vector.extract_strided_slice %131 {offsets = [0, 64], sizes = [2, 32], strides = [1, 1]} : vector<2x96xf32> to vector<2x32xf32>
    %137 = arith.mulf %135, %120 : vector<2x32xf32>
    %138 = arith.mulf %134, %133 : vector<2x32xf32>
    %139 = arith.addf %137, %138 : vector<2x32xf32>
    %140 = math.tanh %139 : vector<2x32xf32>
    %141 = arith.mulf %136, %140 : vector<2x32xf32>
    %142 = vector.extract_strided_slice %5 {offsets = [14, 0], sizes = [2, 128], strides = [1, 1]} : vector<32x128xf32> to vector<2x128xf32>
    %cst_23 = arith.constant dense<0.000000e+00> : vector<2x128xf32>
    %143 = tpu.matmul %141, %6, %cst_23 {dimension_numbers = #tpu.dot_dimension_numbers<[1], [0], [0], [1], [0, 0, 1, 1], [], []>} : vector<2x32xf32>, vector<32x128xf32>, vector<2x128xf32> -> vector<2x128xf32>
    %144 = arith.addf %142, %143 : vector<2x128xf32>
    %145 = vector.extract_strided_slice %144 {offsets = [0, 0], sizes = [2, 96], strides = [1, 1]} : vector<2x128xf32> to vector<2x96xf32>
    %146 = arith.negf %145 : vector<2x96xf32>
    %147 = math.exp %146 : vector<2x96xf32>
    %cst_24 = arith.constant 1.000000e+00 : f32
    %148 = vector.broadcast %cst_24 : f32 to vector<2x96xf32>
    %149 = arith.addf %148, %147 : vector<2x96xf32>
    %150 = arith.divf %148, %149 : vector<2x96xf32>
    %151 = vector.extract_strided_slice %144 {offsets = [0, 96], sizes = [2, 32], strides = [1, 1]} : vector<2x128xf32> to vector<2x32xf32>
    %152 = math.tanh %151 : vector<2x32xf32>
    %153 = vector.extract_strided_slice %150 {offsets = [0, 0], sizes = [2, 32], strides = [1, 1]} : vector<2x96xf32> to vector<2x32xf32>
    %154 = vector.extract_strided_slice %150 {offsets = [0, 32], sizes = [2, 32], strides = [1, 1]} : vector<2x96xf32> to vector<2x32xf32>
    %155 = vector.extract_strided_slice %150 {offsets = [0, 64], sizes = [2, 32], strides = [1, 1]} : vector<2x96xf32> to vector<2x32xf32>
    %156 = arith.mulf %154, %139 : vector<2x32xf32>
    %157 = arith.mulf %153, %152 : vector<2x32xf32>
    %158 = arith.addf %156, %157 : vector<2x32xf32>
    %159 = math.tanh %158 : vector<2x32xf32>
    %160 = arith.mulf %155, %159 : vector<2x32xf32>
    %161 = vector.extract_strided_slice %5 {offsets = [16, 0], sizes = [2, 128], strides = [1, 1]} : vector<32x128xf32> to vector<2x128xf32>
    %cst_25 = arith.constant dense<0.000000e+00> : vector<2x128xf32>
    %162 = tpu.matmul %160, %6, %cst_25 {dimension_numbers = #tpu.dot_dimension_numbers<[1], [0], [0], [1], [0, 0, 1, 1], [], []>} : vector<2x32xf32>, vector<32x128xf32>, vector<2x128xf32> -> vector<2x128xf32>
    %163 = arith.addf %161, %162 : vector<2x128xf32>
    %164 = vector.extract_strided_slice %163 {offsets = [0, 0], sizes = [2, 96], strides = [1, 1]} : vector<2x128xf32> to vector<2x96xf32>
    %165 = arith.negf %164 : vector<2x96xf32>
    %166 = math.exp %165 : vector<2x96xf32>
    %cst_26 = arith.constant 1.000000e+00 : f32
    %167 = vector.broadcast %cst_26 : f32 to vector<2x96xf32>
    %168 = arith.addf %167, %166 : vector<2x96xf32>
    %169 = arith.divf %167, %168 : vector<2x96xf32>
    %170 = vector.extract_strided_slice %163 {offsets = [0, 96], sizes = [2, 32], strides = [1, 1]} : vector<2x128xf32> to vector<2x32xf32>
    %171 = math.tanh %170 : vector<2x32xf32>
    %172 = vector.extract_strided_slice %169 {offsets = [0, 0], sizes = [2, 32], strides = [1, 1]} : vector<2x96xf32> to vector<2x32xf32>
    %173 = vector.extract_strided_slice %169 {offsets = [0, 32], sizes = [2, 32], strides = [1, 1]} : vector<2x96xf32> to vector<2x32xf32>
    %174 = vector.extract_strided_slice %169 {offsets = [0, 64], sizes = [2, 32], strides = [1, 1]} : vector<2x96xf32> to vector<2x32xf32>
    %175 = arith.mulf %173, %158 : vector<2x32xf32>
    %176 = arith.mulf %172, %171 : vector<2x32xf32>
    %177 = arith.addf %175, %176 : vector<2x32xf32>
    %178 = math.tanh %177 : vector<2x32xf32>
    %179 = arith.mulf %174, %178 : vector<2x32xf32>
    %180 = vector.extract_strided_slice %5 {offsets = [18, 0], sizes = [2, 128], strides = [1, 1]} : vector<32x128xf32> to vector<2x128xf32>
    %cst_27 = arith.constant dense<0.000000e+00> : vector<2x128xf32>
    %181 = tpu.matmul %179, %6, %cst_27 {dimension_numbers = #tpu.dot_dimension_numbers<[1], [0], [0], [1], [0, 0, 1, 1], [], []>} : vector<2x32xf32>, vector<32x128xf32>, vector<2x128xf32> -> vector<2x128xf32>
    %182 = arith.addf %180, %181 : vector<2x128xf32>
    %183 = vector.extract_strided_slice %182 {offsets = [0, 0], sizes = [2, 96], strides = [1, 1]} : vector<2x128xf32> to vector<2x96xf32>
    %184 = arith.negf %183 : vector<2x96xf32>
    %185 = math.exp %184 : vector<2x96xf32>
    %cst_28 = arith.constant 1.000000e+00 : f32
    %186 = vector.broadcast %cst_28 : f32 to vector<2x96xf32>
    %187 = arith.addf %186, %185 : vector<2x96xf32>
    %188 = arith.divf %186, %187 : vector<2x96xf32>
    %189 = vector.extract_strided_slice %182 {offsets = [0, 96], sizes = [2, 32], strides = [1, 1]} : vector<2x128xf32> to vector<2x32xf32>
    %190 = math.tanh %189 : vector<2x32xf32>
    %191 = vector.extract_strided_slice %188 {offsets = [0, 0], sizes = [2, 32], strides = [1, 1]} : vector<2x96xf32> to vector<2x32xf32>
    %192 = vector.extract_strided_slice %188 {offsets = [0, 32], sizes = [2, 32], strides = [1, 1]} : vector<2x96xf32> to vector<2x32xf32>
    %193 = vector.extract_strided_slice %188 {offsets = [0, 64], sizes = [2, 32], strides = [1, 1]} : vector<2x96xf32> to vector<2x32xf32>
    %194 = arith.mulf %192, %177 : vector<2x32xf32>
    %195 = arith.mulf %191, %190 : vector<2x32xf32>
    %196 = arith.addf %194, %195 : vector<2x32xf32>
    %197 = math.tanh %196 : vector<2x32xf32>
    %198 = arith.mulf %193, %197 : vector<2x32xf32>
    %199 = vector.extract_strided_slice %5 {offsets = [20, 0], sizes = [2, 128], strides = [1, 1]} : vector<32x128xf32> to vector<2x128xf32>
    %cst_29 = arith.constant dense<0.000000e+00> : vector<2x128xf32>
    %200 = tpu.matmul %198, %6, %cst_29 {dimension_numbers = #tpu.dot_dimension_numbers<[1], [0], [0], [1], [0, 0, 1, 1], [], []>} : vector<2x32xf32>, vector<32x128xf32>, vector<2x128xf32> -> vector<2x128xf32>
    %201 = arith.addf %199, %200 : vector<2x128xf32>
    %202 = vector.extract_strided_slice %201 {offsets = [0, 0], sizes = [2, 96], strides = [1, 1]} : vector<2x128xf32> to vector<2x96xf32>
    %203 = arith.negf %202 : vector<2x96xf32>
    %204 = math.exp %203 : vector<2x96xf32>
    %cst_30 = arith.constant 1.000000e+00 : f32
    %205 = vector.broadcast %cst_30 : f32 to vector<2x96xf32>
    %206 = arith.addf %205, %204 : vector<2x96xf32>
    %207 = arith.divf %205, %206 : vector<2x96xf32>
    %208 = vector.extract_strided_slice %201 {offsets = [0, 96], sizes = [2, 32], strides = [1, 1]} : vector<2x128xf32> to vector<2x32xf32>
    %209 = math.tanh %208 : vector<2x32xf32>
    %210 = vector.extract_strided_slice %207 {offsets = [0, 0], sizes = [2, 32], strides = [1, 1]} : vector<2x96xf32> to vector<2x32xf32>
    %211 = vector.extract_strided_slice %207 {offsets = [0, 32], sizes = [2, 32], strides = [1, 1]} : vector<2x96xf32> to vector<2x32xf32>
    %212 = vector.extract_strided_slice %207 {offsets = [0, 64], sizes = [2, 32], strides = [1, 1]} : vector<2x96xf32> to vector<2x32xf32>
    %213 = arith.mulf %211, %196 : vector<2x32xf32>
    %214 = arith.mulf %210, %209 : vector<2x32xf32>
    %215 = arith.addf %213, %214 : vector<2x32xf32>
    %216 = math.tanh %215 : vector<2x32xf32>
    %217 = arith.mulf %212, %216 : vector<2x32xf32>
    %218 = vector.extract_strided_slice %5 {offsets = [22, 0], sizes = [2, 128], strides = [1, 1]} : vector<32x128xf32> to vector<2x128xf32>
    %cst_31 = arith.constant dense<0.000000e+00> : vector<2x128xf32>
    %219 = tpu.matmul %217, %6, %cst_31 {dimension_numbers = #tpu.dot_dimension_numbers<[1], [0], [0], [1], [0, 0, 1, 1], [], []>} : vector<2x32xf32>, vector<32x128xf32>, vector<2x128xf32> -> vector<2x128xf32>
    %220 = arith.addf %218, %219 : vector<2x128xf32>
    %221 = vector.extract_strided_slice %220 {offsets = [0, 0], sizes = [2, 96], strides = [1, 1]} : vector<2x128xf32> to vector<2x96xf32>
    %222 = arith.negf %221 : vector<2x96xf32>
    %223 = math.exp %222 : vector<2x96xf32>
    %cst_32 = arith.constant 1.000000e+00 : f32
    %224 = vector.broadcast %cst_32 : f32 to vector<2x96xf32>
    %225 = arith.addf %224, %223 : vector<2x96xf32>
    %226 = arith.divf %224, %225 : vector<2x96xf32>
    %227 = vector.extract_strided_slice %220 {offsets = [0, 96], sizes = [2, 32], strides = [1, 1]} : vector<2x128xf32> to vector<2x32xf32>
    %228 = math.tanh %227 : vector<2x32xf32>
    %229 = vector.extract_strided_slice %226 {offsets = [0, 0], sizes = [2, 32], strides = [1, 1]} : vector<2x96xf32> to vector<2x32xf32>
    %230 = vector.extract_strided_slice %226 {offsets = [0, 32], sizes = [2, 32], strides = [1, 1]} : vector<2x96xf32> to vector<2x32xf32>
    %231 = vector.extract_strided_slice %226 {offsets = [0, 64], sizes = [2, 32], strides = [1, 1]} : vector<2x96xf32> to vector<2x32xf32>
    %232 = arith.mulf %230, %215 : vector<2x32xf32>
    %233 = arith.mulf %229, %228 : vector<2x32xf32>
    %234 = arith.addf %232, %233 : vector<2x32xf32>
    %235 = math.tanh %234 : vector<2x32xf32>
    %236 = arith.mulf %231, %235 : vector<2x32xf32>
    %237 = vector.extract_strided_slice %5 {offsets = [24, 0], sizes = [2, 128], strides = [1, 1]} : vector<32x128xf32> to vector<2x128xf32>
    %cst_33 = arith.constant dense<0.000000e+00> : vector<2x128xf32>
    %238 = tpu.matmul %236, %6, %cst_33 {dimension_numbers = #tpu.dot_dimension_numbers<[1], [0], [0], [1], [0, 0, 1, 1], [], []>} : vector<2x32xf32>, vector<32x128xf32>, vector<2x128xf32> -> vector<2x128xf32>
    %239 = arith.addf %237, %238 : vector<2x128xf32>
    %240 = vector.extract_strided_slice %239 {offsets = [0, 0], sizes = [2, 96], strides = [1, 1]} : vector<2x128xf32> to vector<2x96xf32>
    %241 = arith.negf %240 : vector<2x96xf32>
    %242 = math.exp %241 : vector<2x96xf32>
    %cst_34 = arith.constant 1.000000e+00 : f32
    %243 = vector.broadcast %cst_34 : f32 to vector<2x96xf32>
    %244 = arith.addf %243, %242 : vector<2x96xf32>
    %245 = arith.divf %243, %244 : vector<2x96xf32>
    %246 = vector.extract_strided_slice %239 {offsets = [0, 96], sizes = [2, 32], strides = [1, 1]} : vector<2x128xf32> to vector<2x32xf32>
    %247 = math.tanh %246 : vector<2x32xf32>
    %248 = vector.extract_strided_slice %245 {offsets = [0, 0], sizes = [2, 32], strides = [1, 1]} : vector<2x96xf32> to vector<2x32xf32>
    %249 = vector.extract_strided_slice %245 {offsets = [0, 32], sizes = [2, 32], strides = [1, 1]} : vector<2x96xf32> to vector<2x32xf32>
    %250 = vector.extract_strided_slice %245 {offsets = [0, 64], sizes = [2, 32], strides = [1, 1]} : vector<2x96xf32> to vector<2x32xf32>
    %251 = arith.mulf %249, %234 : vector<2x32xf32>
    %252 = arith.mulf %248, %247 : vector<2x32xf32>
    %253 = arith.addf %251, %252 : vector<2x32xf32>
    %254 = math.tanh %253 : vector<2x32xf32>
    %255 = arith.mulf %250, %254 : vector<2x32xf32>
    %256 = vector.extract_strided_slice %5 {offsets = [26, 0], sizes = [2, 128], strides = [1, 1]} : vector<32x128xf32> to vector<2x128xf32>
    %cst_35 = arith.constant dense<0.000000e+00> : vector<2x128xf32>
    %257 = tpu.matmul %255, %6, %cst_35 {dimension_numbers = #tpu.dot_dimension_numbers<[1], [0], [0], [1], [0, 0, 1, 1], [], []>} : vector<2x32xf32>, vector<32x128xf32>, vector<2x128xf32> -> vector<2x128xf32>
    %258 = arith.addf %256, %257 : vector<2x128xf32>
    %259 = vector.extract_strided_slice %258 {offsets = [0, 0], sizes = [2, 96], strides = [1, 1]} : vector<2x128xf32> to vector<2x96xf32>
    %260 = arith.negf %259 : vector<2x96xf32>
    %261 = math.exp %260 : vector<2x96xf32>
    %cst_36 = arith.constant 1.000000e+00 : f32
    %262 = vector.broadcast %cst_36 : f32 to vector<2x96xf32>
    %263 = arith.addf %262, %261 : vector<2x96xf32>
    %264 = arith.divf %262, %263 : vector<2x96xf32>
    %265 = vector.extract_strided_slice %258 {offsets = [0, 96], sizes = [2, 32], strides = [1, 1]} : vector<2x128xf32> to vector<2x32xf32>
    %266 = math.tanh %265 : vector<2x32xf32>
    %267 = vector.extract_strided_slice %264 {offsets = [0, 0], sizes = [2, 32], strides = [1, 1]} : vector<2x96xf32> to vector<2x32xf32>
    %268 = vector.extract_strided_slice %264 {offsets = [0, 32], sizes = [2, 32], strides = [1, 1]} : vector<2x96xf32> to vector<2x32xf32>
    %269 = vector.extract_strided_slice %264 {offsets = [0, 64], sizes = [2, 32], strides = [1, 1]} : vector<2x96xf32> to vector<2x32xf32>
    %270 = arith.mulf %268, %253 : vector<2x32xf32>
    %271 = arith.mulf %267, %266 : vector<2x32xf32>
    %272 = arith.addf %270, %271 : vector<2x32xf32>
    %273 = math.tanh %272 : vector<2x32xf32>
    %274 = arith.mulf %269, %273 : vector<2x32xf32>
    %275 = vector.extract_strided_slice %5 {offsets = [28, 0], sizes = [2, 128], strides = [1, 1]} : vector<32x128xf32> to vector<2x128xf32>
    %cst_37 = arith.constant dense<0.000000e+00> : vector<2x128xf32>
    %276 = tpu.matmul %274, %6, %cst_37 {dimension_numbers = #tpu.dot_dimension_numbers<[1], [0], [0], [1], [0, 0, 1, 1], [], []>} : vector<2x32xf32>, vector<32x128xf32>, vector<2x128xf32> -> vector<2x128xf32>
    %277 = arith.addf %275, %276 : vector<2x128xf32>
    %278 = vector.extract_strided_slice %277 {offsets = [0, 0], sizes = [2, 96], strides = [1, 1]} : vector<2x128xf32> to vector<2x96xf32>
    %279 = arith.negf %278 : vector<2x96xf32>
    %280 = math.exp %279 : vector<2x96xf32>
    %cst_38 = arith.constant 1.000000e+00 : f32
    %281 = vector.broadcast %cst_38 : f32 to vector<2x96xf32>
    %282 = arith.addf %281, %280 : vector<2x96xf32>
    %283 = arith.divf %281, %282 : vector<2x96xf32>
    %284 = vector.extract_strided_slice %277 {offsets = [0, 96], sizes = [2, 32], strides = [1, 1]} : vector<2x128xf32> to vector<2x32xf32>
    %285 = math.tanh %284 : vector<2x32xf32>
    %286 = vector.extract_strided_slice %283 {offsets = [0, 0], sizes = [2, 32], strides = [1, 1]} : vector<2x96xf32> to vector<2x32xf32>
    %287 = vector.extract_strided_slice %283 {offsets = [0, 32], sizes = [2, 32], strides = [1, 1]} : vector<2x96xf32> to vector<2x32xf32>
    %288 = vector.extract_strided_slice %283 {offsets = [0, 64], sizes = [2, 32], strides = [1, 1]} : vector<2x96xf32> to vector<2x32xf32>
    %289 = arith.mulf %287, %272 : vector<2x32xf32>
    %290 = arith.mulf %286, %285 : vector<2x32xf32>
    %291 = arith.addf %289, %290 : vector<2x32xf32>
    %292 = math.tanh %291 : vector<2x32xf32>
    %293 = arith.mulf %288, %292 : vector<2x32xf32>
    %294 = vector.extract_strided_slice %5 {offsets = [30, 0], sizes = [2, 128], strides = [1, 1]} : vector<32x128xf32> to vector<2x128xf32>
    %cst_39 = arith.constant dense<0.000000e+00> : vector<2x128xf32>
    %295 = tpu.matmul %293, %6, %cst_39 {dimension_numbers = #tpu.dot_dimension_numbers<[1], [0], [0], [1], [0, 0, 1, 1], [], []>} : vector<2x32xf32>, vector<32x128xf32>, vector<2x128xf32> -> vector<2x128xf32>
    %296 = arith.addf %294, %295 : vector<2x128xf32>
    %297 = vector.extract_strided_slice %296 {offsets = [0, 0], sizes = [2, 96], strides = [1, 1]} : vector<2x128xf32> to vector<2x96xf32>
    %298 = arith.negf %297 : vector<2x96xf32>
    %299 = math.exp %298 : vector<2x96xf32>
    %cst_40 = arith.constant 1.000000e+00 : f32
    %300 = vector.broadcast %cst_40 : f32 to vector<2x96xf32>
    %301 = arith.addf %300, %299 : vector<2x96xf32>
    %302 = arith.divf %300, %301 : vector<2x96xf32>
    %303 = vector.extract_strided_slice %296 {offsets = [0, 96], sizes = [2, 32], strides = [1, 1]} : vector<2x128xf32> to vector<2x32xf32>
    %304 = math.tanh %303 : vector<2x32xf32>
    %305 = vector.extract_strided_slice %302 {offsets = [0, 0], sizes = [2, 32], strides = [1, 1]} : vector<2x96xf32> to vector<2x32xf32>
    %306 = vector.extract_strided_slice %302 {offsets = [0, 32], sizes = [2, 32], strides = [1, 1]} : vector<2x96xf32> to vector<2x32xf32>
    %307 = vector.extract_strided_slice %302 {offsets = [0, 64], sizes = [2, 32], strides = [1, 1]} : vector<2x96xf32> to vector<2x32xf32>
    %308 = arith.mulf %306, %291 : vector<2x32xf32>
    %309 = arith.mulf %305, %304 : vector<2x32xf32>
    %310 = arith.addf %308, %309 : vector<2x32xf32>
    %311 = math.tanh %310 : vector<2x32xf32>
    %312 = arith.mulf %307, %311 : vector<2x32xf32>
    %313 = vector.extract_strided_slice %0 {offsets = [30, 0], sizes = [2, 8], strides = [1, 1]} : vector<32x8xf32> to vector<2x8xf32>
    %c0_41 = arith.constant 0 : index
    %c0_42 = arith.constant 0 : index
    %314 = vector.load %arg5[%c0_41, %c0_42] : memref<8x128xf32, #tpu.memory_space<vmem>>, vector<8x128xf32>
    %cst_43 = arith.constant dense<0.000000e+00> : vector<2x128xf32>
    %315 = tpu.matmul %313, %314, %cst_43 {dimension_numbers = #tpu.dot_dimension_numbers<[1], [0], [0], [1], [0, 0, 1, 1], [], []>} : vector<2x8xf32>, vector<8x128xf32>, vector<2x128xf32> -> vector<2x128xf32>
    %c0_44 = arith.constant 0 : index
    %c0_45 = arith.constant 0 : index
    %316 = vector.load %arg6[%c0_44, %c0_45] : memref<1x128xf32, #tpu.memory_space<vmem>>, vector<1x128xf32>
    %317 = vector.broadcast %316 : vector<1x128xf32> to vector<2x128xf32>
    %318 = arith.addf %315, %317 : vector<2x128xf32>
    %319 = vector.extract_strided_slice %318 {offsets = [0, 0], sizes = [2, 96], strides = [1, 1]} : vector<2x128xf32> to vector<2x96xf32>
    %320 = arith.negf %319 : vector<2x96xf32>
    %321 = math.exp %320 : vector<2x96xf32>
    %cst_46 = arith.constant 1.000000e+00 : f32
    %322 = vector.broadcast %cst_46 : f32 to vector<2x96xf32>
    %323 = arith.addf %322, %321 : vector<2x96xf32>
    %324 = arith.divf %322, %323 : vector<2x96xf32>
    %325 = vector.extract_strided_slice %318 {offsets = [0, 96], sizes = [2, 32], strides = [1, 1]} : vector<2x128xf32> to vector<2x32xf32>
    %326 = math.tanh %325 : vector<2x32xf32>
    %327 = vector.extract_strided_slice %324 {offsets = [0, 0], sizes = [2, 32], strides = [1, 1]} : vector<2x96xf32> to vector<2x32xf32>
    %328 = arith.mulf %327, %326 : vector<2x32xf32>
    %329 = vector.extract_strided_slice %324 {offsets = [0, 64], sizes = [2, 32], strides = [1, 1]} : vector<2x96xf32> to vector<2x32xf32>
    %330 = math.tanh %328 : vector<2x32xf32>
    %331 = arith.mulf %329, %330 : vector<2x32xf32>
    %c0_47 = arith.constant 0 : index
    %c0_48 = arith.constant 0 : index
    %332 = vector.load %arg1[%c0_47, %c0_48] : memref<32x8xf32, #tpu.memory_space<vmem>>, vector<32x8xf32>
    %333 = arith.truncf %332 : vector<32x8xf32> to vector<32x8xbf16>
    %cst_49 = arith.constant 0.000000e+00 : f32
    %334 = vector.broadcast %cst_49 : f32 to vector<32x128xf32>
    %c0_50 = arith.constant 0 : index
    %c0_51 = arith.constant 0 : index
    %c0_52 = arith.constant 0 : index
    %335 = vector.load %arg10[%c0_50, %c0_51, %c0_52] : memref<7x32x32xbf16, #tpu.memory_space<vmem>>, vector<1x32x32xbf16>
    %336 = vector.shape_cast %335 : vector<1x32x32xbf16> to vector<32x32xbf16>
    %cst_53 = arith.constant dense<0.000000e+00> : vector<32x8xf32>
    %337 = tpu.matmul %336, %333, %cst_53 {dimension_numbers = #tpu.dot_dimension_numbers<[1], [0], [0], [1], [0, 0, 1, 1], [], []>} : vector<32x32xbf16>, vector<32x8xbf16>, vector<32x8xf32> -> vector<32x8xf32>
    %338 = arith.truncf %337 : vector<32x8xf32> to vector<32x8xbf16>
    %c0_54 = arith.constant 0 : index
    %c0_55 = arith.constant 0 : index
    %339 = vector.load %arg7[%c0_54, %c0_55] : memref<56x128xbf16, #tpu.memory_space<vmem>>, vector<8x128xbf16>
    %cst_56 = arith.constant dense<0.000000e+00> : vector<32x128xf32>
    %340 = tpu.matmul %338, %339, %cst_56 {dimension_numbers = #tpu.dot_dimension_numbers<[1], [0], [0], [1], [0, 0, 1, 1], [], []>} : vector<32x8xbf16>, vector<8x128xbf16>, vector<32x128xf32> -> vector<32x128xf32>
    %341 = arith.addf %334, %340 : vector<32x128xf32>
    %c1 = arith.constant 1 : index
    %c0_57 = arith.constant 0 : index
    %c0_58 = arith.constant 0 : index
    %342 = vector.load %arg10[%c1, %c0_57, %c0_58] : memref<7x32x32xbf16, #tpu.memory_space<vmem>>, vector<1x32x32xbf16>
    %343 = vector.shape_cast %342 : vector<1x32x32xbf16> to vector<32x32xbf16>
    %cst_59 = arith.constant dense<0.000000e+00> : vector<32x8xf32>
    %344 = tpu.matmul %343, %333, %cst_59 {dimension_numbers = #tpu.dot_dimension_numbers<[1], [0], [0], [1], [0, 0, 1, 1], [], []>} : vector<32x32xbf16>, vector<32x8xbf16>, vector<32x8xf32> -> vector<32x8xf32>
    %345 = arith.truncf %344 : vector<32x8xf32> to vector<32x8xbf16>
    %c8 = arith.constant 8 : index
    %c0_60 = arith.constant 0 : index
    %346 = vector.load %arg7[%c8, %c0_60] : memref<56x128xbf16, #tpu.memory_space<vmem>>, vector<8x128xbf16>
    %cst_61 = arith.constant dense<0.000000e+00> : vector<32x128xf32>
    %347 = tpu.matmul %345, %346, %cst_61 {dimension_numbers = #tpu.dot_dimension_numbers<[1], [0], [0], [1], [0, 0, 1, 1], [], []>} : vector<32x8xbf16>, vector<8x128xbf16>, vector<32x128xf32> -> vector<32x128xf32>
    %348 = arith.addf %341, %347 : vector<32x128xf32>
    %c2 = arith.constant 2 : index
    %c0_62 = arith.constant 0 : index
    %c0_63 = arith.constant 0 : index
    %349 = vector.load %arg10[%c2, %c0_62, %c0_63] : memref<7x32x32xbf16, #tpu.memory_space<vmem>>, vector<1x32x32xbf16>
    %350 = vector.shape_cast %349 : vector<1x32x32xbf16> to vector<32x32xbf16>
    %cst_64 = arith.constant dense<0.000000e+00> : vector<32x8xf32>
    %351 = tpu.matmul %350, %333, %cst_64 {dimension_numbers = #tpu.dot_dimension_numbers<[1], [0], [0], [1], [0, 0, 1, 1], [], []>} : vector<32x32xbf16>, vector<32x8xbf16>, vector<32x8xf32> -> vector<32x8xf32>
    %352 = arith.truncf %351 : vector<32x8xf32> to vector<32x8xbf16>
    %c16 = arith.constant 16 : index
    %c0_65 = arith.constant 0 : index
    %353 = vector.load %arg7[%c16, %c0_65] : memref<56x128xbf16, #tpu.memory_space<vmem>>, vector<8x128xbf16>
    %cst_66 = arith.constant dense<0.000000e+00> : vector<32x128xf32>
    %354 = tpu.matmul %352, %353, %cst_66 {dimension_numbers = #tpu.dot_dimension_numbers<[1], [0], [0], [1], [0, 0, 1, 1], [], []>} : vector<32x8xbf16>, vector<8x128xbf16>, vector<32x128xf32> -> vector<32x128xf32>
    %355 = arith.addf %348, %354 : vector<32x128xf32>
    %c24 = arith.constant 24 : index
    %c0_67 = arith.constant 0 : index
    %356 = vector.load %arg7[%c24, %c0_67] : memref<56x128xbf16, #tpu.memory_space<vmem>>, vector<8x128xbf16>
    %cst_68 = arith.constant dense<0.000000e+00> : vector<32x128xf32>
    %357 = tpu.matmul %333, %356, %cst_68 {dimension_numbers = #tpu.dot_dimension_numbers<[1], [0], [0], [1], [0, 0, 1, 1], [], []>} : vector<32x8xbf16>, vector<8x128xbf16>, vector<32x128xf32> -> vector<32x128xf32>
    %358 = arith.addf %355, %357 : vector<32x128xf32>
    %c4 = arith.constant 4 : index
    %c0_69 = arith.constant 0 : index
    %c0_70 = arith.constant 0 : index
    %359 = vector.load %arg10[%c4, %c0_69, %c0_70] : memref<7x32x32xbf16, #tpu.memory_space<vmem>>, vector<1x32x32xbf16>
    %360 = vector.shape_cast %359 : vector<1x32x32xbf16> to vector<32x32xbf16>
    %cst_71 = arith.constant dense<0.000000e+00> : vector<32x8xf32>
    %361 = tpu.matmul %360, %333, %cst_71 {dimension_numbers = #tpu.dot_dimension_numbers<[1], [0], [0], [1], [0, 0, 1, 1], [], []>} : vector<32x32xbf16>, vector<32x8xbf16>, vector<32x8xf32> -> vector<32x8xf32>
    %362 = arith.truncf %361 : vector<32x8xf32> to vector<32x8xbf16>
    %c32 = arith.constant 32 : index
    %c0_72 = arith.constant 0 : index
    %363 = vector.load %arg7[%c32, %c0_72] : memref<56x128xbf16, #tpu.memory_space<vmem>>, vector<8x128xbf16>
    %cst_73 = arith.constant dense<0.000000e+00> : vector<32x128xf32>
    %364 = tpu.matmul %362, %363, %cst_73 {dimension_numbers = #tpu.dot_dimension_numbers<[1], [0], [0], [1], [0, 0, 1, 1], [], []>} : vector<32x8xbf16>, vector<8x128xbf16>, vector<32x128xf32> -> vector<32x128xf32>
    %365 = arith.addf %358, %364 : vector<32x128xf32>
    %c5 = arith.constant 5 : index
    %c0_74 = arith.constant 0 : index
    %c0_75 = arith.constant 0 : index
    %366 = vector.load %arg10[%c5, %c0_74, %c0_75] : memref<7x32x32xbf16, #tpu.memory_space<vmem>>, vector<1x32x32xbf16>
    %367 = vector.shape_cast %366 : vector<1x32x32xbf16> to vector<32x32xbf16>
    %cst_76 = arith.constant dense<0.000000e+00> : vector<32x8xf32>
    %368 = tpu.matmul %367, %333, %cst_76 {dimension_numbers = #tpu.dot_dimension_numbers<[1], [0], [0], [1], [0, 0, 1, 1], [], []>} : vector<32x32xbf16>, vector<32x8xbf16>, vector<32x8xf32> -> vector<32x8xf32>
    %369 = arith.truncf %368 : vector<32x8xf32> to vector<32x8xbf16>
    %c40 = arith.constant 40 : index
    %c0_77 = arith.constant 0 : index
    %370 = vector.load %arg7[%c40, %c0_77] : memref<56x128xbf16, #tpu.memory_space<vmem>>, vector<8x128xbf16>
    %cst_78 = arith.constant dense<0.000000e+00> : vector<32x128xf32>
    %371 = tpu.matmul %369, %370, %cst_78 {dimension_numbers = #tpu.dot_dimension_numbers<[1], [0], [0], [1], [0, 0, 1, 1], [], []>} : vector<32x8xbf16>, vector<8x128xbf16>, vector<32x128xf32> -> vector<32x128xf32>
    %372 = arith.addf %365, %371 : vector<32x128xf32>
    %c6 = arith.constant 6 : index
    %c0_79 = arith.constant 0 : index
    %c0_80 = arith.constant 0 : index
    %373 = vector.load %arg10[%c6, %c0_79, %c0_80] : memref<7x32x32xbf16, #tpu.memory_space<vmem>>, vector<1x32x32xbf16>
    %374 = vector.shape_cast %373 : vector<1x32x32xbf16> to vector<32x32xbf16>
    %cst_81 = arith.constant dense<0.000000e+00> : vector<32x8xf32>
    %375 = tpu.matmul %374, %333, %cst_81 {dimension_numbers = #tpu.dot_dimension_numbers<[1], [0], [0], [1], [0, 0, 1, 1], [], []>} : vector<32x32xbf16>, vector<32x8xbf16>, vector<32x8xf32> -> vector<32x8xf32>
    %376 = arith.truncf %375 : vector<32x8xf32> to vector<32x8xbf16>
    %c48 = arith.constant 48 : index
    %c0_82 = arith.constant 0 : index
    %377 = vector.load %arg7[%c48, %c0_82] : memref<56x128xbf16, #tpu.memory_space<vmem>>, vector<8x128xbf16>
    %cst_83 = arith.constant dense<0.000000e+00> : vector<32x128xf32>
    %378 = tpu.matmul %376, %377, %cst_83 {dimension_numbers = #tpu.dot_dimension_numbers<[1], [0], [0], [1], [0, 0, 1, 1], [], []>} : vector<32x8xbf16>, vector<8x128xbf16>, vector<32x128xf32> -> vector<32x128xf32>
    %379 = arith.addf %372, %378 : vector<32x128xf32>
    %c0_84 = arith.constant 0 : index
    %c0_85 = arith.constant 0 : index
    %380 = vector.load %arg8[%c0_84, %c0_85] : memref<1x128xf32, #tpu.memory_space<vmem>>, vector<1x128xf32>
    %381 = vector.broadcast %380 : vector<1x128xf32> to vector<32x128xf32>
    %382 = arith.mulf %379, %381 : vector<32x128xf32>
    %c0_86 = arith.constant 0 : index
    %c0_87 = arith.constant 0 : index
    %383 = vector.load %arg9[%c0_86, %c0_87] : memref<1x128xf32, #tpu.memory_space<vmem>>, vector<1x128xf32>
    %384 = vector.broadcast %383 : vector<1x128xf32> to vector<32x128xf32>
    %385 = arith.addf %382, %384 : vector<32x128xf32>
    %cst_88 = arith.constant 0.000000e+00 : f32
    %386 = vector.broadcast %cst_88 : f32 to vector<32x128xf32>
    %387 = arith.maximumf %385, %386 : vector<32x128xf32>
    %388 = vector.shape_cast %387 : vector<32x128xf32> to vector<2x16x128xf32>
    %cst_89 = arith.constant dense<0.000000e+00> : vector<2x128xf32>
    %389 = vector.multi_reduction <add>, %388, %cst_89 [1] : vector<2x16x128xf32> to vector<2x128xf32>
    %cst_90 = arith.constant 6.250000e-02 : f32
    %390 = vector.broadcast %cst_90 : f32 to vector<2x128xf32>
    %391 = arith.mulf %389, %390 : vector<2x128xf32>
    %392 = arith.truncf %391 : vector<2x128xf32> to vector<2x128xbf16>
    %c0_91 = arith.constant 0 : index
    %c0_92 = arith.constant 0 : index
    %393 = vector.load %arg11[%c0_91, %c0_92] : memref<128x8xbf16, #tpu.memory_space<vmem>>, vector<128x8xbf16>
    %cst_93 = arith.constant dense<0.000000e+00> : vector<2x8xf32>
    %394 = tpu.matmul %392, %393, %cst_93 {dimension_numbers = #tpu.dot_dimension_numbers<[1], [0], [0], [1], [0, 0, 1, 1], [], []>} : vector<2x128xbf16>, vector<128x8xbf16>, vector<2x8xf32> -> vector<2x8xf32>
    %cst_94 = arith.constant 0.000000e+00 : f32
    %395 = vector.broadcast %cst_94 : f32 to vector<2x8xf32>
    %396 = arith.maximumf %394, %395 : vector<2x8xf32>
    %397 = arith.truncf %396 : vector<2x8xf32> to vector<2x8xbf16>
    %c0_95 = arith.constant 0 : index
    %c0_96 = arith.constant 0 : index
    %398 = vector.load %arg12[%c0_95, %c0_96] : memref<8x128xbf16, #tpu.memory_space<vmem>>, vector<8x128xbf16>
    %cst_97 = arith.constant dense<0.000000e+00> : vector<2x128xf32>
    %399 = tpu.matmul %397, %398, %cst_97 {dimension_numbers = #tpu.dot_dimension_numbers<[1], [0], [0], [1], [0, 0, 1, 1], [], []>} : vector<2x8xbf16>, vector<8x128xbf16>, vector<2x128xf32> -> vector<2x128xf32>
    %400 = arith.negf %399 : vector<2x128xf32>
    %401 = math.exp %400 : vector<2x128xf32>
    %cst_98 = arith.constant 1.000000e+00 : f32
    %402 = vector.broadcast %cst_98 : f32 to vector<2x128xf32>
    %403 = arith.addf %402, %401 : vector<2x128xf32>
    %404 = arith.divf %402, %403 : vector<2x128xf32>
    %405 = vector.shape_cast %404 : vector<2x128xf32> to vector<2x1x128xf32>
    %406 = vector.broadcast %405 : vector<2x1x128xf32> to vector<2x16x128xf32>
    %407 = arith.mulf %388, %406 : vector<2x16x128xf32>
    %408 = vector.shape_cast %407 : vector<2x16x128xf32> to vector<32x128xf32>
    %409 = arith.truncf %408 : vector<32x128xf32> to vector<32x128xbf16>
    %cst_99 = arith.constant 0.000000e+00 : f32
    %410 = vector.broadcast %cst_99 : f32 to vector<32x256xf32>
    %c0_100 = arith.constant 0 : index
    %c0_101 = arith.constant 0 : index
    %c0_102 = arith.constant 0 : index
    %411 = vector.load %arg16[%c0_100, %c0_101, %c0_102] : memref<5x32x32xbf16, #tpu.memory_space<vmem>>, vector<1x32x32xbf16>
    %412 = vector.shape_cast %411 : vector<1x32x32xbf16> to vector<32x32xbf16>
    %cst_103 = arith.constant dense<0.000000e+00> : vector<32x128xf32>
    %413 = tpu.matmul %412, %409, %cst_103 {dimension_numbers = #tpu.dot_dimension_numbers<[1], [0], [0], [1], [0, 0, 1, 1], [], []>} : vector<32x32xbf16>, vector<32x128xbf16>, vector<32x128xf32> -> vector<32x128xf32>
    %414 = arith.truncf %413 : vector<32x128xf32> to vector<32x128xbf16>
    %c0_104 = arith.constant 0 : index
    %c0_105 = arith.constant 0 : index
    %415 = vector.load %arg13[%c0_104, %c0_105] : memref<640x256xbf16, #tpu.memory_space<vmem>>, vector<128x256xbf16>
    %cst_106 = arith.constant dense<0.000000e+00> : vector<32x256xf32>
    %416 = tpu.matmul %414, %415, %cst_106 {dimension_numbers = #tpu.dot_dimension_numbers<[1], [0], [0], [1], [0, 0, 1, 1], [], []>} : vector<32x128xbf16>, vector<128x256xbf16>, vector<32x256xf32> -> vector<32x256xf32>
    %417 = arith.addf %410, %416 : vector<32x256xf32>
    %c1_107 = arith.constant 1 : index
    %c0_108 = arith.constant 0 : index
    %c0_109 = arith.constant 0 : index
    %418 = vector.load %arg16[%c1_107, %c0_108, %c0_109] : memref<5x32x32xbf16, #tpu.memory_space<vmem>>, vector<1x32x32xbf16>
    %419 = vector.shape_cast %418 : vector<1x32x32xbf16> to vector<32x32xbf16>
    %cst_110 = arith.constant dense<0.000000e+00> : vector<32x128xf32>
    %420 = tpu.matmul %419, %409, %cst_110 {dimension_numbers = #tpu.dot_dimension_numbers<[1], [0], [0], [1], [0, 0, 1, 1], [], []>} : vector<32x32xbf16>, vector<32x128xbf16>, vector<32x128xf32> -> vector<32x128xf32>
    %421 = arith.truncf %420 : vector<32x128xf32> to vector<32x128xbf16>
    %c128 = arith.constant 128 : index
    %c0_111 = arith.constant 0 : index
    %422 = vector.load %arg13[%c128, %c0_111] : memref<640x256xbf16, #tpu.memory_space<vmem>>, vector<128x256xbf16>
    %cst_112 = arith.constant dense<0.000000e+00> : vector<32x256xf32>
    %423 = tpu.matmul %421, %422, %cst_112 {dimension_numbers = #tpu.dot_dimension_numbers<[1], [0], [0], [1], [0, 0, 1, 1], [], []>} : vector<32x128xbf16>, vector<128x256xbf16>, vector<32x256xf32> -> vector<32x256xf32>
    %424 = arith.addf %417, %423 : vector<32x256xf32>
    %c256 = arith.constant 256 : index
    %c0_113 = arith.constant 0 : index
    %425 = vector.load %arg13[%c256, %c0_113] : memref<640x256xbf16, #tpu.memory_space<vmem>>, vector<128x256xbf16>
    %cst_114 = arith.constant dense<0.000000e+00> : vector<32x256xf32>
    %426 = tpu.matmul %409, %425, %cst_114 {dimension_numbers = #tpu.dot_dimension_numbers<[1], [0], [0], [1], [0, 0, 1, 1], [], []>} : vector<32x128xbf16>, vector<128x256xbf16>, vector<32x256xf32> -> vector<32x256xf32>
    %427 = arith.addf %424, %426 : vector<32x256xf32>
    %c3 = arith.constant 3 : index
    %c0_115 = arith.constant 0 : index
    %c0_116 = arith.constant 0 : index
    %428 = vector.load %arg16[%c3, %c0_115, %c0_116] : memref<5x32x32xbf16, #tpu.memory_space<vmem>>, vector<1x32x32xbf16>
    %429 = vector.shape_cast %428 : vector<1x32x32xbf16> to vector<32x32xbf16>
    %cst_117 = arith.constant dense<0.000000e+00> : vector<32x128xf32>
    %430 = tpu.matmul %429, %409, %cst_117 {dimension_numbers = #tpu.dot_dimension_numbers<[1], [0], [0], [1], [0, 0, 1, 1], [], []>} : vector<32x32xbf16>, vector<32x128xbf16>, vector<32x128xf32> -> vector<32x128xf32>
    %431 = arith.truncf %430 : vector<32x128xf32> to vector<32x128xbf16>
    %c384 = arith.constant 384 : index
    %c0_118 = arith.constant 0 : index
    %432 = vector.load %arg13[%c384, %c0_118] : memref<640x256xbf16, #tpu.memory_space<vmem>>, vector<128x256xbf16>
    %cst_119 = arith.constant dense<0.000000e+00> : vector<32x256xf32>
    %433 = tpu.matmul %431, %432, %cst_119 {dimension_numbers = #tpu.dot_dimension_numbers<[1], [0], [0], [1], [0, 0, 1, 1], [], []>} : vector<32x128xbf16>, vector<128x256xbf16>, vector<32x256xf32> -> vector<32x256xf32>
    %434 = arith.addf %427, %433 : vector<32x256xf32>
    %c4_120 = arith.constant 4 : index
    %c0_121 = arith.constant 0 : index
    %c0_122 = arith.constant 0 : index
    %435 = vector.load %arg16[%c4_120, %c0_121, %c0_122] : memref<5x32x32xbf16, #tpu.memory_space<vmem>>, vector<1x32x32xbf16>
    %436 = vector.shape_cast %435 : vector<1x32x32xbf16> to vector<32x32xbf16>
    %cst_123 = arith.constant dense<0.000000e+00> : vector<32x128xf32>
    %437 = tpu.matmul %436, %409, %cst_123 {dimension_numbers = #tpu.dot_dimension_numbers<[1], [0], [0], [1], [0, 0, 1, 1], [], []>} : vector<32x32xbf16>, vector<32x128xbf16>, vector<32x128xf32> -> vector<32x128xf32>
    %438 = arith.truncf %437 : vector<32x128xf32> to vector<32x128xbf16>
    %c512 = arith.constant 512 : index
    %c0_124 = arith.constant 0 : index
    %439 = vector.load %arg13[%c512, %c0_124] : memref<640x256xbf16, #tpu.memory_space<vmem>>, vector<128x256xbf16>
    %cst_125 = arith.constant dense<0.000000e+00> : vector<32x256xf32>
    %440 = tpu.matmul %438, %439, %cst_125 {dimension_numbers = #tpu.dot_dimension_numbers<[1], [0], [0], [1], [0, 0, 1, 1], [], []>} : vector<32x128xbf16>, vector<128x256xbf16>, vector<32x256xf32> -> vector<32x256xf32>
    %441 = arith.addf %434, %440 : vector<32x256xf32>
    %c0_126 = arith.constant 0 : index
    %c0_127 = arith.constant 0 : index
    %442 = vector.load %arg14[%c0_126, %c0_127] : memref<1x256xf32, #tpu.memory_space<vmem>>, vector<1x256xf32>
    %443 = vector.broadcast %442 : vector<1x256xf32> to vector<32x256xf32>
    %444 = arith.mulf %441, %443 : vector<32x256xf32>
    %c0_128 = arith.constant 0 : index
    %c0_129 = arith.constant 0 : index
    %445 = vector.load %arg15[%c0_128, %c0_129] : memref<1x256xf32, #tpu.memory_space<vmem>>, vector<1x256xf32>
    %446 = vector.broadcast %445 : vector<1x256xf32> to vector<32x256xf32>
    %447 = arith.addf %444, %446 : vector<32x256xf32>
    %cst_130 = arith.constant 0.000000e+00 : f32
    %448 = vector.broadcast %cst_130 : f32 to vector<32x256xf32>
    %449 = arith.maximumf %447, %448 : vector<32x256xf32>
    %450 = vector.shape_cast %449 : vector<32x256xf32> to vector<2x16x256xf32>
    %cst_131 = arith.constant dense<0.000000e+00> : vector<2x256xf32>
    %451 = vector.multi_reduction <add>, %450, %cst_131 [1] : vector<2x16x256xf32> to vector<2x256xf32>
    %cst_132 = arith.constant 6.250000e-02 : f32
    %452 = vector.broadcast %cst_132 : f32 to vector<2x256xf32>
    %453 = arith.mulf %451, %452 : vector<2x256xf32>
    %454 = arith.truncf %453 : vector<2x256xf32> to vector<2x256xbf16>
    %c0_133 = arith.constant 0 : index
    %c0_134 = arith.constant 0 : index
    %455 = vector.load %arg17[%c0_133, %c0_134] : memref<256x16xbf16, #tpu.memory_space<vmem>>, vector<256x16xbf16>
    %cst_135 = arith.constant dense<0.000000e+00> : vector<2x16xf32>
    %456 = tpu.matmul %454, %455, %cst_135 {dimension_numbers = #tpu.dot_dimension_numbers<[1], [0], [0], [1], [0, 0, 1, 1], [], []>} : vector<2x256xbf16>, vector<256x16xbf16>, vector<2x16xf32> -> vector<2x16xf32>
    %cst_136 = arith.constant 0.000000e+00 : f32
    %457 = vector.broadcast %cst_136 : f32 to vector<2x16xf32>
    %458 = arith.maximumf %456, %457 : vector<2x16xf32>
    %459 = arith.truncf %458 : vector<2x16xf32> to vector<2x16xbf16>
    %c0_137 = arith.constant 0 : index
    %c0_138 = arith.constant 0 : index
    %460 = vector.load %arg18[%c0_137, %c0_138] : memref<16x256xbf16, #tpu.memory_space<vmem>>, vector<16x256xbf16>
    %cst_139 = arith.constant dense<0.000000e+00> : vector<2x256xf32>
    %461 = tpu.matmul %459, %460, %cst_139 {dimension_numbers = #tpu.dot_dimension_numbers<[1], [0], [0], [1], [0, 0, 1, 1], [], []>} : vector<2x16xbf16>, vector<16x256xbf16>, vector<2x256xf32> -> vector<2x256xf32>
    %462 = arith.negf %461 : vector<2x256xf32>
    %463 = math.exp %462 : vector<2x256xf32>
    %cst_140 = arith.constant 1.000000e+00 : f32
    %464 = vector.broadcast %cst_140 : f32 to vector<2x256xf32>
    %465 = arith.addf %464, %463 : vector<2x256xf32>
    %466 = arith.divf %464, %465 : vector<2x256xf32>
    %467 = vector.shape_cast %466 : vector<2x256xf32> to vector<2x1x256xf32>
    %468 = vector.broadcast %467 : vector<2x1x256xf32> to vector<2x16x256xf32>
    %469 = arith.mulf %450, %468 : vector<2x16x256xf32>
    %470 = vector.shape_cast %469 : vector<2x16x256xf32> to vector<32x256xf32>
    %471 = arith.truncf %470 : vector<32x256xf32> to vector<32x256xbf16>
    %cst_141 = arith.constant 0.000000e+00 : f32
    %472 = vector.broadcast %cst_141 : f32 to vector<32x128xf32>
    %c0_142 = arith.constant 0 : index
    %c0_143 = arith.constant 0 : index
    %c0_144 = arith.constant 0 : index
    %473 = vector.load %arg22[%c0_142, %c0_143, %c0_144] : memref<3x32x32xbf16, #tpu.memory_space<vmem>>, vector<1x32x32xbf16>
    %474 = vector.shape_cast %473 : vector<1x32x32xbf16> to vector<32x32xbf16>
    %cst_145 = arith.constant dense<0.000000e+00> : vector<32x256xf32>
    %475 = tpu.matmul %474, %471, %cst_145 {dimension_numbers = #tpu.dot_dimension_numbers<[1], [0], [0], [1], [0, 0, 1, 1], [], []>} : vector<32x32xbf16>, vector<32x256xbf16>, vector<32x256xf32> -> vector<32x256xf32>
    %476 = arith.truncf %475 : vector<32x256xf32> to vector<32x256xbf16>
    %c0_146 = arith.constant 0 : index
    %c0_147 = arith.constant 0 : index
    %477 = vector.load %arg19[%c0_146, %c0_147] : memref<768x128xbf16, #tpu.memory_space<vmem>>, vector<256x128xbf16>
    %cst_148 = arith.constant dense<0.000000e+00> : vector<32x128xf32>
    %478 = tpu.matmul %476, %477, %cst_148 {dimension_numbers = #tpu.dot_dimension_numbers<[1], [0], [0], [1], [0, 0, 1, 1], [], []>} : vector<32x256xbf16>, vector<256x128xbf16>, vector<32x128xf32> -> vector<32x128xf32>
    %479 = arith.addf %472, %478 : vector<32x128xf32>
    %c256_149 = arith.constant 256 : index
    %c0_150 = arith.constant 0 : index
    %480 = vector.load %arg19[%c256_149, %c0_150] : memref<768x128xbf16, #tpu.memory_space<vmem>>, vector<256x128xbf16>
    %cst_151 = arith.constant dense<0.000000e+00> : vector<32x128xf32>
    %481 = tpu.matmul %471, %480, %cst_151 {dimension_numbers = #tpu.dot_dimension_numbers<[1], [0], [0], [1], [0, 0, 1, 1], [], []>} : vector<32x256xbf16>, vector<256x128xbf16>, vector<32x128xf32> -> vector<32x128xf32>
    %482 = arith.addf %479, %481 : vector<32x128xf32>
    %c2_152 = arith.constant 2 : index
    %c0_153 = arith.constant 0 : index
    %c0_154 = arith.constant 0 : index
    %483 = vector.load %arg22[%c2_152, %c0_153, %c0_154] : memref<3x32x32xbf16, #tpu.memory_space<vmem>>, vector<1x32x32xbf16>
    %484 = vector.shape_cast %483 : vector<1x32x32xbf16> to vector<32x32xbf16>
    %cst_155 = arith.constant dense<0.000000e+00> : vector<32x256xf32>
    %485 = tpu.matmul %484, %471, %cst_155 {dimension_numbers = #tpu.dot_dimension_numbers<[1], [0], [0], [1], [0, 0, 1, 1], [], []>} : vector<32x32xbf16>, vector<32x256xbf16>, vector<32x256xf32> -> vector<32x256xf32>
    %486 = arith.truncf %485 : vector<32x256xf32> to vector<32x256xbf16>
    %c512_156 = arith.constant 512 : index
    %c0_157 = arith.constant 0 : index
    %487 = vector.load %arg19[%c512_156, %c0_157] : memref<768x128xbf16, #tpu.memory_space<vmem>>, vector<256x128xbf16>
    %cst_158 = arith.constant dense<0.000000e+00> : vector<32x128xf32>
    %488 = tpu.matmul %486, %487, %cst_158 {dimension_numbers = #tpu.dot_dimension_numbers<[1], [0], [0], [1], [0, 0, 1, 1], [], []>} : vector<32x256xbf16>, vector<256x128xbf16>, vector<32x128xf32> -> vector<32x128xf32>
    %489 = arith.addf %482, %488 : vector<32x128xf32>
    %c0_159 = arith.constant 0 : index
    %c0_160 = arith.constant 0 : index
    %490 = vector.load %arg20[%c0_159, %c0_160] : memref<1x128xf32, #tpu.memory_space<vmem>>, vector<1x128xf32>
    %491 = vector.broadcast %490 : vector<1x128xf32> to vector<32x128xf32>
    %492 = arith.mulf %489, %491 : vector<32x128xf32>
    %c0_161 = arith.constant 0 : index
    %c0_162 = arith.constant 0 : index
    %493 = vector.load %arg21[%c0_161, %c0_162] : memref<1x128xf32, #tpu.memory_space<vmem>>, vector<1x128xf32>
    %494 = vector.broadcast %493 : vector<1x128xf32> to vector<32x128xf32>
    %495 = arith.addf %492, %494 : vector<32x128xf32>
    %cst_163 = arith.constant 0.000000e+00 : f32
    %496 = vector.broadcast %cst_163 : f32 to vector<32x128xf32>
    %497 = arith.maximumf %495, %496 : vector<32x128xf32>
    %498 = vector.shape_cast %497 : vector<32x128xf32> to vector<2x16x128xf32>
    %cst_164 = arith.constant dense<0.000000e+00> : vector<2x128xf32>
    %499 = vector.multi_reduction <add>, %498, %cst_164 [1] : vector<2x16x128xf32> to vector<2x128xf32>
    %cst_165 = arith.constant 6.250000e-02 : f32
    %500 = vector.broadcast %cst_165 : f32 to vector<2x128xf32>
    %501 = arith.mulf %499, %500 : vector<2x128xf32>
    %502 = arith.truncf %312 : vector<2x32xf32> to vector<2x32xbf16>
    %c0_166 = arith.constant 0 : index
    %c0_167 = arith.constant 0 : index
    %503 = vector.load %arg23[%c0_166, %c0_167] : memref<32x2xbf16, #tpu.memory_space<vmem>>, vector<32x2xbf16>
    %cst_168 = arith.constant dense<0.000000e+00> : vector<2x2xf32>
    %504 = tpu.matmul %502, %503, %cst_168 {dimension_numbers = #tpu.dot_dimension_numbers<[1], [0], [0], [1], [0, 0, 1, 1], [], []>} : vector<2x32xbf16>, vector<32x2xbf16>, vector<2x2xf32> -> vector<2x2xf32>
    %505 = arith.truncf %331 : vector<2x32xf32> to vector<2x32xbf16>
    %c0_169 = arith.constant 0 : index
    %c0_170 = arith.constant 0 : index
    %506 = vector.load %arg24[%c0_169, %c0_170] : memref<32x2xbf16, #tpu.memory_space<vmem>>, vector<32x2xbf16>
    %cst_171 = arith.constant dense<0.000000e+00> : vector<2x2xf32>
    %507 = tpu.matmul %505, %506, %cst_171 {dimension_numbers = #tpu.dot_dimension_numbers<[1], [0], [0], [1], [0, 0, 1, 1], [], []>} : vector<2x32xbf16>, vector<32x2xbf16>, vector<2x2xf32> -> vector<2x2xf32>
    %508 = arith.addf %504, %507 : vector<2x2xf32>
    %509 = arith.truncf %501 : vector<2x128xf32> to vector<2x128xbf16>
    %c0_172 = arith.constant 0 : index
    %c0_173 = arith.constant 0 : index
    %510 = vector.load %arg25[%c0_172, %c0_173] : memref<128x2xbf16, #tpu.memory_space<vmem>>, vector<128x2xbf16>
    %cst_174 = arith.constant dense<0.000000e+00> : vector<2x2xf32>
    %511 = tpu.matmul %509, %510, %cst_174 {dimension_numbers = #tpu.dot_dimension_numbers<[1], [0], [0], [1], [0, 0, 1, 1], [], []>} : vector<2x128xbf16>, vector<128x2xbf16>, vector<2x2xf32> -> vector<2x2xf32>
    %512 = arith.addf %508, %511 : vector<2x2xf32>
    %c0_175 = arith.constant 0 : index
    %c0_176 = arith.constant 0 : index
    %513 = vector.load %arg26[%c0_175, %c0_176] : memref<1x2xf32, #tpu.memory_space<vmem>>, vector<1x2xf32>
    %514 = vector.broadcast %513 : vector<1x2xf32> to vector<2x2xf32>
    %515 = arith.addf %512, %514 : vector<2x2xf32>
    %c0_177 = arith.constant 0 : index
    %c0_178 = arith.constant 0 : index
    %516 = vector.load %arg27[%c0_177, %c0_178] : memref<2x2xf32, #tpu.memory_space<vmem>>, vector<2x2xf32>
    tpu.vector_store %arg27[%c0_177, %c0_178], %515 {strides = array<i32>} : memref<2x2xf32, #tpu.memory_space<vmem>>, vector<2x2xf32>,
    return
  }
}

</mosaic_0001>

<llo_original>
// kernel: mlstm_fcn_forward.1
$region0: #{mlstm_fcn_forward.1}
  #allocation0 [shape = 'u32[]', space=smem, size = 0x4, offset = 0x4, fixed_abs, tag = 'smem constant byte address 0x4 - core index']
  #allocation1 [shape = 'u32[144,128]{1,0:T(1,128)}', space=vmem, size = 0x12000, scoped, tag = 'internal scratch']
  %s0 = inlined_call_operand.vmem [shape: f32[32,8], index: 0, kind: input, shape index: {}]
  %s1 = inlined_call_operand.vmem [shape: f32[32,8], index: 1, kind: input, shape index: {}]
  %s2 = inlined_call_operand.hbm [shape: f32[8,128], index: 2, kind: input, shape index: {}]
  %s3 = inlined_call_operand.hbm [shape: f32[32,128], index: 3, kind: input, shape index: {}]
  %s4 = inlined_call_operand.hbm [shape: f32[1,128], index: 4, kind: input, shape index: {}]
  %s5 = inlined_call_operand.hbm [shape: f32[8,128], index: 5, kind: input, shape index: {}]
  %s6 = inlined_call_operand.hbm [shape: f32[1,128], index: 6, kind: input, shape index: {}]
  %s7 = inlined_call_operand.hbm [shape: bf16[56,128], index: 7, kind: input, shape index: {}]
  %s8 = inlined_call_operand.hbm [shape: f32[1,128], index: 8, kind: input, shape index: {}]
  %s9 = inlined_call_operand.hbm [shape: f32[1,128], index: 9, kind: input, shape index: {}]
  %s10 = inlined_call_operand.vmem [shape: bf16[7,32,32], index: 10, kind: input, shape index: {}]
  %s11 = inlined_call_operand.vmem [shape: bf16[128,8], index: 11, kind: input, shape index: {}]
  %s12 = inlined_call_operand.hbm [shape: bf16[8,128], index: 12, kind: input, shape index: {}]
  %s13 = inlined_call_operand.hbm [shape: bf16[640,256], index: 13, kind: input, shape index: {}]
  %s14 = inlined_call_operand.hbm [shape: f32[1,256], index: 14, kind: input, shape index: {}]
  %s15 = inlined_call_operand.hbm [shape: f32[1,256], index: 15, kind: input, shape index: {}]
  %s16 = inlined_call_operand.hbm [shape: bf16[5,32,32], index: 16, kind: input, shape index: {}]
  %s17 = inlined_call_operand.vmem [shape: bf16[256,16], index: 17, kind: input, shape index: {}]
  %s18 = inlined_call_operand.hbm [shape: bf16[16,256], index: 18, kind: input, shape index: {}]
  %s19 = inlined_call_operand.vmem [shape: bf16[768,128], index: 19, kind: input, shape index: {}]
  %s20 = inlined_call_operand.hbm [shape: f32[1,128], index: 20, kind: input, shape index: {}]
  %s21 = inlined_call_operand.hbm [shape: f32[1,128], index: 21, kind: input, shape index: {}]
  %s22 = inlined_call_operand.hbm [shape: bf16[3,32,32], index: 22, kind: input, shape index: {}]
  %s23 = inlined_call_operand.vmem [shape: bf16[32,2], index: 23, kind: input, shape index: {}]
  %s24 = inlined_call_operand.vmem [shape: bf16[32,2], index: 24, kind: input, shape index: {}]
  %s25 = inlined_call_operand.vmem [shape: bf16[128,2], index: 25, kind: input, shape index: {}]
  %s26 = inlined_call_operand.hbm [shape: f32[1,2], index: 26, kind: input, shape index: {}]
  %s27 = inlined_call_operand.hbm [shape: f32[2,2], index: 27, kind: output, shape index: {}]
  %s28 = sld [smem:[#allocation0]]
  $region190: #{mlstm_fcn_forward.1} parent=0
    _
  %s30 = ssub.s32 1, %s28
  %s31 = scalar_select 0, %s30, %s28
  $region1: #{mlstm_fcn_forward.1} parent=0
    #allocation2 [shape = 'u8[4096]{0}', space=vmem, size = 0x1000, scoped, tag = 'input window, operand 2, single buffered']
    #allocation3 [shape = 's32[1]{0}', space=sflag, size = 0x4, scoped, tag = 'scoped memory for mlstm_fcn_forward.1']
    #allocation4 [shape = 's32[1]{0}', space=sflag, size = 0x4, scoped, tag = 'scoped memory for mlstm_fcn_forward.1']
    #allocation5 [shape = 'u8[16384]{0}', space=vmem, size = 0x4000, scoped, tag = 'input window, operand 3, single buffered']
    #allocation6 [shape = 's32[1]{0}', space=sflag, size = 0x4, scoped, tag = 'scoped memory for mlstm_fcn_forward.1']
    #allocation7 [shape = 'u8[512]{0}', space=vmem, size = 0x400, scoped, tag = 'input window, operand 4, single buffered']
    #allocation8 [shape = 'u8[4096]{0}', space=vmem, size = 0x1000, scoped, tag = 'input window, operand 5, single buffered']
    #allocation9 [shape = 's32[1]{0}', space=sflag, size = 0x4, scoped, tag = 'scoped memory for mlstm_fcn_forward.1']
    #allocation10 [shape = 'u8[512]{0}', space=vmem, size = 0x400, scoped, tag = 'input window, operand 6, single buffered']
    #allocation11 [shape = 'u8[14336]{0}', space=vmem, size = 0x3800, scoped, tag = 'input window, operand 7, single buffered']
    #allocation12 [shape = 's32[1]{0}', space=sflag, size = 0x4, scoped, tag = 'scoped memory for mlstm_fcn_forward.1']
    #allocation13 [shape = 'u8[512]{0}', space=vmem, size = 0x400, scoped, tag = 'input window, operand 8, single buffered']
    #allocation14 [shape = 'u8[512]{0}', space=vmem, size = 0x400, scoped, tag = 'input window, operand 9, single buffered']
    #allocation15 [shape = 's32[1]{0}', space=sflag, size = 0x4, scoped, tag = 'scoped memory for mlstm_fcn_forward.1']
    #allocation16 [shape = 'u8[2048]{0}', space=vmem, size = 0x800, scoped, tag = 'input window, operand 12, single buffered']
    #allocation17 [shape = 'u8[327680]{0}', space=vmem, size = 0x50000, scoped, tag = 'input window, operand 13, single buffered']
    #allocation18 [shape = 's32[1]{0}', space=sflag, size = 0x4, scoped, tag = 'scoped memory for mlstm_fcn_forward.1']
    #allocation19 [shape = 'u8[1024]{0}', space=vmem, size = 0x400, scoped, tag = 'input window, operand 14, single buffered']
    #allocation20 [shape = 'u8[1024]{0}', space=vmem, size = 0x400, scoped, tag = 'input window, operand 15, single buffered']
    #allocation21 [shape = 's32[1]{0}', space=sflag, size = 0x4, scoped, tag = 'scoped memory for mlstm_fcn_forward.1']
    #allocation22 [shape = 'u8[40960]{0}', space=vmem, size = 0xa000, scoped, tag = 'input window, operand 16, single buffered']
    #allocation23 [shape = 'u8[8192]{0}', space=vmem, size = 0x2000, scoped, tag = 'input window, operand 18, single buffered']
    #allocation24 [shape = 's32[1]{0}', space=sflag, size = 0x4, scoped, tag = 'scoped memory for mlstm_fcn_forward.1']
    #allocation25 [shape = 'u8[512]{0}', space=vmem, size = 0x400, scoped, tag = 'input window, operand 20, single buffered']
    #allocation26 [shape = 'u8[512]{0}', space=vmem, size = 0x400, scoped, tag = 'input window, operand 21, single buffered']
    #allocation27 [shape = 's32[1]{0}', space=sflag, size = 0x4, scoped, tag = 'scoped memory for mlstm_fcn_forward.1']
    #allocation28 [shape = 'u8[24576]{0}', space=vmem, size = 0x6000, scoped, tag = 'input window, operand 22, single buffered']
    #allocation29 [shape = 'u8[512]{0}', space=vmem, size = 0x400, scoped, tag = 'input window, operand 26, single buffered']
    #allocation30 [shape = 's32[1]{0}', space=sflag, size = 0x4, scoped, tag = 'scoped memory for mlstm_fcn_forward.1']
    #allocation31 [shape = 'u8[1024]{0}', space=vmem, size = 0x400, scoped, tag = 'output window, operand 0, single buffered']
    %32 = vsyncpa [#allocation3], 0
    %33 = vsyncpa [#allocation6], 0
    %34 = vsyncpa [#allocation9], 0
    %35 = vsyncpa [#allocation12], 0
    %36 = vsyncpa [#allocation15], 0
    %37 = vsyncpa [#allocation18], 0
    %38 = vsyncpa [#allocation21], 0
    %39 = vsyncpa [#allocation24], 0
    %40 = vsyncpa [#allocation27], 0
    %41 = vsyncpa [#allocation30], 0
    %42 = vsyncpa [#allocation4], 0
    // Predicated region
    $region2: #{mlstm_fcn_forward.1} parent=1 // pred_check
      _
    $region3: #{mlstm_fcn_forward.1} parent=1 // pred_check_branch
      %44 = sbr.rel (0) target = $region5
    $region4: #{mlstm_fcn_forward.1} parent=1 // pred_region
      _
    $region5: #{mlstm_fcn_forward.1} parent=1 // pred_fallthru
      _
    // Predicated region
    $region6: #{mlstm_fcn_forward.1} parent=1 // pred_check
      _
    $region7: #{mlstm_fcn_forward.1} parent=1 // pred_check_branch
      %46 = sbr.rel (0) target = $region9
    $region8: #{mlstm_fcn_forward.1} parent=1 // pred_region
      _
    $region9: #{mlstm_fcn_forward.1} parent=1 // pred_fallthru
      _
    // Predicated region
    $region10: #{mlstm_fcn_forward.1} parent=1 // pred_check
      _
    $region11: #{mlstm_fcn_forward.1} parent=1 // pred_check_branch
      %48 = sbr.rel (0) target = $region13
    $region12: #{mlstm_fcn_forward.1} parent=1 // pred_region
      %s50 = ssub.s32 128, 128
      %51 = vsyncadd [#allocation3], %s50
      %s53 = sshll.u32 [#allocation2], 4
      %s54 = int_to_ptr.vmem [resolvable:$true] %s53
      %56 = dma.hbm_to_vmem [thread:$0]  %s2, 128, %s54, [#allocation3]
    $region13: #{mlstm_fcn_forward.1} parent=1 // pred_fallthru
      _
    // Predicated region
    $region14: #{mlstm_fcn_forward.1} parent=1 // pred_check
      _
    $region15: #{mlstm_fcn_forward.1} parent=1 // pred_check_branch
      %58 = sbr.rel (0) target = $region17
    $region16: #{mlstm_fcn_forward.1} parent=1 // pred_region
      %s60 = ssub.s32 512, 512
      %61 = vsyncadd [#allocation6], %s60
      %s62 = sshll.u32 [#allocation5], 4
      %s63 = int_to_ptr.vmem [resolvable:$true] %s62
      %68 = dma.hbm_to_vmem [thread:$0]  %s3, 512, %s63, [#allocation6], 128, 128, 8
    $region17: #{mlstm_fcn_forward.1} parent=1 // pred_fallthru
      _
    // Predicated region
    $region18: #{mlstm_fcn_forward.1} parent=1 // pred_check
      _
    $region19: #{mlstm_fcn_forward.1} parent=1 // pred_check_branch
      %70 = sbr.rel (0) target = $region21
    $region20: #{mlstm_fcn_forward.1} parent=1 // pred_region
      %s72 = ssub.s32 16, 16
      %73 = vsyncadd [#allocation6], %s72
      %s75 = sshll.u32 [#allocation7], 4
      %s76 = int_to_ptr.vmem [resolvable:$true] %s75
      %78 = dma.hbm_to_vmem [thread:$0]  %s4, 16, %s76, [#allocation6]
    $region21: #{mlstm_fcn_forward.1} parent=1 // pred_fallthru
      _
    // Predicated region
    $region22: #{mlstm_fcn_forward.1} parent=1 // pred_check
      _
    $region23: #{mlstm_fcn_forward.1} parent=1 // pred_check_branch
      %80 = sbr.rel (0) target = $region25
    $region24: #{mlstm_fcn_forward.1} parent=1 // pred_region
      %s82 = ssub.s32 128, 128
      %83 = vsyncadd [#allocation9], %s82
      %s85 = sshll.u32 [#allocation8], 4
      %s86 = int_to_ptr.vmem [resolvable:$true] %s85
      %88 = dma.hbm_to_vmem [thread:$0]  %s5, 128, %s86, [#allocation9]
    $region25: #{mlstm_fcn_forward.1} parent=1 // pred_fallthru
      _
    // Predicated region
    $region26: #{mlstm_fcn_forward.1} parent=1 // pred_check
      _
    $region27: #{mlstm_fcn_forward.1} parent=1 // pred_check_branch
      %90 = sbr.rel (0) target = $region29
    $region28: #{mlstm_fcn_forward.1} parent=1 // pred_region
      %s92 = ssub.s32 16, 16
      %93 = vsyncadd [#allocation9], %s92
      %s95 = sshll.u32 [#allocation10], 4
      %s96 = int_to_ptr.vmem [resolvable:$true] %s95
      %98 = dma.hbm_to_vmem [thread:$0]  %s6, 16, %s96, [#allocation9]
    $region29: #{mlstm_fcn_forward.1} parent=1 // pred_fallthru
      _
    // Predicated region
    $region30: #{mlstm_fcn_forward.1} parent=1 // pred_check
      _
    $region31: #{mlstm_fcn_forward.1} parent=1 // pred_check_branch
      %100 = sbr.rel (0) target = $region33
    $region32: #{mlstm_fcn_forward.1} parent=1 // pred_region
      %s102 = ssub.s32 448, 448
      %103 = vsyncadd [#allocation12], %s102
      %s104 = sshll.u32 [#allocation11], 4
      %s105 = int_to_ptr.vmem [resolvable:$true] %s104
      %110 = dma.hbm_to_vmem [thread:$0]  %s7, 448, %s105, [#allocation12], 64, 64, 4
    $region33: #{mlstm_fcn_forward.1} parent=1 // pred_fallthru
      _
    // Predicated region
    $region34: #{mlstm_fcn_forward.1} parent=1 // pred_check
      _
    $region35: #{mlstm_fcn_forward.1} parent=1 // pred_check_branch
      %112 = sbr.rel (0) target = $region37
    $region36: #{mlstm_fcn_forward.1} parent=1 // pred_region
      %s114 = ssub.s32 16, 16
      %115 = vsyncadd [#allocation12], %s114
      %s117 = sshll.u32 [#allocation13], 4
      %s118 = int_to_ptr.vmem [resolvable:$true] %s117
      %120 = dma.hbm_to_vmem [thread:$0]  %s8, 16, %s118, [#allocation12]
    $region37: #{mlstm_fcn_forward.1} parent=1 // pred_fallthru
      _
    // Predicated region
    $region38: #{mlstm_fcn_forward.1} parent=1 // pred_check
      _
    $region39: #{mlstm_fcn_forward.1} parent=1 // pred_check_branch
      %122 = sbr.rel (0) target = $region41
    $region40: #{mlstm_fcn_forward.1} parent=1 // pred_region
      %s124 = ssub.s32 16, 16
      %125 = vsyncadd [#allocation15], %s124
      %s127 = sshll.u32 [#allocation14], 4
      %s128 = int_to_ptr.vmem [resolvable:$true] %s127
      %130 = dma.hbm_to_vmem [thread:$0]  %s9, 16, %s128, [#allocation15]
    $region41: #{mlstm_fcn_forward.1} parent=1 // pred_fallthru
      _
    // Predicated region
    $region42: #{mlstm_fcn_forward.1} parent=1 // pred_check
      _
    $region43: #{mlstm_fcn_forward.1} parent=1 // pred_check_branch
      %132 = sbr.rel (0) target = $region45
    $region44: #{mlstm_fcn_forward.1} parent=1 // pred_region
      _
    $region45: #{mlstm_fcn_forward.1} parent=1 // pred_fallthru
      _
    // Predicated region
    $region46: #{mlstm_fcn_forward.1} parent=1 // pred_check
      _
    $region47: #{mlstm_fcn_forward.1} parent=1 // pred_check_branch
      %134 = sbr.rel (0) target = $region49
    $region48: #{mlstm_fcn_forward.1} parent=1 // pred_region
      _
    $region49: #{mlstm_fcn_forward.1} parent=1 // pred_fallthru
      _
    // Predicated region
    $region50: #{mlstm_fcn_forward.1} parent=1 // pred_check
      _
    $region51: #{mlstm_fcn_forward.1} parent=1 // pred_check_branch
      %136 = sbr.rel (0) target = $region53
    $region52: #{mlstm_fcn_forward.1} parent=1 // pred_region
      %s138 = ssub.s32 64, 64
      %139 = vsyncadd [#allocation15], %s138
      %s141 = sshll.u32 [#allocation16], 4
      %s142 = int_to_ptr.vmem [resolvable:$true] %s141
      %144 = dma.hbm_to_vmem [thread:$0]  %s12, 64, %s142, [#allocation15]
    $region53: #{mlstm_fcn_forward.1} parent=1 // pred_fallthru
      _
    // Predicated region
    $region54: #{mlstm_fcn_forward.1} parent=1 // pred_check
      _
    $region55: #{mlstm_fcn_forward.1} parent=1 // pred_check_branch
      %146 = sbr.rel (0) target = $region57
    $region56: #{mlstm_fcn_forward.1} parent=1 // pred_region
      %s148 = ssub.s32 10240, 10240
      %149 = vsyncadd [#allocation18], %s148
      %s150 = sshll.u32 [#allocation17], 4
      %s151 = int_to_ptr.vmem [resolvable:$true] %s150
      %156 = dma.hbm_to_vmem [thread:$0]  %s13, 10240, %s151, [#allocation18], 128, 128, 8
    $region57: #{mlstm_fcn_forward.1} parent=1 // pred_fallthru
      _
    // Predicated region
    $region58: #{mlstm_fcn_forward.1} parent=1 // pred_check
      _
    $region59: #{mlstm_fcn_forward.1} parent=1 // pred_check_branch
      %158 = sbr.rel (0) target = $region61
    $region60: #{mlstm_fcn_forward.1} parent=1 // pred_region
      %s160 = ssub.s32 32, 32
      %161 = vsyncadd [#allocation18], %s160
      %s163 = sshll.u32 [#allocation19], 4
      %s164 = int_to_ptr.vmem [resolvable:$true] %s163
      %166 = dma.hbm_to_vmem [thread:$0]  %s14, 32, %s164, [#allocation18]
    $region61: #{mlstm_fcn_forward.1} parent=1 // pred_fallthru
      _
    // Predicated region
    $region62: #{mlstm_fcn_forward.1} parent=1 // pred_check
      _
    $region63: #{mlstm_fcn_forward.1} parent=1 // pred_check_branch
      %168 = sbr.rel (0) target = $region65
    $region64: #{mlstm_fcn_forward.1} parent=1 // pred_region
      %s170 = ssub.s32 32, 32
      %171 = vsyncadd [#allocation21], %s170
      %s173 = sshll.u32 [#allocation20], 4
      %s174 = int_to_ptr.vmem [resolvable:$true] %s173
      %176 = dma.hbm_to_vmem [thread:$0]  %s15, 32, %s174, [#allocation21]
    $region65: #{mlstm_fcn_forward.1} parent=1 // pred_fallthru
      _
    // Predicated region
    $region66: #{mlstm_fcn_forward.1} parent=1 // pred_check
      _
    $region67: #{mlstm_fcn_forward.1} parent=1 // pred_check_branch
      %178 = sbr.rel (0) target = $region69
    $region68: #{mlstm_fcn_forward.1} parent=1 // pred_region
      %s180 = ssub.s32 1280, 1280
      %181 = vsyncadd [#allocation21], %s180
      %s182 = sshll.u32 [#allocation22], 4
      %s183 = int_to_ptr.vmem [resolvable:$true] %s182
      %188 = dma.hbm_to_vmem [thread:$0]  %s16, 1280, %s183, [#allocation21], 64, 64, 4
    $region69: #{mlstm_fcn_forward.1} parent=1 // pred_fallthru
      _
    // Predicated region
    $region70: #{mlstm_fcn_forward.1} parent=1 // pred_check
      _
    $region71: #{mlstm_fcn_forward.1} parent=1 // pred_check_branch
      %190 = sbr.rel (0) target = $region73
    $region72: #{mlstm_fcn_forward.1} parent=1 // pred_region
      _
    $region73: #{mlstm_fcn_forward.1} parent=1 // pred_fallthru
      _
    // Predicated region
    $region74: #{mlstm_fcn_forward.1} parent=1 // pred_check
      _
    $region75: #{mlstm_fcn_forward.1} parent=1 // pred_check_branch
      %192 = sbr.rel (0) target = $region77
    $region76: #{mlstm_fcn_forward.1} parent=1 // pred_region
      %s194 = ssub.s32 256, 256
      %195 = vsyncadd [#allocation24], %s194
      %s196 = sshll.u32 [#allocation23], 4
      %s197 = int_to_ptr.vmem [resolvable:$true] %s196
      %202 = dma.hbm_to_vmem [thread:$0]  %s18, 256, %s197, [#allocation24], 128, 128, 8
    $region77: #{mlstm_fcn_forward.1} parent=1 // pred_fallthru
      _
    // Predicated region
    $region78: #{mlstm_fcn_forward.1} parent=1 // pred_check
      _
    $region79: #{mlstm_fcn_forward.1} parent=1 // pred_check_branch
      %204 = sbr.rel (0) target = $region81
    $region80: #{mlstm_fcn_forward.1} parent=1 // pred_region
      _
    $region81: #{mlstm_fcn_forward.1} parent=1 // pred_fallthru
      _
    // Predicated region
    $region82: #{mlstm_fcn_forward.1} parent=1 // pred_check
      _
    $region83: #{mlstm_fcn_forward.1} parent=1 // pred_check_branch
      %206 = sbr.rel (0) target = $region85
    $region84: #{mlstm_fcn_forward.1} parent=1 // pred_region
      %s208 = ssub.s32 16, 16
      %209 = vsyncadd [#allocation24], %s208
      %s211 = sshll.u32 [#allocation25], 4
      %s212 = int_to_ptr.vmem [resolvable:$true] %s211
      %214 = dma.hbm_to_vmem [thread:$0]  %s20, 16, %s212, [#allocation24]
    $region85: #{mlstm_fcn_forward.1} parent=1 // pred_fallthru
      _
    // Predicated region
    $region86: #{mlstm_fcn_forward.1} parent=1 // pred_check
      _
    $region87: #{mlstm_fcn_forward.1} parent=1 // pred_check_branch
      %216 = sbr.rel (0) target = $region89
    $region88: #{mlstm_fcn_forward.1} parent=1 // pred_region
      %s218 = ssub.s32 16, 16
      %219 = vsyncadd [#allocation27], %s218
      %s221 = sshll.u32 [#allocation26], 4
      %s222 = int_to_ptr.vmem [resolvable:$true] %s221
      %224 = dma.hbm_to_vmem [thread:$0]  %s21, 16, %s222, [#allocation27]
    $region89: #{mlstm_fcn_forward.1} parent=1 // pred_fallthru
      _
    // Predicated region
    $region90: #{mlstm_fcn_forward.1} parent=1 // pred_check
      _
    $region91: #{mlstm_fcn_forward.1} parent=1 // pred_check_branch
      %226 = sbr.rel (0) target = $region93
    $region92: #{mlstm_fcn_forward.1} parent=1 // pred_region
      %s228 = ssub.s32 768, 768
      %229 = vsyncadd [#allocation27], %s228
      %s230 = sshll.u32 [#allocation28], 4
      %s231 = int_to_ptr.vmem [resolvable:$true] %s230
      %236 = dma.hbm_to_vmem [thread:$0]  %s22, 768, %s231, [#allocation27], 64, 64, 4
    $region93: #{mlstm_fcn_forward.1} parent=1 // pred_fallthru
      _
    // Predicated region
    $region94: #{mlstm_fcn_forward.1} parent=1 // pred_check
      _
    $region95: #{mlstm_fcn_forward.1} parent=1 // pred_check_branch
      %238 = sbr.rel (0) target = $region97
    $region96: #{mlstm_fcn_forward.1} parent=1 // pred_region
      _
    $region97: #{mlstm_fcn_forward.1} parent=1 // pred_fallthru
      _
    // Predicated region
    $region98: #{mlstm_fcn_forward.1} parent=1 // pred_check
      _
    $region99: #{mlstm_fcn_forward.1} parent=1 // pred_check_branch
      %240 = sbr.rel (0) target = $region101
    $region100: #{mlstm_fcn_forward.1} parent=1 // pred_region
      _
    $region101: #{mlstm_fcn_forward.1} parent=1 // pred_fallthru
      _
    // Predicated region
    $region102: #{mlstm_fcn_forward.1} parent=1 // pred_check
      _
    $region103: #{mlstm_fcn_forward.1} parent=1 // pred_check_branch
      %242 = sbr.rel (0) target = $region105
    $region104: #{mlstm_fcn_forward.1} parent=1 // pred_region
      _
    $region105: #{mlstm_fcn_forward.1} parent=1 // pred_fallthru
      _
    // Predicated region
    $region106: #{mlstm_fcn_forward.1} parent=1 // pred_check
      _
    $region107: #{mlstm_fcn_forward.1} parent=1 // pred_check_branch
      %244 = sbr.rel (0) target = $region109
    $region108: #{mlstm_fcn_forward.1} parent=1 // pred_region
      %s246 = ssub.s32 16, 16
      %247 = vsyncadd [#allocation30], %s246
      %s249 = sshll.u32 [#allocation29], 4
      %s250 = int_to_ptr.vmem [resolvable:$true] %s249
      %252 = dma.hbm_to_vmem [thread:$0]  %s26, 16, %s250, [#allocation30]
    $region109: #{mlstm_fcn_forward.1} parent=1 // pred_fallthru
      _
    // Predicated region
    $region110: #{mlstm_fcn_forward.1} parent=1 // pred_check
      _
    $region111: #{mlstm_fcn_forward.1} parent=1 // pred_check_branch
      %254 = sbr.rel (0) target = $region113
    $region112: #{mlstm_fcn_forward.1} parent=1 // pred_region
      %255 = dma.done [#allocation3], 128
    $region113: #{mlstm_fcn_forward.1} parent=1 // pred_fallthru
      _
    // Predicated region
    $region114: #{mlstm_fcn_forward.1} parent=1 // pred_check
      _
    $region115: #{mlstm_fcn_forward.1} parent=1 // pred_check_branch
      %257 = sbr.rel (0) target = $region117
    $region116: #{mlstm_fcn_forward.1} parent=1 // pred_region
      %258 = dma.done [#allocation6], 512
    $region117: #{mlstm_fcn_forward.1} parent=1 // pred_fallthru
      _
    // Predicated region
    $region118: #{mlstm_fcn_forward.1} parent=1 // pred_check
      _
    $region119: #{mlstm_fcn_forward.1} parent=1 // pred_check_branch
      %260 = sbr.rel (0) target = $region121
    $region120: #{mlstm_fcn_forward.1} parent=1 // pred_region
      %261 = dma.done [#allocation6], 16
    $region121: #{mlstm_fcn_forward.1} parent=1 // pred_fallthru
      _
    // Predicated region
    $region122: #{mlstm_fcn_forward.1} parent=1 // pred_check
      _
    $region123: #{mlstm_fcn_forward.1} parent=1 // pred_check_branch
      %263 = sbr.rel (0) target = $region125
    $region124: #{mlstm_fcn_forward.1} parent=1 // pred_region
      %264 = dma.done [#allocation9], 128
    $region125: #{mlstm_fcn_forward.1} parent=1 // pred_fallthru
      _
    // Predicated region
    $region126: #{mlstm_fcn_forward.1} parent=1 // pred_check
      _
    $region127: #{mlstm_fcn_forward.1} parent=1 // pred_check_branch
      %266 = sbr.rel (0) target = $region129
    $region128: #{mlstm_fcn_forward.1} parent=1 // pred_region
      %267 = dma.done [#allocation9], 16
    $region129: #{mlstm_fcn_forward.1} parent=1 // pred_fallthru
      _
    // Predicated region
    $region130: #{mlstm_fcn_forward.1} parent=1 // pred_check
      _
    $region131: #{mlstm_fcn_forward.1} parent=1 // pred_check_branch
      %269 = sbr.rel (0) target = $region133
    $region132: #{mlstm_fcn_forward.1} parent=1 // pred_region
      %270 = dma.done [#allocation12], 448
    $region133: #{mlstm_fcn_forward.1} parent=1 // pred_fallthru
      _
    // Predicated region
    $region134: #{mlstm_fcn_forward.1} parent=1 // pred_check
      _
    $region135: #{mlstm_fcn_forward.1} parent=1 // pred_check_branch
      %272 = sbr.rel (0) target = $region137
    $region136: #{mlstm_fcn_forward.1} parent=1 // pred_region
      %273 = dma.done [#allocation12], 16
    $region137: #{mlstm_fcn_forward.1} parent=1 // pred_fallthru
      _
    // Predicated region
    $region138: #{mlstm_fcn_forward.1} parent=1 // pred_check
      _
    $region139: #{mlstm_fcn_forward.1} parent=1 // pred_check_branch
      %275 = sbr.rel (0) target = $region141
    $region140: #{mlstm_fcn_forward.1} parent=1 // pred_region
      %276 = dma.done [#allocation15], 16
    $region141: #{mlstm_fcn_forward.1} parent=1 // pred_fallthru
      _
    // Predicated region
    $region142: #{mlstm_fcn_forward.1} parent=1 // pred_check
      _
    $region143: #{mlstm_fcn_forward.1} parent=1 // pred_check_branch
      %278 = sbr.rel (0) target = $region145
    $region144: #{mlstm_fcn_forward.1} parent=1 // pred_region
      %279 = dma.done [#allocation15], 64
    $region145: #{mlstm_fcn_forward.1} parent=1 // pred_fallthru
      _
    // Predicated region
    $region146: #{mlstm_fcn_forward.1} parent=1 // pred_check
      _
    $region147: #{mlstm_fcn_forward.1} parent=1 // pred_check_branch
      %281 = sbr.rel (0) target = $region149
    $region148: #{mlstm_fcn_forward.1} parent=1 // pred_region
      %282 = dma.done [#allocation18], 10240
    $region149: #{mlstm_fcn_forward.1} parent=1 // pred_fallthru
      _
    // Predicated region
    $region150: #{mlstm_fcn_forward.1} parent=1 // pred_check
      _
    $region151: #{mlstm_fcn_forward.1} parent=1 // pred_check_branch
      %284 = sbr.rel (0) target = $region153
    $region152: #{mlstm_fcn_forward.1} parent=1 // pred_region
      %285 = dma.done [#allocation18], 32
    $region153: #{mlstm_fcn_forward.1} parent=1 // pred_fallthru
      _
    // Predicated region
    $region154: #{mlstm_fcn_forward.1} parent=1 // pred_check
      _
    $region155: #{mlstm_fcn_forward.1} parent=1 // pred_check_branch
      %287 = sbr.rel (0) target = $region157
    $region156: #{mlstm_fcn_forward.1} parent=1 // pred_region
      %288 = dma.done [#allocation21], 32
    $region157: #{mlstm_fcn_forward.1} parent=1 // pred_fallthru
      _
    // Predicated region
    $region158: #{mlstm_fcn_forward.1} parent=1 // pred_check
      _
    $region159: #{mlstm_fcn_forward.1} parent=1 // pred_check_branch
      %290 = sbr.rel (0) target = $region161
    $region160: #{mlstm_fcn_forward.1} parent=1 // pred_region
      %291 = dma.done [#allocation21], 1280
    $region161: #{mlstm_fcn_forward.1} parent=1 // pred_fallthru
      _
    // Predicated region
    $region162: #{mlstm_fcn_forward.1} parent=1 // pred_check
      _
    $region163: #{mlstm_fcn_forward.1} parent=1 // pred_check_branch
      %293 = sbr.rel (0) target = $region165
    $region164: #{mlstm_fcn_forward.1} parent=1 // pred_region
      %294 = dma.done [#allocation24], 256
    $region165: #{mlstm_fcn_forward.1} parent=1 // pred_fallthru
      _
    // Predicated region
    $region166: #{mlstm_fcn_forward.1} parent=1 // pred_check
      _
    $region167: #{mlstm_fcn_forward.1} parent=1 // pred_check_branch
      %296 = sbr.rel (0) target = $region169
    $region168: #{mlstm_fcn_forward.1} parent=1 // pred_region
      %297 = dma.done [#allocation24], 16
    $region169: #{mlstm_fcn_forward.1} parent=1 // pred_fallthru
      _
    // Predicated region
    $region170: #{mlstm_fcn_forward.1} parent=1 // pred_check
      _
    $region171: #{mlstm_fcn_forward.1} parent=1 // pred_check_branch
      %299 = sbr.rel (0) target = $region173
    $region172: #{mlstm_fcn_forward.1} parent=1 // pred_region
      %300 = dma.done [#allocation27], 16
    $region173: #{mlstm_fcn_forward.1} parent=1 // pred_fallthru
      _
    // Predicated region
    $region174: #{mlstm_fcn_forward.1} parent=1 // pred_check
      _
    $region175: #{mlstm_fcn_forward.1} parent=1 // pred_check_branch
      %302 = sbr.rel (0) target = $region177
    $region176: #{mlstm_fcn_forward.1} parent=1 // pred_region
      %303 = dma.done [#allocation27], 768
    $region177: #{mlstm_fcn_forward.1} parent=1 // pred_fallthru
      _
    // Predicated region
    $region178: #{mlstm_fcn_forward.1} parent=1 // pred_check
      _
    $region179: #{mlstm_fcn_forward.1} parent=1 // pred_check_branch
      %305 = sbr.rel (0) target = $region181
    $region180: #{mlstm_fcn_forward.1} parent=1 // pred_region
      %306 = dma.done [#allocation30], 16
    $region181: #{mlstm_fcn_forward.1} parent=1 // pred_fallthru
      _
    %v308 = vld [vmem:[%s0] sm:$0xff]
    %v309 = vld [vmem:[%s0 + $0x8] sm:$0xff]
    %v310 = vld [vmem:[%s0 + $0x10] sm:$0xff]
    %v311 = vld [vmem:[%s0 + $0x18] sm:$0xff]
    %v312 = vld [vmem:[#allocation2] sm:$0xff]
    %v313 = vld [vmem:[#allocation7] sm:$0x1]
    %v315 = vlaneseq
    %v316 = vshrl.u32 %v315, 7
    %v317 = vsub.s32 0, %v316
    %v318 = vrot.slane %v313, %v317
    %vm320 = vcmask 64512
    %v322 = vsel %vm320, %v308, 0
    %v325 = vsel %vm320, %v309, 0
    %v328 = vsel %vm320, %v310, 0
    %v331 = vsel %vm320, %v311, 0
    %333 = vmatprep.subr.mxu0 0.0
    %334 = vmatpush1.msra.mxu0 %v312
    %335 = vmatprep.subr.mxu0 0.0
    %336 = vmatpush1.msra.mxu0 0.0
    %337 = vmatprep.subr.mxu0 0.0
    %338 = vmatpush1.msra.mxu0 0.0
    %339 = vmatprep.subr.mxu0 0.0
    %340 = vmatpush1.msra.mxu0 0.0
    %341 = vmatprep.subr.mxu0 0.0
    %342 = vmatpush1.msra.mxu0 0.0
    %343 = vmatprep.subr.mxu0 0.0
    %344 = vmatpush1.msra.mxu0 0.0
    %345 = vmatprep.subr.mxu0 0.0
    %346 = vmatpush1.msra.mxu0 0.0
    %347 = vmatprep.subr.mxu0 0.0
    %348 = vmatpush1.msra.mxu0 0.0
    %349 = vmatprep.subr.mxu0 0.0
    %350 = vmatpush1.msra.mxu0 0.0
    %351 = vmatprep.subr.mxu0 0.0
    %352 = vmatpush1.msra.mxu0 0.0
    %353 = vmatprep.subr.mxu0 0.0
    %354 = vmatpush1.msra.mxu0 0.0
    %355 = vmatprep.subr.mxu0 0.0
    %356 = vmatpush1.msra.mxu0 0.0
    %357 = vmatprep.subr.mxu0 0.0
    %358 = vmatpush1.msra.mxu0 0.0
    %359 = vmatprep.subr.mxu0 0.0
    %360 = vmatpush1.msra.mxu0 0.0
    %361 = vmatprep.subr.mxu0 0.0
    %362 = vmatpush1.msra.mxu0 0.0
    %363 = vmatprep.subr.mxu0 0.0
    %364 = vmatpush1.msra.mxu0 0.0
    %365 = vmatprep.subr.mxu0 0.0
    %366 = vmatpush1.msra.mxu0 0.0
    %367 = vmatprep.subr.mxu0 0.0
    %368 = vmatpush1.msra.mxu0 0.0
    %369 = vmatprep.subr.mxu0 0.0
    %370 = vmatpush1.msra.mxu0 0.0
    %371 = vmatprep.subr.mxu0 0.0
    %372 = vmatpush1.msra.mxu0 0.0
    %373 = vmatprep.subr.mxu0 0.0
    %374 = vmatpush1.msra.mxu0 0.0
    %375 = vmatprep.subr.mxu0 0.0
    %376 = vmatpush1.msra.mxu0 0.0
    %377 = vmatprep.subr.mxu0 0.0
    %378 = vmatpush1.msra.mxu0 0.0
    %379 = vmatprep.subr.mxu0 0.0
    %380 = vmatpush1.msra.mxu0 0.0
    %381 = vmatprep.subr.mxu0 0.0
    %382 = vmatpush1.msra.mxu0 0.0
    %383 = vmatprep.subr.mxu0 0.0
    %384 = vmatpush1.msra.mxu0 0.0
    %385 = vmatprep.subr.mxu0 0.0
    %386 = vmatpush1.msra.mxu0 0.0
    %387 = vmatprep.subr.mxu0 0.0
    %388 = vmatpush1.msra.mxu0 0.0
    %389 = vmatprep.subr.mxu0 0.0
    %390 = vmatpush1.msra.mxu0 0.0
    %391 = vmatprep.subr.mxu0 0.0
    %392 = vmatpush1.msra.mxu0 0.0
    %393 = vmatprep.subr.mxu0 0.0
    %394 = vmatpush1.msra.mxu0 0.0
    %395 = vmatprep.subr.mxu0 0.0
    %396 = vmatpush1.msra.mxu0 0.0
    %397 = vmatprep.mubr.f32.mxu0 0.0
    %398 = vmatmul.mubr.f32.gmra.mrb[0].mxu0 %v322
    %v399 = vpop.f32.mrb[0].mxu0
    %v400 = vadd.f32 %v318, %v399
    %v401 = vpop.f32.mrb[0].mxu0
    %402 = vmatprep.mubr.f32.mxu0 0.0
    %403 = vmatmul.mubr.f32.gmra.mrb[0].mxu0 %v325
    %v404 = vpop.f32.mrb[0].mxu0
    %v405 = vadd.f32 %v318, %v404
    %v406 = vpop.f32.mrb[0].mxu0
    %407 = vmatprep.mubr.f32.mxu0 0.0
    %408 = vmatmul.mubr.f32.gmra.mrb[0].mxu0 %v328
    %v409 = vpop.f32.mrb[0].mxu0
    %v410 = vadd.f32 %v318, %v409
    %v411 = vpop.f32.mrb[0].mxu0
    %412 = vmatprep.mubr.f32.mxu0 0.0
    %413 = vmatmul.mubr.f32.gmra.mrb[0].mxu0 %v331
    %v414 = vpop.f32.mrb[0].mxu0
    %v415 = vadd.f32 %v318, %v414
    %v416 = vpop.f32.mrb[0].mxu0
    %417 = vdwg.mxu0
    %v418 = vld [vmem:[#allocation5] sm:$0xff]
    %v419 = vld [vmem:[#allocation5 + $0x8] sm:$0xff]
    %v420 = vld [vmem:[#allocation5 + $0x10] sm:$0xff]
    %v421 = vld [vmem:[#allocation5 + $0x18] sm:$0xff]
    %vm422 = vcmask 261120
    %v424 = vsel %vm422, 0.0, 0
    %426 = vmatprep.subr.mxu0 0.0
    %427 = vmatpush1.msra.mxu0 %v418
    %428 = vmatprep.subr.mxu0 0.0
    %429 = vmatpush1.msra.mxu0 %v419
    %430 = vmatprep.subr.mxu0 0.0
    %431 = vmatpush1.msra.mxu0 %v420
    %432 = vmatprep.subr.mxu0 0.0
    %433 = vmatpush1.msra.mxu0 %v421
    %434 = vmatprep.subr.mxu0 0.0
    %435 = vmatpush1.msra.mxu0 0.0
    %436 = vmatprep.subr.mxu0 0.0
    %437 = vmatpush1.msra.mxu0 0.0
    %438 = vmatprep.subr.mxu0 0.0
    %439 = vmatpush1.msra.mxu0 0.0
    %440 = vmatprep.subr.mxu0 0.0
    %441 = vmatpush1.msra.mxu0 0.0
    %442 = vmatprep.subr.mxu0 0.0
    %443 = vmatpush1.msra.mxu0 0.0
    %444 = vmatprep.subr.mxu0 0.0
    %445 = vmatpush1.msra.mxu0 0.0
    %446 = vmatprep.subr.mxu0 0.0
    %447 = vmatpush1.msra.mxu0 0.0
    %448 = vmatprep.subr.mxu0 0.0
    %449 = vmatpush1.msra.mxu0 0.0
    %450 = vmatprep.subr.mxu0 0.0
    %451 = vmatpush1.msra.mxu0 0.0
    %452 = vmatprep.subr.mxu0 0.0
    %453 = vmatpush1.msra.mxu0 0.0
    %454 = vmatprep.subr.mxu0 0.0
    %455 = vmatpush1.msra.mxu0 0.0
    %456 = vmatprep.subr.mxu0 0.0
    %457 = vmatpush1.msra.mxu0 0.0
    %458 = vmatprep.subr.mxu0 0.0
    %459 = vmatpush1.msra.mxu0 0.0
    %460 = vmatprep.subr.mxu0 0.0
    %461 = vmatpush1.msra.mxu0 0.0
    %462 = vmatprep.subr.mxu0 0.0
    %463 = vmatpush1.msra.mxu0 0.0
    %464 = vmatprep.subr.mxu0 0.0
    %465 = vmatpush1.msra.mxu0 0.0
    %466 = vmatprep.subr.mxu0 0.0
    %467 = vmatpush1.msra.mxu0 0.0
    %468 = vmatprep.subr.mxu0 0.0
    %469 = vmatpush1.msra.mxu0 0.0
    %470 = vmatprep.subr.mxu0 0.0
    %471 = vmatpush1.msra.mxu0 0.0
    %472 = vmatprep.subr.mxu0 0.0
    %473 = vmatpush1.msra.mxu0 0.0
    %474 = vmatprep.subr.mxu0 0.0
    %475 = vmatpush1.msra.mxu0 0.0
    %476 = vmatprep.subr.mxu0 0.0
    %477 = vmatpush1.msra.mxu0 0.0
    %478 = vmatprep.subr.mxu0 0.0
    %479 = vmatpush1.msra.mxu0 0.0
    %480 = vmatprep.subr.mxu0 0.0
    %481 = vmatpush1.msra.mxu0 0.0
    %482 = vmatprep.subr.mxu0 0.0
    %483 = vmatpush1.msra.mxu0 0.0
    %484 = vmatprep.subr.mxu0 0.0
    %485 = vmatpush1.msra.mxu0 0.0
    %486 = vmatprep.subr.mxu0 0.0
    %487 = vmatpush1.msra.mxu0 0.0
    %488 = vmatprep.subr.mxu0 0.0
    %489 = vmatpush1.msra.mxu0 0.0
    %490 = vmatprep.mubr.f32.mxu0 0.0
    %491 = vmatmul.mubr.f32.gmra.mrb[0].mxu0 %v424
    %v492 = vpop.f32.mrb[0].mxu0
    %v493 = vadd.f32 0.0, %v492
    %v494 = vpop.f32.mrb[0].mxu0
    %495 = vdwg.mxu0
    %v496 = vadd.f32 %v400, %v493
    %v497 = vxor.u32 %v496, 2147483648
    %v498 = vmul.f32 %v497, 1.442695
    %v499 = vpow.pop %v498
    %v500 = vadd.f32 %v499, 1.0
    %v501 = vrcp.pop %v500
    %v502 = vmul.f32 1.0, %v501
    %v503 = vtanh.pop %v496
    %v504 = vmul.f32 %v502, 0.0
    %506 = vrot.lane.b32.xlu0 %v503, 32
    %v507 = vpop.permute.xlu0 %506
    %v509 = vmul.f32 %v502, %v507
    %511 = vrot.lane.b32.xlu0 %v509, 32
    %v512 = vpop.permute.xlu0 %511
    %v514 = vadd.f32 %v504, %v512
    %v515 = vtanh.pop %v514
    %517 = vrot.lane.b32.xlu0 %v515, 32
    %v518 = vpop.permute.xlu0 %517
    %v520 = vmul.f32 %v502, %v518
    %522 = vrot.lane.b32.xlu0 %v520, 64
    %v523 = vpop.permute.xlu0 %522
    %v524 = vsel %vm422, %v523, 0
    %526 = vmatprep.subr.mxu0 0.0
    %527 = vmatpush1.msra.mxu0 %v418
    %528 = vmatprep.subr.mxu0 0.0
    %529 = vmatpush1.msra.mxu0 %v419
    %530 = vmatprep.subr.mxu0 0.0
    %531 = vmatpush1.msra.mxu0 %v420
    %532 = vmatprep.subr.mxu0 0.0
    %533 = vmatpush1.msra.mxu0 %v421
    %534 = vmatprep.subr.mxu0 0.0
    %535 = vmatpush1.msra.mxu0 0.0
    %536 = vmatprep.subr.mxu0 0.0
    %537 = vmatpush1.msra.mxu0 0.0
    %538 = vmatprep.subr.mxu0 0.0
    %539 = vmatpush1.msra.mxu0 0.0
    %540 = vmatprep.subr.mxu0 0.0
    %541 = vmatpush1.msra.mxu0 0.0
    %542 = vmatprep.subr.mxu0 0.0
    %543 = vmatpush1.msra.mxu0 0.0
    %544 = vmatprep.subr.mxu0 0.0
    %545 = vmatpush1.msra.mxu0 0.0
    %546 = vmatprep.subr.mxu0 0.0
    %547 = vmatpush1.msra.mxu0 0.0
    %548 = vmatprep.subr.mxu0 0.0
    %549 = vmatpush1.msra.mxu0 0.0
    %550 = vmatprep.subr.mxu0 0.0
    %551 = vmatpush1.msra.mxu0 0.0
    %552 = vmatprep.subr.mxu0 0.0
    %553 = vmatpush1.msra.mxu0 0.0
    %554 = vmatprep.subr.mxu0 0.0
    %555 = vmatpush1.msra.mxu0 0.0
    %556 = vmatprep.subr.mxu0 0.0
    %557 = vmatpush1.msra.mxu0 0.0
    %558 = vmatprep.subr.mxu0 0.0
    %559 = vmatpush1.msra.mxu0 0.0
    %560 = vmatprep.subr.mxu0 0.0
    %561 = vmatpush1.msra.mxu0 0.0
    %562 = vmatprep.subr.mxu0 0.0
    %563 = vmatpush1.msra.mxu0 0.0
    %564 = vmatprep.subr.mxu0 0.0
    %565 = vmatpush1.msra.mxu0 0.0
    %566 = vmatprep.subr.mxu0 0.0
    %567 = vmatpush1.msra.mxu0 0.0
    %568 = vmatprep.subr.mxu0 0.0
    %569 = vmatpush1.msra.mxu0 0.0
    %570 = vmatprep.subr.mxu0 0.0
    %571 = vmatpush1.msra.mxu0 0.0
    %572 = vmatprep.subr.mxu0 0.0
    %573 = vmatpush1.msra.mxu0 0.0
    %574 = vmatprep.subr.mxu0 0.0
    %575 = vmatpush1.msra.mxu0 0.0
    %576 = vmatprep.subr.mxu0 0.0
    %577 = vmatpush1.msra.mxu0 0.0
    %578 = vmatprep.subr.mxu0 0.0
    %579 = vmatpush1.msra.mxu0 0.0
    %580 = vmatprep.subr.mxu0 0.0
    %581 = vmatpush1.msra.mxu0 0.0
    %582 = vmatprep.subr.mxu0 0.0
    %583 = vmatpush1.msra.mxu0 0.0
    %584 = vmatprep.subr.mxu0 0.0
    %585 = vmatpush1.msra.mxu0 0.0
    %586 = vmatprep.subr.mxu0 0.0
    %587 = vmatpush1.msra.mxu0 0.0
    %588 = vmatprep.subr.mxu0 0.0
    %589 = vmatpush1.msra.mxu0 0.0
    %590 = vmatprep.mubr.f32.mxu0 0.0
    %591 = vmatmul.mubr.f32.gmra.mrb[0].mxu0 %v524
    %v592 = vpop.f32.mrb[0].mxu0
    %v593 = vadd.f32 0.0, %v592
    %v594 = vpop.f32.mrb[0].mxu0
    %595 = vdwg.mxu0
    %v597 = vrot.slane %v593, 6
    %v599 = vadd.f32 %v400, %v597
    %v600 = vxor.u32 %v599, 2147483648
    %v601 = vmul.f32 %v600, 1.442695
    %v602 = vpow.pop %v601
    %v603 = vadd.f32 %v602, 1.0
    %v604 = vrcp.pop %v603
    %v605 = vmul.f32 1.0, %v604
    %v606 = vtanh.pop %v599
    %v608 = vrot.slane %v514, 6
    %v610 = vmul.f32 %v605, %v608
    %612 = vrot.lane.b32.xlu0 %v606, 32
    %v613 = vpop.permute.xlu0 %612
    %v615 = vmul.f32 %v605, %v613
    %617 = vrot.lane.b32.xlu0 %v615, 32
    %v618 = vpop.permute.xlu0 %617
    %v620 = vadd.f32 %v610, %v618
    %v621 = vtanh.pop %v620
    %623 = vrot.lane.b32.xlu0 %v621, 32
    %v624 = vpop.permute.xlu0 %623
    %v626 = vmul.f32 %v605, %v624
    %v628 = vrot.slane %v626, 2
    %629 = vrot.lane.b32.xlu0 %v628, 64
    %v630 = vpop.permute.xlu0 %629
    %v631 = vsel %vm422, %v630, 0
    %633 = vmatprep.subr.mxu0 0.0
    %634 = vmatpush1.msra.mxu0 %v418
    %635 = vmatprep.subr.mxu0 0.0
    %636 = vmatpush1.msra.mxu0 %v419
    %637 = vmatprep.subr.mxu0 0.0
    %638 = vmatpush1.msra.mxu0 %v420
    %639 = vmatprep.subr.mxu0 0.0
    %640 = vmatpush1.msra.mxu0 %v421
    %641 = vmatprep.subr.mxu0 0.0
    %642 = vmatpush1.msra.mxu0 0.0
    %643 = vmatprep.subr.mxu0 0.0
    %644 = vmatpush1.msra.mxu0 0.0
    %645 = vmatprep.subr.mxu0 0.0
    %646 = vmatpush1.msra.mxu0 0.0
    %647 = vmatprep.subr.mxu0 0.0
    %648 = vmatpush1.msra.mxu0 0.0
    %649 = vmatprep.subr.mxu0 0.0
    %650 = vmatpush1.msra.mxu0 0.0
    %651 = vmatprep.subr.mxu0 0.0
    %652 = vmatpush1.msra.mxu0 0.0
    %653 = vmatprep.subr.mxu0 0.0
    %654 = vmatpush1.msra.mxu0 0.0
    %655 = vmatprep.subr.mxu0 0.0
    %656 = vmatpush1.msra.mxu0 0.0
    %657 = vmatprep.subr.mxu0 0.0
    %658 = vmatpush1.msra.mxu0 0.0
    %659 = vmatprep.subr.mxu0 0.0
    %660 = vmatpush1.msra.mxu0 0.0
    %661 = vmatprep.subr.mxu0 0.0
    %662 = vmatpush1.msra.mxu0 0.0
    %663 = vmatprep.subr.mxu0 0.0
    %664 = vmatpush1.msra.mxu0 0.0
    %665 = vmatprep.subr.mxu0 0.0
    %666 = vmatpush1.msra.mxu0 0.0
    %667 = vmatprep.subr.mxu0 0.0
    %668 = vmatpush1.msra.mxu0 0.0
    %669 = vmatprep.subr.mxu0 0.0
    %670 = vmatpush1.msra.mxu0 0.0
    %671 = vmatprep.subr.mxu0 0.0
    %672 = vmatpush1.msra.mxu0 0.0
    %673 = vmatprep.subr.mxu0 0.0
    %674 = vmatpush1.msra.mxu0 0.0
    %675 = vmatprep.subr.mxu0 0.0
    %676 = vmatpush1.msra.mxu0 0.0
    %677 = vmatprep.subr.mxu0 0.0
    %678 = vmatpush1.msra.mxu0 0.0
    %679 = vmatprep.subr.mxu0 0.0
    %680 = vmatpush1.msra.mxu0 0.0
    %681 = vmatprep.subr.mxu0 0.0
    %682 = vmatpush1.msra.mxu0 0.0
    %683 = vmatprep.subr.mxu0 0.0
    %684 = vmatpush1.msra.mxu0 0.0
    %685 = vmatprep.subr.mxu0 0.0
    %686 = vmatpush1.msra.mxu0 0.0
    %687 = vmatprep.subr.mxu0 0.0
    %688 = vmatpush1.msra.mxu0 0.0
    %689 = vmatprep.subr.mxu0 0.0
    %690 = vmatpush1.msra.mxu0 0.0
    %691 = vmatprep.subr.mxu0 0.0
    %692 = vmatpush1.msra.mxu0 0.0
    %693 = vmatprep.subr.mxu0 0.0
    %694 = vmatpush1.msra.mxu0 0.0
    %695 = vmatprep.subr.mxu0 0.0
    %696 = vmatpush1.msra.mxu0 0.0
    %697 = vmatprep.mubr.f32.mxu0 0.0
    %698 = vmatmul.mubr.f32.gmra.mrb[0].mxu0 %v631
    %v699 = vpop.f32.mrb[0].mxu0
    %v700 = vadd.f32 0.0, %v699
    %v701 = vpop.f32.mrb[0].mxu0
    %702 = vdwg.mxu0
    %v704 = vrot.slane %v700, 4
    %v706 = vadd.f32 %v400, %v704
    %v707 = vxor.u32 %v706, 2147483648
    %v708 = vmul.f32 %v707, 1.442695
    %v709 = vpow.pop %v708
    %v710 = vadd.f32 %v709, 1.0
    %v711 = vrcp.pop %v710
    %v712 = vmul.f32 1.0, %v711
    %v713 = vtanh.pop %v706
    %v715 = vrot.slane %v620, 6
    %v717 = vmul.f32 %v712, %v715
    %719 = vrot.lane.b32.xlu0 %v713, 32
    %v720 = vpop.permute.xlu0 %719
    %v722 = vmul.f32 %v712, %v720
    %724 = vrot.lane.b32.xlu0 %v722, 32
    %v725 = vpop.permute.xlu0 %724
    %v727 = vadd.f32 %v717, %v725
    %v728 = vtanh.pop %v727
    %730 = vrot.lane.b32.xlu0 %v728, 32
    %v731 = vpop.permute.xlu0 %730
    %v733 = vmul.f32 %v712, %v731
    %v735 = vrot.slane %v733, 4
    %736 = vrot.lane.b32.xlu0 %v735, 64
    %v737 = vpop.permute.xlu0 %736
    %v738 = vsel %vm422, %v737, 0
    %740 = vmatprep.subr.mxu0 0.0
    %741 = vmatpush1.msra.mxu0 %v418
    %742 = vmatprep.subr.mxu0 0.0
    %743 = vmatpush1.msra.mxu0 %v419
    %744 = vmatprep.subr.mxu0 0.0
    %745 = vmatpush1.msra.mxu0 %v420
    %746 = vmatprep.subr.mxu0 0.0
    %747 = vmatpush1.msra.mxu0 %v421
    %748 = vmatprep.subr.mxu0 0.0
    %749 = vmatpush1.msra.mxu0 0.0
    %750 = vmatprep.subr.mxu0 0.0
    %751 = vmatpush1.msra.mxu0 0.0
    %752 = vmatprep.subr.mxu0 0.0
    %753 = vmatpush1.msra.mxu0 0.0
    %754 = vmatprep.subr.mxu0 0.0
    %755 = vmatpush1.msra.mxu0 0.0
    %756 = vmatprep.subr.mxu0 0.0
    %757 = vmatpush1.msra.mxu0 0.0
    %758 = vmatprep.subr.mxu0 0.0
    %759 = vmatpush1.msra.mxu0 0.0
    %760 = vmatprep.subr.mxu0 0.0
    %761 = vmatpush1.msra.mxu0 0.0
    %762 = vmatprep.subr.mxu0 0.0
    %763 = vmatpush1.msra.mxu0 0.0
    %764 = vmatprep.subr.mxu0 0.0
    %765 = vmatpush1.msra.mxu0 0.0
    %766 = vmatprep.subr.mxu0 0.0
    %767 = vmatpush1.msra.mxu0 0.0
    %768 = vmatprep.subr.mxu0 0.0
    %769 = vmatpush1.msra.mxu0 0.0
    %770 = vmatprep.subr.mxu0 0.0
    %771 = vmatpush1.msra.mxu0 0.0
    %772 = vmatprep.subr.mxu0 0.0
    %773 = vmatpush1.msra.mxu0 0.0
    %774 = vmatprep.subr.mxu0 0.0
    %775 = vmatpush1.msra.mxu0 0.0
    %776 = vmatprep.subr.mxu0 0.0
    %777 = vmatpush1.msra.mxu0 0.0
    %778 = vmatprep.subr.mxu0 0.0
    %779 = vmatpush1.msra.mxu0 0.0
    %780 = vmatprep.subr.mxu0 0.0
    %781 = vmatpush1.msra.mxu0 0.0
    %782 = vmatprep.subr.mxu0 0.0
    %783 = vmatpush1.msra.mxu0 0.0
    %784 = vmatprep.subr.mxu0 0.0
    %785 = vmatpush1.msra.mxu0 0.0
    %786 = vmatprep.subr.mxu0 0.0
    %787 = vmatpush1.msra.mxu0 0.0
    %788 = vmatprep.subr.mxu0 0.0
    %789 = vmatpush1.msra.mxu0 0.0
    %790 = vmatprep.subr.mxu0 0.0
    %791 = vmatpush1.msra.mxu0 0.0
    %792 = vmatprep.subr.mxu0 0.0
    %793 = vmatpush1.msra.mxu0 0.0
    %794 = vmatprep.subr.mxu0 0.0
    %795 = vmatpush1.msra.mxu0 0.0
    %796 = vmatprep.subr.mxu0 0.0
    %797 = vmatpush1.msra.mxu0 0.0
    %798 = vmatprep.subr.mxu0 0.0
    %799 = vmatpush1.msra.mxu0 0.0
    %800 = vmatprep.subr.mxu0 0.0
    %801 = vmatpush1.msra.mxu0 0.0
    %802 = vmatprep.subr.mxu0 0.0
    %803 = vmatpush1.msra.mxu0 0.0
    %804 = vmatprep.mubr.f32.mxu0 0.0
    %805 = vmatmul.mubr.f32.gmra.mrb[0].mxu0 %v738
    %v806 = vpop.f32.mrb[0].mxu0
    %v807 = vadd.f32 0.0, %v806
    %v808 = vpop.f32.mrb[0].mxu0
    %809 = vdwg.mxu0
    %v811 = vrot.slane %v807, 2
    %v813 = vadd.f32 %v400, %v811
    %v814 = vxor.u32 %v813, 2147483648
    %v815 = vmul.f32 %v814, 1.442695
    %v816 = vpow.pop %v815
    %v817 = vadd.f32 %v816, 1.0
    %v818 = vrcp.pop %v817
    %v819 = vmul.f32 1.0, %v818
    %v820 = vtanh.pop %v813
    %v822 = vrot.slane %v727, 6
    %v824 = vmul.f32 %v819, %v822
    %826 = vrot.lane.b32.xlu0 %v820, 32
    %v827 = vpop.permute.xlu0 %826
    %v829 = vmul.f32 %v819, %v827
    %831 = vrot.lane.b32.xlu0 %v829, 32
    %v832 = vpop.permute.xlu0 %831
    %v834 = vadd.f32 %v824, %v832
    %v835 = vtanh.pop %v834
    %837 = vrot.lane.b32.xlu0 %v835, 32
    %v838 = vpop.permute.xlu0 %837
    %v840 = vmul.f32 %v819, %v838
    %v842 = vrot.slane %v840, 6
    %843 = vrot.lane.b32.xlu0 %v842, 64
    %v844 = vpop.permute.xlu0 %843
    %v845 = vsel %vm422, %v844, 0
    %847 = vmatprep.subr.mxu0 0.0
    %848 = vmatpush1.msra.mxu0 %v418
    %849 = vmatprep.subr.mxu0 0.0
    %850 = vmatpush1.msra.mxu0 %v419
    %851 = vmatprep.subr.mxu0 0.0
    %852 = vmatpush1.msra.mxu0 %v420
    %853 = vmatprep.subr.mxu0 0.0
    %854 = vmatpush1.msra.mxu0 %v421
    %855 = vmatprep.subr.mxu0 0.0
    %856 = vmatpush1.msra.mxu0 0.0
    %857 = vmatprep.subr.mxu0 0.0
    %858 = vmatpush1.msra.mxu0 0.0
    %859 = vmatprep.subr.mxu0 0.0
    %860 = vmatpush1.msra.mxu0 0.0
    %861 = vmatprep.subr.mxu0 0.0
    %862 = vmatpush1.msra.mxu0 0.0
    %863 = vmatprep.subr.mxu0 0.0
    %864 = vmatpush1.msra.mxu0 0.0
    %865 = vmatprep.subr.mxu0 0.0
    %866 = vmatpush1.msra.mxu0 0.0
    %867 = vmatprep.subr.mxu0 0.0
    %868 = vmatpush1.msra.mxu0 0.0
    %869 = vmatprep.subr.mxu0 0.0
    %870 = vmatpush1.msra.mxu0 0.0
    %871 = vmatprep.subr.mxu0 0.0
    %872 = vmatpush1.msra.mxu0 0.0
    %873 = vmatprep.subr.mxu0 0.0
    %874 = vmatpush1.msra.mxu0 0.0
    %875 = vmatprep.subr.mxu0 0.0
    %876 = vmatpush1.msra.mxu0 0.0
    %877 = vmatprep.subr.mxu0 0.0
    %878 = vmatpush1.msra.mxu0 0.0
    %879 = vmatprep.subr.mxu0 0.0
    %880 = vmatpush1.msra.mxu0 0.0
    %881 = vmatprep.subr.mxu0 0.0
    %882 = vmatpush1.msra.mxu0 0.0
    %883 = vmatprep.subr.mxu0 0.0
    %884 = vmatpush1.msra.mxu0 0.0
    %885 = vmatprep.subr.mxu0 0.0
    %886 = vmatpush1.msra.mxu0 0.0
    %887 = vmatprep.subr.mxu0 0.0
    %888 = vmatpush1.msra.mxu0 0.0
    %889 = vmatprep.subr.mxu0 0.0
    %890 = vmatpush1.msra.mxu0 0.0
    %891 = vmatprep.subr.mxu0 0.0
    %892 = vmatpush1.msra.mxu0 0.0
    %893 = vmatprep.subr.mxu0 0.0
    %894 = vmatpush1.msra.mxu0 0.0
    %895 = vmatprep.subr.mxu0 0.0
    %896 = vmatpush1.msra.mxu0 0.0
    %897 = vmatprep.subr.mxu0 0.0
    %898 = vmatpush1.msra.mxu0 0.0
    %899 = vmatprep.subr.mxu0 0.0
    %900 = vmatpush1.msra.mxu0 0.0
    %901 = vmatprep.subr.mxu0 0.0
    %902 = vmatpush1.msra.mxu0 0.0
    %903 = vmatprep.subr.mxu0 0.0
    %904 = vmatpush1.msra.mxu0 0.0
    %905 = vmatprep.subr.mxu0 0.0
    %906 = vmatpush1.msra.mxu0 0.0
    %907 = vmatprep.subr.mxu0 0.0
    %908 = vmatpush1.msra.mxu0 0.0
    %909 = vmatprep.subr.mxu0 0.0
    %910 = vmatpush1.msra.mxu0 0.0
    %911 = vmatprep.mubr.f32.mxu0 0.0
    %912 = vmatmul.mubr.f32.gmra.mrb[0].mxu0 %v845
    %v913 = vpop.f32.mrb[0].mxu0
    %v914 = vadd.f32 0.0, %v913
    %v915 = vpop.f32.mrb[0].mxu0
    %916 = vdwg.mxu0
    %v917 = vadd.f32 %v405, %v914
    %v918 = vxor.u32 %v917, 2147483648
    %v919 = vmul.f32 %v918, 1.442695
    %v920 = vpow.pop %v919
    %v921 = vadd.f32 %v920, 1.0
    %v922 = vrcp.pop %v921
    %v923 = vmul.f32 1.0, %v922
    %v924 = vtanh.pop %v917
    %v926 = vrot.slane %v834, 6
    %v928 = vmul.f32 %v923, %v926
    %930 = vrot.lane.b32.xlu0 %v924, 32
    %v931 = vpop.permute.xlu0 %930
    %v933 = vmul.f32 %v923, %v931
    %935 = vrot.lane.b32.xlu0 %v933, 32
    %v936 = vpop.permute.xlu0 %935
    %v938 = vadd.f32 %v928, %v936
    %v939 = vtanh.pop %v938
    %941 = vrot.lane.b32.xlu0 %v939, 32
    %v942 = vpop.permute.xlu0 %941
    %v944 = vmul.f32 %v923, %v942
    %946 = vrot.lane.b32.xlu0 %v944, 64
    %v947 = vpop.permute.xlu0 %946
    %v948 = vsel %vm422, %v947, 0
    %950 = vmatprep.subr.mxu0 0.0
    %951 = vmatpush1.msra.mxu0 %v418
    %952 = vmatprep.subr.mxu0 0.0
    %953 = vmatpush1.msra.mxu0 %v419
    %954 = vmatprep.subr.mxu0 0.0
    %955 = vmatpush1.msra.mxu0 %v420
    %956 = vmatprep.subr.mxu0 0.0
    %957 = vmatpush1.msra.mxu0 %v421
    %958 = vmatprep.subr.mxu0 0.0
    %959 = vmatpush1.msra.mxu0 0.0
    %960 = vmatprep.subr.mxu0 0.0
    %961 = vmatpush1.msra.mxu0 0.0
    %962 = vmatprep.subr.mxu0 0.0
    %963 = vmatpush1.msra.mxu0 0.0
    %964 = vmatprep.subr.mxu0 0.0
    %965 = vmatpush1.msra.mxu0 0.0
    %966 = vmatprep.subr.mxu0 0.0
    %967 = vmatpush1.msra.mxu0 0.0
    %968 = vmatprep.subr.mxu0 0.0
    %969 = vmatpush1.msra.mxu0 0.0
    %970 = vmatprep.subr.mxu0 0.0
    %971 = vmatpush1.msra.mxu0 0.0
    %972 = vmatprep.subr.mxu0 0.0
    %973 = vmatpush1.msra.mxu0 0.0
    %974 = vmatprep.subr.mxu0 0.0
    %975 = vmatpush1.msra.mxu0 0.0
    %976 = vmatprep.subr.mxu0 0.0
    %977 = vmatpush1.msra.mxu0 0.0
    %978 = vmatprep.subr.mxu0 0.0
    %979 = vmatpush1.msra.mxu0 0.0
    %980 = vmatprep.subr.mxu0 0.0
    %981 = vmatpush1.msra.mxu0 0.0
    %982 = vmatprep.subr.mxu0 0.0
    %983 = vmatpush1.msra.mxu0 0.0
    %984 = vmatprep.subr.mxu0 0.0
    %985 = vmatpush1.msra.mxu0 0.0
    %986 = vmatprep.subr.mxu0 0.0
    %987 = vmatpush1.msra.mxu0 0.0
    %988 = vmatprep.subr.mxu0 0.0
    %989 = vmatpush1.msra.mxu0 0.0
    %990 = vmatprep.subr.mxu0 0.0
    %991 = vmatpush1.msra.mxu0 0.0
    %992 = vmatprep.subr.mxu0 0.0
    %993 = vmatpush1.msra.mxu0 0.0
    %994 = vmatprep.subr.mxu0 0.0
    %995 = vmatpush1.msra.mxu0 0.0
    %996 = vmatprep.subr.mxu0 0.0
    %997 = vmatpush1.msra.mxu0 0.0
    %998 = vmatprep.subr.mxu0 0.0
    %999 = vmatpush1.msra.mxu0 0.0
    %1000 = vmatprep.subr.mxu0 0.0
    %1001 = vmatpush1.msra.mxu0 0.0
    %1002 = vmatprep.subr.mxu0 0.0
    %1003 = vmatpush1.msra.mxu0 0.0
    %1004 = vmatprep.subr.mxu0 0.0
    %1005 = vmatpush1.msra.mxu0 0.0
    %1006 = vmatprep.subr.mxu0 0.0
    %1007 = vmatpush1.msra.mxu0 0.0
    %1008 = vmatprep.subr.mxu0 0.0
    %1009 = vmatpush1.msra.mxu0 0.0
    %1010 = vmatprep.subr.mxu0 0.0
    %1011 = vmatpush1.msra.mxu0 0.0
    %1012 = vmatprep.subr.mxu0 0.0
    %1013 = vmatpush1.msra.mxu0 0.0
    %1014 = vmatprep.mubr.f32.mxu0 0.0
    %1015 = vmatmul.mubr.f32.gmra.mrb[0].mxu0 %v948
    %v1016 = vpop.f32.mrb[0].mxu0
    %v1017 = vadd.f32 0.0, %v1016
    %v1018 = vpop.f32.mrb[0].mxu0
    %1019 = vdwg.mxu0
    %v1021 = vrot.slane %v1017, 6
    %v1023 = vadd.f32 %v405, %v1021
    %v1024 = vxor.u32 %v1023, 2147483648
    %v1025 = vmul.f32 %v1024, 1.442695
    %v1026 = vpow.pop %v1025
    %v1027 = vadd.f32 %v1026, 1.0
    %v1028 = vrcp.pop %v1027
    %v1029 = vmul.f32 1.0, %v1028
    %v1030 = vtanh.pop %v1023
    %v1032 = vrot.slane %v938, 6
    %v1034 = vmul.f32 %v1029, %v1032
    %1036 = vrot.lane.b32.xlu0 %v1030, 32
    %v1037 = vpop.permute.xlu0 %1036
    %v1039 = vmul.f32 %v1029, %v1037
    %1041 = vrot.lane.b32.xlu0 %v1039, 32
    %v1042 = vpop.permute.xlu0 %1041
    %v1044 = vadd.f32 %v1034, %v1042
    %v1045 = vtanh.pop %v1044
    %1047 = vrot.lane.b32.xlu0 %v1045, 32
    %v1048 = vpop.permute.xlu0 %1047
    %v1050 = vmul.f32 %v1029, %v1048
    %v1052 = vrot.slane %v1050, 2
    %1053 = vrot.lane.b32.xlu0 %v1052, 64
    %v1054 = vpop.permute.xlu0 %1053
    %v1055 = vsel %vm422, %v1054, 0
    %1057 = vmatprep.subr.mxu0 0.0
    %1058 = vmatpush1.msra.mxu0 %v418
    %1059 = vmatprep.subr.mxu0 0.0
    %1060 = vmatpush1.msra.mxu0 %v419
    %1061 = vmatprep.subr.mxu0 0.0
    %1062 = vmatpush1.msra.mxu0 %v420
    %1063 = vmatprep.subr.mxu0 0.0
    %1064 = vmatpush1.msra.mxu0 %v421
    %1065 = vmatprep.subr.mxu0 0.0
    %1066 = vmatpush1.msra.mxu0 0.0
    %1067 = vmatprep.subr.mxu0 0.0
    %1068 = vmatpush1.msra.mxu0 0.0
    %1069 = vmatprep.subr.mxu0 0.0
    %1070 = vmatpush1.msra.mxu0 0.0
    %1071 = vmatprep.subr.mxu0 0.0
    %1072 = vmatpush1.msra.mxu0 0.0
    %1073 = vmatprep.subr.mxu0 0.0
    %1074 = vmatpush1.msra.mxu0 0.0
    %1075 = vmatprep.subr.mxu0 0.0
    %1076 = vmatpush1.msra.mxu0 0.0
    %1077 = vmatprep.subr.mxu0 0.0
    %1078 = vmatpush1.msra.mxu0 0.0
    %1079 = vmatprep.subr.mxu0 0.0
    %1080 = vmatpush1.msra.mxu0 0.0
    %1081 = vmatprep.subr.mxu0 0.0
    %1082 = vmatpush1.msra.mxu0 0.0
    %1083 = vmatprep.subr.mxu0 0.0
    %1084 = vmatpush1.msra.mxu0 0.0
    %1085 = vmatprep.subr.mxu0 0.0
    %1086 = vmatpush1.msra.mxu0 0.0
    %1087 = vmatprep.subr.mxu0 0.0
    %1088 = vmatpush1.msra.mxu0 0.0
    %1089 = vmatprep.subr.mxu0 0.0
    %1090 = vmatpush1.msra.mxu0 0.0
    %1091 = vmatprep.subr.mxu0 0.0
    %1092 = vmatpush1.msra.mxu0 0.0
    %1093 = vmatprep.subr.mxu0 0.0
    %1094 = vmatpush1.msra.mxu0 0.0
    %1095 = vmatprep.subr.mxu0 0.0
    %1096 = vmatpush1.msra.mxu0 0.0
    %1097 = vmatprep.subr.mxu0 0.0
    %1098 = vmatpush1.msra.mxu0 0.0
    %1099 = vmatprep.subr.mxu0 0.0
    %1100 = vmatpush1.msra.mxu0 0.0
    %1101 = vmatprep.subr.mxu0 0.0
    %1102 = vmatpush1.msra.mxu0 0.0
    %1103 = vmatprep.subr.mxu0 0.0
    %1104 = vmatpush1.msra.mxu0 0.0
    %1105 = vmatprep.subr.mxu0 0.0
    %1106 = vmatpush1.msra.mxu0 0.0
    %1107 = vmatprep.subr.mxu0 0.0
    %1108 = vmatpush1.msra.mxu0 0.0
    %1109 = vmatprep.subr.mxu0 0.0
    %1110 = vmatpush1.msra.mxu0 0.0
    %1111 = vmatprep.subr.mxu0 0.0
    %1112 = vmatpush1.msra.mxu0 0.0
    %1113 = vmatprep.subr.mxu0 0.0
    %1114 = vmatpush1.msra.mxu0 0.0
    %1115 = vmatprep.subr.mxu0 0.0
    %1116 = vmatpush1.msra.mxu0 0.0
    %1117 = vmatprep.subr.mxu0 0.0
    %1118 = vmatpush1.msra.mxu0 0.0
    %1119 = vmatprep.subr.mxu0 0.0
    %1120 = vmatpush1.msra.mxu0 0.0
    %1121 = vmatprep.mubr.f32.mxu0 0.0
    %1122 = vmatmul.mubr.f32.gmra.mrb[0].mxu0 %v1055
    %v1123 = vpop.f32.mrb[0].mxu0
    %v1124 = vadd.f32 0.0, %v1123
    %v1125 = vpop.f32.mrb[0].mxu0
    %1126 = vdwg.mxu0
    %v1128 = vrot.slane %v1124, 4
    %v1130 = vadd.f32 %v405, %v1128
    %v1131 = vxor.u32 %v1130, 2147483648
    %v1132 = vmul.f32 %v1131, 1.442695
    %v1133 = vpow.pop %v1132
    %v1134 = vadd.f32 %v1133, 1.0
    %v1135 = vrcp.pop %v1134
    %v1136 = vmul.f32 1.0, %v1135
    %v1137 = vtanh.pop %v1130
    %v1139 = vrot.slane %v1044, 6
    %v1141 = vmul.f32 %v1136, %v1139
    %1143 = vrot.lane.b32.xlu0 %v1137, 32
    %v1144 = vpop.permute.xlu0 %1143
    %v1146 = vmul.f32 %v1136, %v1144
    %1148 = vrot.lane.b32.xlu0 %v1146, 32
    %v1149 = vpop.permute.xlu0 %1148
    %v1151 = vadd.f32 %v1141, %v1149
    %v1152 = vtanh.pop %v1151
    %1154 = vrot.lane.b32.xlu0 %v1152, 32
    %v1155 = vpop.permute.xlu0 %1154
    %v1157 = vmul.f32 %v1136, %v1155
    %v1159 = vrot.slane %v1157, 4
    %1160 = vrot.lane.b32.xlu0 %v1159, 64
    %v1161 = vpop.permute.xlu0 %1160
    %v1162 = vsel %vm422, %v1161, 0
    %1164 = vmatprep.subr.mxu0 0.0
    %1165 = vmatpush1.msra.mxu0 %v418
    %1166 = vmatprep.subr.mxu0 0.0
    %1167 = vmatpush1.msra.mxu0 %v419
    %1168 = vmatprep.subr.mxu0 0.0
    %1169 = vmatpush1.msra.mxu0 %v420
    %1170 = vmatprep.subr.mxu0 0.0
    %1171 = vmatpush1.msra.mxu0 %v421
    %1172 = vmatprep.subr.mxu0 0.0
    %1173 = vmatpush1.msra.mxu0 0.0
    %1174 = vmatprep.subr.mxu0 0.0
    %1175 = vmatpush1.msra.mxu0 0.0
    %1176 = vmatprep.subr.mxu0 0.0
    %1177 = vmatpush1.msra.mxu0 0.0
    %1178 = vmatprep.subr.mxu0 0.0
    %1179 = vmatpush1.msra.mxu0 0.0
    %1180 = vmatprep.subr.mxu0 0.0
    %1181 = vmatpush1.msra.mxu0 0.0
    %1182 = vmatprep.subr.mxu0 0.0
    %1183 = vmatpush1.msra.mxu0 0.0
    %1184 = vmatprep.subr.mxu0 0.0
    %1185 = vmatpush1.msra.mxu0 0.0
    %1186 = vmatprep.subr.mxu0 0.0
    %1187 = vmatpush1.msra.mxu0 0.0
    %1188 = vmatprep.subr.mxu0 0.0
    %1189 = vmatpush1.msra.mxu0 0.0
    %1190 = vmatprep.subr.mxu0 0.0
    %1191 = vmatpush1.msra.mxu0 0.0
    %1192 = vmatprep.subr.mxu0 0.0
    %1193 = vmatpush1.msra.mxu0 0.0
    %1194 = vmatprep.subr.mxu0 0.0
    %1195 = vmatpush1.msra.mxu0 0.0
    %1196 = vmatprep.subr.mxu0 0.0
    %1197 = vmatpush1.msra.mxu0 0.0
    %1198 = vmatprep.subr.mxu0 0.0
    %1199 = vmatpush1.msra.mxu0 0.0
    %1200 = vmatprep.subr.mxu0 0.0
    %1201 = vmatpush1.msra.mxu0 0.0
    %1202 = vmatprep.subr.mxu0 0.0
    %1203 = vmatpush1.msra.mxu0 0.0
    %1204 = vmatprep.subr.mxu0 0.0
    %1205 = vmatpush1.msra.mxu0 0.0
    %1206 = vmatprep.subr.mxu0 0.0
    %1207 = vmatpush1.msra.mxu0 0.0
    %1208 = vmatprep.subr.mxu0 0.0
    %1209 = vmatpush1.msra.mxu0 0.0
    %1210 = vmatprep.subr.mxu0 0.0
    %1211 = vmatpush1.msra.mxu0 0.0
    %1212 = vmatprep.subr.mxu0 0.0
    %1213 = vmatpush1.msra.mxu0 0.0
    %1214 = vmatprep.subr.mxu0 0.0
    %1215 = vmatpush1.msra.mxu0 0.0
    %1216 = vmatprep.subr.mxu0 0.0
    %1217 = vmatpush1.msra.mxu0 0.0
    %1218 = vmatprep.subr.mxu0 0.0
    %1219 = vmatpush1.msra.mxu0 0.0
    %1220 = vmatprep.subr.mxu0 0.0
    %1221 = vmatpush1.msra.mxu0 0.0
    %1222 = vmatprep.subr.mxu0 0.0
    %1223 = vmatpush1.msra.mxu0 0.0
    %1224 = vmatprep.subr.mxu0 0.0
    %1225 = vmatpush1.msra.mxu0 0.0
    %1226 = vmatprep.subr.mxu0 0.0
    %1227 = vmatpush1.msra.mxu0 0.0
    %1228 = vmatprep.mubr.f32.mxu0 0.0
    %1229 = vmatmul.mubr.f32.gmra.mrb[0].mxu0 %v1162
    %v1230 = vpop.f32.mrb[0].mxu0
    %v1231 = vadd.f32 0.0, %v1230
    %v1232 = vpop.f32.mrb[0].mxu0
    %1233 = vdwg.mxu0
    %v1235 = vrot.slane %v1231, 2
    %v1237 = vadd.f32 %v405, %v1235
    %v1238 = vxor.u32 %v1237, 2147483648
    %v1239 = vmul.f32 %v1238, 1.442695
    %v1240 = vpow.pop %v1239
    %v1241 = vadd.f32 %v1240, 1.0
    %v1242 = vrcp.pop %v1241
    %v1243 = vmul.f32 1.0, %v1242
    %v1244 = vtanh.pop %v1237
    %v1246 = vrot.slane %v1151, 6
    %v1248 = vmul.f32 %v1243, %v1246
    %1250 = vrot.lane.b32.xlu0 %v1244, 32
    %v1251 = vpop.permute.xlu0 %1250
    %v1253 = vmul.f32 %v1243, %v1251
    %1255 = vrot.lane.b32.xlu0 %v1253, 32
    %v1256 = vpop.permute.xlu0 %1255
    %v1258 = vadd.f32 %v1248, %v1256
    %v1259 = vtanh.pop %v1258
    %1261 = vrot.lane.b32.xlu0 %v1259, 32
    %v1262 = vpop.permute.xlu0 %1261
    %v1264 = vmul.f32 %v1243, %v1262
    %v1266 = vrot.slane %v1264, 6
    %1267 = vrot.lane.b32.xlu0 %v1266, 64
    %v1268 = vpop.permute.xlu0 %1267
    %v1269 = vsel %vm422, %v1268, 0
    %1271 = vmatprep.subr.mxu0 0.0
    %1272 = vmatpush1.msra.mxu0 %v418
    %1273 = vmatprep.subr.mxu0 0.0
    %1274 = vmatpush1.msra.mxu0 %v419
    %1275 = vmatprep.subr.mxu0 0.0
    %1276 = vmatpush1.msra.mxu0 %v420
    %1277 = vmatprep.subr.mxu0 0.0
    %1278 = vmatpush1.msra.mxu0 %v421
    %1279 = vmatprep.subr.mxu0 0.0
    %1280 = vmatpush1.msra.mxu0 0.0
    %1281 = vmatprep.subr.mxu0 0.0
    %1282 = vmatpush1.msra.mxu0 0.0
    %1283 = vmatprep.subr.mxu0 0.0
    %1284 = vmatpush1.msra.mxu0 0.0
    %1285 = vmatprep.subr.mxu0 0.0
    %1286 = vmatpush1.msra.mxu0 0.0
    %1287 = vmatprep.subr.mxu0 0.0
    %1288 = vmatpush1.msra.mxu0 0.0
    %1289 = vmatprep.subr.mxu0 0.0
    %1290 = vmatpush1.msra.mxu0 0.0
    %1291 = vmatprep.subr.mxu0 0.0
    %1292 = vmatpush1.msra.mxu0 0.0
    %1293 = vmatprep.subr.mxu0 0.0
    %1294 = vmatpush1.msra.mxu0 0.0
    %1295 = vmatprep.subr.mxu0 0.0
    %1296 = vmatpush1.msra.mxu0 0.0
    %1297 = vmatprep.subr.mxu0 0.0
    %1298 = vmatpush1.msra.mxu0 0.0
    %1299 = vmatprep.subr.mxu0 0.0
    %1300 = vmatpush1.msra.mxu0 0.0
    %1301 = vmatprep.subr.mxu0 0.0
    %1302 = vmatpush1.msra.mxu0 0.0
    %1303 = vmatprep.subr.mxu0 0.0
    %1304 = vmatpush1.msra.mxu0 0.0
    %1305 = vmatprep.subr.mxu0 0.0
    %1306 = vmatpush1.msra.mxu0 0.0
    %1307 = vmatprep.subr.mxu0 0.0
    %1308 = vmatpush1.msra.mxu0 0.0
    %1309 = vmatprep.subr.mxu0 0.0
    %1310 = vmatpush1.msra.mxu0 0.0
    %1311 = vmatprep.subr.mxu0 0.0
    %1312 = vmatpush1.msra.mxu0 0.0
    %1313 = vmatprep.subr.mxu0 0.0
    %1314 = vmatpush1.msra.mxu0 0.0
    %1315 = vmatprep.subr.mxu0 0.0
    %1316 = vmatpush1.msra.mxu0 0.0
    %1317 = vmatprep.subr.mxu0 0.0
    %1318 = vmatpush1.msra.mxu0 0.0
    %1319 = vmatprep.subr.mxu0 0.0
    %1320 = vmatpush1.msra.mxu0 0.0
    %1321 = vmatprep.subr.mxu0 0.0
    %1322 = vmatpush1.msra.mxu0 0.0
    %1323 = vmatprep.subr.mxu0 0.0
    %1324 = vmatpush1.msra.mxu0 0.0
    %1325 = vmatprep.subr.mxu0 0.0
    %1326 = vmatpush1.msra.mxu0 0.0
    %1327 = vmatprep.subr.mxu0 0.0
    %1328 = vmatpush1.msra.mxu0 0.0
    %1329 = vmatprep.subr.mxu0 0.0
    %1330 = vmatpush1.msra.mxu0 0.0
    %1331 = vmatprep.subr.mxu0 0.0
    %1332 = vmatpush1.msra.mxu0 0.0
    %1333 = vmatprep.subr.mxu0 0.0
    %1334 = vmatpush1.msra.mxu0 0.0
    %1335 = vmatprep.mubr.f32.mxu0 0.0
    %1336 = vmatmul.mubr.f32.gmra.mrb[0].mxu0 %v1269
    %v1337 = vpop.f32.mrb[0].mxu0
    %v1338 = vadd.f32 0.0, %v1337
    %v1339 = vpop.f32.mrb[0].mxu0
    %1340 = vdwg.mxu0
    %v1341 = vadd.f32 %v410, %v1338
    %v1342 = vxor.u32 %v1341, 2147483648
    %v1343 = vmul.f32 %v1342, 1.442695
    %v1344 = vpow.pop %v1343
    %v1345 = vadd.f32 %v1344, 1.0
    %v1346 = vrcp.pop %v1345
    %v1347 = vmul.f32 1.0, %v1346
    %v1348 = vtanh.pop %v1341
    %v1350 = vrot.slane %v1258, 6
    %v1352 = vmul.f32 %v1347, %v1350
    %1354 = vrot.lane.b32.xlu0 %v1348, 32
    %v1355 = vpop.permute.xlu0 %1354
    %v1357 = vmul.f32 %v1347, %v1355
    %1359 = vrot.lane.b32.xlu0 %v1357, 32
    %v1360 = vpop.permute.xlu0 %1359
    %v1362 = vadd.f32 %v1352, %v1360
    %v1363 = vtanh.pop %v1362
    %1365 = vrot.lane.b32.xlu0 %v1363, 32
    %v1366 = vpop.permute.xlu0 %1365
    %v1368 = vmul.f32 %v1347, %v1366
    %1370 = vrot.lane.b32.xlu0 %v1368, 64
    %v1371 = vpop.permute.xlu0 %1370
    %v1372 = vsel %vm422, %v1371, 0
    %1374 = vmatprep.subr.mxu0 0.0
    %1375 = vmatpush1.msra.mxu0 %v418
    %1376 = vmatprep.subr.mxu0 0.0
    %1377 = vmatpush1.msra.mxu0 %v419
    %1378 = vmatprep.subr.mxu0 0.0
    %1379 = vmatpush1.msra.mxu0 %v420
    %1380 = vmatprep.subr.mxu0 0.0
    %1381 = vmatpush1.msra.mxu0 %v421
    %1382 = vmatprep.subr.mxu0 0.0
    %1383 = vmatpush1.msra.mxu0 0.0
    %1384 = vmatprep.subr.mxu0 0.0
    %1385 = vmatpush1.msra.mxu0 0.0
    %1386 = vmatprep.subr.mxu0 0.0
    %1387 = vmatpush1.msra.mxu0 0.0
    %1388 = vmatprep.subr.mxu0 0.0
    %1389 = vmatpush1.msra.mxu0 0.0
    %1390 = vmatprep.subr.mxu0 0.0
    %1391 = vmatpush1.msra.mxu0 0.0
    %1392 = vmatprep.subr.mxu0 0.0
    %1393 = vmatpush1.msra.mxu0 0.0
    %1394 = vmatprep.subr.mxu0 0.0
    %1395 = vmatpush1.msra.mxu0 0.0
    %1396 = vmatprep.subr.mxu0 0.0
    %1397 = vmatpush1.msra.mxu0 0.0
    %1398 = vmatprep.subr.mxu0 0.0
    %1399 = vmatpush1.msra.mxu0 0.0
    %1400 = vmatprep.subr.mxu0 0.0
    %1401 = vmatpush1.msra.mxu0 0.0
    %1402 = vmatprep.subr.mxu0 0.0
    %1403 = vmatpush1.msra.mxu0 0.0
    %1404 = vmatprep.subr.mxu0 0.0
    %1405 = vmatpush1.msra.mxu0 0.0
    %1406 = vmatprep.subr.mxu0 0.0
    %1407 = vmatpush1.msra.mxu0 0.0
    %1408 = vmatprep.subr.mxu0 0.0
    %1409 = vmatpush1.msra.mxu0 0.0
    %1410 = vmatprep.subr.mxu0 0.0
    %1411 = vmatpush1.msra.mxu0 0.0
    %1412 = vmatprep.subr.mxu0 0.0
    %1413 = vmatpush1.msra.mxu0 0.0
    %1414 = vmatprep.subr.mxu0 0.0
    %1415 = vmatpush1.msra.mxu0 0.0
    %1416 = vmatprep.subr.mxu0 0.0
    %1417 = vmatpush1.msra.mxu0 0.0
    %1418 = vmatprep.subr.mxu0 0.0
    %1419 = vmatpush1.msra.mxu0 0.0
    %1420 = vmatprep.subr.mxu0 0.0
    %1421 = vmatpush1.msra.mxu0 0.0
    %1422 = vmatprep.subr.mxu0 0.0
    %1423 = vmatpush1.msra.mxu0 0.0
    %1424 = vmatprep.subr.mxu0 0.0
    %1425 = vmatpush1.msra.mxu0 0.0
    %1426 = vmatprep.subr.mxu0 0.0
    %1427 = vmatpush1.msra.mxu0 0.0
    %1428 = vmatprep.subr.mxu0 0.0
    %1429 = vmatpush1.msra.mxu0 0.0
    %1430 = vmatprep.subr.mxu0 0.0
    %1431 = vmatpush1.msra.mxu0 0.0
    %1432 = vmatprep.subr.mxu0 0.0
    %1433 = vmatpush1.msra.mxu0 0.0
    %1434 = vmatprep.subr.mxu0 0.0
    %1435 = vmatpush1.msra.mxu0 0.0
    %1436 = vmatprep.subr.mxu0 0.0
    %1437 = vmatpush1.msra.mxu0 0.0
    %1438 = vmatprep.mubr.f32.mxu0 0.0
    %1439 = vmatmul.mubr.f32.gmra.mrb[0].mxu0 %v1372
    %v1440 = vpop.f32.mrb[0].mxu0
    %v1441 = vadd.f32 0.0, %v1440
    %v1442 = vpop.f32.mrb[0].mxu0
    %1443 = vdwg.mxu0
    %v1445 = vrot.slane %v1441, 6
    %v1447 = vadd.f32 %v410, %v1445
    %v1448 = vxor.u32 %v1447, 2147483648
    %v1449 = vmul.f32 %v1448, 1.442695
    %v1450 = vpow.pop %v1449
    %v1451 = vadd.f32 %v1450, 1.0
    %v1452 = vrcp.pop %v1451
    %v1453 = vmul.f32 1.0, %v1452
    %v1454 = vtanh.pop %v1447
    %v1456 = vrot.slane %v1362, 6
    %v1458 = vmul.f32 %v1453, %v1456
    %1460 = vrot.lane.b32.xlu0 %v1454, 32
    %v1461 = vpop.permute.xlu0 %1460
    %v1463 = vmul.f32 %v1453, %v1461
    %1465 = vrot.lane.b32.xlu0 %v1463, 32
    %v1466 = vpop.permute.xlu0 %1465
    %v1468 = vadd.f32 %v1458, %v1466
    %v1469 = vtanh.pop %v1468
    %1471 = vrot.lane.b32.xlu0 %v1469, 32
    %v1472 = vpop.permute.xlu0 %1471
    %v1474 = vmul.f32 %v1453, %v1472
    %v1476 = vrot.slane %v1474, 2
    %1477 = vrot.lane.b32.xlu0 %v1476, 64
    %v1478 = vpop.permute.xlu0 %1477
    %v1479 = vsel %vm422, %v1478, 0
    %1481 = vmatprep.subr.mxu0 0.0
    %1482 = vmatpush1.msra.mxu0 %v418
    %1483 = vmatprep.subr.mxu0 0.0
    %1484 = vmatpush1.msra.mxu0 %v419
    %1485 = vmatprep.subr.mxu0 0.0
    %1486 = vmatpush1.msra.mxu0 %v420
    %1487 = vmatprep.subr.mxu0 0.0
    %1488 = vmatpush1.msra.mxu0 %v421
    %1489 = vmatprep.subr.mxu0 0.0
    %1490 = vmatpush1.msra.mxu0 0.0
    %1491 = vmatprep.subr.mxu0 0.0
    %1492 = vmatpush1.msra.mxu0 0.0
    %1493 = vmatprep.subr.mxu0 0.0
    %1494 = vmatpush1.msra.mxu0 0.0
    %1495 = vmatprep.subr.mxu0 0.0
    %1496 = vmatpush1.msra.mxu0 0.0
    %1497 = vmatprep.subr.mxu0 0.0
    %1498 = vmatpush1.msra.mxu0 0.0
    %1499 = vmatprep.subr.mxu0 0.0
    %1500 = vmatpush1.msra.mxu0 0.0
    %1501 = vmatprep.subr.mxu0 0.0
    %1502 = vmatpush1.msra.mxu0 0.0
    %1503 = vmatprep.subr.mxu0 0.0
    %1504 = vmatpush1.msra.mxu0 0.0
    %1505 = vmatprep.subr.mxu0 0.0
    %1506 = vmatpush1.msra.mxu0 0.0
    %1507 = vmatprep.subr.mxu0 0.0
    %1508 = vmatpush1.msra.mxu0 0.0
    %1509 = vmatprep.subr.mxu0 0.0
    %1510 = vmatpush1.msra.mxu0 0.0
    %1511 = vmatprep.subr.mxu0 0.0
    %1512 = vmatpush1.msra.mxu0 0.0
    %1513 = vmatprep.subr.mxu0 0.0
    %1514 = vmatpush1.msra.mxu0 0.0
    %1515 = vmatprep.subr.mxu0 0.0
    %1516 = vmatpush1.msra.mxu0 0.0
    %1517 = vmatprep.subr.mxu0 0.0
    %1518 = vmatpush1.msra.mxu0 0.0
    %1519 = vmatprep.subr.mxu0 0.0
    %1520 = vmatpush1.msra.mxu0 0.0
    %1521 = vmatprep.subr.mxu0 0.0
    %1522 = vmatpush1.msra.mxu0 0.0
    %1523 = vmatprep.subr.mxu0 0.0
    %1524 = vmatpush1.msra.mxu0 0.0
    %1525 = vmatprep.subr.mxu0 0.0
    %1526 = vmatpush1.msra.mxu0 0.0
    %1527 = vmatprep.subr.mxu0 0.0
    %1528 = vmatpush1.msra.mxu0 0.0
    %1529 = vmatprep.subr.mxu0 0.0
    %1530 = vmatpush1.msra.mxu0 0.0
    %1531 = vmatprep.subr.mxu0 0.0
    %1532 = vmatpush1.msra.mxu0 0.0
    %1533 = vmatprep.subr.mxu0 0.0
    %1534 = vmatpush1.msra.mxu0 0.0
    %1535 = vmatprep.subr.mxu0 0.0
    %1536 = vmatpush1.msra.mxu0 0.0
    %1537 = vmatprep.subr.mxu0 0.0
    %1538 = vmatpush1.msra.mxu0 0.0
    %1539 = vmatprep.subr.mxu0 0.0
    %1540 = vmatpush1.msra.mxu0 0.0
    %1541 = vmatprep.subr.mxu0 0.0
    %1542 = vmatpush1.msra.mxu0 0.0
    %1543 = vmatprep.subr.mxu0 0.0
    %1544 = vmatpush1.msra.mxu0 0.0
    %1545 = vmatprep.mubr.f32.mxu0 0.0
    %1546 = vmatmul.mubr.f32.gmra.mrb[0].mxu0 %v1479
    %v1547 = vpop.f32.mrb[0].mxu0
    %v1548 = vadd.f32 0.0, %v1547
    %v1549 = vpop.f32.mrb[0].mxu0
    %1550 = vdwg.mxu0
    %v1552 = vrot.slane %v1548, 4
    %v1554 = vadd.f32 %v410, %v1552
    %v1555 = vxor.u32 %v1554, 2147483648
    %v1556 = vmul.f32 %v1555, 1.442695
    %v1557 = vpow.pop %v1556
    %v1558 = vadd.f32 %v1557, 1.0
    %v1559 = vrcp.pop %v1558
    %v1560 = vmul.f32 1.0, %v1559
    %v1561 = vtanh.pop %v1554
    %v1563 = vrot.slane %v1468, 6
    %v1565 = vmul.f32 %v1560, %v1563
    %1567 = vrot.lane.b32.xlu0 %v1561, 32
    %v1568 = vpop.permute.xlu0 %1567
    %v1570 = vmul.f32 %v1560, %v1568
    %1572 = vrot.lane.b32.xlu0 %v1570, 32
    %v1573 = vpop.permute.xlu0 %1572
    %v1575 = vadd.f32 %v1565, %v1573
    %v1576 = vtanh.pop %v1575
    %1578 = vrot.lane.b32.xlu0 %v1576, 32
    %v1579 = vpop.permute.xlu0 %1578
    %v1581 = vmul.f32 %v1560, %v1579
    %v1583 = vrot.slane %v1581, 4
    %1584 = vrot.lane.b32.xlu0 %v1583, 64
    %v1585 = vpop.permute.xlu0 %1584
    %v1586 = vsel %vm422, %v1585, 0
    %1588 = vmatprep.subr.mxu0 0.0
    %1589 = vmatpush1.msra.mxu0 %v418
    %1590 = vmatprep.subr.mxu0 0.0
    %1591 = vmatpush1.msra.mxu0 %v419
    %1592 = vmatprep.subr.mxu0 0.0
    %1593 = vmatpush1.msra.mxu0 %v420
    %1594 = vmatprep.subr.mxu0 0.0
    %1595 = vmatpush1.msra.mxu0 %v421
    %1596 = vmatprep.subr.mxu0 0.0
    %1597 = vmatpush1.msra.mxu0 0.0
    %1598 = vmatprep.subr.mxu0 0.0
    %1599 = vmatpush1.msra.mxu0 0.0
    %1600 = vmatprep.subr.mxu0 0.0
    %1601 = vmatpush1.msra.mxu0 0.0
    %1602 = vmatprep.subr.mxu0 0.0
    %1603 = vmatpush1.msra.mxu0 0.0
    %1604 = vmatprep.subr.mxu0 0.0
    %1605 = vmatpush1.msra.mxu0 0.0
    %1606 = vmatprep.subr.mxu0 0.0
    %1607 = vmatpush1.msra.mxu0 0.0
    %1608 = vmatprep.subr.mxu0 0.0
    %1609 = vmatpush1.msra.mxu0 0.0
    %1610 = vmatprep.subr.mxu0 0.0
    %1611 = vmatpush1.msra.mxu0 0.0
    %1612 = vmatprep.subr.mxu0 0.0
    %1613 = vmatpush1.msra.mxu0 0.0
    %1614 = vmatprep.subr.mxu0 0.0
    %1615 = vmatpush1.msra.mxu0 0.0
    %1616 = vmatprep.subr.mxu0 0.0
    %1617 = vmatpush1.msra.mxu0 0.0
    %1618 = vmatprep.subr.mxu0 0.0
    %1619 = vmatpush1.msra.mxu0 0.0
    %1620 = vmatprep.subr.mxu0 0.0
    %1621 = vmatpush1.msra.mxu0 0.0
    %1622 = vmatprep.subr.mxu0 0.0
    %1623 = vmatpush1.msra.mxu0 0.0
    %1624 = vmatprep.subr.mxu0 0.0
    %1625 = vmatpush1.msra.mxu0 0.0
    %1626 = vmatprep.subr.mxu0 0.0
    %1627 = vmatpush1.msra.mxu0 0.0
    %1628 = vmatprep.subr.mxu0 0.0
    %1629 = vmatpush1.msra.mxu0 0.0
    %1630 = vmatprep.subr.mxu0 0.0
    %1631 = vmatpush1.msra.mxu0 0.0
    %1632 = vmatprep.subr.mxu0 0.0
    %1633 = vmatpush1.msra.mxu0 0.0
    %1634 = vmatprep.subr.mxu0 0.0
    %1635 = vmatpush1.msra.mxu0 0.0
    %1636 = vmatprep.subr.mxu0 0.0
    %1637 = vmatpush1.msra.mxu0 0.0
    %1638 = vmatprep.subr.mxu0 0.0
    %1639 = vmatpush1.msra.mxu0 0.0
    %1640 = vmatprep.subr.mxu0 0.0
    %1641 = vmatpush1.msra.mxu0 0.0
    %1642 = vmatprep.subr.mxu0 0.0
    %1643 = vmatpush1.msra.mxu0 0.0
    %1644 = vmatprep.subr.mxu0 0.0
    %1645 = vmatpush1.msra.mxu0 0.0
    %1646 = vmatprep.subr.mxu0 0.0
    %1647 = vmatpush1.msra.mxu0 0.0
    %1648 = vmatprep.subr.mxu0 0.0
    %1649 = vmatpush1.msra.mxu0 0.0
    %1650 = vmatprep.subr.mxu0 0.0
    %1651 = vmatpush1.msra.mxu0 0.0
    %1652 = vmatprep.mubr.f32.mxu0 0.0
    %1653 = vmatmul.mubr.f32.gmra.mrb[0].mxu0 %v1586
    %v1654 = vpop.f32.mrb[0].mxu0
    %v1655 = vadd.f32 0.0, %v1654
    %v1656 = vpop.f32.mrb[0].mxu0
    %1657 = vdwg.mxu0
    %v1659 = vrot.slane %v1655, 2
    %v1661 = vadd.f32 %v410, %v1659
    %v1662 = vxor.u32 %v1661, 2147483648
    %v1663 = vmul.f32 %v1662, 1.442695
    %v1664 = vpow.pop %v1663
    %v1665 = vadd.f32 %v1664, 1.0
    %v1666 = vrcp.pop %v1665
    %v1667 = vmul.f32 1.0, %v1666
    %v1668 = vtanh.pop %v1661
    %v1670 = vrot.slane %v1575, 6
    %v1672 = vmul.f32 %v1667, %v1670
    %1674 = vrot.lane.b32.xlu0 %v1668, 32
    %v1675 = vpop.permute.xlu0 %1674
    %v1677 = vmul.f32 %v1667, %v1675
    %1679 = vrot.lane.b32.xlu0 %v1677, 32
    %v1680 = vpop.permute.xlu0 %1679
    %v1682 = vadd.f32 %v1672, %v1680
    %v1683 = vtanh.pop %v1682
    %1685 = vrot.lane.b32.xlu0 %v1683, 32
    %v1686 = vpop.permute.xlu0 %1685
    %v1688 = vmul.f32 %v1667, %v1686
    %v1690 = vrot.slane %v1688, 6
    %1691 = vrot.lane.b32.xlu0 %v1690, 64
    %v1692 = vpop.permute.xlu0 %1691
    %v1693 = vsel %vm422, %v1692, 0
    %1695 = vmatprep.subr.mxu0 0.0
    %1696 = vmatpush1.msra.mxu0 %v418
    %1697 = vmatprep.subr.mxu0 0.0
    %1698 = vmatpush1.msra.mxu0 %v419
    %1699 = vmatprep.subr.mxu0 0.0
    %1700 = vmatpush1.msra.mxu0 %v420
    %1701 = vmatprep.subr.mxu0 0.0
    %1702 = vmatpush1.msra.mxu0 %v421
    %1703 = vmatprep.subr.mxu0 0.0
    %1704 = vmatpush1.msra.mxu0 0.0
    %1705 = vmatprep.subr.mxu0 0.0
    %1706 = vmatpush1.msra.mxu0 0.0
    %1707 = vmatprep.subr.mxu0 0.0
    %1708 = vmatpush1.msra.mxu0 0.0
    %1709 = vmatprep.subr.mxu0 0.0
    %1710 = vmatpush1.msra.mxu0 0.0
    %1711 = vmatprep.subr.mxu0 0.0
    %1712 = vmatpush1.msra.mxu0 0.0
    %1713 = vmatprep.subr.mxu0 0.0
    %1714 = vmatpush1.msra.mxu0 0.0
    %1715 = vmatprep.subr.mxu0 0.0
    %1716 = vmatpush1.msra.mxu0 0.0
    %1717 = vmatprep.subr.mxu0 0.0
    %1718 = vmatpush1.msra.mxu0 0.0
    %1719 = vmatprep.subr.mxu0 0.0
    %1720 = vmatpush1.msra.mxu0 0.0
    %1721 = vmatprep.subr.mxu0 0.0
    %1722 = vmatpush1.msra.mxu0 0.0
    %1723 = vmatprep.subr.mxu0 0.0
    %1724 = vmatpush1.msra.mxu0 0.0
    %1725 = vmatprep.subr.mxu0 0.0
    %1726 = vmatpush1.msra.mxu0 0.0
    %1727 = vmatprep.subr.mxu0 0.0
    %1728 = vmatpush1.msra.mxu0 0.0
    %1729 = vmatprep.subr.mxu0 0.0
    %1730 = vmatpush1.msra.mxu0 0.0
    %1731 = vmatprep.subr.mxu0 0.0
    %1732 = vmatpush1.msra.mxu0 0.0
    %1733 = vmatprep.subr.mxu0 0.0
    %1734 = vmatpush1.msra.mxu0 0.0
    %1735 = vmatprep.subr.mxu0 0.0
    %1736 = vmatpush1.msra.mxu0 0.0
    %1737 = vmatprep.subr.mxu0 0.0
    %1738 = vmatpush1.msra.mxu0 0.0
    %1739 = vmatprep.subr.mxu0 0.0
    %1740 = vmatpush1.msra.mxu0 0.0
    %1741 = vmatprep.subr.mxu0 0.0
    %1742 = vmatpush1.msra.mxu0 0.0
    %1743 = vmatprep.subr.mxu0 0.0
    %1744 = vmatpush1.msra.mxu0 0.0
    %1745 = vmatprep.subr.mxu0 0.0
    %1746 = vmatpush1.msra.mxu0 0.0
    %1747 = vmatprep.subr.mxu0 0.0
    %1748 = vmatpush1.msra.mxu0 0.0
    %1749 = vmatprep.subr.mxu0 0.0
    %1750 = vmatpush1.msra.mxu0 0.0
    %1751 = vmatprep.subr.mxu0 0.0
    %1752 = vmatpush1.msra.mxu0 0.0
    %1753 = vmatprep.subr.mxu0 0.0
    %1754 = vmatpush1.msra.mxu0 0.0
    %1755 = vmatprep.subr.mxu0 0.0
    %1756 = vmatpush1.msra.mxu0 0.0
    %1757 = vmatprep.subr.mxu0 0.0
    %1758 = vmatpush1.msra.mxu0 0.0
    %1759 = vmatprep.mubr.f32.mxu0 0.0
    %1760 = vmatmul.mubr.f32.gmra.mrb[0].mxu0 %v1693
    %v1761 = vpop.f32.mrb[0].mxu0
    %v1762 = vadd.f32 0.0, %v1761
    %v1763 = vpop.f32.mrb[0].mxu0
    %1764 = vdwg.mxu0
    %v1765 = vadd.f32 %v415, %v1762
    %v1766 = vxor.u32 %v1765, 2147483648
    %v1767 = vmul.f32 %v1766, 1.442695
    %v1768 = vpow.pop %v1767
    %v1769 = vadd.f32 %v1768, 1.0
    %v1770 = vrcp.pop %v1769
    %v1771 = vmul.f32 1.0, %v1770
    %v1772 = vtanh.pop %v1765
    %v1774 = vrot.slane %v1682, 6
    %v1776 = vmul.f32 %v1771, %v1774
    %1778 = vrot.lane.b32.xlu0 %v1772, 32
    %v1779 = vpop.permute.xlu0 %1778
    %v1781 = vmul.f32 %v1771, %v1779
    %1783 = vrot.lane.b32.xlu0 %v1781, 32
    %v1784 = vpop.permute.xlu0 %1783
    %v1786 = vadd.f32 %v1776, %v1784
    %v1787 = vtanh.pop %v1786
    %1789 = vrot.lane.b32.xlu0 %v1787, 32
    %v1790 = vpop.permute.xlu0 %1789
    %v1792 = vmul.f32 %v1771, %v1790
    %1794 = vrot.lane.b32.xlu0 %v1792, 64
    %v1795 = vpop.permute.xlu0 %1794
    %v1796 = vsel %vm422, %v1795, 0
    %1798 = vmatprep.subr.mxu0 0.0
    %1799 = vmatpush1.msra.mxu0 %v418
    %1800 = vmatprep.subr.mxu0 0.0
    %1801 = vmatpush1.msra.mxu0 %v419
    %1802 = vmatprep.subr.mxu0 0.0
    %1803 = vmatpush1.msra.mxu0 %v420
    %1804 = vmatprep.subr.mxu0 0.0
    %1805 = vmatpush1.msra.mxu0 %v421
    %1806 = vmatprep.subr.mxu0 0.0
    %1807 = vmatpush1.msra.mxu0 0.0
    %1808 = vmatprep.subr.mxu0 0.0
    %1809 = vmatpush1.msra.mxu0 0.0
    %1810 = vmatprep.subr.mxu0 0.0
    %1811 = vmatpush1.msra.mxu0 0.0
    %1812 = vmatprep.subr.mxu0 0.0
    %1813 = vmatpush1.msra.mxu0 0.0
    %1814 = vmatprep.subr.mxu0 0.0
    %1815 = vmatpush1.msra.mxu0 0.0
    %1816 = vmatprep.subr.mxu0 0.0
    %1817 = vmatpush1.msra.mxu0 0.0
    %1818 = vmatprep.subr.mxu0 0.0
    %1819 = vmatpush1.msra.mxu0 0.0
    %1820 = vmatprep.subr.mxu0 0.0
    %1821 = vmatpush1.msra.mxu0 0.0
    %1822 = vmatprep.subr.mxu0 0.0
    %1823 = vmatpush1.msra.mxu0 0.0
    %1824 = vmatprep.subr.mxu0 0.0
    %1825 = vmatpush1.msra.mxu0 0.0
    %1826 = vmatprep.subr.mxu0 0.0
    %1827 = vmatpush1.msra.mxu0 0.0
    %1828 = vmatprep.subr.mxu0 0.0
    %1829 = vmatpush1.msra.mxu0 0.0
    %1830 = vmatprep.subr.mxu0 0.0
    %1831 = vmatpush1.msra.mxu0 0.0
    %1832 = vmatprep.subr.mxu0 0.0
    %1833 = vmatpush1.msra.mxu0 0.0
    %1834 = vmatprep.subr.mxu0 0.0
    %1835 = vmatpush1.msra.mxu0 0.0
    %1836 = vmatprep.subr.mxu0 0.0
    %1837 = vmatpush1.msra.mxu0 0.0
    %1838 = vmatprep.subr.mxu0 0.0
    %1839 = vmatpush1.msra.mxu0 0.0
    %1840 = vmatprep.subr.mxu0 0.0
    %1841 = vmatpush1.msra.mxu0 0.0
    %1842 = vmatprep.subr.mxu0 0.0
    %1843 = vmatpush1.msra.mxu0 0.0
    %1844 = vmatprep.subr.mxu0 0.0
    %1845 = vmatpush1.msra.mxu0 0.0
    %1846 = vmatprep.subr.mxu0 0.0
    %1847 = vmatpush1.msra.mxu0 0.0
    %1848 = vmatprep.subr.mxu0 0.0
    %1849 = vmatpush1.msra.mxu0 0.0
    %1850 = vmatprep.subr.mxu0 0.0
    %1851 = vmatpush1.msra.mxu0 0.0
    %1852 = vmatprep.subr.mxu0 0.0
    %1853 = vmatpush1.msra.mxu0 0.0
    %1854 = vmatprep.subr.mxu0 0.0
    %1855 = vmatpush1.msra.mxu0 0.0
    %1856 = vmatprep.subr.mxu0 0.0
    %1857 = vmatpush1.msra.mxu0 0.0
    %1858 = vmatprep.subr.mxu0 0.0
    %1859 = vmatpush1.msra.mxu0 0.0
    %1860 = vmatprep.subr.mxu0 0.0
    %1861 = vmatpush1.msra.mxu0 0.0
    %1862 = vmatprep.mubr.f32.mxu0 0.0
    %1863 = vmatmul.mubr.f32.gmra.mrb[0].mxu0 %v1796
    %v1864 = vpop.f32.mrb[0].mxu0
    %v1865 = vadd.f32 0.0, %v1864
    %v1866 = vpop.f32.mrb[0].mxu0
    %1867 = vdwg.mxu0
    %v1869 = vrot.slane %v1865, 6
    %v1871 = vadd.f32 %v415, %v1869
    %v1872 = vxor.u32 %v1871, 2147483648
    %v1873 = vmul.f32 %v1872, 1.442695
    %v1874 = vpow.pop %v1873
    %v1875 = vadd.f32 %v1874, 1.0
    %v1876 = vrcp.pop %v1875
    %v1877 = vmul.f32 1.0, %v1876
    %v1878 = vtanh.pop %v1871
    %v1880 = vrot.slane %v1786, 6
    %v1882 = vmul.f32 %v1877, %v1880
    %1884 = vrot.lane.b32.xlu0 %v1878, 32
    %v1885 = vpop.permute.xlu0 %1884
    %v1887 = vmul.f32 %v1877, %v1885
    %1889 = vrot.lane.b32.xlu0 %v1887, 32
    %v1890 = vpop.permute.xlu0 %1889
    %v1892 = vadd.f32 %v1882, %v1890
    %v1893 = vtanh.pop %v1892
    %1895 = vrot.lane.b32.xlu0 %v1893, 32
    %v1896 = vpop.permute.xlu0 %1895
    %v1898 = vmul.f32 %v1877, %v1896
    %v1900 = vrot.slane %v1898, 2
    %1901 = vrot.lane.b32.xlu0 %v1900, 64
    %v1902 = vpop.permute.xlu0 %1901
    %v1903 = vsel %vm422, %v1902, 0
    %1905 = vmatprep.subr.mxu0 0.0
    %1906 = vmatpush1.msra.mxu0 %v418
    %1907 = vmatprep.subr.mxu0 0.0
    %1908 = vmatpush1.msra.mxu0 %v419
    %1909 = vmatprep.subr.mxu0 0.0
    %1910 = vmatpush1.msra.mxu0 %v420
    %1911 = vmatprep.subr.mxu0 0.0
    %1912 = vmatpush1.msra.mxu0 %v421
    %1913 = vmatprep.subr.mxu0 0.0
    %1914 = vmatpush1.msra.mxu0 0.0
    %1915 = vmatprep.subr.mxu0 0.0
    %1916 = vmatpush1.msra.mxu0 0.0
    %1917 = vmatprep.subr.mxu0 0.0
    %1918 = vmatpush1.msra.mxu0 0.0
    %1919 = vmatprep.subr.mxu0 0.0
    %1920 = vmatpush1.msra.mxu0 0.0
    %1921 = vmatprep.subr.mxu0 0.0
    %1922 = vmatpush1.msra.mxu0 0.0
    %1923 = vmatprep.subr.mxu0 0.0
    %1924 = vmatpush1.msra.mxu0 0.0
    %1925 = vmatprep.subr.mxu0 0.0
    %1926 = vmatpush1.msra.mxu0 0.0
    %1927 = vmatprep.subr.mxu0 0.0
    %1928 = vmatpush1.msra.mxu0 0.0
    %1929 = vmatprep.subr.mxu0 0.0
    %1930 = vmatpush1.msra.mxu0 0.0
    %1931 = vmatprep.subr.mxu0 0.0
    %1932 = vmatpush1.msra.mxu0 0.0
    %1933 = vmatprep.subr.mxu0 0.0
    %1934 = vmatpush1.msra.mxu0 0.0
    %1935 = vmatprep.subr.mxu0 0.0
    %1936 = vmatpush1.msra.mxu0 0.0
    %1937 = vmatprep.subr.mxu0 0.0
    %1938 = vmatpush1.msra.mxu0 0.0
    %1939 = vmatprep.subr.mxu0 0.0
    %1940 = vmatpush1.msra.mxu0 0.0
    %1941 = vmatprep.subr.mxu0 0.0
    %1942 = vmatpush1.msra.mxu0 0.0
    %1943 = vmatprep.subr.mxu0 0.0
    %1944 = vmatpush1.msra.mxu0 0.0
    %1945 = vmatprep.subr.mxu0 0.0
    %1946 = vmatpush1.msra.mxu0 0.0
    %1947 = vmatprep.subr.mxu0 0.0
    %1948 = vmatpush1.msra.mxu0 0.0
    %1949 = vmatprep.subr.mxu0 0.0
    %1950 = vmatpush1.msra.mxu0 0.0
    %1951 = vmatprep.subr.mxu0 0.0
    %1952 = vmatpush1.msra.mxu0 0.0
    %1953 = vmatprep.subr.mxu0 0.0
    %1954 = vmatpush1.msra.mxu0 0.0
    %1955 = vmatprep.subr.mxu0 0.0
    %1956 = vmatpush1.msra.mxu0 0.0
    %1957 = vmatprep.subr.mxu0 0.0
    %1958 = vmatpush1.msra.mxu0 0.0
    %1959 = vmatprep.subr.mxu0 0.0
    %1960 = vmatpush1.msra.mxu0 0.0
    %1961 = vmatprep.subr.mxu0 0.0
    %1962 = vmatpush1.msra.mxu0 0.0
    %1963 = vmatprep.subr.mxu0 0.0
    %1964 = vmatpush1.msra.mxu0 0.0
    %1965 = vmatprep.subr.mxu0 0.0
    %1966 = vmatpush1.msra.mxu0 0.0
    %1967 = vmatprep.subr.mxu0 0.0
    %1968 = vmatpush1.msra.mxu0 0.0
    %1969 = vmatprep.mubr.f32.mxu0 0.0
    %1970 = vmatmul.mubr.f32.gmra.mrb[0].mxu0 %v1903
    %v1971 = vpop.f32.mrb[0].mxu0
    %v1972 = vadd.f32 0.0, %v1971
    %v1973 = vpop.f32.mrb[0].mxu0
    %1974 = vdwg.mxu0
    %v1976 = vrot.slane %v1972, 4
    %v1978 = vadd.f32 %v415, %v1976
    %v1979 = vxor.u32 %v1978, 2147483648
    %v1980 = vmul.f32 %v1979, 1.442695
    %v1981 = vpow.pop %v1980
    %v1982 = vadd.f32 %v1981, 1.0
    %v1983 = vrcp.pop %v1982
    %v1984 = vmul.f32 1.0, %v1983
    %v1985 = vtanh.pop %v1978
    %v1987 = vrot.slane %v1892, 6
    %v1989 = vmul.f32 %v1984, %v1987
    %1991 = vrot.lane.b32.xlu0 %v1985, 32
    %v1992 = vpop.permute.xlu0 %1991
    %v1994 = vmul.f32 %v1984, %v1992
    %1996 = vrot.lane.b32.xlu0 %v1994, 32
    %v1997 = vpop.permute.xlu0 %1996
    %v1999 = vadd.f32 %v1989, %v1997
    %v2000 = vtanh.pop %v1999
    %2002 = vrot.lane.b32.xlu0 %v2000, 32
    %v2003 = vpop.permute.xlu0 %2002
    %v2005 = vmul.f32 %v1984, %v2003
    %v2007 = vrot.slane %v2005, 4
    %2008 = vrot.lane.b32.xlu0 %v2007, 64
    %v2009 = vpop.permute.xlu0 %2008
    %v2010 = vsel %vm422, %v2009, 0
    %2012 = vmatprep.subr.mxu0 0.0
    %2013 = vmatpush1.msra.mxu0 %v418
    %2014 = vmatprep.subr.mxu0 0.0
    %2015 = vmatpush1.msra.mxu0 %v419
    %2016 = vmatprep.subr.mxu0 0.0
    %2017 = vmatpush1.msra.mxu0 %v420
    %2018 = vmatprep.subr.mxu0 0.0
    %2019 = vmatpush1.msra.mxu0 %v421
    %2020 = vmatprep.subr.mxu0 0.0
    %2021 = vmatpush1.msra.mxu0 0.0
    %2022 = vmatprep.subr.mxu0 0.0
    %2023 = vmatpush1.msra.mxu0 0.0
    %2024 = vmatprep.subr.mxu0 0.0
    %2025 = vmatpush1.msra.mxu0 0.0
    %2026 = vmatprep.subr.mxu0 0.0
    %2027 = vmatpush1.msra.mxu0 0.0
    %2028 = vmatprep.subr.mxu0 0.0
    %2029 = vmatpush1.msra.mxu0 0.0
    %2030 = vmatprep.subr.mxu0 0.0
    %2031 = vmatpush1.msra.mxu0 0.0
    %2032 = vmatprep.subr.mxu0 0.0
    %2033 = vmatpush1.msra.mxu0 0.0
    %2034 = vmatprep.subr.mxu0 0.0
    %2035 = vmatpush1.msra.mxu0 0.0
    %2036 = vmatprep.subr.mxu0 0.0
    %2037 = vmatpush1.msra.mxu0 0.0
    %2038 = vmatprep.subr.mxu0 0.0
    %2039 = vmatpush1.msra.mxu0 0.0
    %2040 = vmatprep.subr.mxu0 0.0
    %2041 = vmatpush1.msra.mxu0 0.0
    %2042 = vmatprep.subr.mxu0 0.0
    %2043 = vmatpush1.msra.mxu0 0.0
    %2044 = vmatprep.subr.mxu0 0.0
    %2045 = vmatpush1.msra.mxu0 0.0
    %2046 = vmatprep.subr.mxu0 0.0
    %2047 = vmatpush1.msra.mxu0 0.0
    %2048 = vmatprep.subr.mxu0 0.0
    %2049 = vmatpush1.msra.mxu0 0.0
    %2050 = vmatprep.subr.mxu0 0.0
    %2051 = vmatpush1.msra.mxu0 0.0
    %2052 = vmatprep.subr.mxu0 0.0
    %2053 = vmatpush1.msra.mxu0 0.0
    %2054 = vmatprep.subr.mxu0 0.0
    %2055 = vmatpush1.msra.mxu0 0.0
    %2056 = vmatprep.subr.mxu0 0.0
    %2057 = vmatpush1.msra.mxu0 0.0
    %2058 = vmatprep.subr.mxu0 0.0
    %2059 = vmatpush1.msra.mxu0 0.0
    %2060 = vmatprep.subr.mxu0 0.0
    %2061 = vmatpush1.msra.mxu0 0.0
    %2062 = vmatprep.subr.mxu0 0.0
    %2063 = vmatpush1.msra.mxu0 0.0
    %2064 = vmatprep.subr.mxu0 0.0
    %2065 = vmatpush1.msra.mxu0 0.0
    %2066 = vmatprep.subr.mxu0 0.0
    %2067 = vmatpush1.msra.mxu0 0.0
    %2068 = vmatprep.subr.mxu0 0.0
    %2069 = vmatpush1.msra.mxu0 0.0
    %2070 = vmatprep.subr.mxu0 0.0
    %2071 = vmatpush1.msra.mxu0 0.0
    %2072 = vmatprep.subr.mxu0 0.0
    %2073 = vmatpush1.msra.mxu0 0.0
    %2074 = vmatprep.subr.mxu0 0.0
    %2075 = vmatpush1.msra.mxu0 0.0
    %2076 = vmatprep.mubr.f32.mxu0 0.0
    %2077 = vmatmul.mubr.f32.gmra.mrb[0].mxu0 %v2010
    %v2078 = vpop.f32.mrb[0].mxu0
    %v2079 = vadd.f32 0.0, %v2078
    %v2080 = vpop.f32.mrb[0].mxu0
    %2081 = vdwg.mxu0
    %v2083 = vrot.slane %v2079, 2
    %v2085 = vadd.f32 %v415, %v2083
    %v2086 = vxor.u32 %v2085, 2147483648
    %v2087 = vmul.f32 %v2086, 1.442695
    %v2088 = vpow.pop %v2087
    %v2089 = vadd.f32 %v2088, 1.0
    %v2090 = vrcp.pop %v2089
    %v2091 = vmul.f32 1.0, %v2090
    %v2092 = vtanh.pop %v2085
    %v2094 = vrot.slane %v1999, 6
    %v2096 = vmul.f32 %v2091, %v2094
    %2098 = vrot.lane.b32.xlu0 %v2092, 32
    %v2099 = vpop.permute.xlu0 %2098
    %v2101 = vmul.f32 %v2091, %v2099
    %2103 = vrot.lane.b32.xlu0 %v2101, 32
    %v2104 = vpop.permute.xlu0 %2103
    %v2106 = vadd.f32 %v2096, %v2104
    %v2107 = vtanh.pop %v2106
    %2109 = vrot.lane.b32.xlu0 %v2107, 32
    %v2110 = vpop.permute.xlu0 %2109
    %v2112 = vmul.f32 %v2091, %v2110
    %v2113 = vld [vmem:[#allocation8] sm:$0xff]
    %v2114 = vld [vmem:[#allocation10] sm:$0x1]
    %v2116 = vlaneseq
    %v2117 = vshrl.u32 %v2116, 7
    %v2118 = vsub.s32 0, %v2117
    %v2119 = vrot.slane %v2114, %v2118
    %v2121 = vrot.slane %v311, 6
    %v2122 = vsel %vm320, %v2121, 0
    %2124 = vmatprep.subr.mxu0 0.0
    %2125 = vmatpush1.msra.mxu0 %v2113
    %2126 = vmatprep.subr.mxu0 0.0
    %2127 = vmatpush1.msra.mxu0 0.0
    %2128 = vmatprep.subr.mxu0 0.0
    %2129 = vmatpush1.msra.mxu0 0.0
    %2130 = vmatprep.subr.mxu0 0.0
    %2131 = vmatpush1.msra.mxu0 0.0
    %2132 = vmatprep.subr.mxu0 0.0
    %2133 = vmatpush1.msra.mxu0 0.0
    %2134 = vmatprep.subr.mxu0 0.0
    %2135 = vmatpush1.msra.mxu0 0.0
    %2136 = vmatprep.subr.mxu0 0.0
    %2137 = vmatpush1.msra.mxu0 0.0
    %2138 = vmatprep.subr.mxu0 0.0
    %2139 = vmatpush1.msra.mxu0 0.0
    %2140 = vmatprep.subr.mxu0 0.0
    %2141 = vmatpush1.msra.mxu0 0.0
    %2142 = vmatprep.subr.mxu0 0.0
    %2143 = vmatpush1.msra.mxu0 0.0
    %2144 = vmatprep.subr.mxu0 0.0
    %2145 = vmatpush1.msra.mxu0 0.0
    %2146 = vmatprep.subr.mxu0 0.0
    %2147 = vmatpush1.msra.mxu0 0.0
    %2148 = vmatprep.subr.mxu0 0.0
    %2149 = vmatpush1.msra.mxu0 0.0
    %2150 = vmatprep.subr.mxu0 0.0
    %2151 = vmatpush1.msra.mxu0 0.0
    %2152 = vmatprep.subr.mxu0 0.0
    %2153 = vmatpush1.msra.mxu0 0.0
    %2154 = vmatprep.subr.mxu0 0.0
    %2155 = vmatpush1.msra.mxu0 0.0
    %2156 = vmatprep.subr.mxu0 0.0
    %2157 = vmatpush1.msra.mxu0 0.0
    %2158 = vmatprep.subr.mxu0 0.0
    %2159 = vmatpush1.msra.mxu0 0.0
    %2160 = vmatprep.subr.mxu0 0.0
    %2161 = vmatpush1.msra.mxu0 0.0
    %2162 = vmatprep.subr.mxu0 0.0
    %2163 = vmatpush1.msra.mxu0 0.0
    %2164 = vmatprep.subr.mxu0 0.0
    %2165 = vmatpush1.msra.mxu0 0.0
    %2166 = vmatprep.subr.mxu0 0.0
    %2167 = vmatpush1.msra.mxu0 0.0
    %2168 = vmatprep.subr.mxu0 0.0
    %2169 = vmatpush1.msra.mxu0 0.0
    %2170 = vmatprep.subr.mxu0 0.0
    %2171 = vmatpush1.msra.mxu0 0.0
    %2172 = vmatprep.subr.mxu0 0.0
    %2173 = vmatpush1.msra.mxu0 0.0
    %2174 = vmatprep.subr.mxu0 0.0
    %2175 = vmatpush1.msra.mxu0 0.0
    %2176 = vmatprep.subr.mxu0 0.0
    %2177 = vmatpush1.msra.mxu0 0.0
    %2178 = vmatprep.subr.mxu0 0.0
    %2179 = vmatpush1.msra.mxu0 0.0
    %2180 = vmatprep.subr.mxu0 0.0
    %2181 = vmatpush1.msra.mxu0 0.0
    %2182 = vmatprep.subr.mxu0 0.0
    %2183 = vmatpush1.msra.mxu0 0.0
    %2184 = vmatprep.subr.mxu0 0.0
    %2185 = vmatpush1.msra.mxu0 0.0
    %2186 = vmatprep.subr.mxu0 0.0
    %2187 = vmatpush1.msra.mxu0 0.0
    %2188 = vmatprep.mubr.f32.mxu0 0.0
    %2189 = vmatmul.mubr.f32.gmra.mrb[0].mxu0 %v2122
    %v2190 = vpop.f32.mrb[0].mxu0
    %v2191 = vadd.f32 %v2119, %v2190
    %v2192 = vpop.f32.mrb[0].mxu0
    %2193 = vdwg.mxu0
    %v2194 = vxor.u32 %v2191, 2147483648
    %v2195 = vmul.f32 %v2194, 1.442695
    %v2196 = vpow.pop %v2195
    %v2197 = vadd.f32 %v2196, 1.0
    %v2198 = vrcp.pop %v2197
    %v2199 = vmul.f32 1.0, %v2198
    %v2200 = vtanh.pop %v2191
    %2202 = vrot.lane.b32.xlu0 %v2200, 32
    %v2203 = vpop.permute.xlu0 %2202
    %v2205 = vmul.f32 %v2199, %v2203
    %v2206 = vtanh.pop %v2205
    %2208 = vrot.lane.b32.xlu0 %v2206, 64
    %v2209 = vpop.permute.xlu0 %2208
    %v2211 = vmul.f32 %v2199, %v2209
    %v2212 = vld [vmem:[%s1] sm:$0xff]
    %v2213 = vld [vmem:[%s1 + $0x8] sm:$0xff]
    %v2214 = vld [vmem:[%s1 + $0x10] sm:$0xff]
    %v2215 = vld [vmem:[%s1 + $0x18] sm:$0xff]
    %v2216 = vpack.c.bf16 %v2213, %v2212
    %v2217 = vpack.c.bf16 %v2215, %v2214
    %v2218 = vld [vmem:[%s10] sm:$0xf]
    %v2219 = vld [vmem:[%s10 + $0x4] sm:$0xf]
    %v2220 = vld [vmem:[%s10 + $0x8] sm:$0xf]
    %v2221 = vld [vmem:[%s10 + $0xc] sm:$0xf]
    %v2226 = vunpack.c.l.b16 %v2218
    %v2227 = vunpack.c.l.b16 %v2219
    %v2228 = vunpack.c.l.b16 %v2220
    %v2229 = vunpack.c.l.b16 %v2221
    %v2230 = vpack.c.b16 %v2227, %v2226
    %v2231 = vpack.c.b16 %v2229, %v2228
    %v2233 = vsel %vm422, %v2230, 0
    %v2236 = vsel %vm422, %v2231, 0
    %2238 = vmatprep.subr.bf16.mxu0 0
    %2239 = vmatpush1.bf16.msra.mxu0 %v2216
    %2240 = vmatprep.subr.bf16.mxu0 0
    %2241 = vmatpush1.bf16.msra.mxu0 %v2217
    %2242 = vmatprep.subr.bf16.mxu0 0
    %2243 = vmatpush1.bf16.msra.mxu0 0
    %2244 = vmatprep.subr.bf16.mxu0 0
    %2245 = vmatpush1.bf16.msra.mxu0 0
    %2246 = vmatprep.subr.bf16.mxu0 0
    %2247 = vmatpush1.bf16.msra.mxu0 0
    %2248 = vmatprep.subr.bf16.mxu0 0
    %2249 = vmatpush1.bf16.msra.mxu0 0
    %2250 = vmatprep.subr.bf16.mxu0 0
    %2251 = vmatpush1.bf16.msra.mxu0 0
    %2252 = vmatprep.subr.bf16.mxu0 0
    %2253 = vmatpush1.bf16.msra.mxu0 0
    %2254 = vmatprep.subr.bf16.mxu0 0
    %2255 = vmatpush1.bf16.msra.mxu0 0
    %2256 = vmatprep.subr.bf16.mxu0 0
    %2257 = vmatpush1.bf16.msra.mxu0 0
    %2258 = vmatprep.subr.bf16.mxu0 0
    %2259 = vmatpush1.bf16.msra.mxu0 0
    %2260 = vmatprep.subr.bf16.mxu0 0
    %2261 = vmatpush1.bf16.msra.mxu0 0
    %2262 = vmatprep.subr.bf16.mxu0 0
    %2263 = vmatpush1.bf16.msra.mxu0 0
    %2264 = vmatprep.subr.bf16.mxu0 0
    %2265 = vmatpush1.bf16.msra.mxu0 0
    %2266 = vmatprep.subr.bf16.mxu0 0
    %2267 = vmatpush1.bf16.msra.mxu0 0
    %2268 = vmatprep.subr.bf16.mxu0 0
    %2269 = vmatpush1.bf16.msra.mxu0 0
    %2270 = vmatprep.mubr.bf16.mxu0 0
    %2271 = vmatmul.mubr.bf16.gmra.mrb[0].mxu0 %v2233
    %v2272 = vpop.f32.mrb[0].mxu0
    %v2273 = vadd.f32 0.0, %v2272
    %v2274 = vpop.f32.mrb[0].mxu0
    %v2275 = vpop.f32.mrb[0].mxu0
    %v2276 = vadd.f32 0.0, %v2275
    %v2277 = vpop.f32.mrb[0].mxu0
    %2278 = vmatprep.mubr.bf16.mxu0 0
    %2279 = vmatmul.mubr.bf16.gmra.mrb[0].mxu0 %v2236
    %v2280 = vpop.f32.mrb[0].mxu0
    %v2281 = vadd.f32 0.0, %v2280
    %v2282 = vpop.f32.mrb[0].mxu0
    %v2283 = vpop.f32.mrb[0].mxu0
    %v2284 = vadd.f32 0.0, %v2283
    %v2285 = vpop.f32.mrb[0].mxu0
    %2286 = vdwg.mxu0
    %v2287 = vpack.c.bf16 %v2276, %v2273
    %v2288 = vpack.c.bf16 %v2284, %v2281
    %v2289 = vld [vmem:[#allocation11] sm:$0xf]
    %s2290 = scalar_lea.vmem %s10, 16
    %v2291 = vld [vmem:[%s2290] sm:$0xf]
    %v2292 = vld [vmem:[%s2290 + $0x4] sm:$0xf]
    %v2293 = vld [vmem:[%s2290 + $0x8] sm:$0xf]
    %v2294 = vld [vmem:[%s2290 + $0xc] sm:$0xf]
    %v2299 = vunpack.c.l.b16 %v2291
    %v2300 = vunpack.c.l.b16 %v2292
    %v2301 = vunpack.c.l.b16 %v2293
    %v2302 = vunpack.c.l.b16 %v2294
    %v2303 = vpack.c.b16 %v2300, %v2299
    %v2304 = vpack.c.b16 %v2302, %v2301
    %v2306 = vsel %vm422, %v2303, 0
    %v2309 = vsel %vm422, %v2304, 0
    %2311 = vmatprep.subr.bf16.mxu0 0
    %2312 = vmatpush1.bf16.msra.mxu0 %v2216
    %2313 = vmatprep.subr.bf16.mxu0 0
    %2314 = vmatpush1.bf16.msra.mxu0 %v2217
    %2315 = vmatprep.subr.bf16.mxu0 0
    %2316 = vmatpush1.bf16.msra.mxu0 0
    %2317 = vmatprep.subr.bf16.mxu0 0
    %2318 = vmatpush1.bf16.msra.mxu0 0
    %2319 = vmatprep.subr.bf16.mxu0 0
    %2320 = vmatpush1.bf16.msra.mxu0 0
    %2321 = vmatprep.subr.bf16.mxu0 0
    %2322 = vmatpush1.bf16.msra.mxu0 0
    %2323 = vmatprep.subr.bf16.mxu0 0
    %2324 = vmatpush1.bf16.msra.mxu0 0
    %2325 = vmatprep.subr.bf16.mxu0 0
    %2326 = vmatpush1.bf16.msra.mxu0 0
    %2327 = vmatprep.subr.bf16.mxu0 0
    %2328 = vmatpush1.bf16.msra.mxu0 0
    %2329 = vmatprep.subr.bf16.mxu0 0
    %2330 = vmatpush1.bf16.msra.mxu0 0
    %2331 = vmatprep.subr.bf16.mxu0 0
    %2332 = vmatpush1.bf16.msra.mxu0 0
    %2333 = vmatprep.subr.bf16.mxu0 0
    %2334 = vmatpush1.bf16.msra.mxu0 0
    %2335 = vmatprep.subr.bf16.mxu0 0
    %2336 = vmatpush1.bf16.msra.mxu0 0
    %2337 = vmatprep.subr.bf16.mxu0 0
    %2338 = vmatpush1.bf16.msra.mxu0 0
    %2339 = vmatprep.subr.bf16.mxu0 0
    %2340 = vmatpush1.bf16.msra.mxu0 0
    %2341 = vmatprep.subr.bf16.mxu0 0
    %2342 = vmatpush1.bf16.msra.mxu0 0
    %2343 = vmatprep.mubr.bf16.mxu0 0
    %2344 = vmatmul.mubr.bf16.gmra.mrb[0].mxu0 %v2306
    %v2345 = vpop.f32.mrb[0].mxu0
    %v2346 = vadd.f32 0.0, %v2345
    %v2347 = vpop.f32.mrb[0].mxu0
    %v2348 = vpop.f32.mrb[0].mxu0
    %v2349 = vadd.f32 0.0, %v2348
    %v2350 = vpop.f32.mrb[0].mxu0
    %2351 = vmatprep.mubr.bf16.mxu0 0
    %2352 = vmatmul.mubr.bf16.gmra.mrb[0].mxu0 %v2309
    %v2353 = vpop.f32.mrb[0].mxu0
    %v2354 = vadd.f32 0.0, %v2353
    %v2355 = vpop.f32.mrb[0].mxu0
    %v2356 = vpop.f32.mrb[0].mxu0
    %v2357 = vadd.f32 0.0, %v2356
    %v2358 = vpop.f32.mrb[0].mxu0
    %2359 = vdwg.mxu0
    %v2360 = vpack.c.bf16 %v2349, %v2346
    %v2361 = vpack.c.bf16 %v2357, %v2354
    %v2362 = vld [vmem:[#allocation11 + $0x4] sm:$0xf]
    %v2364 = vsel %vm320, %v2360, 0
    %v2367 = vsel %vm320, %v2361, 0
    %vm2369 = vcmask 1043456
    %v2371 = vsel %vm2369, %v2362, 0
    %2373 = vmatprep.subr.bf16.mxu0 0
    %2374 = vmatpush1.bf16.msra.mxu0 %v2371
    %2375 = vmatprep.subr.bf16.mxu0 0
    %2376 = vmatpush1.bf16.msra.mxu0 0
    %2377 = vmatprep.subr.bf16.mxu0 0
    %2378 = vmatpush1.bf16.msra.mxu0 0
    %2379 = vmatprep.subr.bf16.mxu0 0
    %2380 = vmatpush1.bf16.msra.mxu0 0
    %2381 = vmatprep.subr.bf16.mxu0 0
    %2382 = vmatpush1.bf16.msra.mxu0 0
    %2383 = vmatprep.subr.bf16.mxu0 0
    %2384 = vmatpush1.bf16.msra.mxu0 0
    %2385 = vmatprep.subr.bf16.mxu0 0
    %2386 = vmatpush1.bf16.msra.mxu0 0
    %2387 = vmatprep.subr.bf16.mxu0 0
    %2388 = vmatpush1.bf16.msra.mxu0 0
    %2389 = vmatprep.subr.bf16.mxu0 0
    %2390 = vmatpush1.bf16.msra.mxu0 0
    %2391 = vmatprep.subr.bf16.mxu0 0
    %2392 = vmatpush1.bf16.msra.mxu0 0
    %2393 = vmatprep.subr.bf16.mxu0 0
    %2394 = vmatpush1.bf16.msra.mxu0 0
    %2395 = vmatprep.subr.bf16.mxu0 0
    %2396 = vmatpush1.bf16.msra.mxu0 0
    %2397 = vmatprep.subr.bf16.mxu0 0
    %2398 = vmatpush1.bf16.msra.mxu0 0
    %2399 = vmatprep.subr.bf16.mxu0 0
    %2400 = vmatpush1.bf16.msra.mxu0 0
    %2401 = vmatprep.subr.bf16.mxu0 0
    %2402 = vmatpush1.bf16.msra.mxu0 0
    %2403 = vmatprep.subr.bf16.mxu0 0
    %2404 = vmatpush1.bf16.msra.mxu0 0
    %2405 = vmatprep.mubr.bf16.mxu0 0
    %2406 = vmatmul.mubr.bf16.gmra.mrb[0].mxu0 %v2364
    %v2407 = vpop.f32.mrb[0].mxu0
    %v2408 = vadd.f32 0.0, %v2407
    %v2409 = vpop.f32.mrb[0].mxu0
    %v2410 = vpop.f32.mrb[0].mxu0
    %v2411 = vadd.f32 0.0, %v2410
    %v2412 = vpop.f32.mrb[0].mxu0
    %2413 = vmatprep.mubr.bf16.mxu0 0
    %2414 = vmatmul.mubr.bf16.gmra.mrb[0].mxu0 %v2367
    %v2415 = vpop.f32.mrb[0].mxu0
    %v2416 = vadd.f32 0.0, %v2415
    %v2417 = vpop.f32.mrb[0].mxu0
    %v2418 = vpop.f32.mrb[0].mxu0
    %v2419 = vadd.f32 0.0, %v2418
    %v2420 = vpop.f32.mrb[0].mxu0
    %2421 = vdwg.mxu0
    %v2423 = vsel %vm320, %v2287, 0
    %v2426 = vsel %vm320, %v2288, 0
    %v2429 = vsel %vm2369, %v2289, 0
    %2431 = vmatprep.subr.bf16.mxu0 0
    %2432 = vmatpush1.bf16.msra.mxu0 %v2429
    %2433 = vmatprep.subr.bf16.mxu0 0
    %2434 = vmatpush1.bf16.msra.mxu0 0
    %2435 = vmatprep.subr.bf16.mxu0 0
    %2436 = vmatpush1.bf16.msra.mxu0 0
    %2437 = vmatprep.subr.bf16.mxu0 0
    %2438 = vmatpush1.bf16.msra.mxu0 0
    %2439 = vmatprep.subr.bf16.mxu0 0
    %2440 = vmatpush1.bf16.msra.mxu0 0
    %2441 = vmatprep.subr.bf16.mxu0 0
    %2442 = vmatpush1.bf16.msra.mxu0 0
    %2443 = vmatprep.subr.bf16.mxu0 0
    %2444 = vmatpush1.bf16.msra.mxu0 0
    %2445 = vmatprep.subr.bf16.mxu0 0
    %2446 = vmatpush1.bf16.msra.mxu0 0
    %2447 = vmatprep.subr.bf16.mxu0 0
    %2448 = vmatpush1.bf16.msra.mxu0 0
    %2449 = vmatprep.subr.bf16.mxu0 0
    %2450 = vmatpush1.bf16.msra.mxu0 0
    %2451 = vmatprep.subr.bf16.mxu0 0
    %2452 = vmatpush1.bf16.msra.mxu0 0
    %2453 = vmatprep.subr.bf16.mxu0 0
    %2454 = vmatpush1.bf16.msra.mxu0 0
    %2455 = vmatprep.subr.bf16.mxu0 0
    %2456 = vmatpush1.bf16.msra.mxu0 0
    %2457 = vmatprep.subr.bf16.mxu0 0
    %2458 = vmatpush1.bf16.msra.mxu0 0
    %2459 = vmatprep.subr.bf16.mxu0 0
    %2460 = vmatpush1.bf16.msra.mxu0 0
    %2461 = vmatprep.subr.bf16.mxu0 0
    %2462 = vmatpush1.bf16.msra.mxu0 0
    %2463 = vmatprep.mubr.bf16.mxu0 0
    %2464 = vmatmul.mubr.bf16.gmra.mrb[0].mxu0 %v2423
    %v2465 = vpop.f32.mrb[0].mxu0
    %v2466 = vadd.f32 %v2408, %v2465
    %v2467 = vpop.f32.mrb[0].mxu0
    %v2468 = vpop.f32.mrb[0].mxu0
    %v2469 = vadd.f32 %v2411, %v2468
    %v2470 = vpop.f32.mrb[0].mxu0
    %2471 = vmatprep.mubr.bf16.mxu0 0
    %2472 = vmatmul.mubr.bf16.gmra.mrb[0].mxu0 %v2426
    %v2473 = vpop.f32.mrb[0].mxu0
    %v2474 = vadd.f32 %v2416, %v2473
    %v2475 = vpop.f32.mrb[0].mxu0
    %v2476 = vpop.f32.mrb[0].mxu0
    %v2477 = vadd.f32 %v2419, %v2476
    %v2478 = vpop.f32.mrb[0].mxu0
    %2479 = vdwg.mxu0
    %s2480 = scalar_lea.vmem %s10, 32
    %v2481 = vld [vmem:[%s2480] sm:$0xf]
    %v2482 = vld [vmem:[%s2480 + $0x4] sm:$0xf]
    %v2483 = vld [vmem:[%s2480 + $0x8] sm:$0xf]
    %v2484 = vld [vmem:[%s2480 + $0xc] sm:$0xf]
    %v2489 = vunpack.c.l.b16 %v2481
    %v2490 = vunpack.c.l.b16 %v2482
    %v2491 = vunpack.c.l.b16 %v2483
    %v2492 = vunpack.c.l.b16 %v2484
    %v2493 = vpack.c.b16 %v2490, %v2489
    %v2494 = vpack.c.b16 %v2492, %v2491
    %v2496 = vsel %vm422, %v2493, 0
    %v2499 = vsel %vm422, %v2494, 0
    %2501 = vmatprep.subr.bf16.mxu0 0
    %2502 = vmatpush1.bf16.msra.mxu0 %v2216
    %2503 = vmatprep.subr.bf16.mxu0 0
    %2504 = vmatpush1.bf16.msra.mxu0 %v2217
    %2505 = vmatprep.subr.bf16.mxu0 0
    %2506 = vmatpush1.bf16.msra.mxu0 0
    %2507 = vmatprep.subr.bf16.mxu0 0
    %2508 = vmatpush1.bf16.msra.mxu0 0
    %2509 = vmatprep.subr.bf16.mxu0 0
    %2510 = vmatpush1.bf16.msra.mxu0 0
    %2511 = vmatprep.subr.bf16.mxu0 0
    %2512 = vmatpush1.bf16.msra.mxu0 0
    %2513 = vmatprep.subr.bf16.mxu0 0
    %2514 = vmatpush1.bf16.msra.mxu0 0
    %2515 = vmatprep.subr.bf16.mxu0 0
    %2516 = vmatpush1.bf16.msra.mxu0 0
    %2517 = vmatprep.subr.bf16.mxu0 0
    %2518 = vmatpush1.bf16.msra.mxu0 0
    %2519 = vmatprep.subr.bf16.mxu0 0
    %2520 = vmatpush1.bf16.msra.mxu0 0
    %2521 = vmatprep.subr.bf16.mxu0 0
    %2522 = vmatpush1.bf16.msra.mxu0 0
    %2523 = vmatprep.subr.bf16.mxu0 0
    %2524 = vmatpush1.bf16.msra.mxu0 0
    %2525 = vmatprep.subr.bf16.mxu0 0
    %2526 = vmatpush1.bf16.msra.mxu0 0
    %2527 = vmatprep.subr.bf16.mxu0 0
    %2528 = vmatpush1.bf16.msra.mxu0 0
    %2529 = vmatprep.subr.bf16.mxu0 0
    %2530 = vmatpush1.bf16.msra.mxu0 0
    %2531 = vmatprep.subr.bf16.mxu0 0
    %2532 = vmatpush1.bf16.msra.mxu0 0
    %2533 = vmatprep.mubr.bf16.mxu0 0
    %2534 = vmatmul.mubr.bf16.gmra.mrb[0].mxu0 %v2496
    %v2535 = vpop.f32.mrb[0].mxu0
    %v2536 = vadd.f32 0.0, %v2535
    %v2537 = vpop.f32.mrb[0].mxu0
    %v2538 = vpop.f32.mrb[0].mxu0
    %v2539 = vadd.f32 0.0, %v2538
    %v2540 = vpop.f32.mrb[0].mxu0
    %2541 = vmatprep.mubr.bf16.mxu0 0
    %2542 = vmatmul.mubr.bf16.gmra.mrb[0].mxu0 %v2499
    %v2543 = vpop.f32.mrb[0].mxu0
    %v2544 = vadd.f32 0.0, %v2543
    %v2545 = vpop.f32.mrb[0].mxu0
    %v2546 = vpop.f32.mrb[0].mxu0
    %v2547 = vadd.f32 0.0, %v2546
    %v2548 = vpop.f32.mrb[0].mxu0
    %2549 = vdwg.mxu0
    %v2550 = vpack.c.bf16 %v2539, %v2536
    %v2551 = vpack.c.bf16 %v2547, %v2544
    %v2552 = vld [vmem:[#allocation11 + $0x8] sm:$0xf]
    %v2554 = vsel %vm320, %v2550, 0
    %v2557 = vsel %vm320, %v2551, 0
    %v2560 = vsel %vm2369, %v2552, 0
    %2562 = vmatprep.subr.bf16.mxu0 0
    %2563 = vmatpush1.bf16.msra.mxu0 %v2560
    %2564 = vmatprep.subr.bf16.mxu0 0
    %2565 = vmatpush1.bf16.msra.mxu0 0
    %2566 = vmatprep.subr.bf16.mxu0 0
    %2567 = vmatpush1.bf16.msra.mxu0 0
    %2568 = vmatprep.subr.bf16.mxu0 0
    %2569 = vmatpush1.bf16.msra.mxu0 0
    %2570 = vmatprep.subr.bf16.mxu0 0
    %2571 = vmatpush1.bf16.msra.mxu0 0
    %2572 = vmatprep.subr.bf16.mxu0 0
    %2573 = vmatpush1.bf16.msra.mxu0 0
    %2574 = vmatprep.subr.bf16.mxu0 0
    %2575 = vmatpush1.bf16.msra.mxu0 0
    %2576 = vmatprep.subr.bf16.mxu0 0
    %2577 = vmatpush1.bf16.msra.mxu0 0
    %2578 = vmatprep.subr.bf16.mxu0 0
    %2579 = vmatpush1.bf16.msra.mxu0 0
    %2580 = vmatprep.subr.bf16.mxu0 0
    %2581 = vmatpush1.bf16.msra.mxu0 0
    %2582 = vmatprep.subr.bf16.mxu0 0
    %2583 = vmatpush1.bf16.msra.mxu0 0
    %2584 = vmatprep.subr.bf16.mxu0 0
    %2585 = vmatpush1.bf16.msra.mxu0 0
    %2586 = vmatprep.subr.bf16.mxu0 0
    %2587 = vmatpush1.bf16.msra.mxu0 0
    %2588 = vmatprep.subr.bf16.mxu0 0
    %2589 = vmatpush1.bf16.msra.mxu0 0
    %2590 = vmatprep.subr.bf16.mxu0 0
    %2591 = vmatpush1.bf16.msra.mxu0 0
    %2592 = vmatprep.subr.bf16.mxu0 0
    %2593 = vmatpush1.bf16.msra.mxu0 0
    %2594 = vmatprep.mubr.bf16.mxu0 0
    %2595 = vmatmul.mubr.bf16.gmra.mrb[0].mxu0 %v2554
    %v2596 = vpop.f32.mrb[0].mxu0
    %v2597 = vadd.f32 0.0, %v2596
    %v2598 = vpop.f32.mrb[0].mxu0
    %v2599 = vpop.f32.mrb[0].mxu0
    %v2600 = vadd.f32 0.0, %v2599
    %v2601 = vpop.f32.mrb[0].mxu0
    %2602 = vmatprep.mubr.bf16.mxu0 0
    %2603 = vmatmul.mubr.bf16.gmra.mrb[0].mxu0 %v2557
    %v2604 = vpop.f32.mrb[0].mxu0
    %v2605 = vadd.f32 0.0, %v2604
    %v2606 = vpop.f32.mrb[0].mxu0
    %v2607 = vpop.f32.mrb[0].mxu0
    %v2608 = vadd.f32 0.0, %v2607
    %v2609 = vpop.f32.mrb[0].mxu0
    %2610 = vdwg.mxu0
    %v2611 = vadd.f32 %v2466, %v2597
    %v2612 = vadd.f32 %v2469, %v2600
    %v2613 = vadd.f32 %v2474, %v2605
    %v2614 = vadd.f32 %v2477, %v2608
    %v2615 = vld [vmem:[#allocation11 + $0xc] sm:$0xf]
    %v2617 = vsel %vm320, %v2216, 0
    %v2620 = vsel %vm320, %v2217, 0
    %v2623 = vsel %vm2369, %v2615, 0
    %2625 = vmatprep.subr.bf16.mxu0 0
    %2626 = vmatpush1.bf16.msra.mxu0 %v2623
    %2627 = vmatprep.subr.bf16.mxu0 0
    %2628 = vmatpush1.bf16.msra.mxu0 0
    %2629 = vmatprep.subr.bf16.mxu0 0
    %2630 = vmatpush1.bf16.msra.mxu0 0
    %2631 = vmatprep.subr.bf16.mxu0 0
    %2632 = vmatpush1.bf16.msra.mxu0 0
    %2633 = vmatprep.subr.bf16.mxu0 0
    %2634 = vmatpush1.bf16.msra.mxu0 0
    %2635 = vmatprep.subr.bf16.mxu0 0
    %2636 = vmatpush1.bf16.msra.mxu0 0
    %2637 = vmatprep.subr.bf16.mxu0 0
    %2638 = vmatpush1.bf16.msra.mxu0 0
    %2639 = vmatprep.subr.bf16.mxu0 0
    %2640 = vmatpush1.bf16.msra.mxu0 0
    %2641 = vmatprep.subr.bf16.mxu0 0
    %2642 = vmatpush1.bf16.msra.mxu0 0
    %2643 = vmatprep.subr.bf16.mxu0 0
    %2644 = vmatpush1.bf16.msra.mxu0 0
    %2645 = vmatprep.subr.bf16.mxu0 0
    %2646 = vmatpush1.bf16.msra.mxu0 0
    %2647 = vmatprep.subr.bf16.mxu0 0
    %2648 = vmatpush1.bf16.msra.mxu0 0
    %2649 = vmatprep.subr.bf16.mxu0 0
    %2650 = vmatpush1.bf16.msra.mxu0 0
    %2651 = vmatprep.subr.bf16.mxu0 0
    %2652 = vmatpush1.bf16.msra.mxu0 0
    %2653 = vmatprep.subr.bf16.mxu0 0
    %2654 = vmatpush1.bf16.msra.mxu0 0
    %2655 = vmatprep.subr.bf16.mxu0 0
    %2656 = vmatpush1.bf16.msra.mxu0 0
    %2657 = vmatprep.mubr.bf16.mxu0 0
    %2658 = vmatmul.mubr.bf16.gmra.mrb[0].mxu0 %v2617
    %v2659 = vpop.f32.mrb[0].mxu0
    %v2660 = vadd.f32 0.0, %v2659
    %v2661 = vpop.f32.mrb[0].mxu0
    %v2662 = vpop.f32.mrb[0].mxu0
    %v2663 = vadd.f32 0.0, %v2662
    %v2664 = vpop.f32.mrb[0].mxu0
    %2665 = vmatprep.mubr.bf16.mxu0 0
    %2666 = vmatmul.mubr.bf16.gmra.mrb[0].mxu0 %v2620
    %v2667 = vpop.f32.mrb[0].mxu0
    %v2668 = vadd.f32 0.0, %v2667
    %v2669 = vpop.f32.mrb[0].mxu0
    %v2670 = vpop.f32.mrb[0].mxu0
    %v2671 = vadd.f32 0.0, %v2670
    %v2672 = vpop.f32.mrb[0].mxu0
    %2673 = vdwg.mxu0
    %v2674 = vadd.f32 %v2611, %v2660
    %v2675 = vadd.f32 %v2612, %v2663
    %v2676 = vadd.f32 %v2613, %v2668
    %v2677 = vadd.f32 %v2614, %v2671
    %s2678 = scalar_lea.vmem %s10, 64
    %v2679 = vld [vmem:[%s2678] sm:$0xf]
    %v2680 = vld [vmem:[%s2678 + $0x4] sm:$0xf]
    %v2681 = vld [vmem:[%s2678 + $0x8] sm:$0xf]
    %v2682 = vld [vmem:[%s2678 + $0xc] sm:$0xf]
    %v2687 = vunpack.c.l.b16 %v2679
    %v2688 = vunpack.c.l.b16 %v2680
    %v2689 = vunpack.c.l.b16 %v2681
    %v2690 = vunpack.c.l.b16 %v2682
    %v2691 = vpack.c.b16 %v2688, %v2687
    %v2692 = vpack.c.b16 %v2690, %v2689
    %v2694 = vsel %vm422, %v2691, 0
    %v2697 = vsel %vm422, %v2692, 0
    %2699 = vmatprep.subr.bf16.mxu0 0
    %2700 = vmatpush1.bf16.msra.mxu0 %v2216
    %2701 = vmatprep.subr.bf16.mxu0 0
    %2702 = vmatpush1.bf16.msra.mxu0 %v2217
    %2703 = vmatprep.subr.bf16.mxu0 0
    %2704 = vmatpush1.bf16.msra.mxu0 0
    %2705 = vmatprep.subr.bf16.mxu0 0
    %2706 = vmatpush1.bf16.msra.mxu0 0
    %2707 = vmatprep.subr.bf16.mxu0 0
    %2708 = vmatpush1.bf16.msra.mxu0 0
    %2709 = vmatprep.subr.bf16.mxu0 0
    %2710 = vmatpush1.bf16.msra.mxu0 0
    %2711 = vmatprep.subr.bf16.mxu0 0
    %2712 = vmatpush1.bf16.msra.mxu0 0
    %2713 = vmatprep.subr.bf16.mxu0 0
    %2714 = vmatpush1.bf16.msra.mxu0 0
    %2715 = vmatprep.subr.bf16.mxu0 0
    %2716 = vmatpush1.bf16.msra.mxu0 0
    %2717 = vmatprep.subr.bf16.mxu0 0
    %2718 = vmatpush1.bf16.msra.mxu0 0
    %2719 = vmatprep.subr.bf16.mxu0 0
    %2720 = vmatpush1.bf16.msra.mxu0 0
    %2721 = vmatprep.subr.bf16.mxu0 0
    %2722 = vmatpush1.bf16.msra.mxu0 0
    %2723 = vmatprep.subr.bf16.mxu0 0
    %2724 = vmatpush1.bf16.msra.mxu0 0
    %2725 = vmatprep.subr.bf16.mxu0 0
    %2726 = vmatpush1.bf16.msra.mxu0 0
    %2727 = vmatprep.subr.bf16.mxu0 0
    %2728 = vmatpush1.bf16.msra.mxu0 0
    %2729 = vmatprep.subr.bf16.mxu0 0
    %2730 = vmatpush1.bf16.msra.mxu0 0
    %2731 = vmatprep.mubr.bf16.mxu0 0
    %2732 = vmatmul.mubr.bf16.gmra.mrb[0].mxu0 %v2694
    %v2733 = vpop.f32.mrb[0].mxu0
    %v2734 = vadd.f32 0.0, %v2733
    %v2735 = vpop.f32.mrb[0].mxu0
    %v2736 = vpop.f32.mrb[0].mxu0
    %v2737 = vadd.f32 0.0, %v2736
    %v2738 = vpop.f32.mrb[0].mxu0
    %2739 = vmatprep.mubr.bf16.mxu0 0
    %2740 = vmatmul.mubr.bf16.gmra.mrb[0].mxu0 %v2697
    %v2741 = vpop.f32.mrb[0].mxu0
    %v2742 = vadd.f32 0.0, %v2741
    %v2743 = vpop.f32.mrb[0].mxu0
    %v2744 = vpop.f32.mrb[0].mxu0
    %v2745 = vadd.f32 0.0, %v2744
    %v2746 = vpop.f32.mrb[0].mxu0
    %2747 = vdwg.mxu0
    %v2748 = vpack.c.bf16 %v2737, %v2734
    %v2749 = vpack.c.bf16 %v2745, %v2742
    %v2750 = vld [vmem:[#allocation11 + $0x10] sm:$0xf]
    %v2752 = vsel %vm320, %v2748, 0
    %v2755 = vsel %vm320, %v2749, 0
    %v2758 = vsel %vm2369, %v2750, 0
    %2760 = vmatprep.subr.bf16.mxu0 0
    %2761 = vmatpush1.bf16.msra.mxu0 %v2758
    %2762 = vmatprep.subr.bf16.mxu0 0
    %2763 = vmatpush1.bf16.msra.mxu0 0
    %2764 = vmatprep.subr.bf16.mxu0 0
    %2765 = vmatpush1.bf16.msra.mxu0 0
    %2766 = vmatprep.subr.bf16.mxu0 0
    %2767 = vmatpush1.bf16.msra.mxu0 0
    %2768 = vmatprep.subr.bf16.mxu0 0
    %2769 = vmatpush1.bf16.msra.mxu0 0
    %2770 = vmatprep.subr.bf16.mxu0 0
    %2771 = vmatpush1.bf16.msra.mxu0 0
    %2772 = vmatprep.subr.bf16.mxu0 0
    %2773 = vmatpush1.bf16.msra.mxu0 0
    %2774 = vmatprep.subr.bf16.mxu0 0
    %2775 = vmatpush1.bf16.msra.mxu0 0
    %2776 = vmatprep.subr.bf16.mxu0 0
    %2777 = vmatpush1.bf16.msra.mxu0 0
    %2778 = vmatprep.subr.bf16.mxu0 0
    %2779 = vmatpush1.bf16.msra.mxu0 0
    %2780 = vmatprep.subr.bf16.mxu0 0
    %2781 = vmatpush1.bf16.msra.mxu0 0
    %2782 = vmatprep.subr.bf16.mxu0 0
    %2783 = vmatpush1.bf16.msra.mxu0 0
    %2784 = vmatprep.subr.bf16.mxu0 0
    %2785 = vmatpush1.bf16.msra.mxu0 0
    %2786 = vmatprep.subr.bf16.mxu0 0
    %2787 = vmatpush1.bf16.msra.mxu0 0
    %2788 = vmatprep.subr.bf16.mxu0 0
    %2789 = vmatpush1.bf16.msra.mxu0 0
    %2790 = vmatprep.subr.bf16.mxu0 0
    %2791 = vmatpush1.bf16.msra.mxu0 0
    %2792 = vmatprep.mubr.bf16.mxu0 0
    %2793 = vmatmul.mubr.bf16.gmra.mrb[0].mxu0 %v2752
    %v2794 = vpop.f32.mrb[0].mxu0
    %v2795 = vadd.f32 0.0, %v2794
    %v2796 = vpop.f32.mrb[0].mxu0
    %v2797 = vpop.f32.mrb[0].mxu0
    %v2798 = vadd.f32 0.0, %v2797
    %v2799 = vpop.f32.mrb[0].mxu0
    %2800 = vmatprep.mubr.bf16.mxu0 0
    %2801 = vmatmul.mubr.bf16.gmra.mrb[0].mxu0 %v2755
    %v2802 = vpop.f32.mrb[0].mxu0
    %v2803 = vadd.f32 0.0, %v2802
    %v2804 = vpop.f32.mrb[0].mxu0
    %v2805 = vpop.f32.mrb[0].mxu0
    %v2806 = vadd.f32 0.0, %v2805
    %v2807 = vpop.f32.mrb[0].mxu0
    %2808 = vdwg.mxu0
    %v2809 = vadd.f32 %v2674, %v2795
    %v2810 = vadd.f32 %v2675, %v2798
    %v2811 = vadd.f32 %v2676, %v2803
    %v2812 = vadd.f32 %v2677, %v2806
    %s2813 = scalar_lea.vmem %s10, 80
    %v2814 = vld [vmem:[%s2813] sm:$0xf]
    %v2815 = vld [vmem:[%s2813 + $0x4] sm:$0xf]
    %v2816 = vld [vmem:[%s2813 + $0x8] sm:$0xf]
    %v2817 = vld [vmem:[%s2813 + $0xc] sm:$0xf]
    %v2822 = vunpack.c.l.b16 %v2814
    %v2823 = vunpack.c.l.b16 %v2815
    %v2824 = vunpack.c.l.b16 %v2816
    %v2825 = vunpack.c.l.b16 %v2817
    %v2826 = vpack.c.b16 %v2823, %v2822
    %v2827 = vpack.c.b16 %v2825, %v2824
    %v2829 = vsel %vm422, %v2826, 0
    %v2832 = vsel %vm422, %v2827, 0
    %2834 = vmatprep.subr.bf16.mxu0 0
    %2835 = vmatpush1.bf16.msra.mxu0 %v2216
    %2836 = vmatprep.subr.bf16.mxu0 0
    %2837 = vmatpush1.bf16.msra.mxu0 %v2217
    %2838 = vmatprep.subr.bf16.mxu0 0
    %2839 = vmatpush1.bf16.msra.mxu0 0
    %2840 = vmatprep.subr.bf16.mxu0 0
    %2841 = vmatpush1.bf16.msra.mxu0 0
    %2842 = vmatprep.subr.bf16.mxu0 0
    %2843 = vmatpush1.bf16.msra.mxu0 0
    %2844 = vmatprep.subr.bf16.mxu0 0
    %2845 = vmatpush1.bf16.msra.mxu0 0
    %2846 = vmatprep.subr.bf16.mxu0 0
    %2847 = vmatpush1.bf16.msra.mxu0 0
    %2848 = vmatprep.subr.bf16.mxu0 0
    %2849 = vmatpush1.bf16.msra.mxu0 0
    %2850 = vmatprep.subr.bf16.mxu0 0
    %2851 = vmatpush1.bf16.msra.mxu0 0
    %2852 = vmatprep.subr.bf16.mxu0 0
    %2853 = vmatpush1.bf16.msra.mxu0 0
    %2854 = vmatprep.subr.bf16.mxu0 0
    %2855 = vmatpush1.bf16.msra.mxu0 0
    %2856 = vmatprep.subr.bf16.mxu0 0
    %2857 = vmatpush1.bf16.msra.mxu0 0
    %2858 = vmatprep.subr.bf16.mxu0 0
    %2859 = vmatpush1.bf16.msra.mxu0 0
    %2860 = vmatprep.subr.bf16.mxu0 0
    %2861 = vmatpush1.bf16.msra.mxu0 0
    %2862 = vmatprep.subr.bf16.mxu0 0
    %2863 = vmatpush1.bf16.msra.mxu0 0
    %2864 = vmatprep.subr.bf16.mxu0 0
    %2865 = vmatpush1.bf16.msra.mxu0 0
    %2866 = vmatprep.mubr.bf16.mxu0 0
    %2867 = vmatmul.mubr.bf16.gmra.mrb[0].mxu0 %v2829
    %v2868 = vpop.f32.mrb[0].mxu0
    %v2869 = vadd.f32 0.0, %v2868
    %v2870 = vpop.f32.mrb[0].mxu0
    %v2871 = vpop.f32.mrb[0].mxu0
    %v2872 = vadd.f32 0.0, %v2871
    %v2873 = vpop.f32.mrb[0].mxu0
    %2874 = vmatprep.mubr.bf16.mxu0 0
    %2875 = vmatmul.mubr.bf16.gmra.mrb[0].mxu0 %v2832
    %v2876 = vpop.f32.mrb[0].mxu0
    %v2877 = vadd.f32 0.0, %v2876
    %v2878 = vpop.f32.mrb[0].mxu0
    %v2879 = vpop.f32.mrb[0].mxu0
    %v2880 = vadd.f32 0.0, %v2879
    %v2881 = vpop.f32.mrb[0].mxu0
    %2882 = vdwg.mxu0
    %v2883 = vpack.c.bf16 %v2872, %v2869
    %v2884 = vpack.c.bf16 %v2880, %v2877
    %v2885 = vld [vmem:[#allocation11 + $0x14] sm:$0xf]
    %v2887 = vsel %vm320, %v2883, 0
    %v2890 = vsel %vm320, %v2884, 0
    %v2893 = vsel %vm2369, %v2885, 0
    %2895 = vmatprep.subr.bf16.mxu0 0
    %2896 = vmatpush1.bf16.msra.mxu0 %v2893
    %2897 = vmatprep.subr.bf16.mxu0 0
    %2898 = vmatpush1.bf16.msra.mxu0 0
    %2899 = vmatprep.subr.bf16.mxu0 0
    %2900 = vmatpush1.bf16.msra.mxu0 0
    %2901 = vmatprep.subr.bf16.mxu0 0
    %2902 = vmatpush1.bf16.msra.mxu0 0
    %2903 = vmatprep.subr.bf16.mxu0 0
    %2904 = vmatpush1.bf16.msra.mxu0 0
    %2905 = vmatprep.subr.bf16.mxu0 0
    %2906 = vmatpush1.bf16.msra.mxu0 0
    %2907 = vmatprep.subr.bf16.mxu0 0
    %2908 = vmatpush1.bf16.msra.mxu0 0
    %2909 = vmatprep.subr.bf16.mxu0 0
    %2910 = vmatpush1.bf16.msra.mxu0 0
    %2911 = vmatprep.subr.bf16.mxu0 0
    %2912 = vmatpush1.bf16.msra.mxu0 0
    %2913 = vmatprep.subr.bf16.mxu0 0
    %2914 = vmatpush1.bf16.msra.mxu0 0
    %2915 = vmatprep.subr.bf16.mxu0 0
    %2916 = vmatpush1.bf16.msra.mxu0 0
    %2917 = vmatprep.subr.bf16.mxu0 0
    %2918 = vmatpush1.bf16.msra.mxu0 0
    %2919 = vmatprep.subr.bf16.mxu0 0
    %2920 = vmatpush1.bf16.msra.mxu0 0
    %2921 = vmatprep.subr.bf16.mxu0 0
    %2922 = vmatpush1.bf16.msra.mxu0 0
    %2923 = vmatprep.subr.bf16.mxu0 0
    %2924 = vmatpush1.bf16.msra.mxu0 0
    %2925 = vmatprep.subr.bf16.mxu0 0
    %2926 = vmatpush1.bf16.msra.mxu0 0
    %2927 = vmatprep.mubr.bf16.mxu0 0
    %2928 = vmatmul.mubr.bf16.gmra.mrb[0].mxu0 %v2887
    %v2929 = vpop.f32.mrb[0].mxu0
    %v2930 = vadd.f32 0.0, %v2929
    %v2931 = vpop.f32.mrb[0].mxu0
    %v2932 = vpop.f32.mrb[0].mxu0
    %v2933 = vadd.f32 0.0, %v2932
    %v2934 = vpop.f32.mrb[0].mxu0
    %2935 = vmatprep.mubr.bf16.mxu0 0
    %2936 = vmatmul.mubr.bf16.gmra.mrb[0].mxu0 %v2890
    %v2937 = vpop.f32.mrb[0].mxu0
    %v2938 = vadd.f32 0.0, %v2937
    %v2939 = vpop.f32.mrb[0].mxu0
    %v2940 = vpop.f32.mrb[0].mxu0
    %v2941 = vadd.f32 0.0, %v2940
    %v2942 = vpop.f32.mrb[0].mxu0
    %2943 = vdwg.mxu0
    %v2944 = vadd.f32 %v2809, %v2930
    %v2945 = vadd.f32 %v2810, %v2933
    %v2946 = vadd.f32 %v2811, %v2938
    %v2947 = vadd.f32 %v2812, %v2941
    %s2948 = scalar_lea.vmem %s10, 96
    %v2949 = vld [vmem:[%s2948] sm:$0xf]
    %v2950 = vld [vmem:[%s2948 + $0x4] sm:$0xf]
    %v2951 = vld [vmem:[%s2948 + $0x8] sm:$0xf]
    %v2952 = vld [vmem:[%s2948 + $0xc] sm:$0xf]
    %v2957 = vunpack.c.l.b16 %v2949
    %v2958 = vunpack.c.l.b16 %v2950
    %v2959 = vunpack.c.l.b16 %v2951
    %v2960 = vunpack.c.l.b16 %v2952
    %v2961 = vpack.c.b16 %v2958, %v2957
    %v2962 = vpack.c.b16 %v2960, %v2959
    %v2964 = vsel %vm422, %v2961, 0
    %v2967 = vsel %vm422, %v2962, 0
    %2969 = vmatprep.subr.bf16.mxu0 0
    %2970 = vmatpush1.bf16.msra.mxu0 %v2216
    %2971 = vmatprep.subr.bf16.mxu0 0
    %2972 = vmatpush1.bf16.msra.mxu0 %v2217
    %2973 = vmatprep.subr.bf16.mxu0 0
    %2974 = vmatpush1.bf16.msra.mxu0 0
    %2975 = vmatprep.subr.bf16.mxu0 0
    %2976 = vmatpush1.bf16.msra.mxu0 0
    %2977 = vmatprep.subr.bf16.mxu0 0
    %2978 = vmatpush1.bf16.msra.mxu0 0
    %2979 = vmatprep.subr.bf16.mxu0 0
    %2980 = vmatpush1.bf16.msra.mxu0 0
    %2981 = vmatprep.subr.bf16.mxu0 0
    %2982 = vmatpush1.bf16.msra.mxu0 0
    %2983 = vmatprep.subr.bf16.mxu0 0
    %2984 = vmatpush1.bf16.msra.mxu0 0
    %2985 = vmatprep.subr.bf16.mxu0 0
    %2986 = vmatpush1.bf16.msra.mxu0 0
    %2987 = vmatprep.subr.bf16.mxu0 0
    %2988 = vmatpush1.bf16.msra.mxu0 0
    %2989 = vmatprep.subr.bf16.mxu0 0
    %2990 = vmatpush1.bf16.msra.mxu0 0
    %2991 = vmatprep.subr.bf16.mxu0 0
    %2992 = vmatpush1.bf16.msra.mxu0 0
    %2993 = vmatprep.subr.bf16.mxu0 0
    %2994 = vmatpush1.bf16.msra.mxu0 0
    %2995 = vmatprep.subr.bf16.mxu0 0
    %2996 = vmatpush1.bf16.msra.mxu0 0
    %2997 = vmatprep.subr.bf16.mxu0 0
    %2998 = vmatpush1.bf16.msra.mxu0 0
    %2999 = vmatprep.subr.bf16.mxu0 0
    %3000 = vmatpush1.bf16.msra.mxu0 0
    %3001 = vmatprep.mubr.bf16.mxu0 0
    %3002 = vmatmul.mubr.bf16.gmra.mrb[0].mxu0 %v2964
    %v3003 = vpop.f32.mrb[0].mxu0
    %v3004 = vadd.f32 0.0, %v3003
    %v3005 = vpop.f32.mrb[0].mxu0
    %v3006 = vpop.f32.mrb[0].mxu0
    %v3007 = vadd.f32 0.0, %v3006
    %v3008 = vpop.f32.mrb[0].mxu0
    %3009 = vmatprep.mubr.bf16.mxu0 0
    %3010 = vmatmul.mubr.bf16.gmra.mrb[0].mxu0 %v2967
    %v3011 = vpop.f32.mrb[0].mxu0
    %v3012 = vadd.f32 0.0, %v3011
    %v3013 = vpop.f32.mrb[0].mxu0
    %v3014 = vpop.f32.mrb[0].mxu0
    %v3015 = vadd.f32 0.0, %v3014
    %v3016 = vpop.f32.mrb[0].mxu0
    %3017 = vdwg.mxu0
    %v3018 = vpack.c.bf16 %v3007, %v3004
    %v3019 = vpack.c.bf16 %v3015, %v3012
    %v3020 = vld [vmem:[#allocation11 + $0x18] sm:$0xf]
    %v3022 = vsel %vm320, %v3018, 0
    %v3025 = vsel %vm320, %v3019, 0
    %v3028 = vsel %vm2369, %v3020, 0
    %3030 = vmatprep.subr.bf16.mxu0 0
    %3031 = vmatpush1.bf16.msra.mxu0 %v3028
    %3032 = vmatprep.subr.bf16.mxu0 0
    %3033 = vmatpush1.bf16.msra.mxu0 0
    %3034 = vmatprep.subr.bf16.mxu0 0
    %3035 = vmatpush1.bf16.msra.mxu0 0
    %3036 = vmatprep.subr.bf16.mxu0 0
    %3037 = vmatpush1.bf16.msra.mxu0 0
    %3038 = vmatprep.subr.bf16.mxu0 0
    %3039 = vmatpush1.bf16.msra.mxu0 0
    %3040 = vmatprep.subr.bf16.mxu0 0
    %3041 = vmatpush1.bf16.msra.mxu0 0
    %3042 = vmatprep.subr.bf16.mxu0 0
    %3043 = vmatpush1.bf16.msra.mxu0 0
    %3044 = vmatprep.subr.bf16.mxu0 0
    %3045 = vmatpush1.bf16.msra.mxu0 0
    %3046 = vmatprep.subr.bf16.mxu0 0
    %3047 = vmatpush1.bf16.msra.mxu0 0
    %3048 = vmatprep.subr.bf16.mxu0 0
    %3049 = vmatpush1.bf16.msra.mxu0 0
    %3050 = vmatprep.subr.bf16.mxu0 0
    %3051 = vmatpush1.bf16.msra.mxu0 0
    %3052 = vmatprep.subr.bf16.mxu0 0
    %3053 = vmatpush1.bf16.msra.mxu0 0
    %3054 = vmatprep.subr.bf16.mxu0 0
    %3055 = vmatpush1.bf16.msra.mxu0 0
    %3056 = vmatprep.subr.bf16.mxu0 0
    %3057 = vmatpush1.bf16.msra.mxu0 0
    %3058 = vmatprep.subr.bf16.mxu0 0
    %3059 = vmatpush1.bf16.msra.mxu0 0
    %3060 = vmatprep.subr.bf16.mxu0 0
    %3061 = vmatpush1.bf16.msra.mxu0 0
    %3062 = vmatprep.mubr.bf16.mxu0 0
    %3063 = vmatmul.mubr.bf16.gmra.mrb[0].mxu0 %v3022
    %v3064 = vpop.f32.mrb[0].mxu0
    %v3065 = vadd.f32 0.0, %v3064
    %v3066 = vpop.f32.mrb[0].mxu0
    %v3067 = vpop.f32.mrb[0].mxu0
    %v3068 = vadd.f32 0.0, %v3067
    %v3069 = vpop.f32.mrb[0].mxu0
    %3070 = vmatprep.mubr.bf16.mxu0 0
    %3071 = vmatmul.mubr.bf16.gmra.mrb[0].mxu0 %v3025
    %v3072 = vpop.f32.mrb[0].mxu0
    %v3073 = vadd.f32 0.0, %v3072
    %v3074 = vpop.f32.mrb[0].mxu0
    %v3075 = vpop.f32.mrb[0].mxu0
    %v3076 = vadd.f32 0.0, %v3075
    %v3077 = vpop.f32.mrb[0].mxu0
    %3078 = vdwg.mxu0
    %v3079 = vadd.f32 %v2944, %v3065
    %v3080 = vadd.f32 %v2945, %v3068
    %v3081 = vadd.f32 %v2946, %v3073
    %v3082 = vadd.f32 %v2947, %v3076
    %v3083 = vld [vmem:[#allocation13] sm:$0x1]
    %v3085 = vlaneseq
    %v3086 = vshrl.u32 %v3085, 7
    %v3087 = vsub.s32 0, %v3086
    %v3088 = vrot.slane %v3083, %v3087
    %v3090 = vmul.f32 %v3079, %v3088
    %v3091 = vmul.f32 %v3080, %v3088
    %v3092 = vmul.f32 %v3081, %v3088
    %v3093 = vmul.f32 %v3082, %v3088
    %v3094 = vld [vmem:[#allocation14] sm:$0x1]
    %v3096 = vlaneseq
    %v3097 = vshrl.u32 %v3096, 7
    %v3098 = vsub.s32 0, %v3097
    %v3099 = vrot.slane %v3094, %v3098
    %v3101 = vadd.f32 %v3090, %v3099
    %v3102 = vadd.f32 %v3091, %v3099
    %v3103 = vadd.f32 %v3092, %v3099
    %v3104 = vadd.f32 %v3093, %v3099
    %v3105 = vmax.f32 %v3101, 0.0
    %v3106 = vmax.f32 %v3102, 0.0
    %v3107 = vmax.f32 %v3103, 0.0
    %v3108 = vmax.f32 %v3104, 0.0
    %v3109 = vadd.f32 %v3105, %v3106
    %v3110 = vrot.slane %v3109, 4
    %v3111 = vadd.f32 %v3109, %v3110
    %v3112 = vrot.slane %v3111, 2
    %v3113 = vadd.f32 %v3111, %v3112
    %v3114 = vrot.slane %v3113, 1
    %v3115 = vadd.f32 %v3113, %v3114
    %v3116 = vadd.f32 %v3107, %v3108
    %v3117 = vrot.slane %v3116, 4
    %v3118 = vadd.f32 %v3116, %v3117
    %v3119 = vrot.slane %v3118, 2
    %v3120 = vadd.f32 %v3118, %v3119
    %v3121 = vrot.slane %v3120, 1
    %v3122 = vadd.f32 %v3120, %v3121
    %v3123 = vmul.f32 %v3115, 0.0625
    %v3124 = vmul.f32 %v3122, 0.0625
    %v3125 = vpack.c.bf16 %v3123, %v3123
    %v3126 = vpack.c.bf16 %v3124, %v3124
    %v3127 = vld [vmem:[%s11] sm:$0xf]
    %v3128 = vld [vmem:[%s11 + $0x4] sm:$0xf]
    %v3129 = vld [vmem:[%s11 + $0x8] sm:$0xf]
    %v3130 = vld [vmem:[%s11 + $0xc] sm:$0xf]
    %v3131 = vld [vmem:[%s11 + $0x10] sm:$0xf]
    %v3132 = vld [vmem:[%s11 + $0x14] sm:$0xf]
    %v3133 = vld [vmem:[%s11 + $0x18] sm:$0xf]
    %v3134 = vld [vmem:[%s11 + $0x1c] sm:$0xf]
    %v3135 = vld [vmem:[%s11 + $0x20] sm:$0xf]
    %v3136 = vld [vmem:[%s11 + $0x24] sm:$0xf]
    %v3137 = vld [vmem:[%s11 + $0x28] sm:$0xf]
    %v3138 = vld [vmem:[%s11 + $0x2c] sm:$0xf]
    %v3139 = vld [vmem:[%s11 + $0x30] sm:$0xf]
    %v3140 = vld [vmem:[%s11 + $0x34] sm:$0xf]
    %v3141 = vld [vmem:[%s11 + $0x38] sm:$0xf]
    %v3142 = vld [vmem:[%s11 + $0x3c] sm:$0xf]
    %v3145 = vunpack.c.l.b16 %v3125
    %v3146 = vunpack.c.l.b16 %v3126
    %vm3147 = vcmask 1041409
    %v3148 = vsel %vm3147, %v3146, %v3145
    %v3149 = vpack.c.b16 %v3148, %v3148
    %v3167 = vunpack.c.l.b16 %v3127
    %v3168 = vunpack.c.l.b16 %v3128
    %v3169 = vunpack.c.l.b16 %v3129
    %v3170 = vunpack.c.l.b16 %v3130
    %v3171 = vunpack.c.l.b16 %v3131
    %v3172 = vunpack.c.l.b16 %v3132
    %v3173 = vunpack.c.l.b16 %v3133
    %v3174 = vunpack.c.l.b16 %v3134
    %v3175 = vunpack.c.l.b16 %v3135
    %v3176 = vunpack.c.l.b16 %v3136
    %v3177 = vunpack.c.l.b16 %v3137
    %v3178 = vunpack.c.l.b16 %v3138
    %v3179 = vunpack.c.l.b16 %v3139
    %v3180 = vunpack.c.l.b16 %v3140
    %v3181 = vunpack.c.l.b16 %v3141
    %v3182 = vunpack.c.l.b16 %v3142
    %v3183 = vpack.c.b16 %v3168, %v3167
    %v3184 = vpack.c.b16 %v3170, %v3169
    %v3185 = vpack.c.b16 %v3172, %v3171
    %v3186 = vpack.c.b16 %v3174, %v3173
    %v3187 = vpack.c.b16 %v3176, %v3175
    %v3188 = vpack.c.b16 %v3178, %v3177
    %v3189 = vpack.c.b16 %v3180, %v3179
    %v3190 = vpack.c.b16 %v3182, %v3181
    %3199 = vmatprep.subr.bf16.mxu0 0
    %3200 = vmatpush1.bf16.msra.mxu0 %v3183
    %3201 = vmatprep.subr.bf16.mxu0 0
    %3202 = vmatpush1.bf16.msra.mxu0 %v3184
    %3203 = vmatprep.subr.bf16.mxu0 0
    %3204 = vmatpush1.bf16.msra.mxu0 %v3185
    %3205 = vmatprep.subr.bf16.mxu0 0
    %3206 = vmatpush1.bf16.msra.mxu0 %v3186
    %3207 = vmatprep.subr.bf16.mxu0 0
    %3208 = vmatpush1.bf16.msra.mxu0 %v3187
    %3209 = vmatprep.subr.bf16.mxu0 0
    %3210 = vmatpush1.bf16.msra.mxu0 %v3188
    %3211 = vmatprep.subr.bf16.mxu0 0
    %3212 = vmatpush1.bf16.msra.mxu0 %v3189
    %3213 = vmatprep.subr.bf16.mxu0 0
    %3214 = vmatpush1.bf16.msra.mxu0 %v3190
    %3215 = vmatprep.subr.bf16.mxu0 0
    %3216 = vmatpush1.bf16.msra.mxu0 0
    %3217 = vmatprep.subr.bf16.mxu0 0
    %3218 = vmatpush1.bf16.msra.mxu0 0
    %3219 = vmatprep.subr.bf16.mxu0 0
    %3220 = vmatpush1.bf16.msra.mxu0 0
    %3221 = vmatprep.subr.bf16.mxu0 0
    %3222 = vmatpush1.bf16.msra.mxu0 0
    %3223 = vmatprep.subr.bf16.mxu0 0
    %3224 = vmatpush1.bf16.msra.mxu0 0
    %3225 = vmatprep.subr.bf16.mxu0 0
    %3226 = vmatpush1.bf16.msra.mxu0 0
    %3227 = vmatprep.subr.bf16.mxu0 0
    %3228 = vmatpush1.bf16.msra.mxu0 0
    %3229 = vmatprep.subr.bf16.mxu0 0
    %3230 = vmatpush1.bf16.msra.mxu0 0
    %3231 = vmatprep.mubr.bf16.mxu0 0
    %3232 = vmatmul.mubr.bf16.gmra.mrb[0].mxu0 %v3149
    %v3233 = vpop.f32.mrb[0].mxu0
    %v3234 = vadd.f32 0.0, %v3233
    %v3235 = vpop.f32.mrb[0].mxu0
    %v3236 = vpop.f32.mrb[0].mxu0
    %v3237 = vpop.f32.mrb[0].mxu0
    %3238 = vdwg.mxu0
    %v3239 = vmax.f32 %v3234, 0.0
    %v3240 = vpack.c.bf16 %v3239, %v3239
    %v3241 = vld [vmem:[#allocation16] sm:$0xf]
    %v3243 = vsel %vm320, %v3240, 0
    %v3246 = vsel %vm2369, %v3241, 0
    %3248 = vmatprep.subr.bf16.mxu0 0
    %3249 = vmatpush1.bf16.msra.mxu0 %v3246
    %3250 = vmatprep.subr.bf16.mxu0 0
    %3251 = vmatpush1.bf16.msra.mxu0 0
    %3252 = vmatprep.subr.bf16.mxu0 0
    %3253 = vmatpush1.bf16.msra.mxu0 0
    %3254 = vmatprep.subr.bf16.mxu0 0
    %3255 = vmatpush1.bf16.msra.mxu0 0
    %3256 = vmatprep.subr.bf16.mxu0 0
    %3257 = vmatpush1.bf16.msra.mxu0 0
    %3258 = vmatprep.subr.bf16.mxu0 0
    %3259 = vmatpush1.bf16.msra.mxu0 0
    %3260 = vmatprep.subr.bf16.mxu0 0
    %3261 = vmatpush1.bf16.msra.mxu0 0
    %3262 = vmatprep.subr.bf16.mxu0 0
    %3263 = vmatpush1.bf16.msra.mxu0 0
    %3264 = vmatprep.subr.bf16.mxu0 0
    %3265 = vmatpush1.bf16.msra.mxu0 0
    %3266 = vmatprep.subr.bf16.mxu0 0
    %3267 = vmatpush1.bf16.msra.mxu0 0
    %3268 = vmatprep.subr.bf16.mxu0 0
    %3269 = vmatpush1.bf16.msra.mxu0 0
    %3270 = vmatprep.subr.bf16.mxu0 0
    %3271 = vmatpush1.bf16.msra.mxu0 0
    %3272 = vmatprep.subr.bf16.mxu0 0
    %3273 = vmatpush1.bf16.msra.mxu0 0
    %3274 = vmatprep.subr.bf16.mxu0 0
    %3275 = vmatpush1.bf16.msra.mxu0 0
    %3276 = vmatprep.subr.bf16.mxu0 0
    %3277 = vmatpush1.bf16.msra.mxu0 0
    %3278 = vmatprep.subr.bf16.mxu0 0
    %3279 = vmatpush1.bf16.msra.mxu0 0
    %3280 = vmatprep.mubr.bf16.mxu0 0
    %3281 = vmatmul.mubr.bf16.gmra.mrb[0].mxu0 %v3243
    %v3282 = vpop.f32.mrb[0].mxu0
    %v3283 = vadd.f32 0.0, %v3282
    %v3284 = vpop.f32.mrb[0].mxu0
    %v3285 = vpop.f32.mrb[0].mxu0
    %v3286 = vpop.f32.mrb[0].mxu0
    %3287 = vdwg.mxu0
    %v3288 = vxor.u32 %v3283, 2147483648
    %v3289 = vmul.f32 %v3288, 1.442695
    %v3290 = vpow.pop %v3289
    %v3291 = vadd.f32 %v3290, 1.0
    %v3292 = vrcp.pop %v3291
    %v3293 = vmul.f32 1.0, %v3292
    %v3296 = vunpack.c.l.s4 1966171168
    %v3297 = vunpack.c.0.s8 %v3296
    %v3298 = vlaneseq
    %v3299 = vshrl.u32 %v3298, 7
    %v3300 = vsub.s32 %v3297, %v3299
    %v3301 = vrot.slane %v3293, %v3300
    %v3302 = vcombine.high %v3301, %v3301
    %v3304 = vunpack.c.l.s4 1966171168
    %v3305 = vunpack.c.0.s8 %v3304
    %v3306 = vlaneseq
    %v3307 = vshrl.u32 %v3306, 7
    %v3308 = vsub.s32 %v3305, %v3307
    %v3309 = vrot.slane %v3301, %v3308
    %v3311 = vunpack.c.l.s4 1966171168
    %v3312 = vunpack.c.0.s8 %v3311
    %v3313 = vlaneseq
    %v3314 = vshrl.u32 %v3313, 7
    %v3315 = vsub.s32 %v3312, %v3314
    %v3316 = vrot.slane %v3302, %v3315
    %v3317 = vlaneseq
    %v3318 = vshrl.u32 %v3317, 7
    %v3319 = vsub.s32 0, %v3318
    %v3320 = vrot.slane %v3309, %v3319
    %v3321 = vlaneseq
    %v3322 = vshrl.u32 %v3321, 7
    %v3323 = vsub.s32 0, %v3322
    %v3324 = vrot.slane %v3316, %v3323
    %v3327 = vmul.f32 %v3105, %v3320
    %v3328 = vmul.f32 %v3106, %v3320
    %v3329 = vmul.f32 %v3107, %v3324
    %v3330 = vmul.f32 %v3108, %v3324
    %v3331 = vpack.c.bf16 %v3328, %v3327
    %v3332 = vpack.c.bf16 %v3330, %v3329
    %v3333 = vld [vmem:[#allocation22] sm:$0xf]
    %v3334 = vld [vmem:[#allocation22 + $0x4] sm:$0xf]
    %v3335 = vld [vmem:[#allocation22 + $0x8] sm:$0xf]
    %v3336 = vld [vmem:[#allocation22 + $0xc] sm:$0xf]
    %v3341 = vunpack.c.l.b16 %v3333
    %v3342 = vunpack.c.l.b16 %v3334
    %v3343 = vunpack.c.l.b16 %v3335
    %v3344 = vunpack.c.l.b16 %v3336
    %v3345 = vpack.c.b16 %v3342, %v3341
    %v3346 = vpack.c.b16 %v3344, %v3343
    %v3348 = vsel %vm422, %v3345, 0
    %v3351 = vsel %vm422, %v3346, 0
    %3353 = vmatprep.subr.bf16.mxu0 0
    %3354 = vmatpush1.bf16.msra.mxu0 %v3331
    %3355 = vmatprep.subr.bf16.mxu0 0
    %3356 = vmatpush1.bf16.msra.mxu0 %v3332
    %3357 = vmatprep.subr.bf16.mxu0 0
    %3358 = vmatpush1.bf16.msra.mxu0 0
    %3359 = vmatprep.subr.bf16.mxu0 0
    %3360 = vmatpush1.bf16.msra.mxu0 0
    %3361 = vmatprep.subr.bf16.mxu0 0
    %3362 = vmatpush1.bf16.msra.mxu0 0
    %3363 = vmatprep.subr.bf16.mxu0 0
    %3364 = vmatpush1.bf16.msra.mxu0 0
    %3365 = vmatprep.subr.bf16.mxu0 0
    %3366 = vmatpush1.bf16.msra.mxu0 0
    %3367 = vmatprep.subr.bf16.mxu0 0
    %3368 = vmatpush1.bf16.msra.mxu0 0
    %3369 = vmatprep.subr.bf16.mxu0 0
    %3370 = vmatpush1.bf16.msra.mxu0 0
    %3371 = vmatprep.subr.bf16.mxu0 0
    %3372 = vmatpush1.bf16.msra.mxu0 0
    %3373 = vmatprep.subr.bf16.mxu0 0
    %3374 = vmatpush1.bf16.msra.mxu0 0
    %3375 = vmatprep.subr.bf16.mxu0 0
    %3376 = vmatpush1.bf16.msra.mxu0 0
    %3377 = vmatprep.subr.bf16.mxu0 0
    %3378 = vmatpush1.bf16.msra.mxu0 0
    %3379 = vmatprep.subr.bf16.mxu0 0
    %3380 = vmatpush1.bf16.msra.mxu0 0
    %3381 = vmatprep.subr.bf16.mxu0 0
    %3382 = vmatpush1.bf16.msra.mxu0 0
    %3383 = vmatprep.subr.bf16.mxu0 0
    %3384 = vmatpush1.bf16.msra.mxu0 0
    %3385 = vmatprep.mubr.bf16.mxu0 0
    %3386 = vmatmul.mubr.bf16.gmra.mrb[0].mxu0 %v3348
    %v3387 = vpop.f32.mrb[0].mxu0
    %v3388 = vadd.f32 0.0, %v3387
    %v3389 = vpop.f32.mrb[0].mxu0
    %v3390 = vpop.f32.mrb[0].mxu0
    %v3391 = vadd.f32 0.0, %v3390
    %v3392 = vpop.f32.mrb[0].mxu0
    %3393 = vmatprep.mubr.bf16.mxu0 0
    %3394 = vmatmul.mubr.bf16.gmra.mrb[0].mxu0 %v3351
    %v3395 = vpop.f32.mrb[0].mxu0
    %v3396 = vadd.f32 0.0, %v3395
    %v3397 = vpop.f32.mrb[0].mxu0
    %v3398 = vpop.f32.mrb[0].mxu0
    %v3399 = vadd.f32 0.0, %v3398
    %v3400 = vpop.f32.mrb[0].mxu0
    %3401 = vdwg.mxu0
    %v3402 = vpack.c.bf16 %v3391, %v3388
    %v3403 = vpack.c.bf16 %v3399, %v3396
    %v3404 = vld [vmem:[#allocation17] sm:$0xff]
    %v3405 = vld [vmem:[#allocation17 + $0x8] sm:$0xff]
    %v3406 = vld [vmem:[#allocation17 + $0x10] sm:$0xff]
    %v3407 = vld [vmem:[#allocation17 + $0x18] sm:$0xff]
    %v3408 = vld [vmem:[#allocation17 + $0x20] sm:$0xff]
    %v3409 = vld [vmem:[#allocation17 + $0x28] sm:$0xff]
    %v3410 = vld [vmem:[#allocation17 + $0x30] sm:$0xff]
    %v3411 = vld [vmem:[#allocation17 + $0x38] sm:$0xff]
    %v3412 = vld [vmem:[#allocation17 + $0x40] sm:$0xff]
    %v3413 = vld [vmem:[#allocation17 + $0x48] sm:$0xff]
    %v3414 = vld [vmem:[#allocation17 + $0x50] sm:$0xff]
    %v3415 = vld [vmem:[#allocation17 + $0x58] sm:$0xff]
    %v3416 = vld [vmem:[#allocation17 + $0x60] sm:$0xff]
    %v3417 = vld [vmem:[#allocation17 + $0x68] sm:$0xff]
    %v3418 = vld [vmem:[#allocation17 + $0x70] sm:$0xff]
    %v3419 = vld [vmem:[#allocation17 + $0x78] sm:$0xff]
    %s3420 = scalar_lea.vmem [#allocation22], 16
    %v3421 = vld [vmem:[%s3420] sm:$0xf]
    %v3422 = vld [vmem:[%s3420 + $0x4] sm:$0xf]
    %v3423 = vld [vmem:[%s3420 + $0x8] sm:$0xf]
    %v3424 = vld [vmem:[%s3420 + $0xc] sm:$0xf]
    %v3429 = vunpack.c.l.b16 %v3421
    %v3430 = vunpack.c.l.b16 %v3422
    %v3431 = vunpack.c.l.b16 %v3423
    %v3432 = vunpack.c.l.b16 %v3424
    %v3433 = vpack.c.b16 %v3430, %v3429
    %v3434 = vpack.c.b16 %v3432, %v3431
    %v3436 = vsel %vm422, %v3433, 0
    %v3439 = vsel %vm422, %v3434, 0
    %3441 = vmatprep.subr.bf16.mxu0 0
    %3442 = vmatpush1.bf16.msra.mxu0 %v3331
    %3443 = vmatprep.subr.bf16.mxu0 0
    %3444 = vmatpush1.bf16.msra.mxu0 %v3332
    %3445 = vmatprep.subr.bf16.mxu0 0
    %3446 = vmatpush1.bf16.msra.mxu0 0
    %3447 = vmatprep.subr.bf16.mxu0 0
    %3448 = vmatpush1.bf16.msra.mxu0 0
    %3449 = vmatprep.subr.bf16.mxu0 0
    %3450 = vmatpush1.bf16.msra.mxu0 0
    %3451 = vmatprep.subr.bf16.mxu0 0
    %3452 = vmatpush1.bf16.msra.mxu0 0
    %3453 = vmatprep.subr.bf16.mxu0 0
    %3454 = vmatpush1.bf16.msra.mxu0 0
    %3455 = vmatprep.subr.bf16.mxu0 0
    %3456 = vmatpush1.bf16.msra.mxu0 0
    %3457 = vmatprep.subr.bf16.mxu0 0
    %3458 = vmatpush1.bf16.msra.mxu0 0
    %3459 = vmatprep.subr.bf16.mxu0 0
    %3460 = vmatpush1.bf16.msra.mxu0 0
    %3461 = vmatprep.subr.bf16.mxu0 0
    %3462 = vmatpush1.bf16.msra.mxu0 0
    %3463 = vmatprep.subr.bf16.mxu0 0
    %3464 = vmatpush1.bf16.msra.mxu0 0
    %3465 = vmatprep.subr.bf16.mxu0 0
    %3466 = vmatpush1.bf16.msra.mxu0 0
    %3467 = vmatprep.subr.bf16.mxu0 0
    %3468 = vmatpush1.bf16.msra.mxu0 0
    %3469 = vmatprep.subr.bf16.mxu0 0
    %3470 = vmatpush1.bf16.msra.mxu0 0
    %3471 = vmatprep.subr.bf16.mxu0 0
    %3472 = vmatpush1.bf16.msra.mxu0 0
    %3473 = vmatprep.mubr.bf16.mxu0 0
    %3474 = vmatmul.mubr.bf16.gmra.mrb[0].mxu0 %v3436
    %v3475 = vpop.f32.mrb[0].mxu0
    %v3476 = vadd.f32 0.0, %v3475
    %v3477 = vpop.f32.mrb[0].mxu0
    %v3478 = vpop.f32.mrb[0].mxu0
    %v3479 = vadd.f32 0.0, %v3478
    %v3480 = vpop.f32.mrb[0].mxu0
    %3481 = vmatprep.mubr.bf16.mxu0 0
    %3482 = vmatmul.mubr.bf16.gmra.mrb[0].mxu0 %v3439
    %v3483 = vpop.f32.mrb[0].mxu0
    %v3484 = vadd.f32 0.0, %v3483
    %v3485 = vpop.f32.mrb[0].mxu0
    %v3486 = vpop.f32.mrb[0].mxu0
    %v3487 = vadd.f32 0.0, %v3486
    %v3488 = vpop.f32.mrb[0].mxu0
    %3489 = vdwg.mxu0
    %v3490 = vpack.c.bf16 %v3479, %v3476
    %v3491 = vpack.c.bf16 %v3487, %v3484
    %v3492 = vld [vmem:[#allocation17 + $0x80] sm:$0xff]
    %v3493 = vld [vmem:[#allocation17 + $0x88] sm:$0xff]
    %v3494 = vld [vmem:[#allocation17 + $0x90] sm:$0xff]
    %v3495 = vld [vmem:[#allocation17 + $0x98] sm:$0xff]
    %v3496 = vld [vmem:[#allocation17 + $0xa0] sm:$0xff]
    %v3497 = vld [vmem:[#allocation17 + $0xa8] sm:$0xff]
    %v3498 = vld [vmem:[#allocation17 + $0xb0] sm:$0xff]
    %v3499 = vld [vmem:[#allocation17 + $0xb8] sm:$0xff]
    %v3500 = vld [vmem:[#allocation17 + $0xc0] sm:$0xff]
    %v3501 = vld [vmem:[#allocation17 + $0xc8] sm:$0xff]
    %v3502 = vld [vmem:[#allocation17 + $0xd0] sm:$0xff]
    %v3503 = vld [vmem:[#allocation17 + $0xd8] sm:$0xff]
    %v3504 = vld [vmem:[#allocation17 + $0xe0] sm:$0xff]
    %v3505 = vld [vmem:[#allocation17 + $0xe8] sm:$0xff]
    %v3506 = vld [vmem:[#allocation17 + $0xf0] sm:$0xff]
    %v3507 = vld [vmem:[#allocation17 + $0xf8] sm:$0xff]
    %v3524 = vunpack.c.l.b16 %v3492
    %v3525 = vunpack.c.h.b16 %v3492
    %v3526 = vunpack.c.l.b16 %v3493
    %v3527 = vunpack.c.h.b16 %v3493
    %v3528 = vunpack.c.l.b16 %v3494
    %v3529 = vunpack.c.h.b16 %v3494
    %v3530 = vunpack.c.l.b16 %v3495
    %v3531 = vunpack.c.h.b16 %v3495
    %v3532 = vunpack.c.l.b16 %v3496
    %v3533 = vunpack.c.h.b16 %v3496
    %v3534 = vunpack.c.l.b16 %v3497
    %v3535 = vunpack.c.h.b16 %v3497
    %v3536 = vunpack.c.l.b16 %v3498
    %v3537 = vunpack.c.h.b16 %v3498
    %v3538 = vunpack.c.l.b16 %v3499
    %v3539 = vunpack.c.h.b16 %v3499
    %v3540 = vunpack.c.l.b16 %v3500
    %v3541 = vunpack.c.h.b16 %v3500
    %v3542 = vunpack.c.l.b16 %v3501
    %v3543 = vunpack.c.h.b16 %v3501
    %v3544 = vunpack.c.l.b16 %v3502
    %v3545 = vunpack.c.h.b16 %v3502
    %v3546 = vunpack.c.l.b16 %v3503
    %v3547 = vunpack.c.h.b16 %v3503
    %v3548 = vunpack.c.l.b16 %v3504
    %v3549 = vunpack.c.h.b16 %v3504
    %v3550 = vunpack.c.l.b16 %v3505
    %v3551 = vunpack.c.h.b16 %v3505
    %v3552 = vunpack.c.l.b16 %v3506
    %v3553 = vunpack.c.h.b16 %v3506
    %v3554 = vunpack.c.l.b16 %v3507
    %v3555 = vunpack.c.h.b16 %v3507
    %v3556 = vpack.c.b16 %v3526, %v3524
    %v3557 = vpack.c.b16 %v3527, %v3525
    %v3558 = vpack.c.b16 %v3530, %v3528
    %v3559 = vpack.c.b16 %v3531, %v3529
    %v3560 = vpack.c.b16 %v3534, %v3532
    %v3561 = vpack.c.b16 %v3535, %v3533
    %v3562 = vpack.c.b16 %v3538, %v3536
    %v3563 = vpack.c.b16 %v3539, %v3537
    %v3564 = vpack.c.b16 %v3542, %v3540
    %v3565 = vpack.c.b16 %v3543, %v3541
    %v3566 = vpack.c.b16 %v3546, %v3544
    %v3567 = vpack.c.b16 %v3547, %v3545
    %v3568 = vpack.c.b16 %v3550, %v3548
    %v3569 = vpack.c.b16 %v3551, %v3549
    %v3570 = vpack.c.b16 %v3554, %v3552
    %v3571 = vpack.c.b16 %v3555, %v3553
    %3588 = vmatprep.subr.bf16.mxu0 %v3557
    %3589 = vmatpush1.bf16.msra.mxu0 %v3556
    %3590 = vmatprep.subr.bf16.mxu0 %v3559
    %3591 = vmatpush1.bf16.msra.mxu0 %v3558
    %3592 = vmatprep.subr.bf16.mxu0 %v3561
    %3593 = vmatpush1.bf16.msra.mxu0 %v3560
    %3594 = vmatprep.subr.bf16.mxu0 %v3563
    %3595 = vmatpush1.bf16.msra.mxu0 %v3562
    %3596 = vmatprep.subr.bf16.mxu0 %v3565
    %3597 = vmatpush1.bf16.msra.mxu0 %v3564
    %3598 = vmatprep.subr.bf16.mxu0 %v3567
    %3599 = vmatpush1.bf16.msra.mxu0 %v3566
    %3600 = vmatprep.subr.bf16.mxu0 %v3569
    %3601 = vmatpush1.bf16.msra.mxu0 %v3568
    %3602 = vmatprep.subr.bf16.mxu0 %v3571
    %3603 = vmatpush1.bf16.msra.mxu0 %v3570
    %3604 = vmatprep.subr.bf16.mxu0 0
    %3605 = vmatpush1.bf16.msra.mxu0 0
    %3606 = vmatprep.subr.bf16.mxu0 0
    %3607 = vmatpush1.bf16.msra.mxu0 0
    %3608 = vmatprep.subr.bf16.mxu0 0
    %3609 = vmatpush1.bf16.msra.mxu0 0
    %3610 = vmatprep.subr.bf16.mxu0 0
    %3611 = vmatpush1.bf16.msra.mxu0 0
    %3612 = vmatprep.subr.bf16.mxu0 0
    %3613 = vmatpush1.bf16.msra.mxu0 0
    %3614 = vmatprep.subr.bf16.mxu0 0
    %3615 = vmatpush1.bf16.msra.mxu0 0
    %3616 = vmatprep.subr.bf16.mxu0 0
    %3617 = vmatpush1.bf16.msra.mxu0 0
    %3618 = vmatprep.subr.bf16.mxu0 0
    %3619 = vmatpush1.bf16.msra.mxu0 0
    %3620 = vmatprep.mubr.bf16.mxu0 0
    %3621 = vmatmul.mubr.bf16.gmra.mrb[0].mxu0 %v3490
    %v3622 = vpop.f32.mrb[0].mxu0
    %v3623 = vadd.f32 0.0, %v3622
    %v3624 = vpop.f32.mrb[0].mxu0
    %v3625 = vadd.f32 0.0, %v3624
    %v3626 = vpop.f32.mrb[0].mxu0
    %v3627 = vadd.f32 0.0, %v3626
    %v3628 = vpop.f32.mrb[0].mxu0
    %v3629 = vadd.f32 0.0, %v3628
    %3630 = vmatprep.mubr.bf16.mxu0 0
    %3631 = vmatmul.mubr.bf16.gmra.mrb[0].mxu0 %v3491
    %v3632 = vpop.f32.mrb[0].mxu0
    %v3633 = vadd.f32 0.0, %v3632
    %v3634 = vpop.f32.mrb[0].mxu0
    %v3635 = vadd.f32 0.0, %v3634
    %v3636 = vpop.f32.mrb[0].mxu0
    %v3637 = vadd.f32 0.0, %v3636
    %v3638 = vpop.f32.mrb[0].mxu0
    %v3639 = vadd.f32 0.0, %v3638
    %3640 = vdwg.mxu0
    %v3657 = vunpack.c.l.b16 %v3404
    %v3658 = vunpack.c.h.b16 %v3404
    %v3659 = vunpack.c.l.b16 %v3405
    %v3660 = vunpack.c.h.b16 %v3405
    %v3661 = vunpack.c.l.b16 %v3406
    %v3662 = vunpack.c.h.b16 %v3406
    %v3663 = vunpack.c.l.b16 %v3407
    %v3664 = vunpack.c.h.b16 %v3407
    %v3665 = vunpack.c.l.b16 %v3408
    %v3666 = vunpack.c.h.b16 %v3408
    %v3667 = vunpack.c.l.b16 %v3409
    %v3668 = vunpack.c.h.b16 %v3409
    %v3669 = vunpack.c.l.b16 %v3410
    %v3670 = vunpack.c.h.b16 %v3410
    %v3671 = vunpack.c.l.b16 %v3411
    %v3672 = vunpack.c.h.b16 %v3411
    %v3673 = vunpack.c.l.b16 %v3412
    %v3674 = vunpack.c.h.b16 %v3412
    %v3675 = vunpack.c.l.b16 %v3413
    %v3676 = vunpack.c.h.b16 %v3413
    %v3677 = vunpack.c.l.b16 %v3414
    %v3678 = vunpack.c.h.b16 %v3414
    %v3679 = vunpack.c.l.b16 %v3415
    %v3680 = vunpack.c.h.b16 %v3415
    %v3681 = vunpack.c.l.b16 %v3416
    %v3682 = vunpack.c.h.b16 %v3416
    %v3683 = vunpack.c.l.b16 %v3417
    %v3684 = vunpack.c.h.b16 %v3417
    %v3685 = vunpack.c.l.b16 %v3418
    %v3686 = vunpack.c.h.b16 %v3418
    %v3687 = vunpack.c.l.b16 %v3419
    %v3688 = vunpack.c.h.b16 %v3419
    %v3689 = vpack.c.b16 %v3659, %v3657
    %v3690 = vpack.c.b16 %v3660, %v3658
    %v3691 = vpack.c.b16 %v3663, %v3661
    %v3692 = vpack.c.b16 %v3664, %v3662
    %v3693 = vpack.c.b16 %v3667, %v3665
    %v3694 = vpack.c.b16 %v3668, %v3666
    %v3695 = vpack.c.b16 %v3671, %v3669
    %v3696 = vpack.c.b16 %v3672, %v3670
    %v3697 = vpack.c.b16 %v3675, %v3673
    %v3698 = vpack.c.b16 %v3676, %v3674
    %v3699 = vpack.c.b16 %v3679, %v3677
    %v3700 = vpack.c.b16 %v3680, %v3678
    %v3701 = vpack.c.b16 %v3683, %v3681
    %v3702 = vpack.c.b16 %v3684, %v3682
    %v3703 = vpack.c.b16 %v3687, %v3685
    %v3704 = vpack.c.b16 %v3688, %v3686
    %3721 = vmatprep.subr.bf16.mxu0 %v3690
    %3722 = vmatpush1.bf16.msra.mxu0 %v3689
    %3723 = vmatprep.subr.bf16.mxu0 %v3692
    %3724 = vmatpush1.bf16.msra.mxu0 %v3691
    %3725 = vmatprep.subr.bf16.mxu0 %v3694
    %3726 = vmatpush1.bf16.msra.mxu0 %v3693
    %3727 = vmatprep.subr.bf16.mxu0 %v3696
    %3728 = vmatpush1.bf16.msra.mxu0 %v3695
    %3729 = vmatprep.subr.bf16.mxu0 %v3698
    %3730 = vmatpush1.bf16.msra.mxu0 %v3697
    %3731 = vmatprep.subr.bf16.mxu0 %v3700
    %3732 = vmatpush1.bf16.msra.mxu0 %v3699
    %3733 = vmatprep.subr.bf16.mxu0 %v3702
    %3734 = vmatpush1.bf16.msra.mxu0 %v3701
    %3735 = vmatprep.subr.bf16.mxu0 %v3704
    %3736 = vmatpush1.bf16.msra.mxu0 %v3703
    %3737 = vmatprep.subr.bf16.mxu0 0
    %3738 = vmatpush1.bf16.msra.mxu0 0
    %3739 = vmatprep.subr.bf16.mxu0 0
    %3740 = vmatpush1.bf16.msra.mxu0 0
    %3741 = vmatprep.subr.bf16.mxu0 0
    %3742 = vmatpush1.bf16.msra.mxu0 0
    %3743 = vmatprep.subr.bf16.mxu0 0
    %3744 = vmatpush1.bf16.msra.mxu0 0
    %3745 = vmatprep.subr.bf16.mxu0 0
    %3746 = vmatpush1.bf16.msra.mxu0 0
    %3747 = vmatprep.subr.bf16.mxu0 0
    %3748 = vmatpush1.bf16.msra.mxu0 0
    %3749 = vmatprep.subr.bf16.mxu0 0
    %3750 = vmatpush1.bf16.msra.mxu0 0
    %3751 = vmatprep.subr.bf16.mxu0 0
    %3752 = vmatpush1.bf16.msra.mxu0 0
    %3753 = vmatprep.mubr.bf16.mxu0 0
    %3754 = vmatmul.mubr.bf16.gmra.mrb[0].mxu0 %v3402
    %v3755 = vpop.f32.mrb[0].mxu0
    %v3756 = vadd.f32 %v3623, %v3755
    %v3757 = vpop.f32.mrb[0].mxu0
    %v3758 = vadd.f32 %v3625, %v3757
    %v3759 = vpop.f32.mrb[0].mxu0
    %v3760 = vadd.f32 %v3627, %v3759
    %v3761 = vpop.f32.mrb[0].mxu0
    %v3762 = vadd.f32 %v3629, %v3761
    %3763 = vmatprep.mubr.bf16.mxu0 0
    %3764 = vmatmul.mubr.bf16.gmra.mrb[0].mxu0 %v3403
    %v3765 = vpop.f32.mrb[0].mxu0
    %v3766 = vadd.f32 %v3633, %v3765
    %v3767 = vpop.f32.mrb[0].mxu0
    %v3768 = vadd.f32 %v3635, %v3767
    %v3769 = vpop.f32.mrb[0].mxu0
    %v3770 = vadd.f32 %v3637, %v3769
    %v3771 = vpop.f32.mrb[0].mxu0
    %v3772 = vadd.f32 %v3639, %v3771
    %3773 = vdwg.mxu0
    %v3774 = vld [vmem:[#allocation17 + $0x100] sm:$0xff]
    %v3775 = vld [vmem:[#allocation17 + $0x108] sm:$0xff]
    %v3776 = vld [vmem:[#allocation17 + $0x110] sm:$0xff]
    %v3777 = vld [vmem:[#allocation17 + $0x118] sm:$0xff]
    %v3778 = vld [vmem:[#allocation17 + $0x120] sm:$0xff]
    %v3779 = vld [vmem:[#allocation17 + $0x128] sm:$0xff]
    %v3780 = vld [vmem:[#allocation17 + $0x130] sm:$0xff]
    %v3781 = vld [vmem:[#allocation17 + $0x138] sm:$0xff]
    %v3782 = vld [vmem:[#allocation17 + $0x140] sm:$0xff]
    %v3783 = vld [vmem:[#allocation17 + $0x148] sm:$0xff]
    %v3784 = vld [vmem:[#allocation17 + $0x150] sm:$0xff]
    %v3785 = vld [vmem:[#allocation17 + $0x158] sm:$0xff]
    %v3786 = vld [vmem:[#allocation17 + $0x160] sm:$0xff]
    %v3787 = vld [vmem:[#allocation17 + $0x168] sm:$0xff]
    %v3788 = vld [vmem:[#allocation17 + $0x170] sm:$0xff]
    %v3789 = vld [vmem:[#allocation17 + $0x178] sm:$0xff]
    %v3806 = vunpack.c.l.b16 %v3774
    %v3807 = vunpack.c.h.b16 %v3774
    %v3808 = vunpack.c.l.b16 %v3775
    %v3809 = vunpack.c.h.b16 %v3775
    %v3810 = vunpack.c.l.b16 %v3776
    %v3811 = vunpack.c.h.b16 %v3776
    %v3812 = vunpack.c.l.b16 %v3777
    %v3813 = vunpack.c.h.b16 %v3777
    %v3814 = vunpack.c.l.b16 %v3778
    %v3815 = vunpack.c.h.b16 %v3778
    %v3816 = vunpack.c.l.b16 %v3779
    %v3817 = vunpack.c.h.b16 %v3779
    %v3818 = vunpack.c.l.b16 %v3780
    %v3819 = vunpack.c.h.b16 %v3780
    %v3820 = vunpack.c.l.b16 %v3781
    %v3821 = vunpack.c.h.b16 %v3781
    %v3822 = vunpack.c.l.b16 %v3782
    %v3823 = vunpack.c.h.b16 %v3782
    %v3824 = vunpack.c.l.b16 %v3783
    %v3825 = vunpack.c.h.b16 %v3783
    %v3826 = vunpack.c.l.b16 %v3784
    %v3827 = vunpack.c.h.b16 %v3784
    %v3828 = vunpack.c.l.b16 %v3785
    %v3829 = vunpack.c.h.b16 %v3785
    %v3830 = vunpack.c.l.b16 %v3786
    %v3831 = vunpack.c.h.b16 %v3786
    %v3832 = vunpack.c.l.b16 %v3787
    %v3833 = vunpack.c.h.b16 %v3787
    %v3834 = vunpack.c.l.b16 %v3788
    %v3835 = vunpack.c.h.b16 %v3788
    %v3836 = vunpack.c.l.b16 %v3789
    %v3837 = vunpack.c.h.b16 %v3789
    %v3838 = vpack.c.b16 %v3808, %v3806
    %v3839 = vpack.c.b16 %v3809, %v3807
    %v3840 = vpack.c.b16 %v3812, %v3810
    %v3841 = vpack.c.b16 %v3813, %v3811
    %v3842 = vpack.c.b16 %v3816, %v3814
    %v3843 = vpack.c.b16 %v3817, %v3815
    %v3844 = vpack.c.b16 %v3820, %v3818
    %v3845 = vpack.c.b16 %v3821, %v3819
    %v3846 = vpack.c.b16 %v3824, %v3822
    %v3847 = vpack.c.b16 %v3825, %v3823
    %v3848 = vpack.c.b16 %v3828, %v3826
    %v3849 = vpack.c.b16 %v3829, %v3827
    %v3850 = vpack.c.b16 %v3832, %v3830
    %v3851 = vpack.c.b16 %v3833, %v3831
    %v3852 = vpack.c.b16 %v3836, %v3834
    %v3853 = vpack.c.b16 %v3837, %v3835
    %3870 = vmatprep.subr.bf16.mxu0 %v3839
    %3871 = vmatpush1.bf16.msra.mxu0 %v3838
    %3872 = vmatprep.subr.bf16.mxu0 %v3841
    %3873 = vmatpush1.bf16.msra.mxu0 %v3840
    %3874 = vmatprep.subr.bf16.mxu0 %v3843
    %3875 = vmatpush1.bf16.msra.mxu0 %v3842
    %3876 = vmatprep.subr.bf16.mxu0 %v3845
    %3877 = vmatpush1.bf16.msra.mxu0 %v3844
    %3878 = vmatprep.subr.bf16.mxu0 %v3847
    %3879 = vmatpush1.bf16.msra.mxu0 %v3846
    %3880 = vmatprep.subr.bf16.mxu0 %v3849
    %3881 = vmatpush1.bf16.msra.mxu0 %v3848
    %3882 = vmatprep.subr.bf16.mxu0 %v3851
    %3883 = vmatpush1.bf16.msra.mxu0 %v3850
    %3884 = vmatprep.subr.bf16.mxu0 %v3853
    %3885 = vmatpush1.bf16.msra.mxu0 %v3852
    %3886 = vmatprep.subr.bf16.mxu0 0
    %3887 = vmatpush1.bf16.msra.mxu0 0
    %3888 = vmatprep.subr.bf16.mxu0 0
    %3889 = vmatpush1.bf16.msra.mxu0 0
    %3890 = vmatprep.subr.bf16.mxu0 0
    %3891 = vmatpush1.bf16.msra.mxu0 0
    %3892 = vmatprep.subr.bf16.mxu0 0
    %3893 = vmatpush1.bf16.msra.mxu0 0
    %3894 = vmatprep.subr.bf16.mxu0 0
    %3895 = vmatpush1.bf16.msra.mxu0 0
    %3896 = vmatprep.subr.bf16.mxu0 0
    %3897 = vmatpush1.bf16.msra.mxu0 0
    %3898 = vmatprep.subr.bf16.mxu0 0
    %3899 = vmatpush1.bf16.msra.mxu0 0
    %3900 = vmatprep.subr.bf16.mxu0 0
    %3901 = vmatpush1.bf16.msra.mxu0 0
    %3902 = vmatprep.mubr.bf16.mxu0 0
    %3903 = vmatmul.mubr.bf16.gmra.mrb[0].mxu0 %v3331
    %v3904 = vpop.f32.mrb[0].mxu0
    %v3905 = vadd.f32 0.0, %v3904
    %v3906 = vpop.f32.mrb[0].mxu0
    %v3907 = vadd.f32 0.0, %v3906
    %v3908 = vpop.f32.mrb[0].mxu0
    %v3909 = vadd.f32 0.0, %v3908
    %v3910 = vpop.f32.mrb[0].mxu0
    %v3911 = vadd.f32 0.0, %v3910
    %3912 = vmatprep.mubr.bf16.mxu0 0
    %3913 = vmatmul.mubr.bf16.gmra.mrb[0].mxu0 %v3332
    %v3914 = vpop.f32.mrb[0].mxu0
    %v3915 = vadd.f32 0.0, %v3914
    %v3916 = vpop.f32.mrb[0].mxu0
    %v3917 = vadd.f32 0.0, %v3916
    %v3918 = vpop.f32.mrb[0].mxu0
    %v3919 = vadd.f32 0.0, %v3918
    %v3920 = vpop.f32.mrb[0].mxu0
    %v3921 = vadd.f32 0.0, %v3920
    %3922 = vdwg.mxu0
    %v3923 = vadd.f32 %v3756, %v3905
    %v3924 = vadd.f32 %v3758, %v3907
    %v3925 = vadd.f32 %v3760, %v3909
    %v3926 = vadd.f32 %v3762, %v3911
    %v3927 = vadd.f32 %v3766, %v3915
    %v3928 = vadd.f32 %v3768, %v3917
    %v3929 = vadd.f32 %v3770, %v3919
    %v3930 = vadd.f32 %v3772, %v3921
    %s3931 = scalar_lea.vmem [#allocation22], 48
    %v3932 = vld [vmem:[%s3931] sm:$0xf]
    %v3933 = vld [vmem:[%s3931 + $0x4] sm:$0xf]
    %v3934 = vld [vmem:[%s3931 + $0x8] sm:$0xf]
    %v3935 = vld [vmem:[%s3931 + $0xc] sm:$0xf]
    %v3940 = vunpack.c.l.b16 %v3932
    %v3941 = vunpack.c.l.b16 %v3933
    %v3942 = vunpack.c.l.b16 %v3934
    %v3943 = vunpack.c.l.b16 %v3935
    %v3944 = vpack.c.b16 %v3941, %v3940
    %v3945 = vpack.c.b16 %v3943, %v3942
    %v3947 = vsel %vm422, %v3944, 0
    %v3950 = vsel %vm422, %v3945, 0
    %3952 = vmatprep.subr.bf16.mxu0 0
    %3953 = vmatpush1.bf16.msra.mxu0 %v3331
    %3954 = vmatprep.subr.bf16.mxu0 0
    %3955 = vmatpush1.bf16.msra.mxu0 %v3332
    %3956 = vmatprep.subr.bf16.mxu0 0
    %3957 = vmatpush1.bf16.msra.mxu0 0
    %3958 = vmatprep.subr.bf16.mxu0 0
    %3959 = vmatpush1.bf16.msra.mxu0 0
    %3960 = vmatprep.subr.bf16.mxu0 0
    %3961 = vmatpush1.bf16.msra.mxu0 0
    %3962 = vmatprep.subr.bf16.mxu0 0
    %3963 = vmatpush1.bf16.msra.mxu0 0
    %3964 = vmatprep.subr.bf16.mxu0 0
    %3965 = vmatpush1.bf16.msra.mxu0 0
    %3966 = vmatprep.subr.bf16.mxu0 0
    %3967 = vmatpush1.bf16.msra.mxu0 0
    %3968 = vmatprep.subr.bf16.mxu0 0
    %3969 = vmatpush1.bf16.msra.mxu0 0
    %3970 = vmatprep.subr.bf16.mxu0 0
    %3971 = vmatpush1.bf16.msra.mxu0 0
    %3972 = vmatprep.subr.bf16.mxu0 0
    %3973 = vmatpush1.bf16.msra.mxu0 0
    %3974 = vmatprep.subr.bf16.mxu0 0
    %3975 = vmatpush1.bf16.msra.mxu0 0
    %3976 = vmatprep.subr.bf16.mxu0 0
    %3977 = vmatpush1.bf16.msra.mxu0 0
    %3978 = vmatprep.subr.bf16.mxu0 0
    %3979 = vmatpush1.bf16.msra.mxu0 0
    %3980 = vmatprep.subr.bf16.mxu0 0
    %3981 = vmatpush1.bf16.msra.mxu0 0
    %3982 = vmatprep.subr.bf16.mxu0 0
    %3983 = vmatpush1.bf16.msra.mxu0 0
    %3984 = vmatprep.mubr.bf16.mxu0 0
    %3985 = vmatmul.mubr.bf16.gmra.mrb[0].mxu0 %v3947
    %v3986 = vpop.f32.mrb[0].mxu0
    %v3987 = vadd.f32 0.0, %v3986
    %v3988 = vpop.f32.mrb[0].mxu0
    %v3989 = vpop.f32.mrb[0].mxu0
    %v3990 = vadd.f32 0.0, %v3989
    %v3991 = vpop.f32.mrb[0].mxu0
    %3992 = vmatprep.mubr.bf16.mxu0 0
    %3993 = vmatmul.mubr.bf16.gmra.mrb[0].mxu0 %v3950
    %v3994 = vpop.f32.mrb[0].mxu0
    %v3995 = vadd.f32 0.0, %v3994
    %v3996 = vpop.f32.mrb[0].mxu0
    %v3997 = vpop.f32.mrb[0].mxu0
    %v3998 = vadd.f32 0.0, %v3997
    %v3999 = vpop.f32.mrb[0].mxu0
    %4000 = vdwg.mxu0
    %v4001 = vpack.c.bf16 %v3990, %v3987
    %v4002 = vpack.c.bf16 %v3998, %v3995
    %v4003 = vld [vmem:[#allocation17 + $0x180] sm:$0xff]
    %v4004 = vld [vmem:[#allocation17 + $0x188] sm:$0xff]
    %v4005 = vld [vmem:[#allocation17 + $0x190] sm:$0xff]
    %v4006 = vld [vmem:[#allocation17 + $0x198] sm:$0xff]
    %v4007 = vld [vmem:[#allocation17 + $0x1a0] sm:$0xff]
    %v4008 = vld [vmem:[#allocation17 + $0x1a8] sm:$0xff]
    %v4009 = vld [vmem:[#allocation17 + $0x1b0] sm:$0xff]
    %v4010 = vld [vmem:[#allocation17 + $0x1b8] sm:$0xff]
    %v4011 = vld [vmem:[#allocation17 + $0x1c0] sm:$0xff]
    %v4012 = vld [vmem:[#allocation17 + $0x1c8] sm:$0xff]
    %v4013 = vld [vmem:[#allocation17 + $0x1d0] sm:$0xff]
    %v4014 = vld [vmem:[#allocation17 + $0x1d8] sm:$0xff]
    %v4015 = vld [vmem:[#allocation17 + $0x1e0] sm:$0xff]
    %v4016 = vld [vmem:[#allocation17 + $0x1e8] sm:$0xff]
    %v4017 = vld [vmem:[#allocation17 + $0x1f0] sm:$0xff]
    %v4018 = vld [vmem:[#allocation17 + $0x1f8] sm:$0xff]
    %v4035 = vunpack.c.l.b16 %v4003
    %v4036 = vunpack.c.h.b16 %v4003
    %v4037 = vunpack.c.l.b16 %v4004
    %v4038 = vunpack.c.h.b16 %v4004
    %v4039 = vunpack.c.l.b16 %v4005
    %v4040 = vunpack.c.h.b16 %v4005
    %v4041 = vunpack.c.l.b16 %v4006
    %v4042 = vunpack.c.h.b16 %v4006
    %v4043 = vunpack.c.l.b16 %v4007
    %v4044 = vunpack.c.h.b16 %v4007
    %v4045 = vunpack.c.l.b16 %v4008
    %v4046 = vunpack.c.h.b16 %v4008
    %v4047 = vunpack.c.l.b16 %v4009
    %v4048 = vunpack.c.h.b16 %v4009
    %v4049 = vunpack.c.l.b16 %v4010
    %v4050 = vunpack.c.h.b16 %v4010
    %v4051 = vunpack.c.l.b16 %v4011
    %v4052 = vunpack.c.h.b16 %v4011
    %v4053 = vunpack.c.l.b16 %v4012
    %v4054 = vunpack.c.h.b16 %v4012
    %v4055 = vunpack.c.l.b16 %v4013
    %v4056 = vunpack.c.h.b16 %v4013
    %v4057 = vunpack.c.l.b16 %v4014
    %v4058 = vunpack.c.h.b16 %v4014
    %v4059 = vunpack.c.l.b16 %v4015
    %v4060 = vunpack.c.h.b16 %v4015
    %v4061 = vunpack.c.l.b16 %v4016
    %v4062 = vunpack.c.h.b16 %v4016
    %v4063 = vunpack.c.l.b16 %v4017
    %v4064 = vunpack.c.h.b16 %v4017
    %v4065 = vunpack.c.l.b16 %v4018
    %v4066 = vunpack.c.h.b16 %v4018
    %v4067 = vpack.c.b16 %v4037, %v4035
    %v4068 = vpack.c.b16 %v4038, %v4036
    %v4069 = vpack.c.b16 %v4041, %v4039
    %v4070 = vpack.c.b16 %v4042, %v4040
    %v4071 = vpack.c.b16 %v4045, %v4043
    %v4072 = vpack.c.b16 %v4046, %v4044
    %v4073 = vpack.c.b16 %v4049, %v4047
    %v4074 = vpack.c.b16 %v4050, %v4048
    %v4075 = vpack.c.b16 %v4053, %v4051
    %v4076 = vpack.c.b16 %v4054, %v4052
    %v4077 = vpack.c.b16 %v4057, %v4055
    %v4078 = vpack.c.b16 %v4058, %v4056
    %v4079 = vpack.c.b16 %v4061, %v4059
    %v4080 = vpack.c.b16 %v4062, %v4060
    %v4081 = vpack.c.b16 %v4065, %v4063
    %v4082 = vpack.c.b16 %v4066, %v4064
    %4099 = vmatprep.subr.bf16.mxu0 %v4068
    %4100 = vmatpush1.bf16.msra.mxu0 %v4067
    %4101 = vmatprep.subr.bf16.mxu0 %v4070
    %4102 = vmatpush1.bf16.msra.mxu0 %v4069
    %4103 = vmatprep.subr.bf16.mxu0 %v4072
    %4104 = vmatpush1.bf16.msra.mxu0 %v4071
    %4105 = vmatprep.subr.bf16.mxu0 %v4074
    %4106 = vmatpush1.bf16.msra.mxu0 %v4073
    %4107 = vmatprep.subr.bf16.mxu0 %v4076
    %4108 = vmatpush1.bf16.msra.mxu0 %v4075
    %4109 = vmatprep.subr.bf16.mxu0 %v4078
    %4110 = vmatpush1.bf16.msra.mxu0 %v4077
    %4111 = vmatprep.subr.bf16.mxu0 %v4080
    %4112 = vmatpush1.bf16.msra.mxu0 %v4079
    %4113 = vmatprep.subr.bf16.mxu0 %v4082
    %4114 = vmatpush1.bf16.msra.mxu0 %v4081
    %4115 = vmatprep.subr.bf16.mxu0 0
    %4116 = vmatpush1.bf16.msra.mxu0 0
    %4117 = vmatprep.subr.bf16.mxu0 0
    %4118 = vmatpush1.bf16.msra.mxu0 0
    %4119 = vmatprep.subr.bf16.mxu0 0
    %4120 = vmatpush1.bf16.msra.mxu0 0
    %4121 = vmatprep.subr.bf16.mxu0 0
    %4122 = vmatpush1.bf16.msra.mxu0 0
    %4123 = vmatprep.subr.bf16.mxu0 0
    %4124 = vmatpush1.bf16.msra.mxu0 0
    %4125 = vmatprep.subr.bf16.mxu0 0
    %4126 = vmatpush1.bf16.msra.mxu0 0
    %4127 = vmatprep.subr.bf16.mxu0 0
    %4128 = vmatpush1.bf16.msra.mxu0 0
    %4129 = vmatprep.subr.bf16.mxu0 0
    %4130 = vmatpush1.bf16.msra.mxu0 0
    %4131 = vmatprep.mubr.bf16.mxu0 0
    %4132 = vmatmul.mubr.bf16.gmra.mrb[0].mxu0 %v4001
    %v4133 = vpop.f32.mrb[0].mxu0
    %v4134 = vadd.f32 0.0, %v4133
    %v4135 = vpop.f32.mrb[0].mxu0
    %v4136 = vadd.f32 0.0, %v4135
    %v4137 = vpop.f32.mrb[0].mxu0
    %v4138 = vadd.f32 0.0, %v4137
    %v4139 = vpop.f32.mrb[0].mxu0
    %v4140 = vadd.f32 0.0, %v4139
    %4141 = vmatprep.mubr.bf16.mxu0 0
    %4142 = vmatmul.mubr.bf16.gmra.mrb[0].mxu0 %v4002
    %v4143 = vpop.f32.mrb[0].mxu0
    %v4144 = vadd.f32 0.0, %v4143
    %v4145 = vpop.f32.mrb[0].mxu0
    %v4146 = vadd.f32 0.0, %v4145
    %v4147 = vpop.f32.mrb[0].mxu0
    %v4148 = vadd.f32 0.0, %v4147
    %v4149 = vpop.f32.mrb[0].mxu0
    %v4150 = vadd.f32 0.0, %v4149
    %4151 = vdwg.mxu0
    %v4152 = vadd.f32 %v3923, %v4134
    %v4153 = vadd.f32 %v3924, %v4136
    %v4154 = vadd.f32 %v3925, %v4138
    %v4155 = vadd.f32 %v3926, %v4140
    %v4156 = vadd.f32 %v3927, %v4144
    %v4157 = vadd.f32 %v3928, %v4146
    %v4158 = vadd.f32 %v3929, %v4148
    %v4159 = vadd.f32 %v3930, %v4150
    %s4160 = scalar_lea.vmem [#allocation22], 64
    %v4161 = vld [vmem:[%s4160] sm:$0xf]
    %v4162 = vld [vmem:[%s4160 + $0x4] sm:$0xf]
    %v4163 = vld [vmem:[%s4160 + $0x8] sm:$0xf]
    %v4164 = vld [vmem:[%s4160 + $0xc] sm:$0xf]
    %v4169 = vunpack.c.l.b16 %v4161
    %v4170 = vunpack.c.l.b16 %v4162
    %v4171 = vunpack.c.l.b16 %v4163
    %v4172 = vunpack.c.l.b16 %v4164
    %v4173 = vpack.c.b16 %v4170, %v4169
    %v4174 = vpack.c.b16 %v4172, %v4171
    %v4176 = vsel %vm422, %v4173, 0
    %v4179 = vsel %vm422, %v4174, 0
    %4181 = vmatprep.subr.bf16.mxu0 0
    %4182 = vmatpush1.bf16.msra.mxu0 %v3331
    %4183 = vmatprep.subr.bf16.mxu0 0
    %4184 = vmatpush1.bf16.msra.mxu0 %v3332
    %4185 = vmatprep.subr.bf16.mxu0 0
    %4186 = vmatpush1.bf16.msra.mxu0 0
    %4187 = vmatprep.subr.bf16.mxu0 0
    %4188 = vmatpush1.bf16.msra.mxu0 0
    %4189 = vmatprep.subr.bf16.mxu0 0
    %4190 = vmatpush1.bf16.msra.mxu0 0
    %4191 = vmatprep.subr.bf16.mxu0 0
    %4192 = vmatpush1.bf16.msra.mxu0 0
    %4193 = vmatprep.subr.bf16.mxu0 0
    %4194 = vmatpush1.bf16.msra.mxu0 0
    %4195 = vmatprep.subr.bf16.mxu0 0
    %4196 = vmatpush1.bf16.msra.mxu0 0
    %4197 = vmatprep.subr.bf16.mxu0 0
    %4198 = vmatpush1.bf16.msra.mxu0 0
    %4199 = vmatprep.subr.bf16.mxu0 0
    %4200 = vmatpush1.bf16.msra.mxu0 0
    %4201 = vmatprep.subr.bf16.mxu0 0
    %4202 = vmatpush1.bf16.msra.mxu0 0
    %4203 = vmatprep.subr.bf16.mxu0 0
    %4204 = vmatpush1.bf16.msra.mxu0 0
    %4205 = vmatprep.subr.bf16.mxu0 0
    %4206 = vmatpush1.bf16.msra.mxu0 0
    %4207 = vmatprep.subr.bf16.mxu0 0
    %4208 = vmatpush1.bf16.msra.mxu0 0
    %4209 = vmatprep.subr.bf16.mxu0 0
    %4210 = vmatpush1.bf16.msra.mxu0 0
    %4211 = vmatprep.subr.bf16.mxu0 0
    %4212 = vmatpush1.bf16.msra.mxu0 0
    %4213 = vmatprep.mubr.bf16.mxu0 0
    %4214 = vmatmul.mubr.bf16.gmra.mrb[0].mxu0 %v4176
    %v4215 = vpop.f32.mrb[0].mxu0
    %v4216 = vadd.f32 0.0, %v4215
    %v4217 = vpop.f32.mrb[0].mxu0
    %v4218 = vpop.f32.mrb[0].mxu0
    %v4219 = vadd.f32 0.0, %v4218
    %v4220 = vpop.f32.mrb[0].mxu0
    %4221 = vmatprep.mubr.bf16.mxu0 0
    %4222 = vmatmul.mubr.bf16.gmra.mrb[0].mxu0 %v4179
    %v4223 = vpop.f32.mrb[0].mxu0
    %v4224 = vadd.f32 0.0, %v4223
    %v4225 = vpop.f32.mrb[0].mxu0
    %v4226 = vpop.f32.mrb[0].mxu0
    %v4227 = vadd.f32 0.0, %v4226
    %v4228 = vpop.f32.mrb[0].mxu0
    %4229 = vdwg.mxu0
    %v4230 = vpack.c.bf16 %v4219, %v4216
    %v4231 = vpack.c.bf16 %v4227, %v4224
    %v4232 = vld [vmem:[#allocation17 + $0x200] sm:$0xff]
    %v4233 = vld [vmem:[#allocation17 + $0x208] sm:$0xff]
    %v4234 = vld [vmem:[#allocation17 + $0x210] sm:$0xff]
    %v4235 = vld [vmem:[#allocation17 + $0x218] sm:$0xff]
    %v4236 = vld [vmem:[#allocation17 + $0x220] sm:$0xff]
    %v4237 = vld [vmem:[#allocation17 + $0x228] sm:$0xff]
    %v4238 = vld [vmem:[#allocation17 + $0x230] sm:$0xff]
    %v4239 = vld [vmem:[#allocation17 + $0x238] sm:$0xff]
    %v4240 = vld [vmem:[#allocation17 + $0x240] sm:$0xff]
    %v4241 = vld [vmem:[#allocation17 + $0x248] sm:$0xff]
    %v4242 = vld [vmem:[#allocation17 + $0x250] sm:$0xff]
    %v4243 = vld [vmem:[#allocation17 + $0x258] sm:$0xff]
    %v4244 = vld [vmem:[#allocation17 + $0x260] sm:$0xff]
    %v4245 = vld [vmem:[#allocation17 + $0x268] sm:$0xff]
    %v4246 = vld [vmem:[#allocation17 + $0x270] sm:$0xff]
    %v4247 = vld [vmem:[#allocation17 + $0x278] sm:$0xff]
    %v4264 = vunpack.c.l.b16 %v4232
    %v4265 = vunpack.c.h.b16 %v4232
    %v4266 = vunpack.c.l.b16 %v4233
    %v4267 = vunpack.c.h.b16 %v4233
    %v4268 = vunpack.c.l.b16 %v4234
    %v4269 = vunpack.c.h.b16 %v4234
    %v4270 = vunpack.c.l.b16 %v4235
    %v4271 = vunpack.c.h.b16 %v4235
    %v4272 = vunpack.c.l.b16 %v4236
    %v4273 = vunpack.c.h.b16 %v4236
    %v4274 = vunpack.c.l.b16 %v4237
    %v4275 = vunpack.c.h.b16 %v4237
    %v4276 = vunpack.c.l.b16 %v4238
    %v4277 = vunpack.c.h.b16 %v4238
    %v4278 = vunpack.c.l.b16 %v4239
    %v4279 = vunpack.c.h.b16 %v4239
    %v4280 = vunpack.c.l.b16 %v4240
    %v4281 = vunpack.c.h.b16 %v4240
    %v4282 = vunpack.c.l.b16 %v4241
    %v4283 = vunpack.c.h.b16 %v4241
    %v4284 = vunpack.c.l.b16 %v4242
    %v4285 = vunpack.c.h.b16 %v4242
    %v4286 = vunpack.c.l.b16 %v4243
    %v4287 = vunpack.c.h.b16 %v4243
    %v4288 = vunpack.c.l.b16 %v4244
    %v4289 = vunpack.c.h.b16 %v4244
    %v4290 = vunpack.c.l.b16 %v4245
    %v4291 = vunpack.c.h.b16 %v4245
    %v4292 = vunpack.c.l.b16 %v4246
    %v4293 = vunpack.c.h.b16 %v4246
    %v4294 = vunpack.c.l.b16 %v4247
    %v4295 = vunpack.c.h.b16 %v4247
    %v4296 = vpack.c.b16 %v4266, %v4264
    %v4297 = vpack.c.b16 %v4267, %v4265
    %v4298 = vpack.c.b16 %v4270, %v4268
    %v4299 = vpack.c.b16 %v4271, %v4269
    %v4300 = vpack.c.b16 %v4274, %v4272
    %v4301 = vpack.c.b16 %v4275, %v4273
    %v4302 = vpack.c.b16 %v4278, %v4276
    %v4303 = vpack.c.b16 %v4279, %v4277
    %v4304 = vpack.c.b16 %v4282, %v4280
    %v4305 = vpack.c.b16 %v4283, %v4281
    %v4306 = vpack.c.b16 %v4286, %v4284
    %v4307 = vpack.c.b16 %v4287, %v4285
    %v4308 = vpack.c.b16 %v4290, %v4288
    %v4309 = vpack.c.b16 %v4291, %v4289
    %v4310 = vpack.c.b16 %v4294, %v4292
    %v4311 = vpack.c.b16 %v4295, %v4293
    %4328 = vmatprep.subr.bf16.mxu0 %v4297
    %4329 = vmatpush1.bf16.msra.mxu0 %v4296
    %4330 = vmatprep.subr.bf16.mxu0 %v4299
    %4331 = vmatpush1.bf16.msra.mxu0 %v4298
    %4332 = vmatprep.subr.bf16.mxu0 %v4301
    %4333 = vmatpush1.bf16.msra.mxu0 %v4300
    %4334 = vmatprep.subr.bf16.mxu0 %v4303
    %4335 = vmatpush1.bf16.msra.mxu0 %v4302
    %4336 = vmatprep.subr.bf16.mxu0 %v4305
    %4337 = vmatpush1.bf16.msra.mxu0 %v4304
    %4338 = vmatprep.subr.bf16.mxu0 %v4307
    %4339 = vmatpush1.bf16.msra.mxu0 %v4306
    %4340 = vmatprep.subr.bf16.mxu0 %v4309
    %4341 = vmatpush1.bf16.msra.mxu0 %v4308
    %4342 = vmatprep.subr.bf16.mxu0 %v4311
    %4343 = vmatpush1.bf16.msra.mxu0 %v4310
    %4344 = vmatprep.subr.bf16.mxu0 0
    %4345 = vmatpush1.bf16.msra.mxu0 0
    %4346 = vmatprep.subr.bf16.mxu0 0
    %4347 = vmatpush1.bf16.msra.mxu0 0
    %4348 = vmatprep.subr.bf16.mxu0 0
    %4349 = vmatpush1.bf16.msra.mxu0 0
    %4350 = vmatprep.subr.bf16.mxu0 0
    %4351 = vmatpush1.bf16.msra.mxu0 0
    %4352 = vmatprep.subr.bf16.mxu0 0
    %4353 = vmatpush1.bf16.msra.mxu0 0
    %4354 = vmatprep.subr.bf16.mxu0 0
    %4355 = vmatpush1.bf16.msra.mxu0 0
    %4356 = vmatprep.subr.bf16.mxu0 0
    %4357 = vmatpush1.bf16.msra.mxu0 0
    %4358 = vmatprep.subr.bf16.mxu0 0
    %4359 = vmatpush1.bf16.msra.mxu0 0
    %4360 = vmatprep.mubr.bf16.mxu0 0
    %4361 = vmatmul.mubr.bf16.gmra.mrb[0].mxu0 %v4230
    %v4362 = vpop.f32.mrb[0].mxu0
    %v4363 = vadd.f32 0.0, %v4362
    %v4364 = vpop.f32.mrb[0].mxu0
    %v4365 = vadd.f32 0.0, %v4364
    %v4366 = vpop.f32.mrb[0].mxu0
    %v4367 = vadd.f32 0.0, %v4366
    %v4368 = vpop.f32.mrb[0].mxu0
    %v4369 = vadd.f32 0.0, %v4368
    %4370 = vmatprep.mubr.bf16.mxu0 0
    %4371 = vmatmul.mubr.bf16.gmra.mrb[0].mxu0 %v4231
    %v4372 = vpop.f32.mrb[0].mxu0
    %v4373 = vadd.f32 0.0, %v4372
    %v4374 = vpop.f32.mrb[0].mxu0
    %v4375 = vadd.f32 0.0, %v4374
    %v4376 = vpop.f32.mrb[0].mxu0
    %v4377 = vadd.f32 0.0, %v4376
    %v4378 = vpop.f32.mrb[0].mxu0
    %v4379 = vadd.f32 0.0, %v4378
    %4380 = vdwg.mxu0
    %v4381 = vadd.f32 %v4152, %v4363
    %v4382 = vadd.f32 %v4153, %v4365
    %v4383 = vadd.f32 %v4154, %v4367
    %v4384 = vadd.f32 %v4155, %v4369
    %v4385 = vadd.f32 %v4156, %v4373
    %v4386 = vadd.f32 %v4157, %v4375
    %v4387 = vadd.f32 %v4158, %v4377
    %v4388 = vadd.f32 %v4159, %v4379
    %v4389 = vld [vmem:[#allocation19] sm:$0x3]
    %v4391 = vlaneseq
    %v4392 = vshrl.u32 %v4391, 7
    %v4393 = vsub.s32 0, %v4392
    %v4394 = vrot.slane %v4389, %v4393
    %v4395 = vlaneseq
    %v4396 = vshrl.u32 %v4395, 7
    %v4397 = vsub.s32 1, %v4396
    %v4398 = vrot.slane %v4389, %v4397
    %v4401 = vmul.f32 %v4381, %v4394
    %v4402 = vmul.f32 %v4382, %v4398
    %v4403 = vmul.f32 %v4383, %v4394
    %v4404 = vmul.f32 %v4384, %v4398
    %v4405 = vmul.f32 %v4385, %v4394
    %v4406 = vmul.f32 %v4386, %v4398
    %v4407 = vmul.f32 %v4387, %v4394
    %v4408 = vmul.f32 %v4388, %v4398
    %v4409 = vld [vmem:[#allocation20] sm:$0x3]
    %v4411 = vlaneseq
    %v4412 = vshrl.u32 %v4411, 7
    %v4413 = vsub.s32 0, %v4412
    %v4414 = vrot.slane %v4409, %v4413
    %v4415 = vlaneseq
    %v4416 = vshrl.u32 %v4415, 7
    %v4417 = vsub.s32 1, %v4416
    %v4418 = vrot.slane %v4409, %v4417
    %v4421 = vadd.f32 %v4401, %v4414
    %v4422 = vadd.f32 %v4402, %v4418
    %v4423 = vadd.f32 %v4403, %v4414
    %v4424 = vadd.f32 %v4404, %v4418
    %v4425 = vadd.f32 %v4405, %v4414
    %v4426 = vadd.f32 %v4406, %v4418
    %v4427 = vadd.f32 %v4407, %v4414
    %v4428 = vadd.f32 %v4408, %v4418
    %v4429 = vmax.f32 %v4421, 0.0
    %v4430 = vmax.f32 %v4422, 0.0
    %v4431 = vmax.f32 %v4423, 0.0
    %v4432 = vmax.f32 %v4424, 0.0
    %v4433 = vmax.f32 %v4425, 0.0
    %v4434 = vmax.f32 %v4426, 0.0
    %v4435 = vmax.f32 %v4427, 0.0
    %v4436 = vmax.f32 %v4428, 0.0
    %v4437 = vadd.f32 %v4429, %v4431
    %v4438 = vrot.slane %v4437, 4
    %v4439 = vadd.f32 %v4437, %v4438
    %v4440 = vrot.slane %v4439, 2
    %v4441 = vadd.f32 %v4439, %v4440
    %v4442 = vrot.slane %v4441, 1
    %v4443 = vadd.f32 %v4441, %v4442
    %v4444 = vadd.f32 %v4430, %v4432
    %v4445 = vrot.slane %v4444, 4
    %v4446 = vadd.f32 %v4444, %v4445
    %v4447 = vrot.slane %v4446, 2
    %v4448 = vadd.f32 %v4446, %v4447
    %v4449 = vrot.slane %v4448, 1
    %v4450 = vadd.f32 %v4448, %v4449
    %v4451 = vadd.f32 %v4433, %v4435
    %v4452 = vrot.slane %v4451, 4
    %v4453 = vadd.f32 %v4451, %v4452
    %v4454 = vrot.slane %v4453, 2
    %v4455 = vadd.f32 %v4453, %v4454
    %v4456 = vrot.slane %v4455, 1
    %v4457 = vadd.f32 %v4455, %v4456
    %v4458 = vadd.f32 %v4434, %v4436
    %v4459 = vrot.slane %v4458, 4
    %v4460 = vadd.f32 %v4458, %v4459
    %v4461 = vrot.slane %v4460, 2
    %v4462 = vadd.f32 %v4460, %v4461
    %v4463 = vrot.slane %v4462, 1
    %v4464 = vadd.f32 %v4462, %v4463
    %v4465 = vmul.f32 %v4443, 0.0625
    %v4466 = vmul.f32 %v4450, 0.0625
    %v4467 = vmul.f32 %v4457, 0.0625
    %v4468 = vmul.f32 %v4464, 0.0625
    %v4469 = vpack.c.bf16 %v4465, %v4465
    %v4470 = vpack.c.bf16 %v4466, %v4466
    %v4471 = vpack.c.bf16 %v4467, %v4467
    %v4472 = vpack.c.bf16 %v4468, %v4468
    %v4473 = vld [vmem:[%s17] sm:$0xf]
    %v4474 = vld [vmem:[%s17 + $0x4] sm:$0xf]
    %v4475 = vld [vmem:[%s17 + $0x8] sm:$0xf]
    %v4476 = vld [vmem:[%s17 + $0xc] sm:$0xf]
    %v4477 = vld [vmem:[%s17 + $0x10] sm:$0xf]
    %v4478 = vld [vmem:[%s17 + $0x14] sm:$0xf]
    %v4479 = vld [vmem:[%s17 + $0x18] sm:$0xf]
    %v4480 = vld [vmem:[%s17 + $0x1c] sm:$0xf]
    %v4481 = vld [vmem:[%s17 + $0x20] sm:$0xf]
    %v4482 = vld [vmem:[%s17 + $0x24] sm:$0xf]
    %v4483 = vld [vmem:[%s17 + $0x28] sm:$0xf]
    %v4484 = vld [vmem:[%s17 + $0x2c] sm:$0xf]
    %v4485 = vld [vmem:[%s17 + $0x30] sm:$0xf]
    %v4486 = vld [vmem:[%s17 + $0x34] sm:$0xf]
    %v4487 = vld [vmem:[%s17 + $0x38] sm:$0xf]
    %v4488 = vld [vmem:[%s17 + $0x3c] sm:$0xf]
    %v4489 = vld [vmem:[%s17 + $0x40] sm:$0xf]
    %v4490 = vld [vmem:[%s17 + $0x44] sm:$0xf]
    %v4491 = vld [vmem:[%s17 + $0x48] sm:$0xf]
    %v4492 = vld [vmem:[%s17 + $0x4c] sm:$0xf]
    %v4493 = vld [vmem:[%s17 + $0x50] sm:$0xf]
    %v4494 = vld [vmem:[%s17 + $0x54] sm:$0xf]
    %v4495 = vld [vmem:[%s17 + $0x58] sm:$0xf]
    %v4496 = vld [vmem:[%s17 + $0x5c] sm:$0xf]
    %v4497 = vld [vmem:[%s17 + $0x60] sm:$0xf]
    %v4498 = vld [vmem:[%s17 + $0x64] sm:$0xf]
    %v4499 = vld [vmem:[%s17 + $0x68] sm:$0xf]
    %v4500 = vld [vmem:[%s17 + $0x6c] sm:$0xf]
    %v4501 = vld [vmem:[%s17 + $0x70] sm:$0xf]
    %v4502 = vld [vmem:[%s17 + $0x74] sm:$0xf]
    %v4503 = vld [vmem:[%s17 + $0x78] sm:$0xf]
    %v4504 = vld [vmem:[%s17 + $0x7c] sm:$0xf]
    %v4509 = vunpack.c.l.b16 %v4469
    %v4510 = vunpack.c.l.b16 %v4470
    %v4511 = vunpack.c.l.b16 %v4471
    %v4512 = vunpack.c.l.b16 %v4472
    %v4513 = vsel %vm3147, %v4511, %v4509
    %v4514 = vsel %vm3147, %v4512, %v4510
    %v4515 = vpack.c.b16 %v4513, %v4513
    %v4516 = vpack.c.b16 %v4514, %v4514
    %v4551 = vunpack.c.l.b16 %v4473
    %v4552 = vunpack.c.l.b16 %v4474
    %v4553 = vunpack.c.l.b16 %v4475
    %v4554 = vunpack.c.l.b16 %v4476
    %v4555 = vunpack.c.l.b16 %v4477
    %v4556 = vunpack.c.l.b16 %v4478
    %v4557 = vunpack.c.l.b16 %v4479
    %v4558 = vunpack.c.l.b16 %v4480
    %v4559 = vunpack.c.l.b16 %v4481
    %v4560 = vunpack.c.l.b16 %v4482
    %v4561 = vunpack.c.l.b16 %v4483
    %v4562 = vunpack.c.l.b16 %v4484
    %v4563 = vunpack.c.l.b16 %v4485
    %v4564 = vunpack.c.l.b16 %v4486
    %v4565 = vunpack.c.l.b16 %v4487
    %v4566 = vunpack.c.l.b16 %v4488
    %v4567 = vunpack.c.l.b16 %v4489
    %v4568 = vunpack.c.l.b16 %v4490
    %v4569 = vunpack.c.l.b16 %v4491
    %v4570 = vunpack.c.l.b16 %v4492
    %v4571 = vunpack.c.l.b16 %v4493
    %v4572 = vunpack.c.l.b16 %v4494
    %v4573 = vunpack.c.l.b16 %v4495
    %v4574 = vunpack.c.l.b16 %v4496
    %v4575 = vunpack.c.l.b16 %v4497
    %v4576 = vunpack.c.l.b16 %v4498
    %v4577 = vunpack.c.l.b16 %v4499
    %v4578 = vunpack.c.l.b16 %v4500
    %v4579 = vunpack.c.l.b16 %v4501
    %v4580 = vunpack.c.l.b16 %v4502
    %v4581 = vunpack.c.l.b16 %v4503
    %v4582 = vunpack.c.l.b16 %v4504
    %v4583 = vpack.c.b16 %v4552, %v4551
    %v4584 = vpack.c.b16 %v4554, %v4553
    %v4585 = vpack.c.b16 %v4556, %v4555
    %v4586 = vpack.c.b16 %v4558, %v4557
    %v4587 = vpack.c.b16 %v4560, %v4559
    %v4588 = vpack.c.b16 %v4562, %v4561
    %v4589 = vpack.c.b16 %v4564, %v4563
    %v4590 = vpack.c.b16 %v4566, %v4565
    %v4591 = vpack.c.b16 %v4568, %v4567
    %v4592 = vpack.c.b16 %v4570, %v4569
    %v4593 = vpack.c.b16 %v4572, %v4571
    %v4594 = vpack.c.b16 %v4574, %v4573
    %v4595 = vpack.c.b16 %v4576, %v4575
    %v4596 = vpack.c.b16 %v4578, %v4577
    %v4597 = vpack.c.b16 %v4580, %v4579
    %v4598 = vpack.c.b16 %v4582, %v4581
    %4615 = vmatprep.subr.bf16.mxu0 0
    %4616 = vmatpush1.bf16.msra.mxu0 %v4583
    %4617 = vmatprep.subr.bf16.mxu0 0
    %4618 = vmatpush1.bf16.msra.mxu0 %v4584
    %4619 = vmatprep.subr.bf16.mxu0 0
    %4620 = vmatpush1.bf16.msra.mxu0 %v4585
    %4621 = vmatprep.subr.bf16.mxu0 0
    %4622 = vmatpush1.bf16.msra.mxu0 %v4586
    %4623 = vmatprep.subr.bf16.mxu0 0
    %4624 = vmatpush1.bf16.msra.mxu0 %v4587
    %4625 = vmatprep.subr.bf16.mxu0 0
    %4626 = vmatpush1.bf16.msra.mxu0 %v4588
    %4627 = vmatprep.subr.bf16.mxu0 0
    %4628 = vmatpush1.bf16.msra.mxu0 %v4589
    %4629 = vmatprep.subr.bf16.mxu0 0
    %4630 = vmatpush1.bf16.msra.mxu0 %v4590
    %4631 = vmatprep.subr.bf16.mxu0 0
    %4632 = vmatpush1.bf16.msra.mxu0 %v4591
    %4633 = vmatprep.subr.bf16.mxu0 0
    %4634 = vmatpush1.bf16.msra.mxu0 %v4592
    %4635 = vmatprep.subr.bf16.mxu0 0
    %4636 = vmatpush1.bf16.msra.mxu0 %v4593
    %4637 = vmatprep.subr.bf16.mxu0 0
    %4638 = vmatpush1.bf16.msra.mxu0 %v4594
    %4639 = vmatprep.subr.bf16.mxu0 0
    %4640 = vmatpush1.bf16.msra.mxu0 %v4595
    %4641 = vmatprep.subr.bf16.mxu0 0
    %4642 = vmatpush1.bf16.msra.mxu0 %v4596
    %4643 = vmatprep.subr.bf16.mxu0 0
    %4644 = vmatpush1.bf16.msra.mxu0 %v4597
    %4645 = vmatprep.subr.bf16.mxu0 0
    %4646 = vmatpush1.bf16.msra.mxu0 %v4598
    %4647 = vmatprep.mubr.bf16.mxu0 %v4516
    %4648 = vmatmul.mubr.bf16.gmra.mrb[0].mxu0 %v4515
    %v4649 = vpop.f32.mrb[0].mxu0
    %v4650 = vadd.f32 0.0, %v4649
    %v4651 = vpop.f32.mrb[0].mxu0
    %v4652 = vpop.f32.mrb[0].mxu0
    %v4653 = vpop.f32.mrb[0].mxu0
    %4654 = vdwg.mxu0
    %v4655 = vmax.f32 %v4650, 0.0
    %v4656 = vpack.c.bf16 %v4655, %v4655
    %v4657 = vld [vmem:[#allocation23] sm:$0xff]
    %v4658 = vld [vmem:[#allocation23 + $0x8] sm:$0xff]
    %v4661 = vunpack.c.l.b16 %v4657
    %v4662 = vunpack.c.h.b16 %v4657
    %v4663 = vunpack.c.l.b16 %v4658
    %v4664 = vunpack.c.h.b16 %v4658
    %v4665 = vpack.c.b16 %v4663, %v4661
    %v4666 = vpack.c.b16 %v4664, %v4662
    %vm4669 = vcmask 130048
    %v4671 = vsel %vm4669, %v4656, 0
    %4673 = vmatprep.subr.bf16.mxu0 %v4666
    %4674 = vmatpush1.bf16.msra.mxu0 %v4665
    %4675 = vmatprep.subr.bf16.mxu0 0
    %4676 = vmatpush1.bf16.msra.mxu0 0
    %4677 = vmatprep.subr.bf16.mxu0 0
    %4678 = vmatpush1.bf16.msra.mxu0 0
    %4679 = vmatprep.subr.bf16.mxu0 0
    %4680 = vmatpush1.bf16.msra.mxu0 0
    %4681 = vmatprep.subr.bf16.mxu0 0
    %4682 = vmatpush1.bf16.msra.mxu0 0
    %4683 = vmatprep.subr.bf16.mxu0 0
    %4684 = vmatpush1.bf16.msra.mxu0 0
    %4685 = vmatprep.subr.bf16.mxu0 0
    %4686 = vmatpush1.bf16.msra.mxu0 0
    %4687 = vmatprep.subr.bf16.mxu0 0
    %4688 = vmatpush1.bf16.msra.mxu0 0
    %4689 = vmatprep.subr.bf16.mxu0 0
    %4690 = vmatpush1.bf16.msra.mxu0 0
    %4691 = vmatprep.subr.bf16.mxu0 0
    %4692 = vmatpush1.bf16.msra.mxu0 0
    %4693 = vmatprep.subr.bf16.mxu0 0
    %4694 = vmatpush1.bf16.msra.mxu0 0
    %4695 = vmatprep.subr.bf16.mxu0 0
    %4696 = vmatpush1.bf16.msra.mxu0 0
    %4697 = vmatprep.subr.bf16.mxu0 0
    %4698 = vmatpush1.bf16.msra.mxu0 0
    %4699 = vmatprep.subr.bf16.mxu0 0
    %4700 = vmatpush1.bf16.msra.mxu0 0
    %4701 = vmatprep.subr.bf16.mxu0 0
    %4702 = vmatpush1.bf16.msra.mxu0 0
    %4703 = vmatprep.subr.bf16.mxu0 0
    %4704 = vmatpush1.bf16.msra.mxu0 0
    %4705 = vmatprep.mubr.bf16.mxu0 0
    %4706 = vmatmul.mubr.bf16.gmra.mrb[0].mxu0 %v4671
    %v4707 = vpop.f32.mrb[0].mxu0
    %v4708 = vadd.f32 0.0, %v4707
    %v4709 = vpop.f32.mrb[0].mxu0
    %v4710 = vadd.f32 0.0, %v4709
    %v4711 = vpop.f32.mrb[0].mxu0
    %v4712 = vpop.f32.mrb[0].mxu0
    %4713 = vdwg.mxu0
    %v4714 = vxor.u32 %v4708, 2147483648
    %v4715 = vxor.u32 %v4710, 2147483648
    %v4716 = vmul.f32 %v4714, 1.442695
    %v4717 = vpow.pop %v4716
    %v4718 = vmul.f32 %v4715, 1.442695
    %v4719 = vpow.pop %v4718
    %v4720 = vadd.f32 %v4717, 1.0
    %v4721 = vadd.f32 %v4719, 1.0
    %v4722 = vrcp.pop %v4720
    %v4723 = vmul.f32 1.0, %v4722
    %v4724 = vrcp.pop %v4721
    %v4725 = vmul.f32 1.0, %v4724
    %v4728 = vcombine.low %v4723, %v4725
    %v4730 = vunpack.c.l.s4 1966171168
    %v4731 = vunpack.c.0.s8 %v4730
    %v4732 = vlaneseq
    %v4733 = vshrl.u32 %v4732, 7
    %v4734 = vsub.s32 %v4731, %v4733
    %v4735 = vrot.slane %v4728, %v4734
    %v4736 = vcombine.high %v4735, %v4735
    %v4738 = vunpack.c.l.s4 1966171168
    %v4739 = vunpack.c.0.s8 %v4738
    %v4740 = vlaneseq
    %v4741 = vshrl.u32 %v4740, 7
    %v4742 = vsub.s32 %v4739, %v4741
    %v4743 = vrot.slane %v4735, %v4742
    %v4745 = vunpack.c.l.s4 1966171168
    %v4746 = vunpack.c.0.s8 %v4745
    %v4747 = vlaneseq
    %v4748 = vshrl.u32 %v4747, 7
    %v4749 = vsub.s32 %v4746, %v4748
    %v4750 = vrot.slane %v4736, %v4749
    %v4751 = vlaneseq
    %v4752 = vshrl.u32 %v4751, 7
    %v4753 = vsub.s32 0, %v4752
    %v4754 = vrot.slane %v4743, %v4753
    %v4755 = vlaneseq
    %v4756 = vshrl.u32 %v4755, 7
    %v4757 = vsub.s32 1, %v4756
    %v4758 = vrot.slane %v4743, %v4757
    %v4759 = vlaneseq
    %v4760 = vshrl.u32 %v4759, 7
    %v4761 = vsub.s32 0, %v4760
    %v4762 = vrot.slane %v4750, %v4761
    %v4763 = vlaneseq
    %v4764 = vshrl.u32 %v4763, 7
    %v4765 = vsub.s32 1, %v4764
    %v4766 = vrot.slane %v4750, %v4765
    %v4771 = vmul.f32 %v4429, %v4754
    %v4772 = vmul.f32 %v4430, %v4758
    %v4773 = vmul.f32 %v4431, %v4754
    %v4774 = vmul.f32 %v4432, %v4758
    %v4775 = vmul.f32 %v4433, %v4762
    %v4776 = vmul.f32 %v4434, %v4766
    %v4777 = vmul.f32 %v4435, %v4762
    %v4778 = vmul.f32 %v4436, %v4766
    %v4779 = vpack.c.bf16 %v4773, %v4771
    %v4780 = vpack.c.bf16 %v4774, %v4772
    %v4781 = vpack.c.bf16 %v4777, %v4775
    %v4782 = vpack.c.bf16 %v4778, %v4776
    %v4783 = vld [vmem:[#allocation28] sm:$0xf]
    %v4784 = vld [vmem:[#allocation28 + $0x4] sm:$0xf]
    %v4785 = vld [vmem:[#allocation28 + $0x8] sm:$0xf]
    %v4786 = vld [vmem:[#allocation28 + $0xc] sm:$0xf]
    %v4791 = vunpack.c.l.b16 %v4783
    %v4792 = vunpack.c.l.b16 %v4784
    %v4793 = vunpack.c.l.b16 %v4785
    %v4794 = vunpack.c.l.b16 %v4786
    %v4795 = vpack.c.b16 %v4792, %v4791
    %v4796 = vpack.c.b16 %v4794, %v4793
    %v4798 = vsel %vm422, %v4795, 0
    %v4801 = vsel %vm422, %v4796, 0
    %4803 = vmatprep.subr.bf16.mxu0 %v4780
    %4804 = vmatpush1.bf16.msra.mxu0 %v4779
    %4805 = vmatprep.subr.bf16.mxu0 %v4782
    %4806 = vmatpush1.bf16.msra.mxu0 %v4781
    %4807 = vmatprep.subr.bf16.mxu0 0
    %4808 = vmatpush1.bf16.msra.mxu0 0
    %4809 = vmatprep.subr.bf16.mxu0 0
    %4810 = vmatpush1.bf16.msra.mxu0 0
    %4811 = vmatprep.subr.bf16.mxu0 0
    %4812 = vmatpush1.bf16.msra.mxu0 0
    %4813 = vmatprep.subr.bf16.mxu0 0
    %4814 = vmatpush1.bf16.msra.mxu0 0
    %4815 = vmatprep.subr.bf16.mxu0 0
    %4816 = vmatpush1.bf16.msra.mxu0 0
    %4817 = vmatprep.subr.bf16.mxu0 0
    %4818 = vmatpush1.bf16.msra.mxu0 0
    %4819 = vmatprep.subr.bf16.mxu0 0
    %4820 = vmatpush1.bf16.msra.mxu0 0
    %4821 = vmatprep.subr.bf16.mxu0 0
    %4822 = vmatpush1.bf16.msra.mxu0 0
    %4823 = vmatprep.subr.bf16.mxu0 0
    %4824 = vmatpush1.bf16.msra.mxu0 0
    %4825 = vmatprep.subr.bf16.mxu0 0
    %4826 = vmatpush1.bf16.msra.mxu0 0
    %4827 = vmatprep.subr.bf16.mxu0 0
    %4828 = vmatpush1.bf16.msra.mxu0 0
    %4829 = vmatprep.subr.bf16.mxu0 0
    %4830 = vmatpush1.bf16.msra.mxu0 0
    %4831 = vmatprep.subr.bf16.mxu0 0
    %4832 = vmatpush1.bf16.msra.mxu0 0
    %4833 = vmatprep.subr.bf16.mxu0 0
    %4834 = vmatpush1.bf16.msra.mxu0 0
    %4835 = vmatprep.mubr.bf16.mxu0 0
    %4836 = vmatmul.mubr.bf16.gmra.mrb[0].mxu0 %v4798
    %v4837 = vpop.f32.mrb[0].mxu0
    %v4838 = vadd.f32 0.0, %v4837
    %v4839 = vpop.f32.mrb[0].mxu0
    %v4840 = vadd.f32 0.0, %v4839
    %v4841 = vpop.f32.mrb[0].mxu0
    %v4842 = vadd.f32 0.0, %v4841
    %v4843 = vpop.f32.mrb[0].mxu0
    %v4844 = vadd.f32 0.0, %v4843
    %4845 = vmatprep.mubr.bf16.mxu0 0
    %4846 = vmatmul.mubr.bf16.gmra.mrb[0].mxu0 %v4801
    %v4847 = vpop.f32.mrb[0].mxu0
    %v4848 = vadd.f32 0.0, %v4847
    %v4849 = vpop.f32.mrb[0].mxu0
    %v4850 = vadd.f32 0.0, %v4849
    %v4851 = vpop.f32.mrb[0].mxu0
    %v4852 = vadd.f32 0.0, %v4851
    %v4853 = vpop.f32.mrb[0].mxu0
    %v4854 = vadd.f32 0.0, %v4853
    %4855 = vdwg.mxu0
    %v4856 = vpack.c.bf16 %v4842, %v4838
    %v4857 = vpack.c.bf16 %v4844, %v4840
    %v4858 = vpack.c.bf16 %v4852, %v4848
    %v4859 = vpack.c.bf16 %v4854, %v4850
    %v4860 = vld [vmem:[%s19] sm:$0xf]
    %v4861 = vld [vmem:[%s19 + $0x4] sm:$0xf]
    %v4862 = vld [vmem:[%s19 + $0x8] sm:$0xf]
    %v4863 = vld [vmem:[%s19 + $0xc] sm:$0xf]
    %v4864 = vld [vmem:[%s19 + $0x10] sm:$0xf]
    %v4865 = vld [vmem:[%s19 + $0x14] sm:$0xf]
    %v4866 = vld [vmem:[%s19 + $0x18] sm:$0xf]
    %v4867 = vld [vmem:[%s19 + $0x1c] sm:$0xf]
    %v4868 = vld [vmem:[%s19 + $0x20] sm:$0xf]
    %v4869 = vld [vmem:[%s19 + $0x24] sm:$0xf]
    %v4870 = vld [vmem:[%s19 + $0x28] sm:$0xf]
    %v4871 = vld [vmem:[%s19 + $0x2c] sm:$0xf]
    %v4872 = vld [vmem:[%s19 + $0x30] sm:$0xf]
    %v4873 = vld [vmem:[%s19 + $0x34] sm:$0xf]
    %v4874 = vld [vmem:[%s19 + $0x38] sm:$0xf]
    %v4875 = vld [vmem:[%s19 + $0x3c] sm:$0xf]
    %v4876 = vld [vmem:[%s19 + $0x40] sm:$0xf]
    %v4877 = vld [vmem:[%s19 + $0x44] sm:$0xf]
    %v4878 = vld [vmem:[%s19 + $0x48] sm:$0xf]
    %v4879 = vld [vmem:[%s19 + $0x4c] sm:$0xf]
    %v4880 = vld [vmem:[%s19 + $0x50] sm:$0xf]
    %v4881 = vld [vmem:[%s19 + $0x54] sm:$0xf]
    %v4882 = vld [vmem:[%s19 + $0x58] sm:$0xf]
    %v4883 = vld [vmem:[%s19 + $0x5c] sm:$0xf]
    %v4884 = vld [vmem:[%s19 + $0x60] sm:$0xf]
    %v4885 = vld [vmem:[%s19 + $0x64] sm:$0xf]
    %v4886 = vld [vmem:[%s19 + $0x68] sm:$0xf]
    %v4887 = vld [vmem:[%s19 + $0x6c] sm:$0xf]
    %v4888 = vld [vmem:[%s19 + $0x70] sm:$0xf]
    %v4889 = vld [vmem:[%s19 + $0x74] sm:$0xf]
    %v4890 = vld [vmem:[%s19 + $0x78] sm:$0xf]
    %v4891 = vld [vmem:[%s19 + $0x7c] sm:$0xf]
    %v4892 = vld [vmem:[%s19 + $0x80] sm:$0xf]
    %v4893 = vld [vmem:[%s19 + $0x84] sm:$0xf]
    %v4894 = vld [vmem:[%s19 + $0x88] sm:$0xf]
    %v4895 = vld [vmem:[%s19 + $0x8c] sm:$0xf]
    %v4896 = vld [vmem:[%s19 + $0x90] sm:$0xf]
    %v4897 = vld [vmem:[%s19 + $0x94] sm:$0xf]
    %v4898 = vld [vmem:[%s19 + $0x98] sm:$0xf]
    %v4899 = vld [vmem:[%s19 + $0x9c] sm:$0xf]
    %v4900 = vld [vmem:[%s19 + $0xa0] sm:$0xf]
    %v4901 = vld [vmem:[%s19 + $0xa4] sm:$0xf]
    %v4902 = vld [vmem:[%s19 + $0xa8] sm:$0xf]
    %v4903 = vld [vmem:[%s19 + $0xac] sm:$0xf]
    %v4904 = vld [vmem:[%s19 + $0xb0] sm:$0xf]
    %v4905 = vld [vmem:[%s19 + $0xb4] sm:$0xf]
    %v4906 = vld [vmem:[%s19 + $0xb8] sm:$0xf]
    %v4907 = vld [vmem:[%s19 + $0xbc] sm:$0xf]
    %v4908 = vld [vmem:[%s19 + $0xc0] sm:$0xf]
    %v4909 = vld [vmem:[%s19 + $0xc4] sm:$0xf]
    %v4910 = vld [vmem:[%s19 + $0xc8] sm:$0xf]
    %v4911 = vld [vmem:[%s19 + $0xcc] sm:$0xf]
    %v4912 = vld [vmem:[%s19 + $0xd0] sm:$0xf]
    %v4913 = vld [vmem:[%s19 + $0xd4] sm:$0xf]
    %v4914 = vld [vmem:[%s19 + $0xd8] sm:$0xf]
    %v4915 = vld [vmem:[%s19 + $0xdc] sm:$0xf]
    %v4916 = vld [vmem:[%s19 + $0xe0] sm:$0xf]
    %v4917 = vld [vmem:[%s19 + $0xe4] sm:$0xf]
    %v4918 = vld [vmem:[%s19 + $0xe8] sm:$0xf]
    %v4919 = vld [vmem:[%s19 + $0xec] sm:$0xf]
    %v4920 = vld [vmem:[%s19 + $0xf0] sm:$0xf]
    %v4921 = vld [vmem:[%s19 + $0xf4] sm:$0xf]
    %v4922 = vld [vmem:[%s19 + $0xf8] sm:$0xf]
    %v4923 = vld [vmem:[%s19 + $0xfc] sm:$0xf]
    %v4956 = vunpack.c.l.b16 %v4892
    %v4957 = vunpack.c.l.b16 %v4893
    %v4958 = vunpack.c.l.b16 %v4894
    %v4959 = vunpack.c.l.b16 %v4895
    %v4960 = vunpack.c.l.b16 %v4896
    %v4961 = vunpack.c.l.b16 %v4897
    %v4962 = vunpack.c.l.b16 %v4898
    %v4963 = vunpack.c.l.b16 %v4899
    %v4964 = vunpack.c.l.b16 %v4900
    %v4965 = vunpack.c.l.b16 %v4901
    %v4966 = vunpack.c.l.b16 %v4902
    %v4967 = vunpack.c.l.b16 %v4903
    %v4968 = vunpack.c.l.b16 %v4904
    %v4969 = vunpack.c.l.b16 %v4905
    %v4970 = vunpack.c.l.b16 %v4906
    %v4971 = vunpack.c.l.b16 %v4907
    %v4972 = vunpack.c.l.b16 %v4908
    %v4973 = vunpack.c.l.b16 %v4909
    %v4974 = vunpack.c.l.b16 %v4910
    %v4975 = vunpack.c.l.b16 %v4911
    %v4976 = vunpack.c.l.b16 %v4912
    %v4977 = vunpack.c.l.b16 %v4913
    %v4978 = vunpack.c.l.b16 %v4914
    %v4979 = vunpack.c.l.b16 %v4915
    %v4980 = vunpack.c.l.b16 %v4916
    %v4981 = vunpack.c.l.b16 %v4917
    %v4982 = vunpack.c.l.b16 %v4918
    %v4983 = vunpack.c.l.b16 %v4919
    %v4984 = vunpack.c.l.b16 %v4920
    %v4985 = vunpack.c.l.b16 %v4921
    %v4986 = vunpack.c.l.b16 %v4922
    %v4987 = vunpack.c.l.b16 %v4923
    %v4988 = vpack.c.b16 %v4957, %v4956
    %v4989 = vpack.c.b16 %v4959, %v4958
    %v4990 = vpack.c.b16 %v4961, %v4960
    %v4991 = vpack.c.b16 %v4963, %v4962
    %v4992 = vpack.c.b16 %v4965, %v4964
    %v4993 = vpack.c.b16 %v4967, %v4966
    %v4994 = vpack.c.b16 %v4969, %v4968
    %v4995 = vpack.c.b16 %v4971, %v4970
    %v4996 = vpack.c.b16 %v4973, %v4972
    %v4997 = vpack.c.b16 %v4975, %v4974
    %v4998 = vpack.c.b16 %v4977, %v4976
    %v4999 = vpack.c.b16 %v4979, %v4978
    %v5000 = vpack.c.b16 %v4981, %v4980
    %v5001 = vpack.c.b16 %v4983, %v4982
    %v5002 = vpack.c.b16 %v4985, %v4984
    %v5003 = vpack.c.b16 %v4987, %v4986
    %5020 = vmatprep.subr.bf16.mxu0 0
    %5021 = vmatpush1.bf16.msra.mxu0 %v4988
    %5022 = vmatprep.subr.bf16.mxu0 0
    %5023 = vmatpush1.bf16.msra.mxu0 %v4989
    %5024 = vmatprep.subr.bf16.mxu0 0
    %5025 = vmatpush1.bf16.msra.mxu0 %v4990
    %5026 = vmatprep.subr.bf16.mxu0 0
    %5027 = vmatpush1.bf16.msra.mxu0 %v4991
    %5028 = vmatprep.subr.bf16.mxu0 0
    %5029 = vmatpush1.bf16.msra.mxu0 %v4992
    %5030 = vmatprep.subr.bf16.mxu0 0
    %5031 = vmatpush1.bf16.msra.mxu0 %v4993
    %5032 = vmatprep.subr.bf16.mxu0 0
    %5033 = vmatpush1.bf16.msra.mxu0 %v4994
    %5034 = vmatprep.subr.bf16.mxu0 0
    %5035 = vmatpush1.bf16.msra.mxu0 %v4995
    %5036 = vmatprep.subr.bf16.mxu0 0
    %5037 = vmatpush1.bf16.msra.mxu0 %v4996
    %5038 = vmatprep.subr.bf16.mxu0 0
    %5039 = vmatpush1.bf16.msra.mxu0 %v4997
    %5040 = vmatprep.subr.bf16.mxu0 0
    %5041 = vmatpush1.bf16.msra.mxu0 %v4998
    %5042 = vmatprep.subr.bf16.mxu0 0
    %5043 = vmatpush1.bf16.msra.mxu0 %v4999
    %5044 = vmatprep.subr.bf16.mxu0 0
    %5045 = vmatpush1.bf16.msra.mxu0 %v5000
    %5046 = vmatprep.subr.bf16.mxu0 0
    %5047 = vmatpush1.bf16.msra.mxu0 %v5001
    %5048 = vmatprep.subr.bf16.mxu0 0
    %5049 = vmatpush1.bf16.msra.mxu0 %v5002
    %5050 = vmatprep.subr.bf16.mxu0 0
    %5051 = vmatpush1.bf16.msra.mxu0 %v5003
    %5052 = vmatprep.mubr.bf16.mxu0 %v4780
    %5053 = vmatmul.mubr.bf16.gmra.mrb[0].mxu0 %v4779
    %v5054 = vpop.f32.mrb[0].mxu0
    %v5055 = vadd.f32 0.0, %v5054
    %v5056 = vpop.f32.mrb[0].mxu0
    %v5057 = vpop.f32.mrb[0].mxu0
    %v5058 = vadd.f32 0.0, %v5057
    %v5059 = vpop.f32.mrb[0].mxu0
    %5060 = vmatprep.mubr.bf16.mxu0 %v4782
    %5061 = vmatmul.mubr.bf16.gmra.mrb[0].mxu0 %v4781
    %v5062 = vpop.f32.mrb[0].mxu0
    %v5063 = vadd.f32 0.0, %v5062
    %v5064 = vpop.f32.mrb[0].mxu0
    %v5065 = vpop.f32.mrb[0].mxu0
    %v5066 = vadd.f32 0.0, %v5065
    %v5067 = vpop.f32.mrb[0].mxu0
    %5068 = vdwg.mxu0
    %v5101 = vunpack.c.l.b16 %v4860
    %v5102 = vunpack.c.l.b16 %v4861
    %v5103 = vunpack.c.l.b16 %v4862
    %v5104 = vunpack.c.l.b16 %v4863
    %v5105 = vunpack.c.l.b16 %v4864
    %v5106 = vunpack.c.l.b16 %v4865
    %v5107 = vunpack.c.l.b16 %v4866
    %v5108 = vunpack.c.l.b16 %v4867
    %v5109 = vunpack.c.l.b16 %v4868
    %v5110 = vunpack.c.l.b16 %v4869
    %v5111 = vunpack.c.l.b16 %v4870
    %v5112 = vunpack.c.l.b16 %v4871
    %v5113 = vunpack.c.l.b16 %v4872
    %v5114 = vunpack.c.l.b16 %v4873
    %v5115 = vunpack.c.l.b16 %v4874
    %v5116 = vunpack.c.l.b16 %v4875
    %v5117 = vunpack.c.l.b16 %v4876
    %v5118 = vunpack.c.l.b16 %v4877
    %v5119 = vunpack.c.l.b16 %v4878
    %v5120 = vunpack.c.l.b16 %v4879
    %v5121 = vunpack.c.l.b16 %v4880
    %v5122 = vunpack.c.l.b16 %v4881
    %v5123 = vunpack.c.l.b16 %v4882
    %v5124 = vunpack.c.l.b16 %v4883
    %v5125 = vunpack.c.l.b16 %v4884
    %v5126 = vunpack.c.l.b16 %v4885
    %v5127 = vunpack.c.l.b16 %v4886
    %v5128 = vunpack.c.l.b16 %v4887
    %v5129 = vunpack.c.l.b16 %v4888
    %v5130 = vunpack.c.l.b16 %v4889
    %v5131 = vunpack.c.l.b16 %v4890
    %v5132 = vunpack.c.l.b16 %v4891
    %v5133 = vpack.c.b16 %v5102, %v5101
    %v5134 = vpack.c.b16 %v5104, %v5103
    %v5135 = vpack.c.b16 %v5106, %v5105
    %v5136 = vpack.c.b16 %v5108, %v5107
    %v5137 = vpack.c.b16 %v5110, %v5109
    %v5138 = vpack.c.b16 %v5112, %v5111
    %v5139 = vpack.c.b16 %v5114, %v5113
    %v5140 = vpack.c.b16 %v5116, %v5115
    %v5141 = vpack.c.b16 %v5118, %v5117
    %v5142 = vpack.c.b16 %v5120, %v5119
    %v5143 = vpack.c.b16 %v5122, %v5121
    %v5144 = vpack.c.b16 %v5124, %v5123
    %v5145 = vpack.c.b16 %v5126, %v5125
    %v5146 = vpack.c.b16 %v5128, %v5127
    %v5147 = vpack.c.b16 %v5130, %v5129
    %v5148 = vpack.c.b16 %v5132, %v5131
    %5165 = vmatprep.subr.bf16.mxu0 0
    %5166 = vmatpush1.bf16.msra.mxu0 %v5133
    %5167 = vmatprep.subr.bf16.mxu0 0
    %5168 = vmatpush1.bf16.msra.mxu0 %v5134
    %5169 = vmatprep.subr.bf16.mxu0 0
    %5170 = vmatpush1.bf16.msra.mxu0 %v5135
    %5171 = vmatprep.subr.bf16.mxu0 0
    %5172 = vmatpush1.bf16.msra.mxu0 %v5136
    %5173 = vmatprep.subr.bf16.mxu0 0
    %5174 = vmatpush1.bf16.msra.mxu0 %v5137
    %5175 = vmatprep.subr.bf16.mxu0 0
    %5176 = vmatpush1.bf16.msra.mxu0 %v5138
    %5177 = vmatprep.subr.bf16.mxu0 0
    %5178 = vmatpush1.bf16.msra.mxu0 %v5139
    %5179 = vmatprep.subr.bf16.mxu0 0
    %5180 = vmatpush1.bf16.msra.mxu0 %v5140
    %5181 = vmatprep.subr.bf16.mxu0 0
    %5182 = vmatpush1.bf16.msra.mxu0 %v5141
    %5183 = vmatprep.subr.bf16.mxu0 0
    %5184 = vmatpush1.bf16.msra.mxu0 %v5142
    %5185 = vmatprep.subr.bf16.mxu0 0
    %5186 = vmatpush1.bf16.msra.mxu0 %v5143
    %5187 = vmatprep.subr.bf16.mxu0 0
    %5188 = vmatpush1.bf16.msra.mxu0 %v5144
    %5189 = vmatprep.subr.bf16.mxu0 0
    %5190 = vmatpush1.bf16.msra.mxu0 %v5145
    %5191 = vmatprep.subr.bf16.mxu0 0
    %5192 = vmatpush1.bf16.msra.mxu0 %v5146
    %5193 = vmatprep.subr.bf16.mxu0 0
    %5194 = vmatpush1.bf16.msra.mxu0 %v5147
    %5195 = vmatprep.subr.bf16.mxu0 0
    %5196 = vmatpush1.bf16.msra.mxu0 %v5148
    %5197 = vmatprep.mubr.bf16.mxu0 %v4857
    %5198 = vmatmul.mubr.bf16.gmra.mrb[0].mxu0 %v4856
    %v5199 = vpop.f32.mrb[0].mxu0
    %v5200 = vadd.f32 %v5055, %v5199
    %v5201 = vpop.f32.mrb[0].mxu0
    %v5202 = vpop.f32.mrb[0].mxu0
    %v5203 = vadd.f32 %v5058, %v5202
    %v5204 = vpop.f32.mrb[0].mxu0
    %5205 = vmatprep.mubr.bf16.mxu0 %v4859
    %5206 = vmatmul.mubr.bf16.gmra.mrb[0].mxu0 %v4858
    %v5207 = vpop.f32.mrb[0].mxu0
    %v5208 = vadd.f32 %v5063, %v5207
    %v5209 = vpop.f32.mrb[0].mxu0
    %v5210 = vpop.f32.mrb[0].mxu0
    %v5211 = vadd.f32 %v5066, %v5210
    %v5212 = vpop.f32.mrb[0].mxu0
    %5213 = vdwg.mxu0
    %s5214 = scalar_lea.vmem [#allocation28], 32
    %v5215 = vld [vmem:[%s5214] sm:$0xf]
    %v5216 = vld [vmem:[%s5214 + $0x4] sm:$0xf]
    %v5217 = vld [vmem:[%s5214 + $0x8] sm:$0xf]
    %v5218 = vld [vmem:[%s5214 + $0xc] sm:$0xf]
    %v5223 = vunpack.c.l.b16 %v5215
    %v5224 = vunpack.c.l.b16 %v5216
    %v5225 = vunpack.c.l.b16 %v5217
    %v5226 = vunpack.c.l.b16 %v5218
    %v5227 = vpack.c.b16 %v5224, %v5223
    %v5228 = vpack.c.b16 %v5226, %v5225
    %v5230 = vsel %vm422, %v5227, 0
    %v5233 = vsel %vm422, %v5228, 0
    %5235 = vmatprep.subr.bf16.mxu0 %v4780
    %5236 = vmatpush1.bf16.msra.mxu0 %v4779
    %5237 = vmatprep.subr.bf16.mxu0 %v4782
    %5238 = vmatpush1.bf16.msra.mxu0 %v4781
    %5239 = vmatprep.subr.bf16.mxu0 0
    %5240 = vmatpush1.bf16.msra.mxu0 0
    %5241 = vmatprep.subr.bf16.mxu0 0
    %5242 = vmatpush1.bf16.msra.mxu0 0
    %5243 = vmatprep.subr.bf16.mxu0 0
    %5244 = vmatpush1.bf16.msra.mxu0 0
    %5245 = vmatprep.subr.bf16.mxu0 0
    %5246 = vmatpush1.bf16.msra.mxu0 0
    %5247 = vmatprep.subr.bf16.mxu0 0
    %5248 = vmatpush1.bf16.msra.mxu0 0
    %5249 = vmatprep.subr.bf16.mxu0 0
    %5250 = vmatpush1.bf16.msra.mxu0 0
    %5251 = vmatprep.subr.bf16.mxu0 0
    %5252 = vmatpush1.bf16.msra.mxu0 0
    %5253 = vmatprep.subr.bf16.mxu0 0
    %5254 = vmatpush1.bf16.msra.mxu0 0
    %5255 = vmatprep.subr.bf16.mxu0 0
    %5256 = vmatpush1.bf16.msra.mxu0 0
    %5257 = vmatprep.subr.bf16.mxu0 0
    %5258 = vmatpush1.bf16.msra.mxu0 0
    %5259 = vmatprep.subr.bf16.mxu0 0
    %5260 = vmatpush1.bf16.msra.mxu0 0
    %5261 = vmatprep.subr.bf16.mxu0 0
    %5262 = vmatpush1.bf16.msra.mxu0 0
    %5263 = vmatprep.subr.bf16.mxu0 0
    %5264 = vmatpush1.bf16.msra.mxu0 0
    %5265 = vmatprep.subr.bf16.mxu0 0
    %5266 = vmatpush1.bf16.msra.mxu0 0
    %5267 = vmatprep.mubr.bf16.mxu0 0
    %5268 = vmatmul.mubr.bf16.gmra.mrb[0].mxu0 %v5230
    %v5269 = vpop.f32.mrb[0].mxu0
    %v5270 = vadd.f32 0.0, %v5269
    %v5271 = vpop.f32.mrb[0].mxu0
    %v5272 = vadd.f32 0.0, %v5271
    %v5273 = vpop.f32.mrb[0].mxu0
    %v5274 = vadd.f32 0.0, %v5273
    %v5275 = vpop.f32.mrb[0].mxu0
    %v5276 = vadd.f32 0.0, %v5275
    %5277 = vmatprep.mubr.bf16.mxu0 0
    %5278 = vmatmul.mubr.bf16.gmra.mrb[0].mxu0 %v5233
    %v5279 = vpop.f32.mrb[0].mxu0
    %v5280 = vadd.f32 0.0, %v5279
    %v5281 = vpop.f32.mrb[0].mxu0
    %v5282 = vadd.f32 0.0, %v5281
    %v5283 = vpop.f32.mrb[0].mxu0
    %v5284 = vadd.f32 0.0, %v5283
    %v5285 = vpop.f32.mrb[0].mxu0
    %v5286 = vadd.f32 0.0, %v5285
    %5287 = vdwg.mxu0
    %v5288 = vpack.c.bf16 %v5274, %v5270
    %v5289 = vpack.c.bf16 %v5276, %v5272
    %v5290 = vpack.c.bf16 %v5284, %v5280
    %v5291 = vpack.c.bf16 %v5286, %v5282
    %v5292 = vld [vmem:[%s19 + $0x100] sm:$0xf]
    %v5293 = vld [vmem:[%s19 + $0x104] sm:$0xf]
    %v5294 = vld [vmem:[%s19 + $0x108] sm:$0xf]
    %v5295 = vld [vmem:[%s19 + $0x10c] sm:$0xf]
    %v5296 = vld [vmem:[%s19 + $0x110] sm:$0xf]
    %v5297 = vld [vmem:[%s19 + $0x114] sm:$0xf]
    %v5298 = vld [vmem:[%s19 + $0x118] sm:$0xf]
    %v5299 = vld [vmem:[%s19 + $0x11c] sm:$0xf]
    %v5300 = vld [vmem:[%s19 + $0x120] sm:$0xf]
    %v5301 = vld [vmem:[%s19 + $0x124] sm:$0xf]
    %v5302 = vld [vmem:[%s19 + $0x128] sm:$0xf]
    %v5303 = vld [vmem:[%s19 + $0x12c] sm:$0xf]
    %v5304 = vld [vmem:[%s19 + $0x130] sm:$0xf]
    %v5305 = vld [vmem:[%s19 + $0x134] sm:$0xf]
    %v5306 = vld [vmem:[%s19 + $0x138] sm:$0xf]
    %v5307 = vld [vmem:[%s19 + $0x13c] sm:$0xf]
    %v5308 = vld [vmem:[%s19 + $0x140] sm:$0xf]
    %v5309 = vld [vmem:[%s19 + $0x144] sm:$0xf]
    %v5310 = vld [vmem:[%s19 + $0x148] sm:$0xf]
    %v5311 = vld [vmem:[%s19 + $0x14c] sm:$0xf]
    %v5312 = vld [vmem:[%s19 + $0x150] sm:$0xf]
    %v5313 = vld [vmem:[%s19 + $0x154] sm:$0xf]
    %v5314 = vld [vmem:[%s19 + $0x158] sm:$0xf]
    %v5315 = vld [vmem:[%s19 + $0x15c] sm:$0xf]
    %v5316 = vld [vmem:[%s19 + $0x160] sm:$0xf]
    %v5317 = vld [vmem:[%s19 + $0x164] sm:$0xf]
    %v5318 = vld [vmem:[%s19 + $0x168] sm:$0xf]
    %v5319 = vld [vmem:[%s19 + $0x16c] sm:$0xf]
    %v5320 = vld [vmem:[%s19 + $0x170] sm:$0xf]
    %v5321 = vld [vmem:[%s19 + $0x174] sm:$0xf]
    %v5322 = vld [vmem:[%s19 + $0x178] sm:$0xf]
    %v5323 = vld [vmem:[%s19 + $0x17c] sm:$0xf]
    %v5356 = vunpack.c.l.b16 %v5292
    %v5357 = vunpack.c.l.b16 %v5293
    %v5358 = vunpack.c.l.b16 %v5294
    %v5359 = vunpack.c.l.b16 %v5295
    %v5360 = vunpack.c.l.b16 %v5296
    %v5361 = vunpack.c.l.b16 %v5297
    %v5362 = vunpack.c.l.b16 %v5298
    %v5363 = vunpack.c.l.b16 %v5299
    %v5364 = vunpack.c.l.b16 %v5300
    %v5365 = vunpack.c.l.b16 %v5301
    %v5366 = vunpack.c.l.b16 %v5302
    %v5367 = vunpack.c.l.b16 %v5303
    %v5368 = vunpack.c.l.b16 %v5304
    %v5369 = vunpack.c.l.b16 %v5305
    %v5370 = vunpack.c.l.b16 %v5306
    %v5371 = vunpack.c.l.b16 %v5307
    %v5372 = vunpack.c.l.b16 %v5308
    %v5373 = vunpack.c.l.b16 %v5309
    %v5374 = vunpack.c.l.b16 %v5310
    %v5375 = vunpack.c.l.b16 %v5311
    %v5376 = vunpack.c.l.b16 %v5312
    %v5377 = vunpack.c.l.b16 %v5313
    %v5378 = vunpack.c.l.b16 %v5314
    %v5379 = vunpack.c.l.b16 %v5315
    %v5380 = vunpack.c.l.b16 %v5316
    %v5381 = vunpack.c.l.b16 %v5317
    %v5382 = vunpack.c.l.b16 %v5318
    %v5383 = vunpack.c.l.b16 %v5319
    %v5384 = vunpack.c.l.b16 %v5320
    %v5385 = vunpack.c.l.b16 %v5321
    %v5386 = vunpack.c.l.b16 %v5322
    %v5387 = vunpack.c.l.b16 %v5323
    %v5388 = vpack.c.b16 %v5357, %v5356
    %v5389 = vpack.c.b16 %v5359, %v5358
    %v5390 = vpack.c.b16 %v5361, %v5360
    %v5391 = vpack.c.b16 %v5363, %v5362
    %v5392 = vpack.c.b16 %v5365, %v5364
    %v5393 = vpack.c.b16 %v5367, %v5366
    %v5394 = vpack.c.b16 %v5369, %v5368
    %v5395 = vpack.c.b16 %v5371, %v5370
    %v5396 = vpack.c.b16 %v5373, %v5372
    %v5397 = vpack.c.b16 %v5375, %v5374
    %v5398 = vpack.c.b16 %v5377, %v5376
    %v5399 = vpack.c.b16 %v5379, %v5378
    %v5400 = vpack.c.b16 %v5381, %v5380
    %v5401 = vpack.c.b16 %v5383, %v5382
    %v5402 = vpack.c.b16 %v5385, %v5384
    %v5403 = vpack.c.b16 %v5387, %v5386
    %5420 = vmatprep.subr.bf16.mxu0 0
    %5421 = vmatpush1.bf16.msra.mxu0 %v5388
    %5422 = vmatprep.subr.bf16.mxu0 0
    %5423 = vmatpush1.bf16.msra.mxu0 %v5389
    %5424 = vmatprep.subr.bf16.mxu0 0
    %5425 = vmatpush1.bf16.msra.mxu0 %v5390
    %5426 = vmatprep.subr.bf16.mxu0 0
    %5427 = vmatpush1.bf16.msra.mxu0 %v5391
    %5428 = vmatprep.subr.bf16.mxu0 0
    %5429 = vmatpush1.bf16.msra.mxu0 %v5392
    %5430 = vmatprep.subr.bf16.mxu0 0
    %5431 = vmatpush1.bf16.msra.mxu0 %v5393
    %5432 = vmatprep.subr.bf16.mxu0 0
    %5433 = vmatpush1.bf16.msra.mxu0 %v5394
    %5434 = vmatprep.subr.bf16.mxu0 0
    %5435 = vmatpush1.bf16.msra.mxu0 %v5395
    %5436 = vmatprep.subr.bf16.mxu0 0
    %5437 = vmatpush1.bf16.msra.mxu0 %v5396
    %5438 = vmatprep.subr.bf16.mxu0 0
    %5439 = vmatpush1.bf16.msra.mxu0 %v5397
    %5440 = vmatprep.subr.bf16.mxu0 0
    %5441 = vmatpush1.bf16.msra.mxu0 %v5398
    %5442 = vmatprep.subr.bf16.mxu0 0
    %5443 = vmatpush1.bf16.msra.mxu0 %v5399
    %5444 = vmatprep.subr.bf16.mxu0 0
    %5445 = vmatpush1.bf16.msra.mxu0 %v5400
    %5446 = vmatprep.subr.bf16.mxu0 0
    %5447 = vmatpush1.bf16.msra.mxu0 %v5401
    %5448 = vmatprep.subr.bf16.mxu0 0
    %5449 = vmatpush1.bf16.msra.mxu0 %v5402
    %5450 = vmatprep.subr.bf16.mxu0 0
    %5451 = vmatpush1.bf16.msra.mxu0 %v5403
    %5452 = vmatprep.mubr.bf16.mxu0 %v5289
    %5453 = vmatmul.mubr.bf16.gmra.mrb[0].mxu0 %v5288
    %v5454 = vpop.f32.mrb[0].mxu0
    %v5455 = vadd.f32 0.0, %v5454
    %v5456 = vpop.f32.mrb[0].mxu0
    %v5457 = vpop.f32.mrb[0].mxu0
    %v5458 = vadd.f32 0.0, %v5457
    %v5459 = vpop.f32.mrb[0].mxu0
    %5460 = vmatprep.mubr.bf16.mxu0 %v5291
    %5461 = vmatmul.mubr.bf16.gmra.mrb[0].mxu0 %v5290
    %v5462 = vpop.f32.mrb[0].mxu0
    %v5463 = vadd.f32 0.0, %v5462
    %v5464 = vpop.f32.mrb[0].mxu0
    %v5465 = vpop.f32.mrb[0].mxu0
    %v5466 = vadd.f32 0.0, %v5465
    %v5467 = vpop.f32.mrb[0].mxu0
    %5468 = vdwg.mxu0
    %v5469 = vadd.f32 %v5200, %v5455
    %v5470 = vadd.f32 %v5203, %v5458
    %v5471 = vadd.f32 %v5208, %v5463
    %v5472 = vadd.f32 %v5211, %v5466
    %v5473 = vld [vmem:[#allocation25] sm:$0x1]
    %v5475 = vlaneseq
    %v5476 = vshrl.u32 %v5475, 7
    %v5477 = vsub.s32 0, %v5476
    %v5478 = vrot.slane %v5473, %v5477
    %v5480 = vmul.f32 %v5469, %v5478
    %v5481 = vmul.f32 %v5470, %v5478
    %v5482 = vmul.f32 %v5471, %v5478
    %v5483 = vmul.f32 %v5472, %v5478
    %v5484 = vld [vmem:[#allocation26] sm:$0x1]
    %v5486 = vlaneseq
    %v5487 = vshrl.u32 %v5486, 7
    %v5488 = vsub.s32 0, %v5487
    %v5489 = vrot.slane %v5484, %v5488
    %v5491 = vadd.f32 %v5480, %v5489
    %v5492 = vadd.f32 %v5481, %v5489
    %v5493 = vadd.f32 %v5482, %v5489
    %v5494 = vadd.f32 %v5483, %v5489
    %v5495 = vmax.f32 %v5491, 0.0
    %v5496 = vmax.f32 %v5492, 0.0
    %v5497 = vmax.f32 %v5493, 0.0
    %v5498 = vmax.f32 %v5494, 0.0
    %v5499 = vadd.f32 %v5495, %v5496
    %v5500 = vrot.slane %v5499, 4
    %v5501 = vadd.f32 %v5499, %v5500
    %v5502 = vrot.slane %v5501, 2
    %v5503 = vadd.f32 %v5501, %v5502
    %v5504 = vrot.slane %v5503, 1
    %v5505 = vadd.f32 %v5503, %v5504
    %v5506 = vadd.f32 %v5497, %v5498
    %v5507 = vrot.slane %v5506, 4
    %v5508 = vadd.f32 %v5506, %v5507
    %v5509 = vrot.slane %v5508, 2
    %v5510 = vadd.f32 %v5508, %v5509
    %v5511 = vrot.slane %v5510, 1
    %v5512 = vadd.f32 %v5510, %v5511
    %v5513 = vmul.f32 %v5505, 0.0625
    %v5514 = vmul.f32 %v5512, 0.0625
    %v5515 = vpack.c.bf16 %v2112, %v2112
    %v5516 = vld [vmem:[%s23] sm:$0xf]
    %v5517 = vld [vmem:[%s23 + $0x4] sm:$0xf]
    %v5518 = vld [vmem:[%s23 + $0x8] sm:$0xf]
    %v5519 = vld [vmem:[%s23 + $0xc] sm:$0xf]
    %v5520 = vpack.c.bf16 %v2211, %v2211
    %v5521 = vld [vmem:[%s24] sm:$0xf]
    %v5522 = vld [vmem:[%s24 + $0x4] sm:$0xf]
    %v5523 = vld [vmem:[%s24 + $0x8] sm:$0xf]
    %v5524 = vld [vmem:[%s24 + $0xc] sm:$0xf]
    %5526 = vrot.lane.b32.xlu0 %v5520, 64
    %v5527 = vpop.permute.xlu0 %5526
    %v5532 = vunpack.c.l.b16 %v5521
    %v5533 = vunpack.c.l.b16 %v5522
    %v5534 = vunpack.c.l.b16 %v5523
    %v5535 = vunpack.c.l.b16 %v5524
    %v5536 = vpack.c.b16 %v5533, %v5532
    %v5537 = vpack.c.b16 %v5535, %v5534
    %v5541 = vsel %vm422, %v5527, 0
    %5543 = vmatprep.subr.bf16.mxu0 0
    %5544 = vmatpush1.bf16.msra.mxu0 %v5536
    %5545 = vmatprep.subr.bf16.mxu0 0
    %5546 = vmatpush1.bf16.msra.mxu0 %v5537
    %5547 = vmatprep.subr.bf16.mxu0 0
    %5548 = vmatpush1.bf16.msra.mxu0 0
    %5549 = vmatprep.subr.bf16.mxu0 0
    %5550 = vmatpush1.bf16.msra.mxu0 0
    %5551 = vmatprep.subr.bf16.mxu0 0
    %5552 = vmatpush1.bf16.msra.mxu0 0
    %5553 = vmatprep.subr.bf16.mxu0 0
    %5554 = vmatpush1.bf16.msra.mxu0 0
    %5555 = vmatprep.subr.bf16.mxu0 0
    %5556 = vmatpush1.bf16.msra.mxu0 0
    %5557 = vmatprep.subr.bf16.mxu0 0
    %5558 = vmatpush1.bf16.msra.mxu0 0
    %5559 = vmatprep.subr.bf16.mxu0 0
    %5560 = vmatpush1.bf16.msra.mxu0 0
    %5561 = vmatprep.subr.bf16.mxu0 0
    %5562 = vmatpush1.bf16.msra.mxu0 0
    %5563 = vmatprep.subr.bf16.mxu0 0
    %5564 = vmatpush1.bf16.msra.mxu0 0
    %5565 = vmatprep.subr.bf16.mxu0 0
    %5566 = vmatpush1.bf16.msra.mxu0 0
    %5567 = vmatprep.subr.bf16.mxu0 0
    %5568 = vmatpush1.bf16.msra.mxu0 0
    %5569 = vmatprep.subr.bf16.mxu0 0
    %5570 = vmatpush1.bf16.msra.mxu0 0
    %5571 = vmatprep.subr.bf16.mxu0 0
    %5572 = vmatpush1.bf16.msra.mxu0 0
    %5573 = vmatprep.subr.bf16.mxu0 0
    %5574 = vmatpush1.bf16.msra.mxu0 0
    %5575 = vmatprep.mubr.bf16.mxu0 0
    %5576 = vmatmul.mubr.bf16.gmra.mrb[0].mxu0 %v5541
    %v5577 = vpop.f32.mrb[0].mxu0
    %v5578 = vadd.f32 0.0, %v5577
    %v5579 = vpop.f32.mrb[0].mxu0
    %v5580 = vpop.f32.mrb[0].mxu0
    %v5581 = vpop.f32.mrb[0].mxu0
    %5582 = vdwg.mxu0
    %v5584 = vrot.slane %v5515, 3
    %5585 = vrot.lane.b32.xlu0 %v5584, 64
    %v5586 = vpop.permute.xlu0 %5585
    %v5591 = vunpack.c.l.b16 %v5516
    %v5592 = vunpack.c.l.b16 %v5517
    %v5593 = vunpack.c.l.b16 %v5518
    %v5594 = vunpack.c.l.b16 %v5519
    %v5595 = vpack.c.b16 %v5592, %v5591
    %v5596 = vpack.c.b16 %v5594, %v5593
    %v5600 = vsel %vm422, %v5586, 0
    %5602 = vmatprep.subr.bf16.mxu0 0
    %5603 = vmatpush1.bf16.msra.mxu0 %v5595
    %5604 = vmatprep.subr.bf16.mxu0 0
    %5605 = vmatpush1.bf16.msra.mxu0 %v5596
    %5606 = vmatprep.subr.bf16.mxu0 0
    %5607 = vmatpush1.bf16.msra.mxu0 0
    %5608 = vmatprep.subr.bf16.mxu0 0
    %5609 = vmatpush1.bf16.msra.mxu0 0
    %5610 = vmatprep.subr.bf16.mxu0 0
    %5611 = vmatpush1.bf16.msra.mxu0 0
    %5612 = vmatprep.subr.bf16.mxu0 0
    %5613 = vmatpush1.bf16.msra.mxu0 0
    %5614 = vmatprep.subr.bf16.mxu0 0
    %5615 = vmatpush1.bf16.msra.mxu0 0
    %5616 = vmatprep.subr.bf16.mxu0 0
    %5617 = vmatpush1.bf16.msra.mxu0 0
    %5618 = vmatprep.subr.bf16.mxu0 0
    %5619 = vmatpush1.bf16.msra.mxu0 0
    %5620 = vmatprep.subr.bf16.mxu0 0
    %5621 = vmatpush1.bf16.msra.mxu0 0
    %5622 = vmatprep.subr.bf16.mxu0 0
    %5623 = vmatpush1.bf16.msra.mxu0 0
    %5624 = vmatprep.subr.bf16.mxu0 0
    %5625 = vmatpush1.bf16.msra.mxu0 0
    %5626 = vmatprep.subr.bf16.mxu0 0
    %5627 = vmatpush1.bf16.msra.mxu0 0
    %5628 = vmatprep.subr.bf16.mxu0 0
    %5629 = vmatpush1.bf16.msra.mxu0 0
    %5630 = vmatprep.subr.bf16.mxu0 0
    %5631 = vmatpush1.bf16.msra.mxu0 0
    %5632 = vmatprep.subr.bf16.mxu0 0
    %5633 = vmatpush1.bf16.msra.mxu0 0
    %5634 = vmatprep.mubr.bf16.mxu0 0
    %5635 = vmatmul.mubr.bf16.gmra.mrb[0].mxu0 %v5600
    %v5636 = vpop.f32.mrb[0].mxu0
    %v5637 = vadd.f32 %v5578, %v5636
    %v5638 = vpop.f32.mrb[0].mxu0
    %v5639 = vpop.f32.mrb[0].mxu0
    %v5640 = vpop.f32.mrb[0].mxu0
    %5641 = vdwg.mxu0
    %v5642 = vpack.c.bf16 %v5513, %v5513
    %v5643 = vpack.c.bf16 %v5514, %v5514
    %v5644 = vld [vmem:[%s25] sm:$0xf]
    %v5645 = vld [vmem:[%s25 + $0x4] sm:$0xf]
    %v5646 = vld [vmem:[%s25 + $0x8] sm:$0xf]
    %v5647 = vld [vmem:[%s25 + $0xc] sm:$0xf]
    %v5648 = vld [vmem:[%s25 + $0x10] sm:$0xf]
    %v5649 = vld [vmem:[%s25 + $0x14] sm:$0xf]
    %v5650 = vld [vmem:[%s25 + $0x18] sm:$0xf]
    %v5651 = vld [vmem:[%s25 + $0x1c] sm:$0xf]
    %v5652 = vld [vmem:[%s25 + $0x20] sm:$0xf]
    %v5653 = vld [vmem:[%s25 + $0x24] sm:$0xf]
    %v5654 = vld [vmem:[%s25 + $0x28] sm:$0xf]
    %v5655 = vld [vmem:[%s25 + $0x2c] sm:$0xf]
    %v5656 = vld [vmem:[%s25 + $0x30] sm:$0xf]
    %v5657 = vld [vmem:[%s25 + $0x34] sm:$0xf]
    %v5658 = vld [vmem:[%s25 + $0x38] sm:$0xf]
    %v5659 = vld [vmem:[%s25 + $0x3c] sm:$0xf]
    %v5662 = vunpack.c.l.b16 %v5642
    %v5663 = vunpack.c.l.b16 %v5643
    %v5664 = vsel %vm3147, %v5663, %v5662
    %v5665 = vpack.c.b16 %v5664, %v5664
    %v5683 = vunpack.c.l.b16 %v5644
    %v5684 = vunpack.c.l.b16 %v5645
    %v5685 = vunpack.c.l.b16 %v5646
    %v5686 = vunpack.c.l.b16 %v5647
    %v5687 = vunpack.c.l.b16 %v5648
    %v5688 = vunpack.c.l.b16 %v5649
    %v5689 = vunpack.c.l.b16 %v5650
    %v5690 = vunpack.c.l.b16 %v5651
    %v5691 = vunpack.c.l.b16 %v5652
    %v5692 = vunpack.c.l.b16 %v5653
    %v5693 = vunpack.c.l.b16 %v5654
    %v5694 = vunpack.c.l.b16 %v5655
    %v5695 = vunpack.c.l.b16 %v5656
    %v5696 = vunpack.c.l.b16 %v5657
    %v5697 = vunpack.c.l.b16 %v5658
    %v5698 = vunpack.c.l.b16 %v5659
    %v5699 = vpack.c.b16 %v5684, %v5683
    %v5700 = vpack.c.b16 %v5686, %v5685
    %v5701 = vpack.c.b16 %v5688, %v5687
    %v5702 = vpack.c.b16 %v5690, %v5689
    %v5703 = vpack.c.b16 %v5692, %v5691
    %v5704 = vpack.c.b16 %v5694, %v5693
    %v5705 = vpack.c.b16 %v5696, %v5695
    %v5706 = vpack.c.b16 %v5698, %v5697
    %5715 = vmatprep.subr.bf16.mxu0 0
    %5716 = vmatpush1.bf16.msra.mxu0 %v5699
    %5717 = vmatprep.subr.bf16.mxu0 0
    %5718 = vmatpush1.bf16.msra.mxu0 %v5700
    %5719 = vmatprep.subr.bf16.mxu0 0
    %5720 = vmatpush1.bf16.msra.mxu0 %v5701
    %5721 = vmatprep.subr.bf16.mxu0 0
    %5722 = vmatpush1.bf16.msra.mxu0 %v5702
    %5723 = vmatprep.subr.bf16.mxu0 0
    %5724 = vmatpush1.bf16.msra.mxu0 %v5703
    %5725 = vmatprep.subr.bf16.mxu0 0
    %5726 = vmatpush1.bf16.msra.mxu0 %v5704
    %5727 = vmatprep.subr.bf16.mxu0 0
    %5728 = vmatpush1.bf16.msra.mxu0 %v5705
    %5729 = vmatprep.subr.bf16.mxu0 0
    %5730 = vmatpush1.bf16.msra.mxu0 %v5706
    %5731 = vmatprep.subr.bf16.mxu0 0
    %5732 = vmatpush1.bf16.msra.mxu0 0
    %5733 = vmatprep.subr.bf16.mxu0 0
    %5734 = vmatpush1.bf16.msra.mxu0 0
    %5735 = vmatprep.subr.bf16.mxu0 0
    %5736 = vmatpush1.bf16.msra.mxu0 0
    %5737 = vmatprep.subr.bf16.mxu0 0
    %5738 = vmatpush1.bf16.msra.mxu0 0
    %5739 = vmatprep.subr.bf16.mxu0 0
    %5740 = vmatpush1.bf16.msra.mxu0 0
    %5741 = vmatprep.subr.bf16.mxu0 0
    %5742 = vmatpush1.bf16.msra.mxu0 0
    %5743 = vmatprep.subr.bf16.mxu0 0
    %5744 = vmatpush1.bf16.msra.mxu0 0
    %5745 = vmatprep.subr.bf16.mxu0 0
    %5746 = vmatpush1.bf16.msra.mxu0 0
    %5747 = vmatprep.mubr.bf16.mxu0 0
    %5748 = vmatmul.mubr.bf16.gmra.mrb[0].mxu0 %v5665
    %v5749 = vpop.f32.mrb[0].mxu0
    %v5750 = vadd.f32 0.0, %v5749
    %v5751 = vpop.f32.mrb[0].mxu0
    %v5752 = vpop.f32.mrb[0].mxu0
    %v5753 = vpop.f32.mrb[0].mxu0
    %5754 = vdwg.mxu0
    %v5755 = vadd.f32 %v5637, %v5750
    %v5756 = vld [vmem:[#allocation29] sm:$0x1]
    %v5758 = vlaneseq
    %v5759 = vshrl.u32 %v5758, 7
    %v5760 = vsub.s32 0, %v5759
    %v5761 = vrot.slane %v5756, %v5760
    %v5763 = vadd.f32 %v5755, %v5761
    %vm5764 = vcmask 9216
    %5765 = vst.msk [vmem:[#allocation31] sm:$0x3] %vm5764, %v5763
    // Predicated region
    $region182: #{mlstm_fcn_forward.1} parent=1 // pred_check
      _
    $region183: #{mlstm_fcn_forward.1} parent=1 // pred_check_branch
      %5767 = sbr.rel (0) target = $region185
    $region184: #{mlstm_fcn_forward.1} parent=1 // pred_region
      %s5769 = ssub.s32 32, 32
      %5770 = vsyncadd [#allocation4], %s5769
      %s5772 = sshll.u32 [#allocation31], 4
      %s5773 = int_to_ptr.vmem [resolvable:$true] %s5772
      %5775 = dma.vmem_to_hbm [thread:$0]  %s5773, 32, %s27, [#allocation4]
    $region185: #{mlstm_fcn_forward.1} parent=1 // pred_fallthru
      _
    // Predicated region
    $region186: #{mlstm_fcn_forward.1} parent=1 // pred_check
      _
    $region187: #{mlstm_fcn_forward.1} parent=1 // pred_check_branch
      %5777 = sbr.rel (0) target = $region189
    $region188: #{mlstm_fcn_forward.1} parent=1 // pred_region
      %5778 = dma.done [#allocation4], 32
    $region189: #{mlstm_fcn_forward.1} parent=1 // pred_fallthru
      _
    %5779 = vsyncpa [#allocation3], 1
    %5780 = vsyncpa [#allocation6], 1
    %5781 = vsyncpa [#allocation9], 1
    %5782 = vsyncpa [#allocation12], 1
    %5783 = vsyncpa [#allocation15], 1
    %5784 = vsyncpa [#allocation18], 1
    %5785 = vsyncpa [#allocation21], 1
    %5786 = vsyncpa [#allocation24], 1
    %5787 = vsyncpa [#allocation27], 1
    %5788 = vsyncpa [#allocation30], 1
    %5789 = vsyncpa [#allocation4], 1

</llo_original>
